<compile_context>
chip_gen: v7x
topology: tpu7x:2x2x1
jax: 0.10.0
libtpu: 0.0.40
codegen_flags: <defaults>
</compile_context>

<pallas_src>
import numpy as np

import jax
import jax.numpy as jnp
from jax import lax
from jax.experimental import pallas as pl
from jax.experimental.pallas import tpu as pltpu


LEAKY_SLOPE = 0.05


# ----------------------------------------------------------------------------
# Fused encoder kernel: all conv layers + activations in one pallas_call.
# ----------------------------------------------------------------------------
def _encoder_kernel(xT_ref, *refs):
    # refs = (w1, s1, w2, s2, ..., wL, sL, out_ref)
    out_ref = refs[-1]
    layer_refs = refs[:-1]
    n_layers = len(layer_refs) // 2

    act = xT_ref[...]                                    # (Cin0, N*H0*W0), bf16
    result = None
    for l in range(n_layers):
        w_ref = layer_refs[2 * l]                        # (K*Cout, Cin)  bf16
        s_ref = layer_refs[2 * l + 1]                    # (K, P, M)      bf16 0/1
        K, P, M = s_ref.shape
        Cout = w_ref.shape[0] // K

        # Stage 1: apply every tap's weights at once on the MXU.
        #   (K*Cout, Cin) @ (Cin, P) -> (K*Cout, P), f32 accumulation.
        y = jnp.dot(w_ref[...], act, preferred_element_type=jnp.float32)

        # Stage 2: im2col-as-matmul.  S_k routes each input position to its
        # output pixel for tap k (zeros encode padding), so the matmul is an
        # exact gather.  Accumulate the K taps in f32.
        acc = jnp.zeros((Cout, M), jnp.float32)
        for k in range(K):
            # f32 slice is vreg-row aligned (Cout is a multiple of 8); cast to
            # bf16 only for the MXU operand.
            y_k = y[k * Cout:(k + 1) * Cout, :].astype(jnp.bfloat16)
            acc = acc + jnp.dot(y_k, s_ref[k], preferred_element_type=jnp.float32)

        if l < n_layers - 1:
            acc = jnp.where(acc >= 0, acc, LEAKY_SLOPE * acc)   # LeakyReLU (VPU, f32)
            act = acc.astype(jnp.bfloat16)                      # bf16 for next MXU stage
        else:
            result = jnp.tanh(acc)                              # final Tanh (EUP, f32)

    out_ref[...] = result.astype(out_ref.dtype)                 # (code_size, N)


def _zero_index_map(ndim):
    def index_map(i):
        return (0,) * ndim
    return index_map


# ----------------------------------------------------------------------------
# Encoder (forward-pass equivalent of the PyTorch module, no norm, no bias)
# ----------------------------------------------------------------------------
class EncoderPallas:
    def __init__(self, img_size, code_size, kernel_size=4, num_input_channels=3,
                 num_feature_maps=64, max_feature_maps=512, key=None):
        if not isinstance(img_size, tuple):
            img_size = (img_size, img_size)
        self.img_size = img_size
        self.final_size = (4, 4)
        self.code_size = code_size
        self.kernel_size = kernel_size
        self.num_layers = int(np.log2(max(img_size))) - 2
        self.stride = 2
        # utils.same_padding(4, 2) == 2  ->  padding // 2 == 1
        self.padding = (kernel_size - self.stride) // 2

        if key is None:
            key = jax.random.PRNGKey(0)

        # -- raw conv weights (PyTorch OIHW layout), normal(0.0, 0.02) init --
        self.conv_weights = []
        channels = [num_feature_maps]
        key, k0 = jax.random.split(key)
        self.conv_weights.append(0.02 * jax.random.normal(
            k0, (num_feature_maps, num_input_channels, kernel_size, kernel_size),
            dtype=jnp.float32))
        for _ in range(self.num_layers - 1):
            out_ch = min(max_feature_maps, 2 * channels[-1])
            key, ki = jax.random.split(key)
            self.conv_weights.append(0.02 * jax.random.normal(
                ki, (out_ch, channels[-1], kernel_size, kernel_size),
                dtype=jnp.float32))
            channels.append(out_ch)
        key, kf = jax.random.split(key)
        self.final_weight = 0.02 * jax.random.normal(
            kf, (code_size, channels[-1], self.final_size[0], self.final_size[1]),
            dtype=jnp.float32)
        self.channels = channels

        # -- per-layer geometry --
        H, W = self.img_size
        self.layer_geoms = []
        for _ in range(self.num_layers):
            self.layer_geoms.append(dict(H=H, W=W, kh=kernel_size, kw=kernel_size,
                                         stride=self.stride, pad=self.padding))
            H = (H + 2 * self.padding - kernel_size) // self.stride + 1
            W = (W + 2 * self.padding - kernel_size) // self.stride + 1
        assert (H, W) == self.final_size, (H, W)
        self.layer_geoms.append(dict(H=H, W=W, kh=self.final_size[0],
                                     kw=self.final_size[1], stride=1, pad=0))

        # -- GEMM-layout weights, precomputed ONCE (hoisted out of forward), bf16 --
        # Row (k*Cout + co) of W_all holds w[co, :, ki, kj] with k = ki*kw + kj.
        all_w = list(self.conv_weights) + [self.final_weight]
        self.w_mats = []
        for w in all_w:
            Cout, Cin, kh, kw = w.shape
            w_mat = jnp.transpose(w, (2, 3, 0, 1)).reshape(kh * kw * Cout, Cin)
            self.w_mats.append(w_mat.astype(jnp.bfloat16))

        self._sel_cache = {}   # batch size -> tuple of selection matrices

    # 0/1 routing matrices: S[k, p, m] == 1  iff padded/strided input position p
    # feeds output pixel m through kernel tap k.  Built on host, cached per batch.
    def _selectors(self, N):
        if N in self._sel_cache:
            return self._sel_cache[N]
        sels = []
        for g in self.layer_geoms:
            H, W, kh, kw = g["H"], g["W"], g["kh"], g["kw"]
            s, p = g["stride"], g["pad"]
            Ho = (H + 2 * p - kh) // s + 1
            Wo = (W + 2 * p - kw) // s + 1
            S = np.zeros((kh * kw, N * H * W, N * Ho * Wo), np.float32)
            for ki in range(kh):
                for kj in range(kw):
                    k = ki * kw + kj
                    for ho in range(Ho):
                        h = ho * s + ki - p
                        if h < 0 or h >= H:
                            continue
                        for wo in range(Wo):
                            w_ = wo * s + kj - p
                            if w_ < 0 or w_ >= W:
                                continue
                            for n in range(N):
                                S[k, n * H * W + h * W + w_,
                                  n * Ho * Wo + ho * Wo + wo] = 1.0
            sels.append(jnp.asarray(S, dtype=jnp.bfloat16))
        sels = tuple(sels)
        self._sel_cache[N] = sels
        return sels

    def __call__(self, x_nchw):
        N, C, H, W = x_nchw.shape
        assert (H, W) == self.img_size
        # NCHW -> transposed GEMM layout: channels on sublanes, (n,h,w) on lanes.
        xT = jnp.transpose(x_nchw, (1, 0, 2, 3)).reshape(C, N * H * W)
        xT = xT.astype(jnp.bfloat16)
        sels = self._selectors(N)

        args = [xT]
        for w_mat, S in zip(self.w_mats, sels):
            args.append(w_mat)
            args.append(S)

        in_specs = [pl.BlockSpec(a.shape, _zero_index_map(len(a.shape)))
                    for a in args]
        out_shape = jax.ShapeDtypeStruct((self.code_size, N), jnp.float32)
        out_spec = pl.BlockSpec((self.code_size, N), lambda i: (0, 0))

        codeT = pl.pallas_call(
            _encoder_kernel,
            out_shape=out_shape,
            grid=(1,),
            in_specs=in_specs,
            out_specs=out_spec,
            compiler_params=pltpu.CompilerParams(
                dimension_semantics=("arbitrary",)),
        )(*args)
        # (code_size, N) -> (N, code_size)   (== x.view(-1, code_size))
        return jnp.transpose(codeT)


# ----------------------------------------------------------------------------
# Reference forward (lax.conv, f32 HIGHEST) to validate the Pallas path
# ----------------------------------------------------------------------------
def _reference_forward(enc, x_nchw):
    def conv(x, w, stride, pad):
        return lax.conv_general_dilated(
            x, w, window_strides=(stride, stride),
            padding=((pad, pad), (pad, pad)),
            dimension_numbers=("NCHW", "OIHW", "NCHW"),
            precision=lax.Precision.HIGHEST)

    x = x_nchw
    for w in enc.conv_weights:
        x = conv(x, w, enc.stride, enc.padding)
        x = jnp.where(x >= 0, x, LEAKY_SLOPE * x)      # LeakyReLU(0.05)
    x = jnp.tanh(conv(x, enc.final_weight, 1, 0))      # final conv + Tanh
    return x.reshape(-1, enc.code_size)


if __name__ == "__main__":
    key = jax.random.PRNGKey(0)
    k_in, k_w = jax.random.split(key)

    batch, in_ch, img = 2, 3, 16
    code_size, nf = 32, 8

    x = jax.random.normal(k_in, (batch, in_ch, img, img), dtype=jnp.float32)

    enc = EncoderPallas(img_size=img, code_size=code_size, kernel_size=4,
                        num_input_channels=in_ch, num_feature_maps=nf,
                        max_feature_maps=512, key=k_w)

    out = jax.block_until_ready(enc(x))
    assert out.shape == (batch, code_size), out.shape

    ref = jax.block_until_ready(_reference_forward(enc, x))
    # bf16 MXU inputs vs f32 HIGHEST reference -> loose-but-safe tolerances.
    np.testing.assert_allclose(np.asarray(out), np.asarray(ref),
                               rtol=2e-2, atol=2e-3)

    print("KERNEL_OK")
</pallas_src>

<mosaic_0001>
module attributes {stable_mosaic.version = 11 : i64} {
  func.func @_encoder_kernel(%arg0: i32, %arg1: memref<3x512xbf16, #tpu.memory_space<vmem>>, %arg2: memref<128x3xbf16, #tpu.memory_space<vmem>>, %arg3: memref<16x512x128xbf16, #tpu.memory_space<vmem>>, %arg4: memref<256x8xbf16, #tpu.memory_space<vmem>>, %arg5: memref<16x128x32xbf16, #tpu.memory_space<vmem>>, %arg6: memref<512x16xbf16, #tpu.memory_space<vmem>>, %arg7: memref<16x32x2xbf16, #tpu.memory_space<vmem>>, %arg8: memref<32x2xf32, #tpu.memory_space<vmem>>) attributes {dimension_semantics = [#tpu.dimension_semantics<arbitrary>], iteration_bounds = array<i64: 1>, scalar_prefetch = 0 : i64, scratch_operands = 0 : i64, tpu.core_type = #tpu.core_type<tc>, window_params = [{pipeline_mode = #tpu.pipeline_mode<synchronous>, transform_indices = @transform_0, window_bounds = array<i64: 3, 512>}, {pipeline_mode = #tpu.pipeline_mode<synchronous>, transform_indices = @transform_1, window_bounds = array<i64: 128, 3>}, {pipeline_mode = #tpu.pipeline_mode<synchronous>, transform_indices = @transform_2, window_bounds = array<i64: 16, 512, 128>}, {pipeline_mode = #tpu.pipeline_mode<synchronous>, transform_indices = @transform_3, window_bounds = array<i64: 256, 8>}, {pipeline_mode = #tpu.pipeline_mode<synchronous>, transform_indices = @transform_4, window_bounds = array<i64: 16, 128, 32>}, {pipeline_mode = #tpu.pipeline_mode<synchronous>, transform_indices = @transform_5, window_bounds = array<i64: 512, 16>}, {pipeline_mode = #tpu.pipeline_mode<synchronous>, transform_indices = @transform_6, window_bounds = array<i64: 16, 32, 2>}, {pipeline_mode = #tpu.pipeline_mode<synchronous>, transform_indices = @transform_7, window_bounds = array<i64: 32, 2>}]} {
    %c0 = arith.constant 0 : index
    %c0_0 = arith.constant 0 : index
    %0 = vector.load %arg1[%c0, %c0_0] : memref<3x512xbf16, #tpu.memory_space<vmem>>, vector<3x512xbf16>
    %c0_1 = arith.constant 0 : index
    %c0_2 = arith.constant 0 : index
    %1 = vector.load %arg2[%c0_1, %c0_2] : memref<128x3xbf16, #tpu.memory_space<vmem>>, vector<128x3xbf16>
    %cst = arith.constant dense<0.000000e+00> : vector<128x512xf32>
    %2 = tpu.matmul %1, %0, %cst {dimension_numbers = #tpu.dot_dimension_numbers<[1], [0], [0], [1], [0, 0, 1, 1], [], []>} : vector<128x3xbf16>, vector<3x512xbf16>, vector<128x512xf32> -> vector<128x512xf32>
    %cst_3 = arith.constant 0.000000e+00 : f32
    %3 = vector.broadcast %cst_3 : f32 to vector<8x128xf32>
    %4 = vector.extract_strided_slice %2 {offsets = [0, 0], sizes = [8, 512], strides = [1, 1]} : vector<128x512xf32> to vector<8x512xf32>
    %5 = arith.truncf %4 : vector<8x512xf32> to vector<8x512xbf16>
    %c0_4 = arith.constant 0 : index
    %c0_5 = arith.constant 0 : index
    %c0_6 = arith.constant 0 : index
    %6 = vector.load %arg3[%c0_4, %c0_5, %c0_6] : memref<16x512x128xbf16, #tpu.memory_space<vmem>>, vector<1x512x128xbf16>
    %7 = vector.shape_cast %6 : vector<1x512x128xbf16> to vector<512x128xbf16>
    %cst_7 = arith.constant dense<0.000000e+00> : vector<8x128xf32>
    %8 = tpu.matmul %5, %7, %cst_7 {dimension_numbers = #tpu.dot_dimension_numbers<[1], [0], [0], [1], [0, 0, 1, 1], [], []>} : vector<8x512xbf16>, vector<512x128xbf16>, vector<8x128xf32> -> vector<8x128xf32>
    %9 = arith.addf %3, %8 : vector<8x128xf32>
    %10 = vector.extract_strided_slice %2 {offsets = [8, 0], sizes = [8, 512], strides = [1, 1]} : vector<128x512xf32> to vector<8x512xf32>
    %11 = arith.truncf %10 : vector<8x512xf32> to vector<8x512xbf16>
    %c1 = arith.constant 1 : index
    %c0_8 = arith.constant 0 : index
    %c0_9 = arith.constant 0 : index
    %12 = vector.load %arg3[%c1, %c0_8, %c0_9] : memref<16x512x128xbf16, #tpu.memory_space<vmem>>, vector<1x512x128xbf16>
    %13 = vector.shape_cast %12 : vector<1x512x128xbf16> to vector<512x128xbf16>
    %cst_10 = arith.constant dense<0.000000e+00> : vector<8x128xf32>
    %14 = tpu.matmul %11, %13, %cst_10 {dimension_numbers = #tpu.dot_dimension_numbers<[1], [0], [0], [1], [0, 0, 1, 1], [], []>} : vector<8x512xbf16>, vector<512x128xbf16>, vector<8x128xf32> -> vector<8x128xf32>
    %15 = arith.addf %9, %14 : vector<8x128xf32>
    %16 = vector.extract_strided_slice %2 {offsets = [16, 0], sizes = [8, 512], strides = [1, 1]} : vector<128x512xf32> to vector<8x512xf32>
    %17 = arith.truncf %16 : vector<8x512xf32> to vector<8x512xbf16>
    %c2 = arith.constant 2 : index
    %c0_11 = arith.constant 0 : index
    %c0_12 = arith.constant 0 : index
    %18 = vector.load %arg3[%c2, %c0_11, %c0_12] : memref<16x512x128xbf16, #tpu.memory_space<vmem>>, vector<1x512x128xbf16>
    %19 = vector.shape_cast %18 : vector<1x512x128xbf16> to vector<512x128xbf16>
    %cst_13 = arith.constant dense<0.000000e+00> : vector<8x128xf32>
    %20 = tpu.matmul %17, %19, %cst_13 {dimension_numbers = #tpu.dot_dimension_numbers<[1], [0], [0], [1], [0, 0, 1, 1], [], []>} : vector<8x512xbf16>, vector<512x128xbf16>, vector<8x128xf32> -> vector<8x128xf32>
    %21 = arith.addf %15, %20 : vector<8x128xf32>
    %22 = vector.extract_strided_slice %2 {offsets = [24, 0], sizes = [8, 512], strides = [1, 1]} : vector<128x512xf32> to vector<8x512xf32>
    %23 = arith.truncf %22 : vector<8x512xf32> to vector<8x512xbf16>
    %c3 = arith.constant 3 : index
    %c0_14 = arith.constant 0 : index
    %c0_15 = arith.constant 0 : index
    %24 = vector.load %arg3[%c3, %c0_14, %c0_15] : memref<16x512x128xbf16, #tpu.memory_space<vmem>>, vector<1x512x128xbf16>
    %25 = vector.shape_cast %24 : vector<1x512x128xbf16> to vector<512x128xbf16>
    %cst_16 = arith.constant dense<0.000000e+00> : vector<8x128xf32>
    %26 = tpu.matmul %23, %25, %cst_16 {dimension_numbers = #tpu.dot_dimension_numbers<[1], [0], [0], [1], [0, 0, 1, 1], [], []>} : vector<8x512xbf16>, vector<512x128xbf16>, vector<8x128xf32> -> vector<8x128xf32>
    %27 = arith.addf %21, %26 : vector<8x128xf32>
    %28 = vector.extract_strided_slice %2 {offsets = [32, 0], sizes = [8, 512], strides = [1, 1]} : vector<128x512xf32> to vector<8x512xf32>
    %29 = arith.truncf %28 : vector<8x512xf32> to vector<8x512xbf16>
    %c4 = arith.constant 4 : index
    %c0_17 = arith.constant 0 : index
    %c0_18 = arith.constant 0 : index
    %30 = vector.load %arg3[%c4, %c0_17, %c0_18] : memref<16x512x128xbf16, #tpu.memory_space<vmem>>, vector<1x512x128xbf16>
    %31 = vector.shape_cast %30 : vector<1x512x128xbf16> to vector<512x128xbf16>
    %cst_19 = arith.constant dense<0.000000e+00> : vector<8x128xf32>
    %32 = tpu.matmul %29, %31, %cst_19 {dimension_numbers = #tpu.dot_dimension_numbers<[1], [0], [0], [1], [0, 0, 1, 1], [], []>} : vector<8x512xbf16>, vector<512x128xbf16>, vector<8x128xf32> -> vector<8x128xf32>
    %33 = arith.addf %27, %32 : vector<8x128xf32>
    %34 = vector.extract_strided_slice %2 {offsets = [40, 0], sizes = [8, 512], strides = [1, 1]} : vector<128x512xf32> to vector<8x512xf32>
    %35 = arith.truncf %34 : vector<8x512xf32> to vector<8x512xbf16>
    %c5 = arith.constant 5 : index
    %c0_20 = arith.constant 0 : index
    %c0_21 = arith.constant 0 : index
    %36 = vector.load %arg3[%c5, %c0_20, %c0_21] : memref<16x512x128xbf16, #tpu.memory_space<vmem>>, vector<1x512x128xbf16>
    %37 = vector.shape_cast %36 : vector<1x512x128xbf16> to vector<512x128xbf16>
    %cst_22 = arith.constant dense<0.000000e+00> : vector<8x128xf32>
    %38 = tpu.matmul %35, %37, %cst_22 {dimension_numbers = #tpu.dot_dimension_numbers<[1], [0], [0], [1], [0, 0, 1, 1], [], []>} : vector<8x512xbf16>, vector<512x128xbf16>, vector<8x128xf32> -> vector<8x128xf32>
    %39 = arith.addf %33, %38 : vector<8x128xf32>
    %40 = vector.extract_strided_slice %2 {offsets = [48, 0], sizes = [8, 512], strides = [1, 1]} : vector<128x512xf32> to vector<8x512xf32>
    %41 = arith.truncf %40 : vector<8x512xf32> to vector<8x512xbf16>
    %c6 = arith.constant 6 : index
    %c0_23 = arith.constant 0 : index
    %c0_24 = arith.constant 0 : index
    %42 = vector.load %arg3[%c6, %c0_23, %c0_24] : memref<16x512x128xbf16, #tpu.memory_space<vmem>>, vector<1x512x128xbf16>
    %43 = vector.shape_cast %42 : vector<1x512x128xbf16> to vector<512x128xbf16>
    %cst_25 = arith.constant dense<0.000000e+00> : vector<8x128xf32>
    %44 = tpu.matmul %41, %43, %cst_25 {dimension_numbers = #tpu.dot_dimension_numbers<[1], [0], [0], [1], [0, 0, 1, 1], [], []>} : vector<8x512xbf16>, vector<512x128xbf16>, vector<8x128xf32> -> vector<8x128xf32>
    %45 = arith.addf %39, %44 : vector<8x128xf32>
    %46 = vector.extract_strided_slice %2 {offsets = [56, 0], sizes = [8, 512], strides = [1, 1]} : vector<128x512xf32> to vector<8x512xf32>
    %47 = arith.truncf %46 : vector<8x512xf32> to vector<8x512xbf16>
    %c7 = arith.constant 7 : index
    %c0_26 = arith.constant 0 : index
    %c0_27 = arith.constant 0 : index
    %48 = vector.load %arg3[%c7, %c0_26, %c0_27] : memref<16x512x128xbf16, #tpu.memory_space<vmem>>, vector<1x512x128xbf16>
    %49 = vector.shape_cast %48 : vector<1x512x128xbf16> to vector<512x128xbf16>
    %cst_28 = arith.constant dense<0.000000e+00> : vector<8x128xf32>
    %50 = tpu.matmul %47, %49, %cst_28 {dimension_numbers = #tpu.dot_dimension_numbers<[1], [0], [0], [1], [0, 0, 1, 1], [], []>} : vector<8x512xbf16>, vector<512x128xbf16>, vector<8x128xf32> -> vector<8x128xf32>
    %51 = arith.addf %45, %50 : vector<8x128xf32>
    %52 = vector.extract_strided_slice %2 {offsets = [64, 0], sizes = [8, 512], strides = [1, 1]} : vector<128x512xf32> to vector<8x512xf32>
    %53 = arith.truncf %52 : vector<8x512xf32> to vector<8x512xbf16>
    %c8 = arith.constant 8 : index
    %c0_29 = arith.constant 0 : index
    %c0_30 = arith.constant 0 : index
    %54 = vector.load %arg3[%c8, %c0_29, %c0_30] : memref<16x512x128xbf16, #tpu.memory_space<vmem>>, vector<1x512x128xbf16>
    %55 = vector.shape_cast %54 : vector<1x512x128xbf16> to vector<512x128xbf16>
    %cst_31 = arith.constant dense<0.000000e+00> : vector<8x128xf32>
    %56 = tpu.matmul %53, %55, %cst_31 {dimension_numbers = #tpu.dot_dimension_numbers<[1], [0], [0], [1], [0, 0, 1, 1], [], []>} : vector<8x512xbf16>, vector<512x128xbf16>, vector<8x128xf32> -> vector<8x128xf32>
    %57 = arith.addf %51, %56 : vector<8x128xf32>
    %58 = vector.extract_strided_slice %2 {offsets = [72, 0], sizes = [8, 512], strides = [1, 1]} : vector<128x512xf32> to vector<8x512xf32>
    %59 = arith.truncf %58 : vector<8x512xf32> to vector<8x512xbf16>
    %c9 = arith.constant 9 : index
    %c0_32 = arith.constant 0 : index
    %c0_33 = arith.constant 0 : index
    %60 = vector.load %arg3[%c9, %c0_32, %c0_33] : memref<16x512x128xbf16, #tpu.memory_space<vmem>>, vector<1x512x128xbf16>
    %61 = vector.shape_cast %60 : vector<1x512x128xbf16> to vector<512x128xbf16>
    %cst_34 = arith.constant dense<0.000000e+00> : vector<8x128xf32>
    %62 = tpu.matmul %59, %61, %cst_34 {dimension_numbers = #tpu.dot_dimension_numbers<[1], [0], [0], [1], [0, 0, 1, 1], [], []>} : vector<8x512xbf16>, vector<512x128xbf16>, vector<8x128xf32> -> vector<8x128xf32>
    %63 = arith.addf %57, %62 : vector<8x128xf32>
    %64 = vector.extract_strided_slice %2 {offsets = [80, 0], sizes = [8, 512], strides = [1, 1]} : vector<128x512xf32> to vector<8x512xf32>
    %65 = arith.truncf %64 : vector<8x512xf32> to vector<8x512xbf16>
    %c10 = arith.constant 10 : index
    %c0_35 = arith.constant 0 : index
    %c0_36 = arith.constant 0 : index
    %66 = vector.load %arg3[%c10, %c0_35, %c0_36] : memref<16x512x128xbf16, #tpu.memory_space<vmem>>, vector<1x512x128xbf16>
    %67 = vector.shape_cast %66 : vector<1x512x128xbf16> to vector<512x128xbf16>
    %cst_37 = arith.constant dense<0.000000e+00> : vector<8x128xf32>
    %68 = tpu.matmul %65, %67, %cst_37 {dimension_numbers = #tpu.dot_dimension_numbers<[1], [0], [0], [1], [0, 0, 1, 1], [], []>} : vector<8x512xbf16>, vector<512x128xbf16>, vector<8x128xf32> -> vector<8x128xf32>
    %69 = arith.addf %63, %68 : vector<8x128xf32>
    %70 = vector.extract_strided_slice %2 {offsets = [88, 0], sizes = [8, 512], strides = [1, 1]} : vector<128x512xf32> to vector<8x512xf32>
    %71 = arith.truncf %70 : vector<8x512xf32> to vector<8x512xbf16>
    %c11 = arith.constant 11 : index
    %c0_38 = arith.constant 0 : index
    %c0_39 = arith.constant 0 : index
    %72 = vector.load %arg3[%c11, %c0_38, %c0_39] : memref<16x512x128xbf16, #tpu.memory_space<vmem>>, vector<1x512x128xbf16>
    %73 = vector.shape_cast %72 : vector<1x512x128xbf16> to vector<512x128xbf16>
    %cst_40 = arith.constant dense<0.000000e+00> : vector<8x128xf32>
    %74 = tpu.matmul %71, %73, %cst_40 {dimension_numbers = #tpu.dot_dimension_numbers<[1], [0], [0], [1], [0, 0, 1, 1], [], []>} : vector<8x512xbf16>, vector<512x128xbf16>, vector<8x128xf32> -> vector<8x128xf32>
    %75 = arith.addf %69, %74 : vector<8x128xf32>
    %76 = vector.extract_strided_slice %2 {offsets = [96, 0], sizes = [8, 512], strides = [1, 1]} : vector<128x512xf32> to vector<8x512xf32>
    %77 = arith.truncf %76 : vector<8x512xf32> to vector<8x512xbf16>
    %c12 = arith.constant 12 : index
    %c0_41 = arith.constant 0 : index
    %c0_42 = arith.constant 0 : index
    %78 = vector.load %arg3[%c12, %c0_41, %c0_42] : memref<16x512x128xbf16, #tpu.memory_space<vmem>>, vector<1x512x128xbf16>
    %79 = vector.shape_cast %78 : vector<1x512x128xbf16> to vector<512x128xbf16>
    %cst_43 = arith.constant dense<0.000000e+00> : vector<8x128xf32>
    %80 = tpu.matmul %77, %79, %cst_43 {dimension_numbers = #tpu.dot_dimension_numbers<[1], [0], [0], [1], [0, 0, 1, 1], [], []>} : vector<8x512xbf16>, vector<512x128xbf16>, vector<8x128xf32> -> vector<8x128xf32>
    %81 = arith.addf %75, %80 : vector<8x128xf32>
    %82 = vector.extract_strided_slice %2 {offsets = [104, 0], sizes = [8, 512], strides = [1, 1]} : vector<128x512xf32> to vector<8x512xf32>
    %83 = arith.truncf %82 : vector<8x512xf32> to vector<8x512xbf16>
    %c13 = arith.constant 13 : index
    %c0_44 = arith.constant 0 : index
    %c0_45 = arith.constant 0 : index
    %84 = vector.load %arg3[%c13, %c0_44, %c0_45] : memref<16x512x128xbf16, #tpu.memory_space<vmem>>, vector<1x512x128xbf16>
    %85 = vector.shape_cast %84 : vector<1x512x128xbf16> to vector<512x128xbf16>
    %cst_46 = arith.constant dense<0.000000e+00> : vector<8x128xf32>
    %86 = tpu.matmul %83, %85, %cst_46 {dimension_numbers = #tpu.dot_dimension_numbers<[1], [0], [0], [1], [0, 0, 1, 1], [], []>} : vector<8x512xbf16>, vector<512x128xbf16>, vector<8x128xf32> -> vector<8x128xf32>
    %87 = arith.addf %81, %86 : vector<8x128xf32>
    %88 = vector.extract_strided_slice %2 {offsets = [112, 0], sizes = [8, 512], strides = [1, 1]} : vector<128x512xf32> to vector<8x512xf32>
    %89 = arith.truncf %88 : vector<8x512xf32> to vector<8x512xbf16>
    %c14 = arith.constant 14 : index
    %c0_47 = arith.constant 0 : index
    %c0_48 = arith.constant 0 : index
    %90 = vector.load %arg3[%c14, %c0_47, %c0_48] : memref<16x512x128xbf16, #tpu.memory_space<vmem>>, vector<1x512x128xbf16>
    %91 = vector.shape_cast %90 : vector<1x512x128xbf16> to vector<512x128xbf16>
    %cst_49 = arith.constant dense<0.000000e+00> : vector<8x128xf32>
    %92 = tpu.matmul %89, %91, %cst_49 {dimension_numbers = #tpu.dot_dimension_numbers<[1], [0], [0], [1], [0, 0, 1, 1], [], []>} : vector<8x512xbf16>, vector<512x128xbf16>, vector<8x128xf32> -> vector<8x128xf32>
    %93 = arith.addf %87, %92 : vector<8x128xf32>
    %94 = vector.extract_strided_slice %2 {offsets = [120, 0], sizes = [8, 512], strides = [1, 1]} : vector<128x512xf32> to vector<8x512xf32>
    %95 = arith.truncf %94 : vector<8x512xf32> to vector<8x512xbf16>
    %c15 = arith.constant 15 : index
    %c0_50 = arith.constant 0 : index
    %c0_51 = arith.constant 0 : index
    %96 = vector.load %arg3[%c15, %c0_50, %c0_51] : memref<16x512x128xbf16, #tpu.memory_space<vmem>>, vector<1x512x128xbf16>
    %97 = vector.shape_cast %96 : vector<1x512x128xbf16> to vector<512x128xbf16>
    %cst_52 = arith.constant dense<0.000000e+00> : vector<8x128xf32>
    %98 = tpu.matmul %95, %97, %cst_52 {dimension_numbers = #tpu.dot_dimension_numbers<[1], [0], [0], [1], [0, 0, 1, 1], [], []>} : vector<8x512xbf16>, vector<512x128xbf16>, vector<8x128xf32> -> vector<8x128xf32>
    %99 = arith.addf %93, %98 : vector<8x128xf32>
    %cst_53 = arith.constant 0.000000e+00 : f32
    %100 = vector.broadcast %cst_53 : f32 to vector<8x128xf32>
    %101 = arith.cmpf oge, %99, %100 : vector<8x128xf32>
    %cst_54 = arith.constant 5.000000e-02 : f32
    %102 = vector.broadcast %cst_54 : f32 to vector<8x128xf32>
    %103 = arith.mulf %102, %99 : vector<8x128xf32>
    %104 = arith.select %101, %99, %103 : vector<8x128xi1>, vector<8x128xf32>
    %105 = arith.truncf %104 : vector<8x128xf32> to vector<8x128xbf16>
    %c0_55 = arith.constant 0 : index
    %c0_56 = arith.constant 0 : index
    %106 = vector.load %arg4[%c0_55, %c0_56] : memref<256x8xbf16, #tpu.memory_space<vmem>>, vector<256x8xbf16>
    %cst_57 = arith.constant dense<0.000000e+00> : vector<256x128xf32>
    %107 = tpu.matmul %106, %105, %cst_57 {dimension_numbers = #tpu.dot_dimension_numbers<[1], [0], [0], [1], [0, 0, 1, 1], [], []>} : vector<256x8xbf16>, vector<8x128xbf16>, vector<256x128xf32> -> vector<256x128xf32>
    %cst_58 = arith.constant 0.000000e+00 : f32
    %108 = vector.broadcast %cst_58 : f32 to vector<16x32xf32>
    %109 = vector.extract_strided_slice %107 {offsets = [0, 0], sizes = [16, 128], strides = [1, 1]} : vector<256x128xf32> to vector<16x128xf32>
    %110 = arith.truncf %109 : vector<16x128xf32> to vector<16x128xbf16>
    %c0_59 = arith.constant 0 : index
    %c0_60 = arith.constant 0 : index
    %c0_61 = arith.constant 0 : index
    %111 = vector.load %arg5[%c0_59, %c0_60, %c0_61] : memref<16x128x32xbf16, #tpu.memory_space<vmem>>, vector<1x128x32xbf16>
    %112 = vector.shape_cast %111 : vector<1x128x32xbf16> to vector<128x32xbf16>
    %cst_62 = arith.constant dense<0.000000e+00> : vector<16x32xf32>
    %113 = tpu.matmul %110, %112, %cst_62 {dimension_numbers = #tpu.dot_dimension_numbers<[1], [0], [0], [1], [0, 0, 1, 1], [], []>} : vector<16x128xbf16>, vector<128x32xbf16>, vector<16x32xf32> -> vector<16x32xf32>
    %114 = arith.addf %108, %113 : vector<16x32xf32>
    %115 = vector.extract_strided_slice %107 {offsets = [16, 0], sizes = [16, 128], strides = [1, 1]} : vector<256x128xf32> to vector<16x128xf32>
    %116 = arith.truncf %115 : vector<16x128xf32> to vector<16x128xbf16>
    %c1_63 = arith.constant 1 : index
    %c0_64 = arith.constant 0 : index
    %c0_65 = arith.constant 0 : index
    %117 = vector.load %arg5[%c1_63, %c0_64, %c0_65] : memref<16x128x32xbf16, #tpu.memory_space<vmem>>, vector<1x128x32xbf16>
    %118 = vector.shape_cast %117 : vector<1x128x32xbf16> to vector<128x32xbf16>
    %cst_66 = arith.constant dense<0.000000e+00> : vector<16x32xf32>
    %119 = tpu.matmul %116, %118, %cst_66 {dimension_numbers = #tpu.dot_dimension_numbers<[1], [0], [0], [1], [0, 0, 1, 1], [], []>} : vector<16x128xbf16>, vector<128x32xbf16>, vector<16x32xf32> -> vector<16x32xf32>
    %120 = arith.addf %114, %119 : vector<16x32xf32>
    %121 = vector.extract_strided_slice %107 {offsets = [32, 0], sizes = [16, 128], strides = [1, 1]} : vector<256x128xf32> to vector<16x128xf32>
    %122 = arith.truncf %121 : vector<16x128xf32> to vector<16x128xbf16>
    %c2_67 = arith.constant 2 : index
    %c0_68 = arith.constant 0 : index
    %c0_69 = arith.constant 0 : index
    %123 = vector.load %arg5[%c2_67, %c0_68, %c0_69] : memref<16x128x32xbf16, #tpu.memory_space<vmem>>, vector<1x128x32xbf16>
    %124 = vector.shape_cast %123 : vector<1x128x32xbf16> to vector<128x32xbf16>
    %cst_70 = arith.constant dense<0.000000e+00> : vector<16x32xf32>
    %125 = tpu.matmul %122, %124, %cst_70 {dimension_numbers = #tpu.dot_dimension_numbers<[1], [0], [0], [1], [0, 0, 1, 1], [], []>} : vector<16x128xbf16>, vector<128x32xbf16>, vector<16x32xf32> -> vector<16x32xf32>
    %126 = arith.addf %120, %125 : vector<16x32xf32>
    %127 = vector.extract_strided_slice %107 {offsets = [48, 0], sizes = [16, 128], strides = [1, 1]} : vector<256x128xf32> to vector<16x128xf32>
    %128 = arith.truncf %127 : vector<16x128xf32> to vector<16x128xbf16>
    %c3_71 = arith.constant 3 : index
    %c0_72 = arith.constant 0 : index
    %c0_73 = arith.constant 0 : index
    %129 = vector.load %arg5[%c3_71, %c0_72, %c0_73] : memref<16x128x32xbf16, #tpu.memory_space<vmem>>, vector<1x128x32xbf16>
    %130 = vector.shape_cast %129 : vector<1x128x32xbf16> to vector<128x32xbf16>
    %cst_74 = arith.constant dense<0.000000e+00> : vector<16x32xf32>
    %131 = tpu.matmul %128, %130, %cst_74 {dimension_numbers = #tpu.dot_dimension_numbers<[1], [0], [0], [1], [0, 0, 1, 1], [], []>} : vector<16x128xbf16>, vector<128x32xbf16>, vector<16x32xf32> -> vector<16x32xf32>
    %132 = arith.addf %126, %131 : vector<16x32xf32>
    %133 = vector.extract_strided_slice %107 {offsets = [64, 0], sizes = [16, 128], strides = [1, 1]} : vector<256x128xf32> to vector<16x128xf32>
    %134 = arith.truncf %133 : vector<16x128xf32> to vector<16x128xbf16>
    %c4_75 = arith.constant 4 : index
    %c0_76 = arith.constant 0 : index
    %c0_77 = arith.constant 0 : index
    %135 = vector.load %arg5[%c4_75, %c0_76, %c0_77] : memref<16x128x32xbf16, #tpu.memory_space<vmem>>, vector<1x128x32xbf16>
    %136 = vector.shape_cast %135 : vector<1x128x32xbf16> to vector<128x32xbf16>
    %cst_78 = arith.constant dense<0.000000e+00> : vector<16x32xf32>
    %137 = tpu.matmul %134, %136, %cst_78 {dimension_numbers = #tpu.dot_dimension_numbers<[1], [0], [0], [1], [0, 0, 1, 1], [], []>} : vector<16x128xbf16>, vector<128x32xbf16>, vector<16x32xf32> -> vector<16x32xf32>
    %138 = arith.addf %132, %137 : vector<16x32xf32>
    %139 = vector.extract_strided_slice %107 {offsets = [80, 0], sizes = [16, 128], strides = [1, 1]} : vector<256x128xf32> to vector<16x128xf32>
    %140 = arith.truncf %139 : vector<16x128xf32> to vector<16x128xbf16>
    %c5_79 = arith.constant 5 : index
    %c0_80 = arith.constant 0 : index
    %c0_81 = arith.constant 0 : index
    %141 = vector.load %arg5[%c5_79, %c0_80, %c0_81] : memref<16x128x32xbf16, #tpu.memory_space<vmem>>, vector<1x128x32xbf16>
    %142 = vector.shape_cast %141 : vector<1x128x32xbf16> to vector<128x32xbf16>
    %cst_82 = arith.constant dense<0.000000e+00> : vector<16x32xf32>
    %143 = tpu.matmul %140, %142, %cst_82 {dimension_numbers = #tpu.dot_dimension_numbers<[1], [0], [0], [1], [0, 0, 1, 1], [], []>} : vector<16x128xbf16>, vector<128x32xbf16>, vector<16x32xf32> -> vector<16x32xf32>
    %144 = arith.addf %138, %143 : vector<16x32xf32>
    %145 = vector.extract_strided_slice %107 {offsets = [96, 0], sizes = [16, 128], strides = [1, 1]} : vector<256x128xf32> to vector<16x128xf32>
    %146 = arith.truncf %145 : vector<16x128xf32> to vector<16x128xbf16>
    %c6_83 = arith.constant 6 : index
    %c0_84 = arith.constant 0 : index
    %c0_85 = arith.constant 0 : index
    %147 = vector.load %arg5[%c6_83, %c0_84, %c0_85] : memref<16x128x32xbf16, #tpu.memory_space<vmem>>, vector<1x128x32xbf16>
    %148 = vector.shape_cast %147 : vector<1x128x32xbf16> to vector<128x32xbf16>
    %cst_86 = arith.constant dense<0.000000e+00> : vector<16x32xf32>
    %149 = tpu.matmul %146, %148, %cst_86 {dimension_numbers = #tpu.dot_dimension_numbers<[1], [0], [0], [1], [0, 0, 1, 1], [], []>} : vector<16x128xbf16>, vector<128x32xbf16>, vector<16x32xf32> -> vector<16x32xf32>
    %150 = arith.addf %144, %149 : vector<16x32xf32>
    %151 = vector.extract_strided_slice %107 {offsets = [112, 0], sizes = [16, 128], strides = [1, 1]} : vector<256x128xf32> to vector<16x128xf32>
    %152 = arith.truncf %151 : vector<16x128xf32> to vector<16x128xbf16>
    %c7_87 = arith.constant 7 : index
    %c0_88 = arith.constant 0 : index
    %c0_89 = arith.constant 0 : index
    %153 = vector.load %arg5[%c7_87, %c0_88, %c0_89] : memref<16x128x32xbf16, #tpu.memory_space<vmem>>, vector<1x128x32xbf16>
    %154 = vector.shape_cast %153 : vector<1x128x32xbf16> to vector<128x32xbf16>
    %cst_90 = arith.constant dense<0.000000e+00> : vector<16x32xf32>
    %155 = tpu.matmul %152, %154, %cst_90 {dimension_numbers = #tpu.dot_dimension_numbers<[1], [0], [0], [1], [0, 0, 1, 1], [], []>} : vector<16x128xbf16>, vector<128x32xbf16>, vector<16x32xf32> -> vector<16x32xf32>
    %156 = arith.addf %150, %155 : vector<16x32xf32>
    %157 = vector.extract_strided_slice %107 {offsets = [128, 0], sizes = [16, 128], strides = [1, 1]} : vector<256x128xf32> to vector<16x128xf32>
    %158 = arith.truncf %157 : vector<16x128xf32> to vector<16x128xbf16>
    %c8_91 = arith.constant 8 : index
    %c0_92 = arith.constant 0 : index
    %c0_93 = arith.constant 0 : index
    %159 = vector.load %arg5[%c8_91, %c0_92, %c0_93] : memref<16x128x32xbf16, #tpu.memory_space<vmem>>, vector<1x128x32xbf16>
    %160 = vector.shape_cast %159 : vector<1x128x32xbf16> to vector<128x32xbf16>
    %cst_94 = arith.constant dense<0.000000e+00> : vector<16x32xf32>
    %161 = tpu.matmul %158, %160, %cst_94 {dimension_numbers = #tpu.dot_dimension_numbers<[1], [0], [0], [1], [0, 0, 1, 1], [], []>} : vector<16x128xbf16>, vector<128x32xbf16>, vector<16x32xf32> -> vector<16x32xf32>
    %162 = arith.addf %156, %161 : vector<16x32xf32>
    %163 = vector.extract_strided_slice %107 {offsets = [144, 0], sizes = [16, 128], strides = [1, 1]} : vector<256x128xf32> to vector<16x128xf32>
    %164 = arith.truncf %163 : vector<16x128xf32> to vector<16x128xbf16>
    %c9_95 = arith.constant 9 : index
    %c0_96 = arith.constant 0 : index
    %c0_97 = arith.constant 0 : index
    %165 = vector.load %arg5[%c9_95, %c0_96, %c0_97] : memref<16x128x32xbf16, #tpu.memory_space<vmem>>, vector<1x128x32xbf16>
    %166 = vector.shape_cast %165 : vector<1x128x32xbf16> to vector<128x32xbf16>
    %cst_98 = arith.constant dense<0.000000e+00> : vector<16x32xf32>
    %167 = tpu.matmul %164, %166, %cst_98 {dimension_numbers = #tpu.dot_dimension_numbers<[1], [0], [0], [1], [0, 0, 1, 1], [], []>} : vector<16x128xbf16>, vector<128x32xbf16>, vector<16x32xf32> -> vector<16x32xf32>
    %168 = arith.addf %162, %167 : vector<16x32xf32>
    %169 = vector.extract_strided_slice %107 {offsets = [160, 0], sizes = [16, 128], strides = [1, 1]} : vector<256x128xf32> to vector<16x128xf32>
    %170 = arith.truncf %169 : vector<16x128xf32> to vector<16x128xbf16>
    %c10_99 = arith.constant 10 : index
    %c0_100 = arith.constant 0 : index
    %c0_101 = arith.constant 0 : index
    %171 = vector.load %arg5[%c10_99, %c0_100, %c0_101] : memref<16x128x32xbf16, #tpu.memory_space<vmem>>, vector<1x128x32xbf16>
    %172 = vector.shape_cast %171 : vector<1x128x32xbf16> to vector<128x32xbf16>
    %cst_102 = arith.constant dense<0.000000e+00> : vector<16x32xf32>
    %173 = tpu.matmul %170, %172, %cst_102 {dimension_numbers = #tpu.dot_dimension_numbers<[1], [0], [0], [1], [0, 0, 1, 1], [], []>} : vector<16x128xbf16>, vector<128x32xbf16>, vector<16x32xf32> -> vector<16x32xf32>
    %174 = arith.addf %168, %173 : vector<16x32xf32>
    %175 = vector.extract_strided_slice %107 {offsets = [176, 0], sizes = [16, 128], strides = [1, 1]} : vector<256x128xf32> to vector<16x128xf32>
    %176 = arith.truncf %175 : vector<16x128xf32> to vector<16x128xbf16>
    %c11_103 = arith.constant 11 : index
    %c0_104 = arith.constant 0 : index
    %c0_105 = arith.constant 0 : index
    %177 = vector.load %arg5[%c11_103, %c0_104, %c0_105] : memref<16x128x32xbf16, #tpu.memory_space<vmem>>, vector<1x128x32xbf16>
    %178 = vector.shape_cast %177 : vector<1x128x32xbf16> to vector<128x32xbf16>
    %cst_106 = arith.constant dense<0.000000e+00> : vector<16x32xf32>
    %179 = tpu.matmul %176, %178, %cst_106 {dimension_numbers = #tpu.dot_dimension_numbers<[1], [0], [0], [1], [0, 0, 1, 1], [], []>} : vector<16x128xbf16>, vector<128x32xbf16>, vector<16x32xf32> -> vector<16x32xf32>
    %180 = arith.addf %174, %179 : vector<16x32xf32>
    %181 = vector.extract_strided_slice %107 {offsets = [192, 0], sizes = [16, 128], strides = [1, 1]} : vector<256x128xf32> to vector<16x128xf32>
    %182 = arith.truncf %181 : vector<16x128xf32> to vector<16x128xbf16>
    %c12_107 = arith.constant 12 : index
    %c0_108 = arith.constant 0 : index
    %c0_109 = arith.constant 0 : index
    %183 = vector.load %arg5[%c12_107, %c0_108, %c0_109] : memref<16x128x32xbf16, #tpu.memory_space<vmem>>, vector<1x128x32xbf16>
    %184 = vector.shape_cast %183 : vector<1x128x32xbf16> to vector<128x32xbf16>
    %cst_110 = arith.constant dense<0.000000e+00> : vector<16x32xf32>
    %185 = tpu.matmul %182, %184, %cst_110 {dimension_numbers = #tpu.dot_dimension_numbers<[1], [0], [0], [1], [0, 0, 1, 1], [], []>} : vector<16x128xbf16>, vector<128x32xbf16>, vector<16x32xf32> -> vector<16x32xf32>
    %186 = arith.addf %180, %185 : vector<16x32xf32>
    %187 = vector.extract_strided_slice %107 {offsets = [208, 0], sizes = [16, 128], strides = [1, 1]} : vector<256x128xf32> to vector<16x128xf32>
    %188 = arith.truncf %187 : vector<16x128xf32> to vector<16x128xbf16>
    %c13_111 = arith.constant 13 : index
    %c0_112 = arith.constant 0 : index
    %c0_113 = arith.constant 0 : index
    %189 = vector.load %arg5[%c13_111, %c0_112, %c0_113] : memref<16x128x32xbf16, #tpu.memory_space<vmem>>, vector<1x128x32xbf16>
    %190 = vector.shape_cast %189 : vector<1x128x32xbf16> to vector<128x32xbf16>
    %cst_114 = arith.constant dense<0.000000e+00> : vector<16x32xf32>
    %191 = tpu.matmul %188, %190, %cst_114 {dimension_numbers = #tpu.dot_dimension_numbers<[1], [0], [0], [1], [0, 0, 1, 1], [], []>} : vector<16x128xbf16>, vector<128x32xbf16>, vector<16x32xf32> -> vector<16x32xf32>
    %192 = arith.addf %186, %191 : vector<16x32xf32>
    %193 = vector.extract_strided_slice %107 {offsets = [224, 0], sizes = [16, 128], strides = [1, 1]} : vector<256x128xf32> to vector<16x128xf32>
    %194 = arith.truncf %193 : vector<16x128xf32> to vector<16x128xbf16>
    %c14_115 = arith.constant 14 : index
    %c0_116 = arith.constant 0 : index
    %c0_117 = arith.constant 0 : index
    %195 = vector.load %arg5[%c14_115, %c0_116, %c0_117] : memref<16x128x32xbf16, #tpu.memory_space<vmem>>, vector<1x128x32xbf16>
    %196 = vector.shape_cast %195 : vector<1x128x32xbf16> to vector<128x32xbf16>
    %cst_118 = arith.constant dense<0.000000e+00> : vector<16x32xf32>
    %197 = tpu.matmul %194, %196, %cst_118 {dimension_numbers = #tpu.dot_dimension_numbers<[1], [0], [0], [1], [0, 0, 1, 1], [], []>} : vector<16x128xbf16>, vector<128x32xbf16>, vector<16x32xf32> -> vector<16x32xf32>
    %198 = arith.addf %192, %197 : vector<16x32xf32>
    %199 = vector.extract_strided_slice %107 {offsets = [240, 0], sizes = [16, 128], strides = [1, 1]} : vector<256x128xf32> to vector<16x128xf32>
    %200 = arith.truncf %199 : vector<16x128xf32> to vector<16x128xbf16>
    %c15_119 = arith.constant 15 : index
    %c0_120 = arith.constant 0 : index
    %c0_121 = arith.constant 0 : index
    %201 = vector.load %arg5[%c15_119, %c0_120, %c0_121] : memref<16x128x32xbf16, #tpu.memory_space<vmem>>, vector<1x128x32xbf16>
    %202 = vector.shape_cast %201 : vector<1x128x32xbf16> to vector<128x32xbf16>
    %cst_122 = arith.constant dense<0.000000e+00> : vector<16x32xf32>
    %203 = tpu.matmul %200, %202, %cst_122 {dimension_numbers = #tpu.dot_dimension_numbers<[1], [0], [0], [1], [0, 0, 1, 1], [], []>} : vector<16x128xbf16>, vector<128x32xbf16>, vector<16x32xf32> -> vector<16x32xf32>
    %204 = arith.addf %198, %203 : vector<16x32xf32>
    %cst_123 = arith.constant 0.000000e+00 : f32
    %205 = vector.broadcast %cst_123 : f32 to vector<16x32xf32>
    %206 = arith.cmpf oge, %204, %205 : vector<16x32xf32>
    %cst_124 = arith.constant 5.000000e-02 : f32
    %207 = vector.broadcast %cst_124 : f32 to vector<16x32xf32>
    %208 = arith.mulf %207, %204 : vector<16x32xf32>
    %209 = arith.select %206, %204, %208 : vector<16x32xi1>, vector<16x32xf32>
    %210 = arith.truncf %209 : vector<16x32xf32> to vector<16x32xbf16>
    %c0_125 = arith.constant 0 : index
    %c0_126 = arith.constant 0 : index
    %211 = vector.load %arg6[%c0_125, %c0_126] : memref<512x16xbf16, #tpu.memory_space<vmem>>, vector<512x16xbf16>
    %cst_127 = arith.constant dense<0.000000e+00> : vector<512x32xf32>
    %212 = tpu.matmul %211, %210, %cst_127 {dimension_numbers = #tpu.dot_dimension_numbers<[1], [0], [0], [1], [0, 0, 1, 1], [], []>} : vector<512x16xbf16>, vector<16x32xbf16>, vector<512x32xf32> -> vector<512x32xf32>
    %cst_128 = arith.constant 0.000000e+00 : f32
    %213 = vector.broadcast %cst_128 : f32 to vector<32x2xf32>
    %214 = vector.extract_strided_slice %212 {offsets = [0, 0], sizes = [32, 32], strides = [1, 1]} : vector<512x32xf32> to vector<32x32xf32>
    %215 = arith.truncf %214 : vector<32x32xf32> to vector<32x32xbf16>
    %c0_129 = arith.constant 0 : index
    %c0_130 = arith.constant 0 : index
    %c0_131 = arith.constant 0 : index
    %216 = vector.load %arg7[%c0_129, %c0_130, %c0_131] : memref<16x32x2xbf16, #tpu.memory_space<vmem>>, vector<1x32x2xbf16>
    %217 = vector.shape_cast %216 : vector<1x32x2xbf16> to vector<32x2xbf16>
    %cst_132 = arith.constant dense<0.000000e+00> : vector<32x2xf32>
    %218 = tpu.matmul %215, %217, %cst_132 {dimension_numbers = #tpu.dot_dimension_numbers<[1], [0], [0], [1], [0, 0, 1, 1], [], []>} : vector<32x32xbf16>, vector<32x2xbf16>, vector<32x2xf32> -> vector<32x2xf32>
    %219 = arith.addf %213, %218 : vector<32x2xf32>
    %220 = vector.extract_strided_slice %212 {offsets = [32, 0], sizes = [32, 32], strides = [1, 1]} : vector<512x32xf32> to vector<32x32xf32>
    %221 = arith.truncf %220 : vector<32x32xf32> to vector<32x32xbf16>
    %c1_133 = arith.constant 1 : index
    %c0_134 = arith.constant 0 : index
    %c0_135 = arith.constant 0 : index
    %222 = vector.load %arg7[%c1_133, %c0_134, %c0_135] : memref<16x32x2xbf16, #tpu.memory_space<vmem>>, vector<1x32x2xbf16>
    %223 = vector.shape_cast %222 : vector<1x32x2xbf16> to vector<32x2xbf16>
    %cst_136 = arith.constant dense<0.000000e+00> : vector<32x2xf32>
    %224 = tpu.matmul %221, %223, %cst_136 {dimension_numbers = #tpu.dot_dimension_numbers<[1], [0], [0], [1], [0, 0, 1, 1], [], []>} : vector<32x32xbf16>, vector<32x2xbf16>, vector<32x2xf32> -> vector<32x2xf32>
    %225 = arith.addf %219, %224 : vector<32x2xf32>
    %226 = vector.extract_strided_slice %212 {offsets = [64, 0], sizes = [32, 32], strides = [1, 1]} : vector<512x32xf32> to vector<32x32xf32>
    %227 = arith.truncf %226 : vector<32x32xf32> to vector<32x32xbf16>
    %c2_137 = arith.constant 2 : index
    %c0_138 = arith.constant 0 : index
    %c0_139 = arith.constant 0 : index
    %228 = vector.load %arg7[%c2_137, %c0_138, %c0_139] : memref<16x32x2xbf16, #tpu.memory_space<vmem>>, vector<1x32x2xbf16>
    %229 = vector.shape_cast %228 : vector<1x32x2xbf16> to vector<32x2xbf16>
    %cst_140 = arith.constant dense<0.000000e+00> : vector<32x2xf32>
    %230 = tpu.matmul %227, %229, %cst_140 {dimension_numbers = #tpu.dot_dimension_numbers<[1], [0], [0], [1], [0, 0, 1, 1], [], []>} : vector<32x32xbf16>, vector<32x2xbf16>, vector<32x2xf32> -> vector<32x2xf32>
    %231 = arith.addf %225, %230 : vector<32x2xf32>
    %232 = vector.extract_strided_slice %212 {offsets = [96, 0], sizes = [32, 32], strides = [1, 1]} : vector<512x32xf32> to vector<32x32xf32>
    %233 = arith.truncf %232 : vector<32x32xf32> to vector<32x32xbf16>
    %c3_141 = arith.constant 3 : index
    %c0_142 = arith.constant 0 : index
    %c0_143 = arith.constant 0 : index
    %234 = vector.load %arg7[%c3_141, %c0_142, %c0_143] : memref<16x32x2xbf16, #tpu.memory_space<vmem>>, vector<1x32x2xbf16>
    %235 = vector.shape_cast %234 : vector<1x32x2xbf16> to vector<32x2xbf16>
    %cst_144 = arith.constant dense<0.000000e+00> : vector<32x2xf32>
    %236 = tpu.matmul %233, %235, %cst_144 {dimension_numbers = #tpu.dot_dimension_numbers<[1], [0], [0], [1], [0, 0, 1, 1], [], []>} : vector<32x32xbf16>, vector<32x2xbf16>, vector<32x2xf32> -> vector<32x2xf32>
    %237 = arith.addf %231, %236 : vector<32x2xf32>
    %238 = vector.extract_strided_slice %212 {offsets = [128, 0], sizes = [32, 32], strides = [1, 1]} : vector<512x32xf32> to vector<32x32xf32>
    %239 = arith.truncf %238 : vector<32x32xf32> to vector<32x32xbf16>
    %c4_145 = arith.constant 4 : index
    %c0_146 = arith.constant 0 : index
    %c0_147 = arith.constant 0 : index
    %240 = vector.load %arg7[%c4_145, %c0_146, %c0_147] : memref<16x32x2xbf16, #tpu.memory_space<vmem>>, vector<1x32x2xbf16>
    %241 = vector.shape_cast %240 : vector<1x32x2xbf16> to vector<32x2xbf16>
    %cst_148 = arith.constant dense<0.000000e+00> : vector<32x2xf32>
    %242 = tpu.matmul %239, %241, %cst_148 {dimension_numbers = #tpu.dot_dimension_numbers<[1], [0], [0], [1], [0, 0, 1, 1], [], []>} : vector<32x32xbf16>, vector<32x2xbf16>, vector<32x2xf32> -> vector<32x2xf32>
    %243 = arith.addf %237, %242 : vector<32x2xf32>
    %244 = vector.extract_strided_slice %212 {offsets = [160, 0], sizes = [32, 32], strides = [1, 1]} : vector<512x32xf32> to vector<32x32xf32>
    %245 = arith.truncf %244 : vector<32x32xf32> to vector<32x32xbf16>
    %c5_149 = arith.constant 5 : index
    %c0_150 = arith.constant 0 : index
    %c0_151 = arith.constant 0 : index
    %246 = vector.load %arg7[%c5_149, %c0_150, %c0_151] : memref<16x32x2xbf16, #tpu.memory_space<vmem>>, vector<1x32x2xbf16>
    %247 = vector.shape_cast %246 : vector<1x32x2xbf16> to vector<32x2xbf16>
    %cst_152 = arith.constant dense<0.000000e+00> : vector<32x2xf32>
    %248 = tpu.matmul %245, %247, %cst_152 {dimension_numbers = #tpu.dot_dimension_numbers<[1], [0], [0], [1], [0, 0, 1, 1], [], []>} : vector<32x32xbf16>, vector<32x2xbf16>, vector<32x2xf32> -> vector<32x2xf32>
    %249 = arith.addf %243, %248 : vector<32x2xf32>
    %250 = vector.extract_strided_slice %212 {offsets = [192, 0], sizes = [32, 32], strides = [1, 1]} : vector<512x32xf32> to vector<32x32xf32>
    %251 = arith.truncf %250 : vector<32x32xf32> to vector<32x32xbf16>
    %c6_153 = arith.constant 6 : index
    %c0_154 = arith.constant 0 : index
    %c0_155 = arith.constant 0 : index
    %252 = vector.load %arg7[%c6_153, %c0_154, %c0_155] : memref<16x32x2xbf16, #tpu.memory_space<vmem>>, vector<1x32x2xbf16>
    %253 = vector.shape_cast %252 : vector<1x32x2xbf16> to vector<32x2xbf16>
    %cst_156 = arith.constant dense<0.000000e+00> : vector<32x2xf32>
    %254 = tpu.matmul %251, %253, %cst_156 {dimension_numbers = #tpu.dot_dimension_numbers<[1], [0], [0], [1], [0, 0, 1, 1], [], []>} : vector<32x32xbf16>, vector<32x2xbf16>, vector<32x2xf32> -> vector<32x2xf32>
    %255 = arith.addf %249, %254 : vector<32x2xf32>
    %256 = vector.extract_strided_slice %212 {offsets = [224, 0], sizes = [32, 32], strides = [1, 1]} : vector<512x32xf32> to vector<32x32xf32>
    %257 = arith.truncf %256 : vector<32x32xf32> to vector<32x32xbf16>
    %c7_157 = arith.constant 7 : index
    %c0_158 = arith.constant 0 : index
    %c0_159 = arith.constant 0 : index
    %258 = vector.load %arg7[%c7_157, %c0_158, %c0_159] : memref<16x32x2xbf16, #tpu.memory_space<vmem>>, vector<1x32x2xbf16>
    %259 = vector.shape_cast %258 : vector<1x32x2xbf16> to vector<32x2xbf16>
    %cst_160 = arith.constant dense<0.000000e+00> : vector<32x2xf32>
    %260 = tpu.matmul %257, %259, %cst_160 {dimension_numbers = #tpu.dot_dimension_numbers<[1], [0], [0], [1], [0, 0, 1, 1], [], []>} : vector<32x32xbf16>, vector<32x2xbf16>, vector<32x2xf32> -> vector<32x2xf32>
    %261 = arith.addf %255, %260 : vector<32x2xf32>
    %262 = vector.extract_strided_slice %212 {offsets = [256, 0], sizes = [32, 32], strides = [1, 1]} : vector<512x32xf32> to vector<32x32xf32>
    %263 = arith.truncf %262 : vector<32x32xf32> to vector<32x32xbf16>
    %c8_161 = arith.constant 8 : index
    %c0_162 = arith.constant 0 : index
    %c0_163 = arith.constant 0 : index
    %264 = vector.load %arg7[%c8_161, %c0_162, %c0_163] : memref<16x32x2xbf16, #tpu.memory_space<vmem>>, vector<1x32x2xbf16>
    %265 = vector.shape_cast %264 : vector<1x32x2xbf16> to vector<32x2xbf16>
    %cst_164 = arith.constant dense<0.000000e+00> : vector<32x2xf32>
    %266 = tpu.matmul %263, %265, %cst_164 {dimension_numbers = #tpu.dot_dimension_numbers<[1], [0], [0], [1], [0, 0, 1, 1], [], []>} : vector<32x32xbf16>, vector<32x2xbf16>, vector<32x2xf32> -> vector<32x2xf32>
    %267 = arith.addf %261, %266 : vector<32x2xf32>
    %268 = vector.extract_strided_slice %212 {offsets = [288, 0], sizes = [32, 32], strides = [1, 1]} : vector<512x32xf32> to vector<32x32xf32>
    %269 = arith.truncf %268 : vector<32x32xf32> to vector<32x32xbf16>
    %c9_165 = arith.constant 9 : index
    %c0_166 = arith.constant 0 : index
    %c0_167 = arith.constant 0 : index
    %270 = vector.load %arg7[%c9_165, %c0_166, %c0_167] : memref<16x32x2xbf16, #tpu.memory_space<vmem>>, vector<1x32x2xbf16>
    %271 = vector.shape_cast %270 : vector<1x32x2xbf16> to vector<32x2xbf16>
    %cst_168 = arith.constant dense<0.000000e+00> : vector<32x2xf32>
    %272 = tpu.matmul %269, %271, %cst_168 {dimension_numbers = #tpu.dot_dimension_numbers<[1], [0], [0], [1], [0, 0, 1, 1], [], []>} : vector<32x32xbf16>, vector<32x2xbf16>, vector<32x2xf32> -> vector<32x2xf32>
    %273 = arith.addf %267, %272 : vector<32x2xf32>
    %274 = vector.extract_strided_slice %212 {offsets = [320, 0], sizes = [32, 32], strides = [1, 1]} : vector<512x32xf32> to vector<32x32xf32>
    %275 = arith.truncf %274 : vector<32x32xf32> to vector<32x32xbf16>
    %c10_169 = arith.constant 10 : index
    %c0_170 = arith.constant 0 : index
    %c0_171 = arith.constant 0 : index
    %276 = vector.load %arg7[%c10_169, %c0_170, %c0_171] : memref<16x32x2xbf16, #tpu.memory_space<vmem>>, vector<1x32x2xbf16>
    %277 = vector.shape_cast %276 : vector<1x32x2xbf16> to vector<32x2xbf16>
    %cst_172 = arith.constant dense<0.000000e+00> : vector<32x2xf32>
    %278 = tpu.matmul %275, %277, %cst_172 {dimension_numbers = #tpu.dot_dimension_numbers<[1], [0], [0], [1], [0, 0, 1, 1], [], []>} : vector<32x32xbf16>, vector<32x2xbf16>, vector<32x2xf32> -> vector<32x2xf32>
    %279 = arith.addf %273, %278 : vector<32x2xf32>
    %280 = vector.extract_strided_slice %212 {offsets = [352, 0], sizes = [32, 32], strides = [1, 1]} : vector<512x32xf32> to vector<32x32xf32>
    %281 = arith.truncf %280 : vector<32x32xf32> to vector<32x32xbf16>
    %c11_173 = arith.constant 11 : index
    %c0_174 = arith.constant 0 : index
    %c0_175 = arith.constant 0 : index
    %282 = vector.load %arg7[%c11_173, %c0_174, %c0_175] : memref<16x32x2xbf16, #tpu.memory_space<vmem>>, vector<1x32x2xbf16>
    %283 = vector.shape_cast %282 : vector<1x32x2xbf16> to vector<32x2xbf16>
    %cst_176 = arith.constant dense<0.000000e+00> : vector<32x2xf32>
    %284 = tpu.matmul %281, %283, %cst_176 {dimension_numbers = #tpu.dot_dimension_numbers<[1], [0], [0], [1], [0, 0, 1, 1], [], []>} : vector<32x32xbf16>, vector<32x2xbf16>, vector<32x2xf32> -> vector<32x2xf32>
    %285 = arith.addf %279, %284 : vector<32x2xf32>
    %286 = vector.extract_strided_slice %212 {offsets = [384, 0], sizes = [32, 32], strides = [1, 1]} : vector<512x32xf32> to vector<32x32xf32>
    %287 = arith.truncf %286 : vector<32x32xf32> to vector<32x32xbf16>
    %c12_177 = arith.constant 12 : index
    %c0_178 = arith.constant 0 : index
    %c0_179 = arith.constant 0 : index
    %288 = vector.load %arg7[%c12_177, %c0_178, %c0_179] : memref<16x32x2xbf16, #tpu.memory_space<vmem>>, vector<1x32x2xbf16>
    %289 = vector.shape_cast %288 : vector<1x32x2xbf16> to vector<32x2xbf16>
    %cst_180 = arith.constant dense<0.000000e+00> : vector<32x2xf32>
    %290 = tpu.matmul %287, %289, %cst_180 {dimension_numbers = #tpu.dot_dimension_numbers<[1], [0], [0], [1], [0, 0, 1, 1], [], []>} : vector<32x32xbf16>, vector<32x2xbf16>, vector<32x2xf32> -> vector<32x2xf32>
    %291 = arith.addf %285, %290 : vector<32x2xf32>
    %292 = vector.extract_strided_slice %212 {offsets = [416, 0], sizes = [32, 32], strides = [1, 1]} : vector<512x32xf32> to vector<32x32xf32>
    %293 = arith.truncf %292 : vector<32x32xf32> to vector<32x32xbf16>
    %c13_181 = arith.constant 13 : index
    %c0_182 = arith.constant 0 : index
    %c0_183 = arith.constant 0 : index
    %294 = vector.load %arg7[%c13_181, %c0_182, %c0_183] : memref<16x32x2xbf16, #tpu.memory_space<vmem>>, vector<1x32x2xbf16>
    %295 = vector.shape_cast %294 : vector<1x32x2xbf16> to vector<32x2xbf16>
    %cst_184 = arith.constant dense<0.000000e+00> : vector<32x2xf32>
    %296 = tpu.matmul %293, %295, %cst_184 {dimension_numbers = #tpu.dot_dimension_numbers<[1], [0], [0], [1], [0, 0, 1, 1], [], []>} : vector<32x32xbf16>, vector<32x2xbf16>, vector<32x2xf32> -> vector<32x2xf32>
    %297 = arith.addf %291, %296 : vector<32x2xf32>
    %298 = vector.extract_strided_slice %212 {offsets = [448, 0], sizes = [32, 32], strides = [1, 1]} : vector<512x32xf32> to vector<32x32xf32>
    %299 = arith.truncf %298 : vector<32x32xf32> to vector<32x32xbf16>
    %c14_185 = arith.constant 14 : index
    %c0_186 = arith.constant 0 : index
    %c0_187 = arith.constant 0 : index
    %300 = vector.load %arg7[%c14_185, %c0_186, %c0_187] : memref<16x32x2xbf16, #tpu.memory_space<vmem>>, vector<1x32x2xbf16>
    %301 = vector.shape_cast %300 : vector<1x32x2xbf16> to vector<32x2xbf16>
    %cst_188 = arith.constant dense<0.000000e+00> : vector<32x2xf32>
    %302 = tpu.matmul %299, %301, %cst_188 {dimension_numbers = #tpu.dot_dimension_numbers<[1], [0], [0], [1], [0, 0, 1, 1], [], []>} : vector<32x32xbf16>, vector<32x2xbf16>, vector<32x2xf32> -> vector<32x2xf32>
    %303 = arith.addf %297, %302 : vector<32x2xf32>
    %304 = vector.extract_strided_slice %212 {offsets = [480, 0], sizes = [32, 32], strides = [1, 1]} : vector<512x32xf32> to vector<32x32xf32>
    %305 = arith.truncf %304 : vector<32x32xf32> to vector<32x32xbf16>
    %c15_189 = arith.constant 15 : index
    %c0_190 = arith.constant 0 : index
    %c0_191 = arith.constant 0 : index
    %306 = vector.load %arg7[%c15_189, %c0_190, %c0_191] : memref<16x32x2xbf16, #tpu.memory_space<vmem>>, vector<1x32x2xbf16>
    %307 = vector.shape_cast %306 : vector<1x32x2xbf16> to vector<32x2xbf16>
    %cst_192 = arith.constant dense<0.000000e+00> : vector<32x2xf32>
    %308 = tpu.matmul %305, %307, %cst_192 {dimension_numbers = #tpu.dot_dimension_numbers<[1], [0], [0], [1], [0, 0, 1, 1], [], []>} : vector<32x32xbf16>, vector<32x2xbf16>, vector<32x2xf32> -> vector<32x2xf32>
    %309 = arith.addf %303, %308 : vector<32x2xf32>
    %310 = math.tanh %309 : vector<32x2xf32>
    %c0_193 = arith.constant 0 : index
    %c0_194 = arith.constant 0 : index
    %311 = vector.load %arg8[%c0_193, %c0_194] : memref<32x2xf32, #tpu.memory_space<vmem>>, vector<32x2xf32>
    tpu.vector_store %arg8[%c0_193, %c0_194], %310 {strides = array<i32>} : memref<32x2xf32, #tpu.memory_space<vmem>>, vector<32x2xf32>,
    return
  }
  func.func @transform_0(%arg0: i32) -> (i32, i32) {
    %c0_i32 = arith.constant 0 : i32
    %c0_i32_0 = arith.constant 0 : i32
    %c0_i32_1 = arith.constant 0 : i32
    return %c0_i32, %c0_i32_0 : i32, i32
  }
  func.func @transform_1(%arg0: i32) -> (i32, i32) {
    %c0_i32 = arith.constant 0 : i32
    %c0_i32_0 = arith.constant 0 : i32
    %c0_i32_1 = arith.constant 0 : i32
    return %c0_i32, %c0_i32_0 : i32, i32
  }
  func.func @transform_2(%arg0: i32) -> (i32, i32, i32) {
    %c0_i32 = arith.constant 0 : i32
    %c0_i32_0 = arith.constant 0 : i32
    %c0_i32_1 = arith.constant 0 : i32
    %c0_i32_2 = arith.constant 0 : i32
    return %c0_i32, %c0_i32_0, %c0_i32_1 : i32, i32, i32
  }
  func.func @transform_3(%arg0: i32) -> (i32, i32) {
    %c0_i32 = arith.constant 0 : i32
    %c0_i32_0 = arith.constant 0 : i32
    %c0_i32_1 = arith.constant 0 : i32
    return %c0_i32, %c0_i32_0 : i32, i32
  }
  func.func @transform_4(%arg0: i32) -> (i32, i32, i32) {
    %c0_i32 = arith.constant 0 : i32
    %c0_i32_0 = arith.constant 0 : i32
    %c0_i32_1 = arith.constant 0 : i32
    %c0_i32_2 = arith.constant 0 : i32
    return %c0_i32, %c0_i32_0, %c0_i32_1 : i32, i32, i32
  }
  func.func @transform_5(%arg0: i32) -> (i32, i32) {
    %c0_i32 = arith.constant 0 : i32
    %c0_i32_0 = arith.constant 0 : i32
    %c0_i32_1 = arith.constant 0 : i32
    return %c0_i32, %c0_i32_0 : i32, i32
  }
  func.func @transform_6(%arg0: i32) -> (i32, i32, i32) {
    %c0_i32 = arith.constant 0 : i32
    %c0_i32_0 = arith.constant 0 : i32
    %c0_i32_1 = arith.constant 0 : i32
    %c0_i32_2 = arith.constant 0 : i32
    return %c0_i32, %c0_i32_0, %c0_i32_1 : i32, i32, i32
  }
  func.func @transform_7(%arg0: i32) -> (i32, i32) {
    %c0_i32 = arith.constant 0 : i32
    %c0_i32_0 = arith.constant 0 : i32
    %c0_i32_1 = arith.constant 0 : i32
    return %c0_i32, %c0_i32_0 : i32, i32
  }
}

</mosaic_0001>

<llo_original>
// kernel: tpu_custom_call.1
$region0: #{tpu_custom_call.1}
  #allocation0 [shape = 'u32[]', space=smem, size = 0x4, offset = 0x4, fixed_abs, tag = 'smem constant byte address 0x4 - core index']
  #allocation1 [shape = 'u32[144,128]{1,0:T(1,128)}', space=vmem, size = 0x12000, scoped, tag = 'internal scratch']
  %s0 = inlined_call_operand.hbm [shape: bf16[3,512], index: 0, kind: input, shape index: {}]
  %s1 = inlined_call_operand.vmem [shape: bf16[128,3], index: 1, kind: input, shape index: {}]
  %s2 = inlined_call_operand.hbm [shape: bf16[16,512,128], index: 2, kind: input, shape index: {}]
  %s3 = inlined_call_operand.vmem [shape: bf16[256,8], index: 3, kind: input, shape index: {}]
  %s4 = inlined_call_operand.vmem [shape: bf16[16,128,32], index: 4, kind: input, shape index: {}]
  %s5 = inlined_call_operand.vmem [shape: bf16[512,16], index: 5, kind: input, shape index: {}]
  %s6 = inlined_call_operand.vmem [shape: bf16[16,32,2], index: 6, kind: input, shape index: {}]
  %s7 = inlined_call_operand.vmem [shape: f32[32,2], index: 7, kind: output, shape index: {}]
  %s8 = sld [smem:[#allocation0]]
  $region46: #{tpu_custom_call.1} parent=0
    _
  %s10 = ssub.s32 1, %s8
  %s11 = scalar_select 0, %s10, %s8
  $region1: #{tpu_custom_call.1} parent=0
    #allocation2 [shape = 'u8[4096]{0}', space=vmem, size = 0x1000, scoped, tag = 'input window, operand 0, single buffered']
    #allocation3 [shape = 's32[1]{0}', space=sflag, size = 0x4, scoped, tag = 'scoped memory for tpu_custom_call.1']
    #allocation4 [shape = 'u8[2097152]{0}', space=vmem, size = 0x200000, scoped, tag = 'input window, operand 2, single buffered']
    #allocation5 [shape = 's32[1]{0}', space=sflag, size = 0x4, scoped, tag = 'scoped memory for tpu_custom_call.1']
    %12 = vsyncpa [#allocation3], 0
    %13 = vsyncpa [#allocation5], 0
    // Predicated region
    $region2: #{tpu_custom_call.1} parent=1 // pred_check
      _
    $region3: #{tpu_custom_call.1} parent=1 // pred_check_branch
      %15 = sbr.rel (0) target = $region5
    $region4: #{tpu_custom_call.1} parent=1 // pred_region
      %s17 = ssub.s32 128, 128
      %18 = vsyncadd [#allocation3], %s17
      %s20 = sshll.u32 [#allocation2], 4
      %s21 = int_to_ptr.vmem [resolvable:$true] %s20
      %23 = dma.hbm_to_vmem [thread:$0]  %s0, 128, %s21, [#allocation3]
    $region5: #{tpu_custom_call.1} parent=1 // pred_fallthru
      _
    // Predicated region
    $region6: #{tpu_custom_call.1} parent=1 // pred_check
      _
    $region7: #{tpu_custom_call.1} parent=1 // pred_check_branch
      %25 = sbr.rel (0) target = $region9
    $region8: #{tpu_custom_call.1} parent=1 // pred_region
      _
    $region9: #{tpu_custom_call.1} parent=1 // pred_fallthru
      _
    // Predicated region
    $region10: #{tpu_custom_call.1} parent=1 // pred_check
      _
    $region11: #{tpu_custom_call.1} parent=1 // pred_check_branch
      %27 = sbr.rel (0) target = $region13
    $region12: #{tpu_custom_call.1} parent=1 // pred_region
      %s29 = ssub.s32 65536, 65536
      %30 = vsyncadd [#allocation5], %s29
      %s31 = sshll.u32 [#allocation4], 4
      %s32 = int_to_ptr.vmem [resolvable:$true] %s31
      %37 = dma.hbm_to_vmem [thread:$0]  %s2, 65536, %s32, [#allocation5], 64, 64, 4
    $region13: #{tpu_custom_call.1} parent=1 // pred_fallthru
      _
    // Predicated region
    $region14: #{tpu_custom_call.1} parent=1 // pred_check
      _
    $region15: #{tpu_custom_call.1} parent=1 // pred_check_branch
      %39 = sbr.rel (0) target = $region17
    $region16: #{tpu_custom_call.1} parent=1 // pred_region
      _
    $region17: #{tpu_custom_call.1} parent=1 // pred_fallthru
      _
    // Predicated region
    $region18: #{tpu_custom_call.1} parent=1 // pred_check
      _
    $region19: #{tpu_custom_call.1} parent=1 // pred_check_branch
      %41 = sbr.rel (0) target = $region21
    $region20: #{tpu_custom_call.1} parent=1 // pred_region
      _
    $region21: #{tpu_custom_call.1} parent=1 // pred_fallthru
      _
    // Predicated region
    $region22: #{tpu_custom_call.1} parent=1 // pred_check
      _
    $region23: #{tpu_custom_call.1} parent=1 // pred_check_branch
      %43 = sbr.rel (0) target = $region25
    $region24: #{tpu_custom_call.1} parent=1 // pred_region
      _
    $region25: #{tpu_custom_call.1} parent=1 // pred_fallthru
      _
    // Predicated region
    $region26: #{tpu_custom_call.1} parent=1 // pred_check
      _
    $region27: #{tpu_custom_call.1} parent=1 // pred_check_branch
      %45 = sbr.rel (0) target = $region29
    $region28: #{tpu_custom_call.1} parent=1 // pred_region
      _
    $region29: #{tpu_custom_call.1} parent=1 // pred_fallthru
      _
    // Predicated region
    $region30: #{tpu_custom_call.1} parent=1 // pred_check
      _
    $region31: #{tpu_custom_call.1} parent=1 // pred_check_branch
      %47 = sbr.rel (0) target = $region33
    $region32: #{tpu_custom_call.1} parent=1 // pred_region
      %48 = dma.done [#allocation3], 128
    $region33: #{tpu_custom_call.1} parent=1 // pred_fallthru
      _
    // Predicated region
    $region34: #{tpu_custom_call.1} parent=1 // pred_check
      _
    $region35: #{tpu_custom_call.1} parent=1 // pred_check_branch
      %50 = sbr.rel (0) target = $region37
    $region36: #{tpu_custom_call.1} parent=1 // pred_region
      %51 = dma.done [#allocation5], 65536
    $region37: #{tpu_custom_call.1} parent=1 // pred_fallthru
      _
    %v53 = vld [vmem:[#allocation2] sm:$0xff]
    %v54 = vld [vmem:[%s1] sm:$0xf]
    %v55 = vld [vmem:[%s1 + $0x4] sm:$0xf]
    %v56 = vld [vmem:[%s1 + $0x8] sm:$0xf]
    %v57 = vld [vmem:[%s1 + $0xc] sm:$0xf]
    %v58 = vld [vmem:[%s1 + $0x10] sm:$0xf]
    %v59 = vld [vmem:[%s1 + $0x14] sm:$0xf]
    %v60 = vld [vmem:[%s1 + $0x18] sm:$0xf]
    %v61 = vld [vmem:[%s1 + $0x1c] sm:$0xf]
    %v62 = vld [vmem:[%s1 + $0x20] sm:$0xf]
    %v63 = vld [vmem:[%s1 + $0x24] sm:$0xf]
    %v64 = vld [vmem:[%s1 + $0x28] sm:$0xf]
    %v65 = vld [vmem:[%s1 + $0x2c] sm:$0xf]
    %v66 = vld [vmem:[%s1 + $0x30] sm:$0xf]
    %v67 = vld [vmem:[%s1 + $0x34] sm:$0xf]
    %v68 = vld [vmem:[%s1 + $0x38] sm:$0xf]
    %v69 = vld [vmem:[%s1 + $0x3c] sm:$0xf]
    %v86 = vunpack.c.l.b16 %v54
    %v87 = vunpack.c.l.b16 %v55
    %v88 = vunpack.c.l.b16 %v56
    %v89 = vunpack.c.l.b16 %v57
    %v90 = vunpack.c.l.b16 %v58
    %v91 = vunpack.c.l.b16 %v59
    %v92 = vunpack.c.l.b16 %v60
    %v93 = vunpack.c.l.b16 %v61
    %v94 = vunpack.c.l.b16 %v62
    %v95 = vunpack.c.l.b16 %v63
    %v96 = vunpack.c.l.b16 %v64
    %v97 = vunpack.c.l.b16 %v65
    %v98 = vunpack.c.l.b16 %v66
    %v99 = vunpack.c.l.b16 %v67
    %v100 = vunpack.c.l.b16 %v68
    %v101 = vunpack.c.l.b16 %v69
    %v102 = vpack.c.b16 %v87, %v86
    %v103 = vpack.c.b16 %v89, %v88
    %v104 = vpack.c.b16 %v91, %v90
    %v105 = vpack.c.b16 %v93, %v92
    %v106 = vpack.c.b16 %v95, %v94
    %v107 = vpack.c.b16 %v97, %v96
    %v108 = vpack.c.b16 %v99, %v98
    %v109 = vpack.c.b16 %v101, %v100
    %v111 = vcombine.high %v53, %v53
    %v113 = vunpack.c.l.s4 1983009808
    %v114 = vunpack.c.0.s8 %v113
    %v115 = vlaneseq
    %v116 = vshrl.u32 %v115, 7
    %v117 = vsub.s32 %v114, %v116
    %v118 = vrot.slane %v53, %v117
    %v120 = vunpack.c.l.s4 1983009808
    %v121 = vunpack.c.0.s8 %v120
    %v122 = vlaneseq
    %v123 = vshrl.u32 %v122, 7
    %v124 = vsub.s32 %v121, %v123
    %v125 = vrot.slane %v111, %v124
    %v126 = vcombine.high %v118, %v118
    %v127 = vcombine.high %v125, %v125
    %vm128 = vcmask 23552
    %v130 = vsel %vm128, %v102, 0
    %v133 = vsel %vm128, %v103, 0
    %v136 = vsel %vm128, %v104, 0
    %v139 = vsel %vm128, %v105, 0
    %v142 = vsel %vm128, %v106, 0
    %v145 = vsel %vm128, %v107, 0
    %v148 = vsel %vm128, %v108, 0
    %v151 = vsel %vm128, %v109, 0
    %vm153 = vcmask 1040384
    %vm154 = vcmask 1041408
    %v155 = vsel %vm153, 4294967295, 65535
    %v156 = vsel %vm154, %v155, 0
    %v158 = vand.u32 %v118, %v156
    %v161 = vand.u32 %v126, %v156
    %v164 = vand.u32 %v125, %v156
    %v167 = vand.u32 %v127, %v156
    %169 = vmatprep.subr.bf16.mxu0 %v161
    %170 = vmatpush1.bf16.msra.mxu0 %v158
    %171 = vmatprep.subr.bf16.mxu0 0
    %172 = vmatpush1.bf16.msra.mxu0 0
    %173 = vmatprep.subr.bf16.mxu0 0
    %174 = vmatpush1.bf16.msra.mxu0 0
    %175 = vmatprep.subr.bf16.mxu0 0
    %176 = vmatpush1.bf16.msra.mxu0 0
    %177 = vmatprep.subr.bf16.mxu0 0
    %178 = vmatpush1.bf16.msra.mxu0 0
    %179 = vmatprep.subr.bf16.mxu0 0
    %180 = vmatpush1.bf16.msra.mxu0 0
    %181 = vmatprep.subr.bf16.mxu0 0
    %182 = vmatpush1.bf16.msra.mxu0 0
    %183 = vmatprep.subr.bf16.mxu0 0
    %184 = vmatpush1.bf16.msra.mxu0 0
    %185 = vmatprep.subr.bf16.mxu0 0
    %186 = vmatpush1.bf16.msra.mxu0 0
    %187 = vmatprep.subr.bf16.mxu0 0
    %188 = vmatpush1.bf16.msra.mxu0 0
    %189 = vmatprep.subr.bf16.mxu0 0
    %190 = vmatpush1.bf16.msra.mxu0 0
    %191 = vmatprep.subr.bf16.mxu0 0
    %192 = vmatpush1.bf16.msra.mxu0 0
    %193 = vmatprep.subr.bf16.mxu0 0
    %194 = vmatpush1.bf16.msra.mxu0 0
    %195 = vmatprep.subr.bf16.mxu0 0
    %196 = vmatpush1.bf16.msra.mxu0 0
    %197 = vmatprep.subr.bf16.mxu0 0
    %198 = vmatpush1.bf16.msra.mxu0 0
    %199 = vmatprep.subr.bf16.mxu0 0
    %200 = vmatpush1.bf16.msra.mxu0 0
    %201 = vmatprep.mubr.bf16.mxu0 0
    %202 = vmatmul.mubr.bf16.gmra.mrb[0].mxu0 %v130
    %v203 = vpop.f32.mrb[0].mxu0
    %v204 = vadd.f32 0.0, %v203
    %v205 = vpop.f32.mrb[0].mxu0
    %v206 = vadd.f32 0.0, %v205
    %v207 = vpop.f32.mrb[0].mxu0
    %v208 = vadd.f32 0.0, %v207
    %v209 = vpop.f32.mrb[0].mxu0
    %v210 = vadd.f32 0.0, %v209
    %211 = vmatprep.mubr.bf16.mxu0 0
    %212 = vmatmul.mubr.bf16.gmra.mrb[0].mxu0 %v133
    %v213 = vpop.f32.mrb[0].mxu0
    %v214 = vadd.f32 0.0, %v213
    %v215 = vpop.f32.mrb[0].mxu0
    %v216 = vadd.f32 0.0, %v215
    %v217 = vpop.f32.mrb[0].mxu0
    %v218 = vadd.f32 0.0, %v217
    %v219 = vpop.f32.mrb[0].mxu0
    %v220 = vadd.f32 0.0, %v219
    %221 = vmatprep.mubr.bf16.mxu0 0
    %222 = vmatmul.mubr.bf16.gmra.mrb[0].mxu0 %v136
    %v223 = vpop.f32.mrb[0].mxu0
    %v224 = vadd.f32 0.0, %v223
    %v225 = vpop.f32.mrb[0].mxu0
    %v226 = vadd.f32 0.0, %v225
    %v227 = vpop.f32.mrb[0].mxu0
    %v228 = vadd.f32 0.0, %v227
    %v229 = vpop.f32.mrb[0].mxu0
    %v230 = vadd.f32 0.0, %v229
    %231 = vmatprep.mubr.bf16.mxu0 0
    %232 = vmatmul.mubr.bf16.gmra.mrb[0].mxu0 %v139
    %v233 = vpop.f32.mrb[0].mxu0
    %v234 = vadd.f32 0.0, %v233
    %v235 = vpop.f32.mrb[0].mxu0
    %v236 = vadd.f32 0.0, %v235
    %v237 = vpop.f32.mrb[0].mxu0
    %v238 = vadd.f32 0.0, %v237
    %v239 = vpop.f32.mrb[0].mxu0
    %v240 = vadd.f32 0.0, %v239
    %241 = vmatprep.mubr.bf16.mxu0 0
    %242 = vmatmul.mubr.bf16.gmra.mrb[0].mxu0 %v142
    %v243 = vpop.f32.mrb[0].mxu0
    %v244 = vadd.f32 0.0, %v243
    %v245 = vpop.f32.mrb[0].mxu0
    %v246 = vadd.f32 0.0, %v245
    %v247 = vpop.f32.mrb[0].mxu0
    %v248 = vadd.f32 0.0, %v247
    %v249 = vpop.f32.mrb[0].mxu0
    %v250 = vadd.f32 0.0, %v249
    %251 = vmatprep.mubr.bf16.mxu0 0
    %252 = vmatmul.mubr.bf16.gmra.mrb[0].mxu0 %v145
    %v253 = vpop.f32.mrb[0].mxu0
    %v254 = vadd.f32 0.0, %v253
    %v255 = vpop.f32.mrb[0].mxu0
    %v256 = vadd.f32 0.0, %v255
    %v257 = vpop.f32.mrb[0].mxu0
    %v258 = vadd.f32 0.0, %v257
    %v259 = vpop.f32.mrb[0].mxu0
    %v260 = vadd.f32 0.0, %v259
    %261 = vmatprep.mubr.bf16.mxu0 0
    %262 = vmatmul.mubr.bf16.gmra.mrb[0].mxu0 %v148
    %v263 = vpop.f32.mrb[0].mxu0
    %v264 = vadd.f32 0.0, %v263
    %v265 = vpop.f32.mrb[0].mxu0
    %v266 = vadd.f32 0.0, %v265
    %v267 = vpop.f32.mrb[0].mxu0
    %v268 = vadd.f32 0.0, %v267
    %v269 = vpop.f32.mrb[0].mxu0
    %v270 = vadd.f32 0.0, %v269
    %271 = vmatprep.mubr.bf16.mxu0 0
    %272 = vmatmul.mubr.bf16.gmra.mrb[0].mxu0 %v151
    %v273 = vpop.f32.mrb[0].mxu0
    %v274 = vadd.f32 0.0, %v273
    %v275 = vpop.f32.mrb[0].mxu0
    %v276 = vadd.f32 0.0, %v275
    %v277 = vpop.f32.mrb[0].mxu0
    %v278 = vadd.f32 0.0, %v277
    %v279 = vpop.f32.mrb[0].mxu0
    %v280 = vadd.f32 0.0, %v279
    %281 = vdwg.mxu0
    %282 = vmatprep.subr.bf16.mxu0 %v167
    %283 = vmatpush1.bf16.msra.mxu0 %v164
    %284 = vmatprep.subr.bf16.mxu0 0
    %285 = vmatpush1.bf16.msra.mxu0 0
    %286 = vmatprep.subr.bf16.mxu0 0
    %287 = vmatpush1.bf16.msra.mxu0 0
    %288 = vmatprep.subr.bf16.mxu0 0
    %289 = vmatpush1.bf16.msra.mxu0 0
    %290 = vmatprep.subr.bf16.mxu0 0
    %291 = vmatpush1.bf16.msra.mxu0 0
    %292 = vmatprep.subr.bf16.mxu0 0
    %293 = vmatpush1.bf16.msra.mxu0 0
    %294 = vmatprep.subr.bf16.mxu0 0
    %295 = vmatpush1.bf16.msra.mxu0 0
    %296 = vmatprep.subr.bf16.mxu0 0
    %297 = vmatpush1.bf16.msra.mxu0 0
    %298 = vmatprep.subr.bf16.mxu0 0
    %299 = vmatpush1.bf16.msra.mxu0 0
    %300 = vmatprep.subr.bf16.mxu0 0
    %301 = vmatpush1.bf16.msra.mxu0 0
    %302 = vmatprep.subr.bf16.mxu0 0
    %303 = vmatpush1.bf16.msra.mxu0 0
    %304 = vmatprep.subr.bf16.mxu0 0
    %305 = vmatpush1.bf16.msra.mxu0 0
    %306 = vmatprep.subr.bf16.mxu0 0
    %307 = vmatpush1.bf16.msra.mxu0 0
    %308 = vmatprep.subr.bf16.mxu0 0
    %309 = vmatpush1.bf16.msra.mxu0 0
    %310 = vmatprep.subr.bf16.mxu0 0
    %311 = vmatpush1.bf16.msra.mxu0 0
    %312 = vmatprep.subr.bf16.mxu0 0
    %313 = vmatpush1.bf16.msra.mxu0 0
    %314 = vmatprep.mubr.bf16.mxu0 0
    %315 = vmatmul.mubr.bf16.gmra.mrb[0].mxu0 %v130
    %v316 = vpop.f32.mrb[0].mxu0
    %v317 = vadd.f32 0.0, %v316
    %v318 = vpop.f32.mrb[0].mxu0
    %v319 = vadd.f32 0.0, %v318
    %v320 = vpop.f32.mrb[0].mxu0
    %v321 = vadd.f32 0.0, %v320
    %v322 = vpop.f32.mrb[0].mxu0
    %v323 = vadd.f32 0.0, %v322
    %324 = vmatprep.mubr.bf16.mxu0 0
    %325 = vmatmul.mubr.bf16.gmra.mrb[0].mxu0 %v133
    %v326 = vpop.f32.mrb[0].mxu0
    %v327 = vadd.f32 0.0, %v326
    %v328 = vpop.f32.mrb[0].mxu0
    %v329 = vadd.f32 0.0, %v328
    %v330 = vpop.f32.mrb[0].mxu0
    %v331 = vadd.f32 0.0, %v330
    %v332 = vpop.f32.mrb[0].mxu0
    %v333 = vadd.f32 0.0, %v332
    %334 = vmatprep.mubr.bf16.mxu0 0
    %335 = vmatmul.mubr.bf16.gmra.mrb[0].mxu0 %v136
    %v336 = vpop.f32.mrb[0].mxu0
    %v337 = vadd.f32 0.0, %v336
    %v338 = vpop.f32.mrb[0].mxu0
    %v339 = vadd.f32 0.0, %v338
    %v340 = vpop.f32.mrb[0].mxu0
    %v341 = vadd.f32 0.0, %v340
    %v342 = vpop.f32.mrb[0].mxu0
    %v343 = vadd.f32 0.0, %v342
    %344 = vmatprep.mubr.bf16.mxu0 0
    %345 = vmatmul.mubr.bf16.gmra.mrb[0].mxu0 %v139
    %v346 = vpop.f32.mrb[0].mxu0
    %v347 = vadd.f32 0.0, %v346
    %v348 = vpop.f32.mrb[0].mxu0
    %v349 = vadd.f32 0.0, %v348
    %v350 = vpop.f32.mrb[0].mxu0
    %v351 = vadd.f32 0.0, %v350
    %v352 = vpop.f32.mrb[0].mxu0
    %v353 = vadd.f32 0.0, %v352
    %354 = vmatprep.mubr.bf16.mxu0 0
    %355 = vmatmul.mubr.bf16.gmra.mrb[0].mxu0 %v142
    %v356 = vpop.f32.mrb[0].mxu0
    %v357 = vadd.f32 0.0, %v356
    %v358 = vpop.f32.mrb[0].mxu0
    %v359 = vadd.f32 0.0, %v358
    %v360 = vpop.f32.mrb[0].mxu0
    %v361 = vadd.f32 0.0, %v360
    %v362 = vpop.f32.mrb[0].mxu0
    %v363 = vadd.f32 0.0, %v362
    %364 = vmatprep.mubr.bf16.mxu0 0
    %365 = vmatmul.mubr.bf16.gmra.mrb[0].mxu0 %v145
    %v366 = vpop.f32.mrb[0].mxu0
    %v367 = vadd.f32 0.0, %v366
    %v368 = vpop.f32.mrb[0].mxu0
    %v369 = vadd.f32 0.0, %v368
    %v370 = vpop.f32.mrb[0].mxu0
    %v371 = vadd.f32 0.0, %v370
    %v372 = vpop.f32.mrb[0].mxu0
    %v373 = vadd.f32 0.0, %v372
    %374 = vmatprep.mubr.bf16.mxu0 0
    %375 = vmatmul.mubr.bf16.gmra.mrb[0].mxu0 %v148
    %v376 = vpop.f32.mrb[0].mxu0
    %v377 = vadd.f32 0.0, %v376
    %v378 = vpop.f32.mrb[0].mxu0
    %v379 = vadd.f32 0.0, %v378
    %v380 = vpop.f32.mrb[0].mxu0
    %v381 = vadd.f32 0.0, %v380
    %v382 = vpop.f32.mrb[0].mxu0
    %v383 = vadd.f32 0.0, %v382
    %384 = vmatprep.mubr.bf16.mxu0 0
    %385 = vmatmul.mubr.bf16.gmra.mrb[0].mxu0 %v151
    %v386 = vpop.f32.mrb[0].mxu0
    %v387 = vadd.f32 0.0, %v386
    %v388 = vpop.f32.mrb[0].mxu0
    %v389 = vadd.f32 0.0, %v388
    %v390 = vpop.f32.mrb[0].mxu0
    %v391 = vadd.f32 0.0, %v390
    %v392 = vpop.f32.mrb[0].mxu0
    %v393 = vadd.f32 0.0, %v392
    %394 = vdwg.mxu0
    %v395 = vpack.c.bf16 %v204, %v204
    %v396 = vpack.c.bf16 %v206, %v206
    %v397 = vpack.c.bf16 %v317, %v317
    %v398 = vpack.c.bf16 %v319, %v319
    %v399 = vld [vmem:[#allocation4] sm:$0xf]
    %v400 = vld [vmem:[#allocation4 + $0x4] sm:$0xf]
    %v401 = vld [vmem:[#allocation4 + $0x8] sm:$0xf]
    %v402 = vld [vmem:[#allocation4 + $0xc] sm:$0xf]
    %v403 = vld [vmem:[#allocation4 + $0x10] sm:$0xf]
    %v404 = vld [vmem:[#allocation4 + $0x14] sm:$0xf]
    %v405 = vld [vmem:[#allocation4 + $0x18] sm:$0xf]
    %v406 = vld [vmem:[#allocation4 + $0x1c] sm:$0xf]
    %v407 = vld [vmem:[#allocation4 + $0x20] sm:$0xf]
    %v408 = vld [vmem:[#allocation4 + $0x24] sm:$0xf]
    %v409 = vld [vmem:[#allocation4 + $0x28] sm:$0xf]
    %v410 = vld [vmem:[#allocation4 + $0x2c] sm:$0xf]
    %v411 = vld [vmem:[#allocation4 + $0x30] sm:$0xf]
    %v412 = vld [vmem:[#allocation4 + $0x34] sm:$0xf]
    %v413 = vld [vmem:[#allocation4 + $0x38] sm:$0xf]
    %v414 = vld [vmem:[#allocation4 + $0x3c] sm:$0xf]
    %v415 = vld [vmem:[#allocation4 + $0x40] sm:$0xf]
    %v416 = vld [vmem:[#allocation4 + $0x44] sm:$0xf]
    %v417 = vld [vmem:[#allocation4 + $0x48] sm:$0xf]
    %v418 = vld [vmem:[#allocation4 + $0x4c] sm:$0xf]
    %v419 = vld [vmem:[#allocation4 + $0x50] sm:$0xf]
    %v420 = vld [vmem:[#allocation4 + $0x54] sm:$0xf]
    %v421 = vld [vmem:[#allocation4 + $0x58] sm:$0xf]
    %v422 = vld [vmem:[#allocation4 + $0x5c] sm:$0xf]
    %v423 = vld [vmem:[#allocation4 + $0x60] sm:$0xf]
    %v424 = vld [vmem:[#allocation4 + $0x64] sm:$0xf]
    %v425 = vld [vmem:[#allocation4 + $0x68] sm:$0xf]
    %v426 = vld [vmem:[#allocation4 + $0x6c] sm:$0xf]
    %v427 = vld [vmem:[#allocation4 + $0x70] sm:$0xf]
    %v428 = vld [vmem:[#allocation4 + $0x74] sm:$0xf]
    %v429 = vld [vmem:[#allocation4 + $0x78] sm:$0xf]
    %v430 = vld [vmem:[#allocation4 + $0x7c] sm:$0xf]
    %v431 = vld [vmem:[#allocation4 + $0x80] sm:$0xf]
    %v432 = vld [vmem:[#allocation4 + $0x84] sm:$0xf]
    %v433 = vld [vmem:[#allocation4 + $0x88] sm:$0xf]
    %v434 = vld [vmem:[#allocation4 + $0x8c] sm:$0xf]
    %v435 = vld [vmem:[#allocation4 + $0x90] sm:$0xf]
    %v436 = vld [vmem:[#allocation4 + $0x94] sm:$0xf]
    %v437 = vld [vmem:[#allocation4 + $0x98] sm:$0xf]
    %v438 = vld [vmem:[#allocation4 + $0x9c] sm:$0xf]
    %v439 = vld [vmem:[#allocation4 + $0xa0] sm:$0xf]
    %v440 = vld [vmem:[#allocation4 + $0xa4] sm:$0xf]
    %v441 = vld [vmem:[#allocation4 + $0xa8] sm:$0xf]
    %v442 = vld [vmem:[#allocation4 + $0xac] sm:$0xf]
    %v443 = vld [vmem:[#allocation4 + $0xb0] sm:$0xf]
    %v444 = vld [vmem:[#allocation4 + $0xb4] sm:$0xf]
    %v445 = vld [vmem:[#allocation4 + $0xb8] sm:$0xf]
    %v446 = vld [vmem:[#allocation4 + $0xbc] sm:$0xf]
    %v447 = vld [vmem:[#allocation4 + $0xc0] sm:$0xf]
    %v448 = vld [vmem:[#allocation4 + $0xc4] sm:$0xf]
    %v449 = vld [vmem:[#allocation4 + $0xc8] sm:$0xf]
    %v450 = vld [vmem:[#allocation4 + $0xcc] sm:$0xf]
    %v451 = vld [vmem:[#allocation4 + $0xd0] sm:$0xf]
    %v452 = vld [vmem:[#allocation4 + $0xd4] sm:$0xf]
    %v453 = vld [vmem:[#allocation4 + $0xd8] sm:$0xf]
    %v454 = vld [vmem:[#allocation4 + $0xdc] sm:$0xf]
    %v455 = vld [vmem:[#allocation4 + $0xe0] sm:$0xf]
    %v456 = vld [vmem:[#allocation4 + $0xe4] sm:$0xf]
    %v457 = vld [vmem:[#allocation4 + $0xe8] sm:$0xf]
    %v458 = vld [vmem:[#allocation4 + $0xec] sm:$0xf]
    %v459 = vld [vmem:[#allocation4 + $0xf0] sm:$0xf]
    %v460 = vld [vmem:[#allocation4 + $0xf4] sm:$0xf]
    %v461 = vld [vmem:[#allocation4 + $0xf8] sm:$0xf]
    %v462 = vld [vmem:[#allocation4 + $0xfc] sm:$0xf]
    %v463 = vpack.c.bf16 %v208, %v208
    %v464 = vpack.c.bf16 %v210, %v210
    %v465 = vpack.c.bf16 %v321, %v321
    %v466 = vpack.c.bf16 %v323, %v323
    %s467 = scalar_lea.vmem [#allocation4], 256
    %v468 = vld [vmem:[%s467] sm:$0xf]
    %v469 = vld [vmem:[%s467 + $0x4] sm:$0xf]
    %v470 = vld [vmem:[%s467 + $0x8] sm:$0xf]
    %v471 = vld [vmem:[%s467 + $0xc] sm:$0xf]
    %v472 = vld [vmem:[%s467 + $0x10] sm:$0xf]
    %v473 = vld [vmem:[%s467 + $0x14] sm:$0xf]
    %v474 = vld [vmem:[%s467 + $0x18] sm:$0xf]
    %v475 = vld [vmem:[%s467 + $0x1c] sm:$0xf]
    %v476 = vld [vmem:[%s467 + $0x20] sm:$0xf]
    %v477 = vld [vmem:[%s467 + $0x24] sm:$0xf]
    %v478 = vld [vmem:[%s467 + $0x28] sm:$0xf]
    %v479 = vld [vmem:[%s467 + $0x2c] sm:$0xf]
    %v480 = vld [vmem:[%s467 + $0x30] sm:$0xf]
    %v481 = vld [vmem:[%s467 + $0x34] sm:$0xf]
    %v482 = vld [vmem:[%s467 + $0x38] sm:$0xf]
    %v483 = vld [vmem:[%s467 + $0x3c] sm:$0xf]
    %v484 = vld [vmem:[%s467 + $0x40] sm:$0xf]
    %v485 = vld [vmem:[%s467 + $0x44] sm:$0xf]
    %v486 = vld [vmem:[%s467 + $0x48] sm:$0xf]
    %v487 = vld [vmem:[%s467 + $0x4c] sm:$0xf]
    %v488 = vld [vmem:[%s467 + $0x50] sm:$0xf]
    %v489 = vld [vmem:[%s467 + $0x54] sm:$0xf]
    %v490 = vld [vmem:[%s467 + $0x58] sm:$0xf]
    %v491 = vld [vmem:[%s467 + $0x5c] sm:$0xf]
    %v492 = vld [vmem:[%s467 + $0x60] sm:$0xf]
    %v493 = vld [vmem:[%s467 + $0x64] sm:$0xf]
    %v494 = vld [vmem:[%s467 + $0x68] sm:$0xf]
    %v495 = vld [vmem:[%s467 + $0x6c] sm:$0xf]
    %v496 = vld [vmem:[%s467 + $0x70] sm:$0xf]
    %v497 = vld [vmem:[%s467 + $0x74] sm:$0xf]
    %v498 = vld [vmem:[%s467 + $0x78] sm:$0xf]
    %v499 = vld [vmem:[%s467 + $0x7c] sm:$0xf]
    %v500 = vld [vmem:[%s467 + $0x80] sm:$0xf]
    %v501 = vld [vmem:[%s467 + $0x84] sm:$0xf]
    %v502 = vld [vmem:[%s467 + $0x88] sm:$0xf]
    %v503 = vld [vmem:[%s467 + $0x8c] sm:$0xf]
    %v504 = vld [vmem:[%s467 + $0x90] sm:$0xf]
    %v505 = vld [vmem:[%s467 + $0x94] sm:$0xf]
    %v506 = vld [vmem:[%s467 + $0x98] sm:$0xf]
    %v507 = vld [vmem:[%s467 + $0x9c] sm:$0xf]
    %v508 = vld [vmem:[%s467 + $0xa0] sm:$0xf]
    %v509 = vld [vmem:[%s467 + $0xa4] sm:$0xf]
    %v510 = vld [vmem:[%s467 + $0xa8] sm:$0xf]
    %v511 = vld [vmem:[%s467 + $0xac] sm:$0xf]
    %v512 = vld [vmem:[%s467 + $0xb0] sm:$0xf]
    %v513 = vld [vmem:[%s467 + $0xb4] sm:$0xf]
    %v514 = vld [vmem:[%s467 + $0xb8] sm:$0xf]
    %v515 = vld [vmem:[%s467 + $0xbc] sm:$0xf]
    %v516 = vld [vmem:[%s467 + $0xc0] sm:$0xf]
    %v517 = vld [vmem:[%s467 + $0xc4] sm:$0xf]
    %v518 = vld [vmem:[%s467 + $0xc8] sm:$0xf]
    %v519 = vld [vmem:[%s467 + $0xcc] sm:$0xf]
    %v520 = vld [vmem:[%s467 + $0xd0] sm:$0xf]
    %v521 = vld [vmem:[%s467 + $0xd4] sm:$0xf]
    %v522 = vld [vmem:[%s467 + $0xd8] sm:$0xf]
    %v523 = vld [vmem:[%s467 + $0xdc] sm:$0xf]
    %v524 = vld [vmem:[%s467 + $0xe0] sm:$0xf]
    %v525 = vld [vmem:[%s467 + $0xe4] sm:$0xf]
    %v526 = vld [vmem:[%s467 + $0xe8] sm:$0xf]
    %v527 = vld [vmem:[%s467 + $0xec] sm:$0xf]
    %v528 = vld [vmem:[%s467 + $0xf0] sm:$0xf]
    %v529 = vld [vmem:[%s467 + $0xf4] sm:$0xf]
    %v530 = vld [vmem:[%s467 + $0xf8] sm:$0xf]
    %v531 = vld [vmem:[%s467 + $0xfc] sm:$0xf]
    %v596 = vunpack.c.l.b16 %v468
    %v597 = vunpack.c.l.b16 %v469
    %v598 = vunpack.c.l.b16 %v470
    %v599 = vunpack.c.l.b16 %v471
    %v600 = vunpack.c.l.b16 %v472
    %v601 = vunpack.c.l.b16 %v473
    %v602 = vunpack.c.l.b16 %v474
    %v603 = vunpack.c.l.b16 %v475
    %v604 = vunpack.c.l.b16 %v476
    %v605 = vunpack.c.l.b16 %v477
    %v606 = vunpack.c.l.b16 %v478
    %v607 = vunpack.c.l.b16 %v479
    %v608 = vunpack.c.l.b16 %v480
    %v609 = vunpack.c.l.b16 %v481
    %v610 = vunpack.c.l.b16 %v482
    %v611 = vunpack.c.l.b16 %v483
    %v612 = vunpack.c.l.b16 %v484
    %v613 = vunpack.c.l.b16 %v485
    %v614 = vunpack.c.l.b16 %v486
    %v615 = vunpack.c.l.b16 %v487
    %v616 = vunpack.c.l.b16 %v488
    %v617 = vunpack.c.l.b16 %v489
    %v618 = vunpack.c.l.b16 %v490
    %v619 = vunpack.c.l.b16 %v491
    %v620 = vunpack.c.l.b16 %v492
    %v621 = vunpack.c.l.b16 %v493
    %v622 = vunpack.c.l.b16 %v494
    %v623 = vunpack.c.l.b16 %v495
    %v624 = vunpack.c.l.b16 %v496
    %v625 = vunpack.c.l.b16 %v497
    %v626 = vunpack.c.l.b16 %v498
    %v627 = vunpack.c.l.b16 %v499
    %v628 = vunpack.c.l.b16 %v500
    %v629 = vunpack.c.l.b16 %v501
    %v630 = vunpack.c.l.b16 %v502
    %v631 = vunpack.c.l.b16 %v503
    %v632 = vunpack.c.l.b16 %v504
    %v633 = vunpack.c.l.b16 %v505
    %v634 = vunpack.c.l.b16 %v506
    %v635 = vunpack.c.l.b16 %v507
    %v636 = vunpack.c.l.b16 %v508
    %v637 = vunpack.c.l.b16 %v509
    %v638 = vunpack.c.l.b16 %v510
    %v639 = vunpack.c.l.b16 %v511
    %v640 = vunpack.c.l.b16 %v512
    %v641 = vunpack.c.l.b16 %v513
    %v642 = vunpack.c.l.b16 %v514
    %v643 = vunpack.c.l.b16 %v515
    %v644 = vunpack.c.l.b16 %v516
    %v645 = vunpack.c.l.b16 %v517
    %v646 = vunpack.c.l.b16 %v518
    %v647 = vunpack.c.l.b16 %v519
    %v648 = vunpack.c.l.b16 %v520
    %v649 = vunpack.c.l.b16 %v521
    %v650 = vunpack.c.l.b16 %v522
    %v651 = vunpack.c.l.b16 %v523
    %v652 = vunpack.c.l.b16 %v524
    %v653 = vunpack.c.l.b16 %v525
    %v654 = vunpack.c.l.b16 %v526
    %v655 = vunpack.c.l.b16 %v527
    %v656 = vunpack.c.l.b16 %v528
    %v657 = vunpack.c.l.b16 %v529
    %v658 = vunpack.c.l.b16 %v530
    %v659 = vunpack.c.l.b16 %v531
    %v660 = vpack.c.b16 %v597, %v596
    %v661 = vpack.c.b16 %v599, %v598
    %v662 = vpack.c.b16 %v601, %v600
    %v663 = vpack.c.b16 %v603, %v602
    %v664 = vpack.c.b16 %v605, %v604
    %v665 = vpack.c.b16 %v607, %v606
    %v666 = vpack.c.b16 %v609, %v608
    %v667 = vpack.c.b16 %v611, %v610
    %v668 = vpack.c.b16 %v613, %v612
    %v669 = vpack.c.b16 %v615, %v614
    %v670 = vpack.c.b16 %v617, %v616
    %v671 = vpack.c.b16 %v619, %v618
    %v672 = vpack.c.b16 %v621, %v620
    %v673 = vpack.c.b16 %v623, %v622
    %v674 = vpack.c.b16 %v625, %v624
    %v675 = vpack.c.b16 %v627, %v626
    %v676 = vpack.c.b16 %v629, %v628
    %v677 = vpack.c.b16 %v631, %v630
    %v678 = vpack.c.b16 %v633, %v632
    %v679 = vpack.c.b16 %v635, %v634
    %v680 = vpack.c.b16 %v637, %v636
    %v681 = vpack.c.b16 %v639, %v638
    %v682 = vpack.c.b16 %v641, %v640
    %v683 = vpack.c.b16 %v643, %v642
    %v684 = vpack.c.b16 %v645, %v644
    %v685 = vpack.c.b16 %v647, %v646
    %v686 = vpack.c.b16 %v649, %v648
    %v687 = vpack.c.b16 %v651, %v650
    %v688 = vpack.c.b16 %v653, %v652
    %v689 = vpack.c.b16 %v655, %v654
    %v690 = vpack.c.b16 %v657, %v656
    %v691 = vpack.c.b16 %v659, %v658
    %724 = vmatprep.subr.bf16.mxu0 0
    %725 = vmatpush1.bf16.msra.mxu0 %v660
    %726 = vmatprep.subr.bf16.mxu0 0
    %727 = vmatpush1.bf16.msra.mxu0 %v661
    %728 = vmatprep.subr.bf16.mxu0 0
    %729 = vmatpush1.bf16.msra.mxu0 %v662
    %730 = vmatprep.subr.bf16.mxu0 0
    %731 = vmatpush1.bf16.msra.mxu0 %v663
    %732 = vmatprep.subr.bf16.mxu0 0
    %733 = vmatpush1.bf16.msra.mxu0 %v664
    %734 = vmatprep.subr.bf16.mxu0 0
    %735 = vmatpush1.bf16.msra.mxu0 %v665
    %736 = vmatprep.subr.bf16.mxu0 0
    %737 = vmatpush1.bf16.msra.mxu0 %v666
    %738 = vmatprep.subr.bf16.mxu0 0
    %739 = vmatpush1.bf16.msra.mxu0 %v667
    %740 = vmatprep.subr.bf16.mxu0 0
    %741 = vmatpush1.bf16.msra.mxu0 %v668
    %742 = vmatprep.subr.bf16.mxu0 0
    %743 = vmatpush1.bf16.msra.mxu0 %v669
    %744 = vmatprep.subr.bf16.mxu0 0
    %745 = vmatpush1.bf16.msra.mxu0 %v670
    %746 = vmatprep.subr.bf16.mxu0 0
    %747 = vmatpush1.bf16.msra.mxu0 %v671
    %748 = vmatprep.subr.bf16.mxu0 0
    %749 = vmatpush1.bf16.msra.mxu0 %v672
    %750 = vmatprep.subr.bf16.mxu0 0
    %751 = vmatpush1.bf16.msra.mxu0 %v673
    %752 = vmatprep.subr.bf16.mxu0 0
    %753 = vmatpush1.bf16.msra.mxu0 %v674
    %754 = vmatprep.subr.bf16.mxu0 0
    %755 = vmatpush1.bf16.msra.mxu0 %v675
    %756 = vmatprep.mubr.bf16.mxu0 %v464
    %757 = vmatmul.mubr.bf16.gmra.mrb[0].mxu0 %v463
    %v758 = vpop.f32.mrb[0].mxu0
    %v759 = vadd.f32 0.0, %v758
    %v760 = vpop.f32.mrb[0].mxu0
    %v761 = vpop.f32.mrb[0].mxu0
    %v762 = vpop.f32.mrb[0].mxu0
    %763 = vdwg.mxu0
    %764 = vmatprep.subr.bf16.mxu0 0
    %765 = vmatpush1.bf16.msra.mxu0 %v676
    %766 = vmatprep.subr.bf16.mxu0 0
    %767 = vmatpush1.bf16.msra.mxu0 %v677
    %768 = vmatprep.subr.bf16.mxu0 0
    %769 = vmatpush1.bf16.msra.mxu0 %v678
    %770 = vmatprep.subr.bf16.mxu0 0
    %771 = vmatpush1.bf16.msra.mxu0 %v679
    %772 = vmatprep.subr.bf16.mxu0 0
    %773 = vmatpush1.bf16.msra.mxu0 %v680
    %774 = vmatprep.subr.bf16.mxu0 0
    %775 = vmatpush1.bf16.msra.mxu0 %v681
    %776 = vmatprep.subr.bf16.mxu0 0
    %777 = vmatpush1.bf16.msra.mxu0 %v682
    %778 = vmatprep.subr.bf16.mxu0 0
    %779 = vmatpush1.bf16.msra.mxu0 %v683
    %780 = vmatprep.subr.bf16.mxu0 0
    %781 = vmatpush1.bf16.msra.mxu0 %v684
    %782 = vmatprep.subr.bf16.mxu0 0
    %783 = vmatpush1.bf16.msra.mxu0 %v685
    %784 = vmatprep.subr.bf16.mxu0 0
    %785 = vmatpush1.bf16.msra.mxu0 %v686
    %786 = vmatprep.subr.bf16.mxu0 0
    %787 = vmatpush1.bf16.msra.mxu0 %v687
    %788 = vmatprep.subr.bf16.mxu0 0
    %789 = vmatpush1.bf16.msra.mxu0 %v688
    %790 = vmatprep.subr.bf16.mxu0 0
    %791 = vmatpush1.bf16.msra.mxu0 %v689
    %792 = vmatprep.subr.bf16.mxu0 0
    %793 = vmatpush1.bf16.msra.mxu0 %v690
    %794 = vmatprep.subr.bf16.mxu0 0
    %795 = vmatpush1.bf16.msra.mxu0 %v691
    %796 = vmatprep.mubr.bf16.mxu0 %v466
    %797 = vmatmul.mubr.bf16.gmra.mrb[0].mxu0 %v465
    %v798 = vpop.f32.mrb[0].mxu0
    %v799 = vadd.f32 %v759, %v798
    %v800 = vpop.f32.mrb[0].mxu0
    %v801 = vpop.f32.mrb[0].mxu0
    %v802 = vpop.f32.mrb[0].mxu0
    %803 = vdwg.mxu0
    %v868 = vunpack.c.l.b16 %v399
    %v869 = vunpack.c.l.b16 %v400
    %v870 = vunpack.c.l.b16 %v401
    %v871 = vunpack.c.l.b16 %v402
    %v872 = vunpack.c.l.b16 %v403
    %v873 = vunpack.c.l.b16 %v404
    %v874 = vunpack.c.l.b16 %v405
    %v875 = vunpack.c.l.b16 %v406
    %v876 = vunpack.c.l.b16 %v407
    %v877 = vunpack.c.l.b16 %v408
    %v878 = vunpack.c.l.b16 %v409
    %v879 = vunpack.c.l.b16 %v410
    %v880 = vunpack.c.l.b16 %v411
    %v881 = vunpack.c.l.b16 %v412
    %v882 = vunpack.c.l.b16 %v413
    %v883 = vunpack.c.l.b16 %v414
    %v884 = vunpack.c.l.b16 %v415
    %v885 = vunpack.c.l.b16 %v416
    %v886 = vunpack.c.l.b16 %v417
    %v887 = vunpack.c.l.b16 %v418
    %v888 = vunpack.c.l.b16 %v419
    %v889 = vunpack.c.l.b16 %v420
    %v890 = vunpack.c.l.b16 %v421
    %v891 = vunpack.c.l.b16 %v422
    %v892 = vunpack.c.l.b16 %v423
    %v893 = vunpack.c.l.b16 %v424
    %v894 = vunpack.c.l.b16 %v425
    %v895 = vunpack.c.l.b16 %v426
    %v896 = vunpack.c.l.b16 %v427
    %v897 = vunpack.c.l.b16 %v428
    %v898 = vunpack.c.l.b16 %v429
    %v899 = vunpack.c.l.b16 %v430
    %v900 = vunpack.c.l.b16 %v431
    %v901 = vunpack.c.l.b16 %v432
    %v902 = vunpack.c.l.b16 %v433
    %v903 = vunpack.c.l.b16 %v434
    %v904 = vunpack.c.l.b16 %v435
    %v905 = vunpack.c.l.b16 %v436
    %v906 = vunpack.c.l.b16 %v437
    %v907 = vunpack.c.l.b16 %v438
    %v908 = vunpack.c.l.b16 %v439
    %v909 = vunpack.c.l.b16 %v440
    %v910 = vunpack.c.l.b16 %v441
    %v911 = vunpack.c.l.b16 %v442
    %v912 = vunpack.c.l.b16 %v443
    %v913 = vunpack.c.l.b16 %v444
    %v914 = vunpack.c.l.b16 %v445
    %v915 = vunpack.c.l.b16 %v446
    %v916 = vunpack.c.l.b16 %v447
    %v917 = vunpack.c.l.b16 %v448
    %v918 = vunpack.c.l.b16 %v449
    %v919 = vunpack.c.l.b16 %v450
    %v920 = vunpack.c.l.b16 %v451
    %v921 = vunpack.c.l.b16 %v452
    %v922 = vunpack.c.l.b16 %v453
    %v923 = vunpack.c.l.b16 %v454
    %v924 = vunpack.c.l.b16 %v455
    %v925 = vunpack.c.l.b16 %v456
    %v926 = vunpack.c.l.b16 %v457
    %v927 = vunpack.c.l.b16 %v458
    %v928 = vunpack.c.l.b16 %v459
    %v929 = vunpack.c.l.b16 %v460
    %v930 = vunpack.c.l.b16 %v461
    %v931 = vunpack.c.l.b16 %v462
    %v932 = vpack.c.b16 %v869, %v868
    %v933 = vpack.c.b16 %v871, %v870
    %v934 = vpack.c.b16 %v873, %v872
    %v935 = vpack.c.b16 %v875, %v874
    %v936 = vpack.c.b16 %v877, %v876
    %v937 = vpack.c.b16 %v879, %v878
    %v938 = vpack.c.b16 %v881, %v880
    %v939 = vpack.c.b16 %v883, %v882
    %v940 = vpack.c.b16 %v885, %v884
    %v941 = vpack.c.b16 %v887, %v886
    %v942 = vpack.c.b16 %v889, %v888
    %v943 = vpack.c.b16 %v891, %v890
    %v944 = vpack.c.b16 %v893, %v892
    %v945 = vpack.c.b16 %v895, %v894
    %v946 = vpack.c.b16 %v897, %v896
    %v947 = vpack.c.b16 %v899, %v898
    %v948 = vpack.c.b16 %v901, %v900
    %v949 = vpack.c.b16 %v903, %v902
    %v950 = vpack.c.b16 %v905, %v904
    %v951 = vpack.c.b16 %v907, %v906
    %v952 = vpack.c.b16 %v909, %v908
    %v953 = vpack.c.b16 %v911, %v910
    %v954 = vpack.c.b16 %v913, %v912
    %v955 = vpack.c.b16 %v915, %v914
    %v956 = vpack.c.b16 %v917, %v916
    %v957 = vpack.c.b16 %v919, %v918
    %v958 = vpack.c.b16 %v921, %v920
    %v959 = vpack.c.b16 %v923, %v922
    %v960 = vpack.c.b16 %v925, %v924
    %v961 = vpack.c.b16 %v927, %v926
    %v962 = vpack.c.b16 %v929, %v928
    %v963 = vpack.c.b16 %v931, %v930
    %996 = vmatprep.subr.bf16.mxu0 0
    %997 = vmatpush1.bf16.msra.mxu0 %v932
    %998 = vmatprep.subr.bf16.mxu0 0
    %999 = vmatpush1.bf16.msra.mxu0 %v933
    %1000 = vmatprep.subr.bf16.mxu0 0
    %1001 = vmatpush1.bf16.msra.mxu0 %v934
    %1002 = vmatprep.subr.bf16.mxu0 0
    %1003 = vmatpush1.bf16.msra.mxu0 %v935
    %1004 = vmatprep.subr.bf16.mxu0 0
    %1005 = vmatpush1.bf16.msra.mxu0 %v936
    %1006 = vmatprep.subr.bf16.mxu0 0
    %1007 = vmatpush1.bf16.msra.mxu0 %v937
    %1008 = vmatprep.subr.bf16.mxu0 0
    %1009 = vmatpush1.bf16.msra.mxu0 %v938
    %1010 = vmatprep.subr.bf16.mxu0 0
    %1011 = vmatpush1.bf16.msra.mxu0 %v939
    %1012 = vmatprep.subr.bf16.mxu0 0
    %1013 = vmatpush1.bf16.msra.mxu0 %v940
    %1014 = vmatprep.subr.bf16.mxu0 0
    %1015 = vmatpush1.bf16.msra.mxu0 %v941
    %1016 = vmatprep.subr.bf16.mxu0 0
    %1017 = vmatpush1.bf16.msra.mxu0 %v942
    %1018 = vmatprep.subr.bf16.mxu0 0
    %1019 = vmatpush1.bf16.msra.mxu0 %v943
    %1020 = vmatprep.subr.bf16.mxu0 0
    %1021 = vmatpush1.bf16.msra.mxu0 %v944
    %1022 = vmatprep.subr.bf16.mxu0 0
    %1023 = vmatpush1.bf16.msra.mxu0 %v945
    %1024 = vmatprep.subr.bf16.mxu0 0
    %1025 = vmatpush1.bf16.msra.mxu0 %v946
    %1026 = vmatprep.subr.bf16.mxu0 0
    %1027 = vmatpush1.bf16.msra.mxu0 %v947
    %1028 = vmatprep.mubr.bf16.mxu0 %v396
    %1029 = vmatmul.mubr.bf16.gmra.mrb[0].mxu0 %v395
    %v1030 = vpop.f32.mrb[0].mxu0
    %v1031 = vadd.f32 %v799, %v1030
    %v1032 = vpop.f32.mrb[0].mxu0
    %v1033 = vpop.f32.mrb[0].mxu0
    %v1034 = vpop.f32.mrb[0].mxu0
    %1035 = vdwg.mxu0
    %1036 = vmatprep.subr.bf16.mxu0 0
    %1037 = vmatpush1.bf16.msra.mxu0 %v948
    %1038 = vmatprep.subr.bf16.mxu0 0
    %1039 = vmatpush1.bf16.msra.mxu0 %v949
    %1040 = vmatprep.subr.bf16.mxu0 0
    %1041 = vmatpush1.bf16.msra.mxu0 %v950
    %1042 = vmatprep.subr.bf16.mxu0 0
    %1043 = vmatpush1.bf16.msra.mxu0 %v951
    %1044 = vmatprep.subr.bf16.mxu0 0
    %1045 = vmatpush1.bf16.msra.mxu0 %v952
    %1046 = vmatprep.subr.bf16.mxu0 0
    %1047 = vmatpush1.bf16.msra.mxu0 %v953
    %1048 = vmatprep.subr.bf16.mxu0 0
    %1049 = vmatpush1.bf16.msra.mxu0 %v954
    %1050 = vmatprep.subr.bf16.mxu0 0
    %1051 = vmatpush1.bf16.msra.mxu0 %v955
    %1052 = vmatprep.subr.bf16.mxu0 0
    %1053 = vmatpush1.bf16.msra.mxu0 %v956
    %1054 = vmatprep.subr.bf16.mxu0 0
    %1055 = vmatpush1.bf16.msra.mxu0 %v957
    %1056 = vmatprep.subr.bf16.mxu0 0
    %1057 = vmatpush1.bf16.msra.mxu0 %v958
    %1058 = vmatprep.subr.bf16.mxu0 0
    %1059 = vmatpush1.bf16.msra.mxu0 %v959
    %1060 = vmatprep.subr.bf16.mxu0 0
    %1061 = vmatpush1.bf16.msra.mxu0 %v960
    %1062 = vmatprep.subr.bf16.mxu0 0
    %1063 = vmatpush1.bf16.msra.mxu0 %v961
    %1064 = vmatprep.subr.bf16.mxu0 0
    %1065 = vmatpush1.bf16.msra.mxu0 %v962
    %1066 = vmatprep.subr.bf16.mxu0 0
    %1067 = vmatpush1.bf16.msra.mxu0 %v963
    %1068 = vmatprep.mubr.bf16.mxu0 %v398
    %1069 = vmatmul.mubr.bf16.gmra.mrb[0].mxu0 %v397
    %v1070 = vpop.f32.mrb[0].mxu0
    %v1071 = vadd.f32 %v1031, %v1070
    %v1072 = vpop.f32.mrb[0].mxu0
    %v1073 = vpop.f32.mrb[0].mxu0
    %v1074 = vpop.f32.mrb[0].mxu0
    %1075 = vdwg.mxu0
    %v1076 = vpack.c.bf16 %v214, %v214
    %v1077 = vpack.c.bf16 %v216, %v216
    %v1078 = vpack.c.bf16 %v327, %v327
    %v1079 = vpack.c.bf16 %v329, %v329
    %s1080 = scalar_lea.vmem [#allocation4], 512
    %v1081 = vld [vmem:[%s1080] sm:$0xf]
    %v1082 = vld [vmem:[%s1080 + $0x4] sm:$0xf]
    %v1083 = vld [vmem:[%s1080 + $0x8] sm:$0xf]
    %v1084 = vld [vmem:[%s1080 + $0xc] sm:$0xf]
    %v1085 = vld [vmem:[%s1080 + $0x10] sm:$0xf]
    %v1086 = vld [vmem:[%s1080 + $0x14] sm:$0xf]
    %v1087 = vld [vmem:[%s1080 + $0x18] sm:$0xf]
    %v1088 = vld [vmem:[%s1080 + $0x1c] sm:$0xf]
    %v1089 = vld [vmem:[%s1080 + $0x20] sm:$0xf]
    %v1090 = vld [vmem:[%s1080 + $0x24] sm:$0xf]
    %v1091 = vld [vmem:[%s1080 + $0x28] sm:$0xf]
    %v1092 = vld [vmem:[%s1080 + $0x2c] sm:$0xf]
    %v1093 = vld [vmem:[%s1080 + $0x30] sm:$0xf]
    %v1094 = vld [vmem:[%s1080 + $0x34] sm:$0xf]
    %v1095 = vld [vmem:[%s1080 + $0x38] sm:$0xf]
    %v1096 = vld [vmem:[%s1080 + $0x3c] sm:$0xf]
    %v1097 = vld [vmem:[%s1080 + $0x40] sm:$0xf]
    %v1098 = vld [vmem:[%s1080 + $0x44] sm:$0xf]
    %v1099 = vld [vmem:[%s1080 + $0x48] sm:$0xf]
    %v1100 = vld [vmem:[%s1080 + $0x4c] sm:$0xf]
    %v1101 = vld [vmem:[%s1080 + $0x50] sm:$0xf]
    %v1102 = vld [vmem:[%s1080 + $0x54] sm:$0xf]
    %v1103 = vld [vmem:[%s1080 + $0x58] sm:$0xf]
    %v1104 = vld [vmem:[%s1080 + $0x5c] sm:$0xf]
    %v1105 = vld [vmem:[%s1080 + $0x60] sm:$0xf]
    %v1106 = vld [vmem:[%s1080 + $0x64] sm:$0xf]
    %v1107 = vld [vmem:[%s1080 + $0x68] sm:$0xf]
    %v1108 = vld [vmem:[%s1080 + $0x6c] sm:$0xf]
    %v1109 = vld [vmem:[%s1080 + $0x70] sm:$0xf]
    %v1110 = vld [vmem:[%s1080 + $0x74] sm:$0xf]
    %v1111 = vld [vmem:[%s1080 + $0x78] sm:$0xf]
    %v1112 = vld [vmem:[%s1080 + $0x7c] sm:$0xf]
    %v1113 = vld [vmem:[%s1080 + $0x80] sm:$0xf]
    %v1114 = vld [vmem:[%s1080 + $0x84] sm:$0xf]
    %v1115 = vld [vmem:[%s1080 + $0x88] sm:$0xf]
    %v1116 = vld [vmem:[%s1080 + $0x8c] sm:$0xf]
    %v1117 = vld [vmem:[%s1080 + $0x90] sm:$0xf]
    %v1118 = vld [vmem:[%s1080 + $0x94] sm:$0xf]
    %v1119 = vld [vmem:[%s1080 + $0x98] sm:$0xf]
    %v1120 = vld [vmem:[%s1080 + $0x9c] sm:$0xf]
    %v1121 = vld [vmem:[%s1080 + $0xa0] sm:$0xf]
    %v1122 = vld [vmem:[%s1080 + $0xa4] sm:$0xf]
    %v1123 = vld [vmem:[%s1080 + $0xa8] sm:$0xf]
    %v1124 = vld [vmem:[%s1080 + $0xac] sm:$0xf]
    %v1125 = vld [vmem:[%s1080 + $0xb0] sm:$0xf]
    %v1126 = vld [vmem:[%s1080 + $0xb4] sm:$0xf]
    %v1127 = vld [vmem:[%s1080 + $0xb8] sm:$0xf]
    %v1128 = vld [vmem:[%s1080 + $0xbc] sm:$0xf]
    %v1129 = vld [vmem:[%s1080 + $0xc0] sm:$0xf]
    %v1130 = vld [vmem:[%s1080 + $0xc4] sm:$0xf]
    %v1131 = vld [vmem:[%s1080 + $0xc8] sm:$0xf]
    %v1132 = vld [vmem:[%s1080 + $0xcc] sm:$0xf]
    %v1133 = vld [vmem:[%s1080 + $0xd0] sm:$0xf]
    %v1134 = vld [vmem:[%s1080 + $0xd4] sm:$0xf]
    %v1135 = vld [vmem:[%s1080 + $0xd8] sm:$0xf]
    %v1136 = vld [vmem:[%s1080 + $0xdc] sm:$0xf]
    %v1137 = vld [vmem:[%s1080 + $0xe0] sm:$0xf]
    %v1138 = vld [vmem:[%s1080 + $0xe4] sm:$0xf]
    %v1139 = vld [vmem:[%s1080 + $0xe8] sm:$0xf]
    %v1140 = vld [vmem:[%s1080 + $0xec] sm:$0xf]
    %v1141 = vld [vmem:[%s1080 + $0xf0] sm:$0xf]
    %v1142 = vld [vmem:[%s1080 + $0xf4] sm:$0xf]
    %v1143 = vld [vmem:[%s1080 + $0xf8] sm:$0xf]
    %v1144 = vld [vmem:[%s1080 + $0xfc] sm:$0xf]
    %v1209 = vunpack.c.l.b16 %v1081
    %v1210 = vunpack.c.l.b16 %v1082
    %v1211 = vunpack.c.l.b16 %v1083
    %v1212 = vunpack.c.l.b16 %v1084
    %v1213 = vunpack.c.l.b16 %v1085
    %v1214 = vunpack.c.l.b16 %v1086
    %v1215 = vunpack.c.l.b16 %v1087
    %v1216 = vunpack.c.l.b16 %v1088
    %v1217 = vunpack.c.l.b16 %v1089
    %v1218 = vunpack.c.l.b16 %v1090
    %v1219 = vunpack.c.l.b16 %v1091
    %v1220 = vunpack.c.l.b16 %v1092
    %v1221 = vunpack.c.l.b16 %v1093
    %v1222 = vunpack.c.l.b16 %v1094
    %v1223 = vunpack.c.l.b16 %v1095
    %v1224 = vunpack.c.l.b16 %v1096
    %v1225 = vunpack.c.l.b16 %v1097
    %v1226 = vunpack.c.l.b16 %v1098
    %v1227 = vunpack.c.l.b16 %v1099
    %v1228 = vunpack.c.l.b16 %v1100
    %v1229 = vunpack.c.l.b16 %v1101
    %v1230 = vunpack.c.l.b16 %v1102
    %v1231 = vunpack.c.l.b16 %v1103
    %v1232 = vunpack.c.l.b16 %v1104
    %v1233 = vunpack.c.l.b16 %v1105
    %v1234 = vunpack.c.l.b16 %v1106
    %v1235 = vunpack.c.l.b16 %v1107
    %v1236 = vunpack.c.l.b16 %v1108
    %v1237 = vunpack.c.l.b16 %v1109
    %v1238 = vunpack.c.l.b16 %v1110
    %v1239 = vunpack.c.l.b16 %v1111
    %v1240 = vunpack.c.l.b16 %v1112
    %v1241 = vunpack.c.l.b16 %v1113
    %v1242 = vunpack.c.l.b16 %v1114
    %v1243 = vunpack.c.l.b16 %v1115
    %v1244 = vunpack.c.l.b16 %v1116
    %v1245 = vunpack.c.l.b16 %v1117
    %v1246 = vunpack.c.l.b16 %v1118
    %v1247 = vunpack.c.l.b16 %v1119
    %v1248 = vunpack.c.l.b16 %v1120
    %v1249 = vunpack.c.l.b16 %v1121
    %v1250 = vunpack.c.l.b16 %v1122
    %v1251 = vunpack.c.l.b16 %v1123
    %v1252 = vunpack.c.l.b16 %v1124
    %v1253 = vunpack.c.l.b16 %v1125
    %v1254 = vunpack.c.l.b16 %v1126
    %v1255 = vunpack.c.l.b16 %v1127
    %v1256 = vunpack.c.l.b16 %v1128
    %v1257 = vunpack.c.l.b16 %v1129
    %v1258 = vunpack.c.l.b16 %v1130
    %v1259 = vunpack.c.l.b16 %v1131
    %v1260 = vunpack.c.l.b16 %v1132
    %v1261 = vunpack.c.l.b16 %v1133
    %v1262 = vunpack.c.l.b16 %v1134
    %v1263 = vunpack.c.l.b16 %v1135
    %v1264 = vunpack.c.l.b16 %v1136
    %v1265 = vunpack.c.l.b16 %v1137
    %v1266 = vunpack.c.l.b16 %v1138
    %v1267 = vunpack.c.l.b16 %v1139
    %v1268 = vunpack.c.l.b16 %v1140
    %v1269 = vunpack.c.l.b16 %v1141
    %v1270 = vunpack.c.l.b16 %v1142
    %v1271 = vunpack.c.l.b16 %v1143
    %v1272 = vunpack.c.l.b16 %v1144
    %v1273 = vpack.c.b16 %v1210, %v1209
    %v1274 = vpack.c.b16 %v1212, %v1211
    %v1275 = vpack.c.b16 %v1214, %v1213
    %v1276 = vpack.c.b16 %v1216, %v1215
    %v1277 = vpack.c.b16 %v1218, %v1217
    %v1278 = vpack.c.b16 %v1220, %v1219
    %v1279 = vpack.c.b16 %v1222, %v1221
    %v1280 = vpack.c.b16 %v1224, %v1223
    %v1281 = vpack.c.b16 %v1226, %v1225
    %v1282 = vpack.c.b16 %v1228, %v1227
    %v1283 = vpack.c.b16 %v1230, %v1229
    %v1284 = vpack.c.b16 %v1232, %v1231
    %v1285 = vpack.c.b16 %v1234, %v1233
    %v1286 = vpack.c.b16 %v1236, %v1235
    %v1287 = vpack.c.b16 %v1238, %v1237
    %v1288 = vpack.c.b16 %v1240, %v1239
    %v1289 = vpack.c.b16 %v1242, %v1241
    %v1290 = vpack.c.b16 %v1244, %v1243
    %v1291 = vpack.c.b16 %v1246, %v1245
    %v1292 = vpack.c.b16 %v1248, %v1247
    %v1293 = vpack.c.b16 %v1250, %v1249
    %v1294 = vpack.c.b16 %v1252, %v1251
    %v1295 = vpack.c.b16 %v1254, %v1253
    %v1296 = vpack.c.b16 %v1256, %v1255
    %v1297 = vpack.c.b16 %v1258, %v1257
    %v1298 = vpack.c.b16 %v1260, %v1259
    %v1299 = vpack.c.b16 %v1262, %v1261
    %v1300 = vpack.c.b16 %v1264, %v1263
    %v1301 = vpack.c.b16 %v1266, %v1265
    %v1302 = vpack.c.b16 %v1268, %v1267
    %v1303 = vpack.c.b16 %v1270, %v1269
    %v1304 = vpack.c.b16 %v1272, %v1271
    %1337 = vmatprep.subr.bf16.mxu0 0
    %1338 = vmatpush1.bf16.msra.mxu0 %v1273
    %1339 = vmatprep.subr.bf16.mxu0 0
    %1340 = vmatpush1.bf16.msra.mxu0 %v1274
    %1341 = vmatprep.subr.bf16.mxu0 0
    %1342 = vmatpush1.bf16.msra.mxu0 %v1275
    %1343 = vmatprep.subr.bf16.mxu0 0
    %1344 = vmatpush1.bf16.msra.mxu0 %v1276
    %1345 = vmatprep.subr.bf16.mxu0 0
    %1346 = vmatpush1.bf16.msra.mxu0 %v1277
    %1347 = vmatprep.subr.bf16.mxu0 0
    %1348 = vmatpush1.bf16.msra.mxu0 %v1278
    %1349 = vmatprep.subr.bf16.mxu0 0
    %1350 = vmatpush1.bf16.msra.mxu0 %v1279
    %1351 = vmatprep.subr.bf16.mxu0 0
    %1352 = vmatpush1.bf16.msra.mxu0 %v1280
    %1353 = vmatprep.subr.bf16.mxu0 0
    %1354 = vmatpush1.bf16.msra.mxu0 %v1281
    %1355 = vmatprep.subr.bf16.mxu0 0
    %1356 = vmatpush1.bf16.msra.mxu0 %v1282
    %1357 = vmatprep.subr.bf16.mxu0 0
    %1358 = vmatpush1.bf16.msra.mxu0 %v1283
    %1359 = vmatprep.subr.bf16.mxu0 0
    %1360 = vmatpush1.bf16.msra.mxu0 %v1284
    %1361 = vmatprep.subr.bf16.mxu0 0
    %1362 = vmatpush1.bf16.msra.mxu0 %v1285
    %1363 = vmatprep.subr.bf16.mxu0 0
    %1364 = vmatpush1.bf16.msra.mxu0 %v1286
    %1365 = vmatprep.subr.bf16.mxu0 0
    %1366 = vmatpush1.bf16.msra.mxu0 %v1287
    %1367 = vmatprep.subr.bf16.mxu0 0
    %1368 = vmatpush1.bf16.msra.mxu0 %v1288
    %1369 = vmatprep.mubr.bf16.mxu0 %v1077
    %1370 = vmatmul.mubr.bf16.gmra.mrb[0].mxu0 %v1076
    %v1371 = vpop.f32.mrb[0].mxu0
    %v1372 = vadd.f32 0.0, %v1371
    %v1373 = vpop.f32.mrb[0].mxu0
    %v1374 = vpop.f32.mrb[0].mxu0
    %v1375 = vpop.f32.mrb[0].mxu0
    %1376 = vdwg.mxu0
    %1377 = vmatprep.subr.bf16.mxu0 0
    %1378 = vmatpush1.bf16.msra.mxu0 %v1289
    %1379 = vmatprep.subr.bf16.mxu0 0
    %1380 = vmatpush1.bf16.msra.mxu0 %v1290
    %1381 = vmatprep.subr.bf16.mxu0 0
    %1382 = vmatpush1.bf16.msra.mxu0 %v1291
    %1383 = vmatprep.subr.bf16.mxu0 0
    %1384 = vmatpush1.bf16.msra.mxu0 %v1292
    %1385 = vmatprep.subr.bf16.mxu0 0
    %1386 = vmatpush1.bf16.msra.mxu0 %v1293
    %1387 = vmatprep.subr.bf16.mxu0 0
    %1388 = vmatpush1.bf16.msra.mxu0 %v1294
    %1389 = vmatprep.subr.bf16.mxu0 0
    %1390 = vmatpush1.bf16.msra.mxu0 %v1295
    %1391 = vmatprep.subr.bf16.mxu0 0
    %1392 = vmatpush1.bf16.msra.mxu0 %v1296
    %1393 = vmatprep.subr.bf16.mxu0 0
    %1394 = vmatpush1.bf16.msra.mxu0 %v1297
    %1395 = vmatprep.subr.bf16.mxu0 0
    %1396 = vmatpush1.bf16.msra.mxu0 %v1298
    %1397 = vmatprep.subr.bf16.mxu0 0
    %1398 = vmatpush1.bf16.msra.mxu0 %v1299
    %1399 = vmatprep.subr.bf16.mxu0 0
    %1400 = vmatpush1.bf16.msra.mxu0 %v1300
    %1401 = vmatprep.subr.bf16.mxu0 0
    %1402 = vmatpush1.bf16.msra.mxu0 %v1301
    %1403 = vmatprep.subr.bf16.mxu0 0
    %1404 = vmatpush1.bf16.msra.mxu0 %v1302
    %1405 = vmatprep.subr.bf16.mxu0 0
    %1406 = vmatpush1.bf16.msra.mxu0 %v1303
    %1407 = vmatprep.subr.bf16.mxu0 0
    %1408 = vmatpush1.bf16.msra.mxu0 %v1304
    %1409 = vmatprep.mubr.bf16.mxu0 %v1079
    %1410 = vmatmul.mubr.bf16.gmra.mrb[0].mxu0 %v1078
    %v1411 = vpop.f32.mrb[0].mxu0
    %v1412 = vadd.f32 %v1372, %v1411
    %v1413 = vpop.f32.mrb[0].mxu0
    %v1414 = vpop.f32.mrb[0].mxu0
    %v1415 = vpop.f32.mrb[0].mxu0
    %1416 = vdwg.mxu0
    %v1417 = vadd.f32 %v1071, %v1412
    %v1418 = vpack.c.bf16 %v218, %v218
    %v1419 = vpack.c.bf16 %v220, %v220
    %v1420 = vpack.c.bf16 %v331, %v331
    %v1421 = vpack.c.bf16 %v333, %v333
    %s1422 = scalar_lea.vmem [#allocation4], 768
    %v1423 = vld [vmem:[%s1422] sm:$0xf]
    %v1424 = vld [vmem:[%s1422 + $0x4] sm:$0xf]
    %v1425 = vld [vmem:[%s1422 + $0x8] sm:$0xf]
    %v1426 = vld [vmem:[%s1422 + $0xc] sm:$0xf]
    %v1427 = vld [vmem:[%s1422 + $0x10] sm:$0xf]
    %v1428 = vld [vmem:[%s1422 + $0x14] sm:$0xf]
    %v1429 = vld [vmem:[%s1422 + $0x18] sm:$0xf]
    %v1430 = vld [vmem:[%s1422 + $0x1c] sm:$0xf]
    %v1431 = vld [vmem:[%s1422 + $0x20] sm:$0xf]
    %v1432 = vld [vmem:[%s1422 + $0x24] sm:$0xf]
    %v1433 = vld [vmem:[%s1422 + $0x28] sm:$0xf]
    %v1434 = vld [vmem:[%s1422 + $0x2c] sm:$0xf]
    %v1435 = vld [vmem:[%s1422 + $0x30] sm:$0xf]
    %v1436 = vld [vmem:[%s1422 + $0x34] sm:$0xf]
    %v1437 = vld [vmem:[%s1422 + $0x38] sm:$0xf]
    %v1438 = vld [vmem:[%s1422 + $0x3c] sm:$0xf]
    %v1439 = vld [vmem:[%s1422 + $0x40] sm:$0xf]
    %v1440 = vld [vmem:[%s1422 + $0x44] sm:$0xf]
    %v1441 = vld [vmem:[%s1422 + $0x48] sm:$0xf]
    %v1442 = vld [vmem:[%s1422 + $0x4c] sm:$0xf]
    %v1443 = vld [vmem:[%s1422 + $0x50] sm:$0xf]
    %v1444 = vld [vmem:[%s1422 + $0x54] sm:$0xf]
    %v1445 = vld [vmem:[%s1422 + $0x58] sm:$0xf]
    %v1446 = vld [vmem:[%s1422 + $0x5c] sm:$0xf]
    %v1447 = vld [vmem:[%s1422 + $0x60] sm:$0xf]
    %v1448 = vld [vmem:[%s1422 + $0x64] sm:$0xf]
    %v1449 = vld [vmem:[%s1422 + $0x68] sm:$0xf]
    %v1450 = vld [vmem:[%s1422 + $0x6c] sm:$0xf]
    %v1451 = vld [vmem:[%s1422 + $0x70] sm:$0xf]
    %v1452 = vld [vmem:[%s1422 + $0x74] sm:$0xf]
    %v1453 = vld [vmem:[%s1422 + $0x78] sm:$0xf]
    %v1454 = vld [vmem:[%s1422 + $0x7c] sm:$0xf]
    %v1455 = vld [vmem:[%s1422 + $0x80] sm:$0xf]
    %v1456 = vld [vmem:[%s1422 + $0x84] sm:$0xf]
    %v1457 = vld [vmem:[%s1422 + $0x88] sm:$0xf]
    %v1458 = vld [vmem:[%s1422 + $0x8c] sm:$0xf]
    %v1459 = vld [vmem:[%s1422 + $0x90] sm:$0xf]
    %v1460 = vld [vmem:[%s1422 + $0x94] sm:$0xf]
    %v1461 = vld [vmem:[%s1422 + $0x98] sm:$0xf]
    %v1462 = vld [vmem:[%s1422 + $0x9c] sm:$0xf]
    %v1463 = vld [vmem:[%s1422 + $0xa0] sm:$0xf]
    %v1464 = vld [vmem:[%s1422 + $0xa4] sm:$0xf]
    %v1465 = vld [vmem:[%s1422 + $0xa8] sm:$0xf]
    %v1466 = vld [vmem:[%s1422 + $0xac] sm:$0xf]
    %v1467 = vld [vmem:[%s1422 + $0xb0] sm:$0xf]
    %v1468 = vld [vmem:[%s1422 + $0xb4] sm:$0xf]
    %v1469 = vld [vmem:[%s1422 + $0xb8] sm:$0xf]
    %v1470 = vld [vmem:[%s1422 + $0xbc] sm:$0xf]
    %v1471 = vld [vmem:[%s1422 + $0xc0] sm:$0xf]
    %v1472 = vld [vmem:[%s1422 + $0xc4] sm:$0xf]
    %v1473 = vld [vmem:[%s1422 + $0xc8] sm:$0xf]
    %v1474 = vld [vmem:[%s1422 + $0xcc] sm:$0xf]
    %v1475 = vld [vmem:[%s1422 + $0xd0] sm:$0xf]
    %v1476 = vld [vmem:[%s1422 + $0xd4] sm:$0xf]
    %v1477 = vld [vmem:[%s1422 + $0xd8] sm:$0xf]
    %v1478 = vld [vmem:[%s1422 + $0xdc] sm:$0xf]
    %v1479 = vld [vmem:[%s1422 + $0xe0] sm:$0xf]
    %v1480 = vld [vmem:[%s1422 + $0xe4] sm:$0xf]
    %v1481 = vld [vmem:[%s1422 + $0xe8] sm:$0xf]
    %v1482 = vld [vmem:[%s1422 + $0xec] sm:$0xf]
    %v1483 = vld [vmem:[%s1422 + $0xf0] sm:$0xf]
    %v1484 = vld [vmem:[%s1422 + $0xf4] sm:$0xf]
    %v1485 = vld [vmem:[%s1422 + $0xf8] sm:$0xf]
    %v1486 = vld [vmem:[%s1422 + $0xfc] sm:$0xf]
    %v1551 = vunpack.c.l.b16 %v1423
    %v1552 = vunpack.c.l.b16 %v1424
    %v1553 = vunpack.c.l.b16 %v1425
    %v1554 = vunpack.c.l.b16 %v1426
    %v1555 = vunpack.c.l.b16 %v1427
    %v1556 = vunpack.c.l.b16 %v1428
    %v1557 = vunpack.c.l.b16 %v1429
    %v1558 = vunpack.c.l.b16 %v1430
    %v1559 = vunpack.c.l.b16 %v1431
    %v1560 = vunpack.c.l.b16 %v1432
    %v1561 = vunpack.c.l.b16 %v1433
    %v1562 = vunpack.c.l.b16 %v1434
    %v1563 = vunpack.c.l.b16 %v1435
    %v1564 = vunpack.c.l.b16 %v1436
    %v1565 = vunpack.c.l.b16 %v1437
    %v1566 = vunpack.c.l.b16 %v1438
    %v1567 = vunpack.c.l.b16 %v1439
    %v1568 = vunpack.c.l.b16 %v1440
    %v1569 = vunpack.c.l.b16 %v1441
    %v1570 = vunpack.c.l.b16 %v1442
    %v1571 = vunpack.c.l.b16 %v1443
    %v1572 = vunpack.c.l.b16 %v1444
    %v1573 = vunpack.c.l.b16 %v1445
    %v1574 = vunpack.c.l.b16 %v1446
    %v1575 = vunpack.c.l.b16 %v1447
    %v1576 = vunpack.c.l.b16 %v1448
    %v1577 = vunpack.c.l.b16 %v1449
    %v1578 = vunpack.c.l.b16 %v1450
    %v1579 = vunpack.c.l.b16 %v1451
    %v1580 = vunpack.c.l.b16 %v1452
    %v1581 = vunpack.c.l.b16 %v1453
    %v1582 = vunpack.c.l.b16 %v1454
    %v1583 = vunpack.c.l.b16 %v1455
    %v1584 = vunpack.c.l.b16 %v1456
    %v1585 = vunpack.c.l.b16 %v1457
    %v1586 = vunpack.c.l.b16 %v1458
    %v1587 = vunpack.c.l.b16 %v1459
    %v1588 = vunpack.c.l.b16 %v1460
    %v1589 = vunpack.c.l.b16 %v1461
    %v1590 = vunpack.c.l.b16 %v1462
    %v1591 = vunpack.c.l.b16 %v1463
    %v1592 = vunpack.c.l.b16 %v1464
    %v1593 = vunpack.c.l.b16 %v1465
    %v1594 = vunpack.c.l.b16 %v1466
    %v1595 = vunpack.c.l.b16 %v1467
    %v1596 = vunpack.c.l.b16 %v1468
    %v1597 = vunpack.c.l.b16 %v1469
    %v1598 = vunpack.c.l.b16 %v1470
    %v1599 = vunpack.c.l.b16 %v1471
    %v1600 = vunpack.c.l.b16 %v1472
    %v1601 = vunpack.c.l.b16 %v1473
    %v1602 = vunpack.c.l.b16 %v1474
    %v1603 = vunpack.c.l.b16 %v1475
    %v1604 = vunpack.c.l.b16 %v1476
    %v1605 = vunpack.c.l.b16 %v1477
    %v1606 = vunpack.c.l.b16 %v1478
    %v1607 = vunpack.c.l.b16 %v1479
    %v1608 = vunpack.c.l.b16 %v1480
    %v1609 = vunpack.c.l.b16 %v1481
    %v1610 = vunpack.c.l.b16 %v1482
    %v1611 = vunpack.c.l.b16 %v1483
    %v1612 = vunpack.c.l.b16 %v1484
    %v1613 = vunpack.c.l.b16 %v1485
    %v1614 = vunpack.c.l.b16 %v1486
    %v1615 = vpack.c.b16 %v1552, %v1551
    %v1616 = vpack.c.b16 %v1554, %v1553
    %v1617 = vpack.c.b16 %v1556, %v1555
    %v1618 = vpack.c.b16 %v1558, %v1557
    %v1619 = vpack.c.b16 %v1560, %v1559
    %v1620 = vpack.c.b16 %v1562, %v1561
    %v1621 = vpack.c.b16 %v1564, %v1563
    %v1622 = vpack.c.b16 %v1566, %v1565
    %v1623 = vpack.c.b16 %v1568, %v1567
    %v1624 = vpack.c.b16 %v1570, %v1569
    %v1625 = vpack.c.b16 %v1572, %v1571
    %v1626 = vpack.c.b16 %v1574, %v1573
    %v1627 = vpack.c.b16 %v1576, %v1575
    %v1628 = vpack.c.b16 %v1578, %v1577
    %v1629 = vpack.c.b16 %v1580, %v1579
    %v1630 = vpack.c.b16 %v1582, %v1581
    %v1631 = vpack.c.b16 %v1584, %v1583
    %v1632 = vpack.c.b16 %v1586, %v1585
    %v1633 = vpack.c.b16 %v1588, %v1587
    %v1634 = vpack.c.b16 %v1590, %v1589
    %v1635 = vpack.c.b16 %v1592, %v1591
    %v1636 = vpack.c.b16 %v1594, %v1593
    %v1637 = vpack.c.b16 %v1596, %v1595
    %v1638 = vpack.c.b16 %v1598, %v1597
    %v1639 = vpack.c.b16 %v1600, %v1599
    %v1640 = vpack.c.b16 %v1602, %v1601
    %v1641 = vpack.c.b16 %v1604, %v1603
    %v1642 = vpack.c.b16 %v1606, %v1605
    %v1643 = vpack.c.b16 %v1608, %v1607
    %v1644 = vpack.c.b16 %v1610, %v1609
    %v1645 = vpack.c.b16 %v1612, %v1611
    %v1646 = vpack.c.b16 %v1614, %v1613
    %1679 = vmatprep.subr.bf16.mxu0 0
    %1680 = vmatpush1.bf16.msra.mxu0 %v1615
    %1681 = vmatprep.subr.bf16.mxu0 0
    %1682 = vmatpush1.bf16.msra.mxu0 %v1616
    %1683 = vmatprep.subr.bf16.mxu0 0
    %1684 = vmatpush1.bf16.msra.mxu0 %v1617
    %1685 = vmatprep.subr.bf16.mxu0 0
    %1686 = vmatpush1.bf16.msra.mxu0 %v1618
    %1687 = vmatprep.subr.bf16.mxu0 0
    %1688 = vmatpush1.bf16.msra.mxu0 %v1619
    %1689 = vmatprep.subr.bf16.mxu0 0
    %1690 = vmatpush1.bf16.msra.mxu0 %v1620
    %1691 = vmatprep.subr.bf16.mxu0 0
    %1692 = vmatpush1.bf16.msra.mxu0 %v1621
    %1693 = vmatprep.subr.bf16.mxu0 0
    %1694 = vmatpush1.bf16.msra.mxu0 %v1622
    %1695 = vmatprep.subr.bf16.mxu0 0
    %1696 = vmatpush1.bf16.msra.mxu0 %v1623
    %1697 = vmatprep.subr.bf16.mxu0 0
    %1698 = vmatpush1.bf16.msra.mxu0 %v1624
    %1699 = vmatprep.subr.bf16.mxu0 0
    %1700 = vmatpush1.bf16.msra.mxu0 %v1625
    %1701 = vmatprep.subr.bf16.mxu0 0
    %1702 = vmatpush1.bf16.msra.mxu0 %v1626
    %1703 = vmatprep.subr.bf16.mxu0 0
    %1704 = vmatpush1.bf16.msra.mxu0 %v1627
    %1705 = vmatprep.subr.bf16.mxu0 0
    %1706 = vmatpush1.bf16.msra.mxu0 %v1628
    %1707 = vmatprep.subr.bf16.mxu0 0
    %1708 = vmatpush1.bf16.msra.mxu0 %v1629
    %1709 = vmatprep.subr.bf16.mxu0 0
    %1710 = vmatpush1.bf16.msra.mxu0 %v1630
    %1711 = vmatprep.mubr.bf16.mxu0 %v1419
    %1712 = vmatmul.mubr.bf16.gmra.mrb[0].mxu0 %v1418
    %v1713 = vpop.f32.mrb[0].mxu0
    %v1714 = vadd.f32 0.0, %v1713
    %v1715 = vpop.f32.mrb[0].mxu0
    %v1716 = vpop.f32.mrb[0].mxu0
    %v1717 = vpop.f32.mrb[0].mxu0
    %1718 = vdwg.mxu0
    %1719 = vmatprep.subr.bf16.mxu0 0
    %1720 = vmatpush1.bf16.msra.mxu0 %v1631
    %1721 = vmatprep.subr.bf16.mxu0 0
    %1722 = vmatpush1.bf16.msra.mxu0 %v1632
    %1723 = vmatprep.subr.bf16.mxu0 0
    %1724 = vmatpush1.bf16.msra.mxu0 %v1633
    %1725 = vmatprep.subr.bf16.mxu0 0
    %1726 = vmatpush1.bf16.msra.mxu0 %v1634
    %1727 = vmatprep.subr.bf16.mxu0 0
    %1728 = vmatpush1.bf16.msra.mxu0 %v1635
    %1729 = vmatprep.subr.bf16.mxu0 0
    %1730 = vmatpush1.bf16.msra.mxu0 %v1636
    %1731 = vmatprep.subr.bf16.mxu0 0
    %1732 = vmatpush1.bf16.msra.mxu0 %v1637
    %1733 = vmatprep.subr.bf16.mxu0 0
    %1734 = vmatpush1.bf16.msra.mxu0 %v1638
    %1735 = vmatprep.subr.bf16.mxu0 0
    %1736 = vmatpush1.bf16.msra.mxu0 %v1639
    %1737 = vmatprep.subr.bf16.mxu0 0
    %1738 = vmatpush1.bf16.msra.mxu0 %v1640
    %1739 = vmatprep.subr.bf16.mxu0 0
    %1740 = vmatpush1.bf16.msra.mxu0 %v1641
    %1741 = vmatprep.subr.bf16.mxu0 0
    %1742 = vmatpush1.bf16.msra.mxu0 %v1642
    %1743 = vmatprep.subr.bf16.mxu0 0
    %1744 = vmatpush1.bf16.msra.mxu0 %v1643
    %1745 = vmatprep.subr.bf16.mxu0 0
    %1746 = vmatpush1.bf16.msra.mxu0 %v1644
    %1747 = vmatprep.subr.bf16.mxu0 0
    %1748 = vmatpush1.bf16.msra.mxu0 %v1645
    %1749 = vmatprep.subr.bf16.mxu0 0
    %1750 = vmatpush1.bf16.msra.mxu0 %v1646
    %1751 = vmatprep.mubr.bf16.mxu0 %v1421
    %1752 = vmatmul.mubr.bf16.gmra.mrb[0].mxu0 %v1420
    %v1753 = vpop.f32.mrb[0].mxu0
    %v1754 = vadd.f32 %v1714, %v1753
    %v1755 = vpop.f32.mrb[0].mxu0
    %v1756 = vpop.f32.mrb[0].mxu0
    %v1757 = vpop.f32.mrb[0].mxu0
    %1758 = vdwg.mxu0
    %v1759 = vadd.f32 %v1417, %v1754
    %v1760 = vpack.c.bf16 %v224, %v224
    %v1761 = vpack.c.bf16 %v226, %v226
    %v1762 = vpack.c.bf16 %v337, %v337
    %v1763 = vpack.c.bf16 %v339, %v339
    %s1764 = scalar_lea.vmem [#allocation4], 1024
    %v1765 = vld [vmem:[%s1764] sm:$0xf]
    %v1766 = vld [vmem:[%s1764 + $0x4] sm:$0xf]
    %v1767 = vld [vmem:[%s1764 + $0x8] sm:$0xf]
    %v1768 = vld [vmem:[%s1764 + $0xc] sm:$0xf]
    %v1769 = vld [vmem:[%s1764 + $0x10] sm:$0xf]
    %v1770 = vld [vmem:[%s1764 + $0x14] sm:$0xf]
    %v1771 = vld [vmem:[%s1764 + $0x18] sm:$0xf]
    %v1772 = vld [vmem:[%s1764 + $0x1c] sm:$0xf]
    %v1773 = vld [vmem:[%s1764 + $0x20] sm:$0xf]
    %v1774 = vld [vmem:[%s1764 + $0x24] sm:$0xf]
    %v1775 = vld [vmem:[%s1764 + $0x28] sm:$0xf]
    %v1776 = vld [vmem:[%s1764 + $0x2c] sm:$0xf]
    %v1777 = vld [vmem:[%s1764 + $0x30] sm:$0xf]
    %v1778 = vld [vmem:[%s1764 + $0x34] sm:$0xf]
    %v1779 = vld [vmem:[%s1764 + $0x38] sm:$0xf]
    %v1780 = vld [vmem:[%s1764 + $0x3c] sm:$0xf]
    %v1781 = vld [vmem:[%s1764 + $0x40] sm:$0xf]
    %v1782 = vld [vmem:[%s1764 + $0x44] sm:$0xf]
    %v1783 = vld [vmem:[%s1764 + $0x48] sm:$0xf]
    %v1784 = vld [vmem:[%s1764 + $0x4c] sm:$0xf]
    %v1785 = vld [vmem:[%s1764 + $0x50] sm:$0xf]
    %v1786 = vld [vmem:[%s1764 + $0x54] sm:$0xf]
    %v1787 = vld [vmem:[%s1764 + $0x58] sm:$0xf]
    %v1788 = vld [vmem:[%s1764 + $0x5c] sm:$0xf]
    %v1789 = vld [vmem:[%s1764 + $0x60] sm:$0xf]
    %v1790 = vld [vmem:[%s1764 + $0x64] sm:$0xf]
    %v1791 = vld [vmem:[%s1764 + $0x68] sm:$0xf]
    %v1792 = vld [vmem:[%s1764 + $0x6c] sm:$0xf]
    %v1793 = vld [vmem:[%s1764 + $0x70] sm:$0xf]
    %v1794 = vld [vmem:[%s1764 + $0x74] sm:$0xf]
    %v1795 = vld [vmem:[%s1764 + $0x78] sm:$0xf]
    %v1796 = vld [vmem:[%s1764 + $0x7c] sm:$0xf]
    %v1797 = vld [vmem:[%s1764 + $0x80] sm:$0xf]
    %v1798 = vld [vmem:[%s1764 + $0x84] sm:$0xf]
    %v1799 = vld [vmem:[%s1764 + $0x88] sm:$0xf]
    %v1800 = vld [vmem:[%s1764 + $0x8c] sm:$0xf]
    %v1801 = vld [vmem:[%s1764 + $0x90] sm:$0xf]
    %v1802 = vld [vmem:[%s1764 + $0x94] sm:$0xf]
    %v1803 = vld [vmem:[%s1764 + $0x98] sm:$0xf]
    %v1804 = vld [vmem:[%s1764 + $0x9c] sm:$0xf]
    %v1805 = vld [vmem:[%s1764 + $0xa0] sm:$0xf]
    %v1806 = vld [vmem:[%s1764 + $0xa4] sm:$0xf]
    %v1807 = vld [vmem:[%s1764 + $0xa8] sm:$0xf]
    %v1808 = vld [vmem:[%s1764 + $0xac] sm:$0xf]
    %v1809 = vld [vmem:[%s1764 + $0xb0] sm:$0xf]
    %v1810 = vld [vmem:[%s1764 + $0xb4] sm:$0xf]
    %v1811 = vld [vmem:[%s1764 + $0xb8] sm:$0xf]
    %v1812 = vld [vmem:[%s1764 + $0xbc] sm:$0xf]
    %v1813 = vld [vmem:[%s1764 + $0xc0] sm:$0xf]
    %v1814 = vld [vmem:[%s1764 + $0xc4] sm:$0xf]
    %v1815 = vld [vmem:[%s1764 + $0xc8] sm:$0xf]
    %v1816 = vld [vmem:[%s1764 + $0xcc] sm:$0xf]
    %v1817 = vld [vmem:[%s1764 + $0xd0] sm:$0xf]
    %v1818 = vld [vmem:[%s1764 + $0xd4] sm:$0xf]
    %v1819 = vld [vmem:[%s1764 + $0xd8] sm:$0xf]
    %v1820 = vld [vmem:[%s1764 + $0xdc] sm:$0xf]
    %v1821 = vld [vmem:[%s1764 + $0xe0] sm:$0xf]
    %v1822 = vld [vmem:[%s1764 + $0xe4] sm:$0xf]
    %v1823 = vld [vmem:[%s1764 + $0xe8] sm:$0xf]
    %v1824 = vld [vmem:[%s1764 + $0xec] sm:$0xf]
    %v1825 = vld [vmem:[%s1764 + $0xf0] sm:$0xf]
    %v1826 = vld [vmem:[%s1764 + $0xf4] sm:$0xf]
    %v1827 = vld [vmem:[%s1764 + $0xf8] sm:$0xf]
    %v1828 = vld [vmem:[%s1764 + $0xfc] sm:$0xf]
    %v1893 = vunpack.c.l.b16 %v1765
    %v1894 = vunpack.c.l.b16 %v1766
    %v1895 = vunpack.c.l.b16 %v1767
    %v1896 = vunpack.c.l.b16 %v1768
    %v1897 = vunpack.c.l.b16 %v1769
    %v1898 = vunpack.c.l.b16 %v1770
    %v1899 = vunpack.c.l.b16 %v1771
    %v1900 = vunpack.c.l.b16 %v1772
    %v1901 = vunpack.c.l.b16 %v1773
    %v1902 = vunpack.c.l.b16 %v1774
    %v1903 = vunpack.c.l.b16 %v1775
    %v1904 = vunpack.c.l.b16 %v1776
    %v1905 = vunpack.c.l.b16 %v1777
    %v1906 = vunpack.c.l.b16 %v1778
    %v1907 = vunpack.c.l.b16 %v1779
    %v1908 = vunpack.c.l.b16 %v1780
    %v1909 = vunpack.c.l.b16 %v1781
    %v1910 = vunpack.c.l.b16 %v1782
    %v1911 = vunpack.c.l.b16 %v1783
    %v1912 = vunpack.c.l.b16 %v1784
    %v1913 = vunpack.c.l.b16 %v1785
    %v1914 = vunpack.c.l.b16 %v1786
    %v1915 = vunpack.c.l.b16 %v1787
    %v1916 = vunpack.c.l.b16 %v1788
    %v1917 = vunpack.c.l.b16 %v1789
    %v1918 = vunpack.c.l.b16 %v1790
    %v1919 = vunpack.c.l.b16 %v1791
    %v1920 = vunpack.c.l.b16 %v1792
    %v1921 = vunpack.c.l.b16 %v1793
    %v1922 = vunpack.c.l.b16 %v1794
    %v1923 = vunpack.c.l.b16 %v1795
    %v1924 = vunpack.c.l.b16 %v1796
    %v1925 = vunpack.c.l.b16 %v1797
    %v1926 = vunpack.c.l.b16 %v1798
    %v1927 = vunpack.c.l.b16 %v1799
    %v1928 = vunpack.c.l.b16 %v1800
    %v1929 = vunpack.c.l.b16 %v1801
    %v1930 = vunpack.c.l.b16 %v1802
    %v1931 = vunpack.c.l.b16 %v1803
    %v1932 = vunpack.c.l.b16 %v1804
    %v1933 = vunpack.c.l.b16 %v1805
    %v1934 = vunpack.c.l.b16 %v1806
    %v1935 = vunpack.c.l.b16 %v1807
    %v1936 = vunpack.c.l.b16 %v1808
    %v1937 = vunpack.c.l.b16 %v1809
    %v1938 = vunpack.c.l.b16 %v1810
    %v1939 = vunpack.c.l.b16 %v1811
    %v1940 = vunpack.c.l.b16 %v1812
    %v1941 = vunpack.c.l.b16 %v1813
    %v1942 = vunpack.c.l.b16 %v1814
    %v1943 = vunpack.c.l.b16 %v1815
    %v1944 = vunpack.c.l.b16 %v1816
    %v1945 = vunpack.c.l.b16 %v1817
    %v1946 = vunpack.c.l.b16 %v1818
    %v1947 = vunpack.c.l.b16 %v1819
    %v1948 = vunpack.c.l.b16 %v1820
    %v1949 = vunpack.c.l.b16 %v1821
    %v1950 = vunpack.c.l.b16 %v1822
    %v1951 = vunpack.c.l.b16 %v1823
    %v1952 = vunpack.c.l.b16 %v1824
    %v1953 = vunpack.c.l.b16 %v1825
    %v1954 = vunpack.c.l.b16 %v1826
    %v1955 = vunpack.c.l.b16 %v1827
    %v1956 = vunpack.c.l.b16 %v1828
    %v1957 = vpack.c.b16 %v1894, %v1893
    %v1958 = vpack.c.b16 %v1896, %v1895
    %v1959 = vpack.c.b16 %v1898, %v1897
    %v1960 = vpack.c.b16 %v1900, %v1899
    %v1961 = vpack.c.b16 %v1902, %v1901
    %v1962 = vpack.c.b16 %v1904, %v1903
    %v1963 = vpack.c.b16 %v1906, %v1905
    %v1964 = vpack.c.b16 %v1908, %v1907
    %v1965 = vpack.c.b16 %v1910, %v1909
    %v1966 = vpack.c.b16 %v1912, %v1911
    %v1967 = vpack.c.b16 %v1914, %v1913
    %v1968 = vpack.c.b16 %v1916, %v1915
    %v1969 = vpack.c.b16 %v1918, %v1917
    %v1970 = vpack.c.b16 %v1920, %v1919
    %v1971 = vpack.c.b16 %v1922, %v1921
    %v1972 = vpack.c.b16 %v1924, %v1923
    %v1973 = vpack.c.b16 %v1926, %v1925
    %v1974 = vpack.c.b16 %v1928, %v1927
    %v1975 = vpack.c.b16 %v1930, %v1929
    %v1976 = vpack.c.b16 %v1932, %v1931
    %v1977 = vpack.c.b16 %v1934, %v1933
    %v1978 = vpack.c.b16 %v1936, %v1935
    %v1979 = vpack.c.b16 %v1938, %v1937
    %v1980 = vpack.c.b16 %v1940, %v1939
    %v1981 = vpack.c.b16 %v1942, %v1941
    %v1982 = vpack.c.b16 %v1944, %v1943
    %v1983 = vpack.c.b16 %v1946, %v1945
    %v1984 = vpack.c.b16 %v1948, %v1947
    %v1985 = vpack.c.b16 %v1950, %v1949
    %v1986 = vpack.c.b16 %v1952, %v1951
    %v1987 = vpack.c.b16 %v1954, %v1953
    %v1988 = vpack.c.b16 %v1956, %v1955
    %2021 = vmatprep.subr.bf16.mxu0 0
    %2022 = vmatpush1.bf16.msra.mxu0 %v1957
    %2023 = vmatprep.subr.bf16.mxu0 0
    %2024 = vmatpush1.bf16.msra.mxu0 %v1958
    %2025 = vmatprep.subr.bf16.mxu0 0
    %2026 = vmatpush1.bf16.msra.mxu0 %v1959
    %2027 = vmatprep.subr.bf16.mxu0 0
    %2028 = vmatpush1.bf16.msra.mxu0 %v1960
    %2029 = vmatprep.subr.bf16.mxu0 0
    %2030 = vmatpush1.bf16.msra.mxu0 %v1961
    %2031 = vmatprep.subr.bf16.mxu0 0
    %2032 = vmatpush1.bf16.msra.mxu0 %v1962
    %2033 = vmatprep.subr.bf16.mxu0 0
    %2034 = vmatpush1.bf16.msra.mxu0 %v1963
    %2035 = vmatprep.subr.bf16.mxu0 0
    %2036 = vmatpush1.bf16.msra.mxu0 %v1964
    %2037 = vmatprep.subr.bf16.mxu0 0
    %2038 = vmatpush1.bf16.msra.mxu0 %v1965
    %2039 = vmatprep.subr.bf16.mxu0 0
    %2040 = vmatpush1.bf16.msra.mxu0 %v1966
    %2041 = vmatprep.subr.bf16.mxu0 0
    %2042 = vmatpush1.bf16.msra.mxu0 %v1967
    %2043 = vmatprep.subr.bf16.mxu0 0
    %2044 = vmatpush1.bf16.msra.mxu0 %v1968
    %2045 = vmatprep.subr.bf16.mxu0 0
    %2046 = vmatpush1.bf16.msra.mxu0 %v1969
    %2047 = vmatprep.subr.bf16.mxu0 0
    %2048 = vmatpush1.bf16.msra.mxu0 %v1970
    %2049 = vmatprep.subr.bf16.mxu0 0
    %2050 = vmatpush1.bf16.msra.mxu0 %v1971
    %2051 = vmatprep.subr.bf16.mxu0 0
    %2052 = vmatpush1.bf16.msra.mxu0 %v1972
    %2053 = vmatprep.mubr.bf16.mxu0 %v1761
    %2054 = vmatmul.mubr.bf16.gmra.mrb[0].mxu0 %v1760
    %v2055 = vpop.f32.mrb[0].mxu0
    %v2056 = vadd.f32 0.0, %v2055
    %v2057 = vpop.f32.mrb[0].mxu0
    %v2058 = vpop.f32.mrb[0].mxu0
    %v2059 = vpop.f32.mrb[0].mxu0
    %2060 = vdwg.mxu0
    %2061 = vmatprep.subr.bf16.mxu0 0
    %2062 = vmatpush1.bf16.msra.mxu0 %v1973
    %2063 = vmatprep.subr.bf16.mxu0 0
    %2064 = vmatpush1.bf16.msra.mxu0 %v1974
    %2065 = vmatprep.subr.bf16.mxu0 0
    %2066 = vmatpush1.bf16.msra.mxu0 %v1975
    %2067 = vmatprep.subr.bf16.mxu0 0
    %2068 = vmatpush1.bf16.msra.mxu0 %v1976
    %2069 = vmatprep.subr.bf16.mxu0 0
    %2070 = vmatpush1.bf16.msra.mxu0 %v1977
    %2071 = vmatprep.subr.bf16.mxu0 0
    %2072 = vmatpush1.bf16.msra.mxu0 %v1978
    %2073 = vmatprep.subr.bf16.mxu0 0
    %2074 = vmatpush1.bf16.msra.mxu0 %v1979
    %2075 = vmatprep.subr.bf16.mxu0 0
    %2076 = vmatpush1.bf16.msra.mxu0 %v1980
    %2077 = vmatprep.subr.bf16.mxu0 0
    %2078 = vmatpush1.bf16.msra.mxu0 %v1981
    %2079 = vmatprep.subr.bf16.mxu0 0
    %2080 = vmatpush1.bf16.msra.mxu0 %v1982
    %2081 = vmatprep.subr.bf16.mxu0 0
    %2082 = vmatpush1.bf16.msra.mxu0 %v1983
    %2083 = vmatprep.subr.bf16.mxu0 0
    %2084 = vmatpush1.bf16.msra.mxu0 %v1984
    %2085 = vmatprep.subr.bf16.mxu0 0
    %2086 = vmatpush1.bf16.msra.mxu0 %v1985
    %2087 = vmatprep.subr.bf16.mxu0 0
    %2088 = vmatpush1.bf16.msra.mxu0 %v1986
    %2089 = vmatprep.subr.bf16.mxu0 0
    %2090 = vmatpush1.bf16.msra.mxu0 %v1987
    %2091 = vmatprep.subr.bf16.mxu0 0
    %2092 = vmatpush1.bf16.msra.mxu0 %v1988
    %2093 = vmatprep.mubr.bf16.mxu0 %v1763
    %2094 = vmatmul.mubr.bf16.gmra.mrb[0].mxu0 %v1762
    %v2095 = vpop.f32.mrb[0].mxu0
    %v2096 = vadd.f32 %v2056, %v2095
    %v2097 = vpop.f32.mrb[0].mxu0
    %v2098 = vpop.f32.mrb[0].mxu0
    %v2099 = vpop.f32.mrb[0].mxu0
    %2100 = vdwg.mxu0
    %v2101 = vadd.f32 %v1759, %v2096
    %v2102 = vpack.c.bf16 %v228, %v228
    %v2103 = vpack.c.bf16 %v230, %v230
    %v2104 = vpack.c.bf16 %v341, %v341
    %v2105 = vpack.c.bf16 %v343, %v343
    %s2106 = scalar_lea.vmem [#allocation4], 1280
    %v2107 = vld [vmem:[%s2106] sm:$0xf]
    %v2108 = vld [vmem:[%s2106 + $0x4] sm:$0xf]
    %v2109 = vld [vmem:[%s2106 + $0x8] sm:$0xf]
    %v2110 = vld [vmem:[%s2106 + $0xc] sm:$0xf]
    %v2111 = vld [vmem:[%s2106 + $0x10] sm:$0xf]
    %v2112 = vld [vmem:[%s2106 + $0x14] sm:$0xf]
    %v2113 = vld [vmem:[%s2106 + $0x18] sm:$0xf]
    %v2114 = vld [vmem:[%s2106 + $0x1c] sm:$0xf]
    %v2115 = vld [vmem:[%s2106 + $0x20] sm:$0xf]
    %v2116 = vld [vmem:[%s2106 + $0x24] sm:$0xf]
    %v2117 = vld [vmem:[%s2106 + $0x28] sm:$0xf]
    %v2118 = vld [vmem:[%s2106 + $0x2c] sm:$0xf]
    %v2119 = vld [vmem:[%s2106 + $0x30] sm:$0xf]
    %v2120 = vld [vmem:[%s2106 + $0x34] sm:$0xf]
    %v2121 = vld [vmem:[%s2106 + $0x38] sm:$0xf]
    %v2122 = vld [vmem:[%s2106 + $0x3c] sm:$0xf]
    %v2123 = vld [vmem:[%s2106 + $0x40] sm:$0xf]
    %v2124 = vld [vmem:[%s2106 + $0x44] sm:$0xf]
    %v2125 = vld [vmem:[%s2106 + $0x48] sm:$0xf]
    %v2126 = vld [vmem:[%s2106 + $0x4c] sm:$0xf]
    %v2127 = vld [vmem:[%s2106 + $0x50] sm:$0xf]
    %v2128 = vld [vmem:[%s2106 + $0x54] sm:$0xf]
    %v2129 = vld [vmem:[%s2106 + $0x58] sm:$0xf]
    %v2130 = vld [vmem:[%s2106 + $0x5c] sm:$0xf]
    %v2131 = vld [vmem:[%s2106 + $0x60] sm:$0xf]
    %v2132 = vld [vmem:[%s2106 + $0x64] sm:$0xf]
    %v2133 = vld [vmem:[%s2106 + $0x68] sm:$0xf]
    %v2134 = vld [vmem:[%s2106 + $0x6c] sm:$0xf]
    %v2135 = vld [vmem:[%s2106 + $0x70] sm:$0xf]
    %v2136 = vld [vmem:[%s2106 + $0x74] sm:$0xf]
    %v2137 = vld [vmem:[%s2106 + $0x78] sm:$0xf]
    %v2138 = vld [vmem:[%s2106 + $0x7c] sm:$0xf]
    %v2139 = vld [vmem:[%s2106 + $0x80] sm:$0xf]
    %v2140 = vld [vmem:[%s2106 + $0x84] sm:$0xf]
    %v2141 = vld [vmem:[%s2106 + $0x88] sm:$0xf]
    %v2142 = vld [vmem:[%s2106 + $0x8c] sm:$0xf]
    %v2143 = vld [vmem:[%s2106 + $0x90] sm:$0xf]
    %v2144 = vld [vmem:[%s2106 + $0x94] sm:$0xf]
    %v2145 = vld [vmem:[%s2106 + $0x98] sm:$0xf]
    %v2146 = vld [vmem:[%s2106 + $0x9c] sm:$0xf]
    %v2147 = vld [vmem:[%s2106 + $0xa0] sm:$0xf]
    %v2148 = vld [vmem:[%s2106 + $0xa4] sm:$0xf]
    %v2149 = vld [vmem:[%s2106 + $0xa8] sm:$0xf]
    %v2150 = vld [vmem:[%s2106 + $0xac] sm:$0xf]
    %v2151 = vld [vmem:[%s2106 + $0xb0] sm:$0xf]
    %v2152 = vld [vmem:[%s2106 + $0xb4] sm:$0xf]
    %v2153 = vld [vmem:[%s2106 + $0xb8] sm:$0xf]
    %v2154 = vld [vmem:[%s2106 + $0xbc] sm:$0xf]
    %v2155 = vld [vmem:[%s2106 + $0xc0] sm:$0xf]
    %v2156 = vld [vmem:[%s2106 + $0xc4] sm:$0xf]
    %v2157 = vld [vmem:[%s2106 + $0xc8] sm:$0xf]
    %v2158 = vld [vmem:[%s2106 + $0xcc] sm:$0xf]
    %v2159 = vld [vmem:[%s2106 + $0xd0] sm:$0xf]
    %v2160 = vld [vmem:[%s2106 + $0xd4] sm:$0xf]
    %v2161 = vld [vmem:[%s2106 + $0xd8] sm:$0xf]
    %v2162 = vld [vmem:[%s2106 + $0xdc] sm:$0xf]
    %v2163 = vld [vmem:[%s2106 + $0xe0] sm:$0xf]
    %v2164 = vld [vmem:[%s2106 + $0xe4] sm:$0xf]
    %v2165 = vld [vmem:[%s2106 + $0xe8] sm:$0xf]
    %v2166 = vld [vmem:[%s2106 + $0xec] sm:$0xf]
    %v2167 = vld [vmem:[%s2106 + $0xf0] sm:$0xf]
    %v2168 = vld [vmem:[%s2106 + $0xf4] sm:$0xf]
    %v2169 = vld [vmem:[%s2106 + $0xf8] sm:$0xf]
    %v2170 = vld [vmem:[%s2106 + $0xfc] sm:$0xf]
    %v2235 = vunpack.c.l.b16 %v2107
    %v2236 = vunpack.c.l.b16 %v2108
    %v2237 = vunpack.c.l.b16 %v2109
    %v2238 = vunpack.c.l.b16 %v2110
    %v2239 = vunpack.c.l.b16 %v2111
    %v2240 = vunpack.c.l.b16 %v2112
    %v2241 = vunpack.c.l.b16 %v2113
    %v2242 = vunpack.c.l.b16 %v2114
    %v2243 = vunpack.c.l.b16 %v2115
    %v2244 = vunpack.c.l.b16 %v2116
    %v2245 = vunpack.c.l.b16 %v2117
    %v2246 = vunpack.c.l.b16 %v2118
    %v2247 = vunpack.c.l.b16 %v2119
    %v2248 = vunpack.c.l.b16 %v2120
    %v2249 = vunpack.c.l.b16 %v2121
    %v2250 = vunpack.c.l.b16 %v2122
    %v2251 = vunpack.c.l.b16 %v2123
    %v2252 = vunpack.c.l.b16 %v2124
    %v2253 = vunpack.c.l.b16 %v2125
    %v2254 = vunpack.c.l.b16 %v2126
    %v2255 = vunpack.c.l.b16 %v2127
    %v2256 = vunpack.c.l.b16 %v2128
    %v2257 = vunpack.c.l.b16 %v2129
    %v2258 = vunpack.c.l.b16 %v2130
    %v2259 = vunpack.c.l.b16 %v2131
    %v2260 = vunpack.c.l.b16 %v2132
    %v2261 = vunpack.c.l.b16 %v2133
    %v2262 = vunpack.c.l.b16 %v2134
    %v2263 = vunpack.c.l.b16 %v2135
    %v2264 = vunpack.c.l.b16 %v2136
    %v2265 = vunpack.c.l.b16 %v2137
    %v2266 = vunpack.c.l.b16 %v2138
    %v2267 = vunpack.c.l.b16 %v2139
    %v2268 = vunpack.c.l.b16 %v2140
    %v2269 = vunpack.c.l.b16 %v2141
    %v2270 = vunpack.c.l.b16 %v2142
    %v2271 = vunpack.c.l.b16 %v2143
    %v2272 = vunpack.c.l.b16 %v2144
    %v2273 = vunpack.c.l.b16 %v2145
    %v2274 = vunpack.c.l.b16 %v2146
    %v2275 = vunpack.c.l.b16 %v2147
    %v2276 = vunpack.c.l.b16 %v2148
    %v2277 = vunpack.c.l.b16 %v2149
    %v2278 = vunpack.c.l.b16 %v2150
    %v2279 = vunpack.c.l.b16 %v2151
    %v2280 = vunpack.c.l.b16 %v2152
    %v2281 = vunpack.c.l.b16 %v2153
    %v2282 = vunpack.c.l.b16 %v2154
    %v2283 = vunpack.c.l.b16 %v2155
    %v2284 = vunpack.c.l.b16 %v2156
    %v2285 = vunpack.c.l.b16 %v2157
    %v2286 = vunpack.c.l.b16 %v2158
    %v2287 = vunpack.c.l.b16 %v2159
    %v2288 = vunpack.c.l.b16 %v2160
    %v2289 = vunpack.c.l.b16 %v2161
    %v2290 = vunpack.c.l.b16 %v2162
    %v2291 = vunpack.c.l.b16 %v2163
    %v2292 = vunpack.c.l.b16 %v2164
    %v2293 = vunpack.c.l.b16 %v2165
    %v2294 = vunpack.c.l.b16 %v2166
    %v2295 = vunpack.c.l.b16 %v2167
    %v2296 = vunpack.c.l.b16 %v2168
    %v2297 = vunpack.c.l.b16 %v2169
    %v2298 = vunpack.c.l.b16 %v2170
    %v2299 = vpack.c.b16 %v2236, %v2235
    %v2300 = vpack.c.b16 %v2238, %v2237
    %v2301 = vpack.c.b16 %v2240, %v2239
    %v2302 = vpack.c.b16 %v2242, %v2241
    %v2303 = vpack.c.b16 %v2244, %v2243
    %v2304 = vpack.c.b16 %v2246, %v2245
    %v2305 = vpack.c.b16 %v2248, %v2247
    %v2306 = vpack.c.b16 %v2250, %v2249
    %v2307 = vpack.c.b16 %v2252, %v2251
    %v2308 = vpack.c.b16 %v2254, %v2253
    %v2309 = vpack.c.b16 %v2256, %v2255
    %v2310 = vpack.c.b16 %v2258, %v2257
    %v2311 = vpack.c.b16 %v2260, %v2259
    %v2312 = vpack.c.b16 %v2262, %v2261
    %v2313 = vpack.c.b16 %v2264, %v2263
    %v2314 = vpack.c.b16 %v2266, %v2265
    %v2315 = vpack.c.b16 %v2268, %v2267
    %v2316 = vpack.c.b16 %v2270, %v2269
    %v2317 = vpack.c.b16 %v2272, %v2271
    %v2318 = vpack.c.b16 %v2274, %v2273
    %v2319 = vpack.c.b16 %v2276, %v2275
    %v2320 = vpack.c.b16 %v2278, %v2277
    %v2321 = vpack.c.b16 %v2280, %v2279
    %v2322 = vpack.c.b16 %v2282, %v2281
    %v2323 = vpack.c.b16 %v2284, %v2283
    %v2324 = vpack.c.b16 %v2286, %v2285
    %v2325 = vpack.c.b16 %v2288, %v2287
    %v2326 = vpack.c.b16 %v2290, %v2289
    %v2327 = vpack.c.b16 %v2292, %v2291
    %v2328 = vpack.c.b16 %v2294, %v2293
    %v2329 = vpack.c.b16 %v2296, %v2295
    %v2330 = vpack.c.b16 %v2298, %v2297
    %2363 = vmatprep.subr.bf16.mxu0 0
    %2364 = vmatpush1.bf16.msra.mxu0 %v2299
    %2365 = vmatprep.subr.bf16.mxu0 0
    %2366 = vmatpush1.bf16.msra.mxu0 %v2300
    %2367 = vmatprep.subr.bf16.mxu0 0
    %2368 = vmatpush1.bf16.msra.mxu0 %v2301
    %2369 = vmatprep.subr.bf16.mxu0 0
    %2370 = vmatpush1.bf16.msra.mxu0 %v2302
    %2371 = vmatprep.subr.bf16.mxu0 0
    %2372 = vmatpush1.bf16.msra.mxu0 %v2303
    %2373 = vmatprep.subr.bf16.mxu0 0
    %2374 = vmatpush1.bf16.msra.mxu0 %v2304
    %2375 = vmatprep.subr.bf16.mxu0 0
    %2376 = vmatpush1.bf16.msra.mxu0 %v2305
    %2377 = vmatprep.subr.bf16.mxu0 0
    %2378 = vmatpush1.bf16.msra.mxu0 %v2306
    %2379 = vmatprep.subr.bf16.mxu0 0
    %2380 = vmatpush1.bf16.msra.mxu0 %v2307
    %2381 = vmatprep.subr.bf16.mxu0 0
    %2382 = vmatpush1.bf16.msra.mxu0 %v2308
    %2383 = vmatprep.subr.bf16.mxu0 0
    %2384 = vmatpush1.bf16.msra.mxu0 %v2309
    %2385 = vmatprep.subr.bf16.mxu0 0
    %2386 = vmatpush1.bf16.msra.mxu0 %v2310
    %2387 = vmatprep.subr.bf16.mxu0 0
    %2388 = vmatpush1.bf16.msra.mxu0 %v2311
    %2389 = vmatprep.subr.bf16.mxu0 0
    %2390 = vmatpush1.bf16.msra.mxu0 %v2312
    %2391 = vmatprep.subr.bf16.mxu0 0
    %2392 = vmatpush1.bf16.msra.mxu0 %v2313
    %2393 = vmatprep.subr.bf16.mxu0 0
    %2394 = vmatpush1.bf16.msra.mxu0 %v2314
    %2395 = vmatprep.mubr.bf16.mxu0 %v2103
    %2396 = vmatmul.mubr.bf16.gmra.mrb[0].mxu0 %v2102
    %v2397 = vpop.f32.mrb[0].mxu0
    %v2398 = vadd.f32 0.0, %v2397
    %v2399 = vpop.f32.mrb[0].mxu0
    %v2400 = vpop.f32.mrb[0].mxu0
    %v2401 = vpop.f32.mrb[0].mxu0
    %2402 = vdwg.mxu0
    %2403 = vmatprep.subr.bf16.mxu0 0
    %2404 = vmatpush1.bf16.msra.mxu0 %v2315
    %2405 = vmatprep.subr.bf16.mxu0 0
    %2406 = vmatpush1.bf16.msra.mxu0 %v2316
    %2407 = vmatprep.subr.bf16.mxu0 0
    %2408 = vmatpush1.bf16.msra.mxu0 %v2317
    %2409 = vmatprep.subr.bf16.mxu0 0
    %2410 = vmatpush1.bf16.msra.mxu0 %v2318
    %2411 = vmatprep.subr.bf16.mxu0 0
    %2412 = vmatpush1.bf16.msra.mxu0 %v2319
    %2413 = vmatprep.subr.bf16.mxu0 0
    %2414 = vmatpush1.bf16.msra.mxu0 %v2320
    %2415 = vmatprep.subr.bf16.mxu0 0
    %2416 = vmatpush1.bf16.msra.mxu0 %v2321
    %2417 = vmatprep.subr.bf16.mxu0 0
    %2418 = vmatpush1.bf16.msra.mxu0 %v2322
    %2419 = vmatprep.subr.bf16.mxu0 0
    %2420 = vmatpush1.bf16.msra.mxu0 %v2323
    %2421 = vmatprep.subr.bf16.mxu0 0
    %2422 = vmatpush1.bf16.msra.mxu0 %v2324
    %2423 = vmatprep.subr.bf16.mxu0 0
    %2424 = vmatpush1.bf16.msra.mxu0 %v2325
    %2425 = vmatprep.subr.bf16.mxu0 0
    %2426 = vmatpush1.bf16.msra.mxu0 %v2326
    %2427 = vmatprep.subr.bf16.mxu0 0
    %2428 = vmatpush1.bf16.msra.mxu0 %v2327
    %2429 = vmatprep.subr.bf16.mxu0 0
    %2430 = vmatpush1.bf16.msra.mxu0 %v2328
    %2431 = vmatprep.subr.bf16.mxu0 0
    %2432 = vmatpush1.bf16.msra.mxu0 %v2329
    %2433 = vmatprep.subr.bf16.mxu0 0
    %2434 = vmatpush1.bf16.msra.mxu0 %v2330
    %2435 = vmatprep.mubr.bf16.mxu0 %v2105
    %2436 = vmatmul.mubr.bf16.gmra.mrb[0].mxu0 %v2104
    %v2437 = vpop.f32.mrb[0].mxu0
    %v2438 = vadd.f32 %v2398, %v2437
    %v2439 = vpop.f32.mrb[0].mxu0
    %v2440 = vpop.f32.mrb[0].mxu0
    %v2441 = vpop.f32.mrb[0].mxu0
    %2442 = vdwg.mxu0
    %v2443 = vadd.f32 %v2101, %v2438
    %v2444 = vpack.c.bf16 %v234, %v234
    %v2445 = vpack.c.bf16 %v236, %v236
    %v2446 = vpack.c.bf16 %v347, %v347
    %v2447 = vpack.c.bf16 %v349, %v349
    %s2448 = scalar_lea.vmem [#allocation4], 1536
    %v2449 = vld [vmem:[%s2448] sm:$0xf]
    %v2450 = vld [vmem:[%s2448 + $0x4] sm:$0xf]
    %v2451 = vld [vmem:[%s2448 + $0x8] sm:$0xf]
    %v2452 = vld [vmem:[%s2448 + $0xc] sm:$0xf]
    %v2453 = vld [vmem:[%s2448 + $0x10] sm:$0xf]
    %v2454 = vld [vmem:[%s2448 + $0x14] sm:$0xf]
    %v2455 = vld [vmem:[%s2448 + $0x18] sm:$0xf]
    %v2456 = vld [vmem:[%s2448 + $0x1c] sm:$0xf]
    %v2457 = vld [vmem:[%s2448 + $0x20] sm:$0xf]
    %v2458 = vld [vmem:[%s2448 + $0x24] sm:$0xf]
    %v2459 = vld [vmem:[%s2448 + $0x28] sm:$0xf]
    %v2460 = vld [vmem:[%s2448 + $0x2c] sm:$0xf]
    %v2461 = vld [vmem:[%s2448 + $0x30] sm:$0xf]
    %v2462 = vld [vmem:[%s2448 + $0x34] sm:$0xf]
    %v2463 = vld [vmem:[%s2448 + $0x38] sm:$0xf]
    %v2464 = vld [vmem:[%s2448 + $0x3c] sm:$0xf]
    %v2465 = vld [vmem:[%s2448 + $0x40] sm:$0xf]
    %v2466 = vld [vmem:[%s2448 + $0x44] sm:$0xf]
    %v2467 = vld [vmem:[%s2448 + $0x48] sm:$0xf]
    %v2468 = vld [vmem:[%s2448 + $0x4c] sm:$0xf]
    %v2469 = vld [vmem:[%s2448 + $0x50] sm:$0xf]
    %v2470 = vld [vmem:[%s2448 + $0x54] sm:$0xf]
    %v2471 = vld [vmem:[%s2448 + $0x58] sm:$0xf]
    %v2472 = vld [vmem:[%s2448 + $0x5c] sm:$0xf]
    %v2473 = vld [vmem:[%s2448 + $0x60] sm:$0xf]
    %v2474 = vld [vmem:[%s2448 + $0x64] sm:$0xf]
    %v2475 = vld [vmem:[%s2448 + $0x68] sm:$0xf]
    %v2476 = vld [vmem:[%s2448 + $0x6c] sm:$0xf]
    %v2477 = vld [vmem:[%s2448 + $0x70] sm:$0xf]
    %v2478 = vld [vmem:[%s2448 + $0x74] sm:$0xf]
    %v2479 = vld [vmem:[%s2448 + $0x78] sm:$0xf]
    %v2480 = vld [vmem:[%s2448 + $0x7c] sm:$0xf]
    %v2481 = vld [vmem:[%s2448 + $0x80] sm:$0xf]
    %v2482 = vld [vmem:[%s2448 + $0x84] sm:$0xf]
    %v2483 = vld [vmem:[%s2448 + $0x88] sm:$0xf]
    %v2484 = vld [vmem:[%s2448 + $0x8c] sm:$0xf]
    %v2485 = vld [vmem:[%s2448 + $0x90] sm:$0xf]
    %v2486 = vld [vmem:[%s2448 + $0x94] sm:$0xf]
    %v2487 = vld [vmem:[%s2448 + $0x98] sm:$0xf]
    %v2488 = vld [vmem:[%s2448 + $0x9c] sm:$0xf]
    %v2489 = vld [vmem:[%s2448 + $0xa0] sm:$0xf]
    %v2490 = vld [vmem:[%s2448 + $0xa4] sm:$0xf]
    %v2491 = vld [vmem:[%s2448 + $0xa8] sm:$0xf]
    %v2492 = vld [vmem:[%s2448 + $0xac] sm:$0xf]
    %v2493 = vld [vmem:[%s2448 + $0xb0] sm:$0xf]
    %v2494 = vld [vmem:[%s2448 + $0xb4] sm:$0xf]
    %v2495 = vld [vmem:[%s2448 + $0xb8] sm:$0xf]
    %v2496 = vld [vmem:[%s2448 + $0xbc] sm:$0xf]
    %v2497 = vld [vmem:[%s2448 + $0xc0] sm:$0xf]
    %v2498 = vld [vmem:[%s2448 + $0xc4] sm:$0xf]
    %v2499 = vld [vmem:[%s2448 + $0xc8] sm:$0xf]
    %v2500 = vld [vmem:[%s2448 + $0xcc] sm:$0xf]
    %v2501 = vld [vmem:[%s2448 + $0xd0] sm:$0xf]
    %v2502 = vld [vmem:[%s2448 + $0xd4] sm:$0xf]
    %v2503 = vld [vmem:[%s2448 + $0xd8] sm:$0xf]
    %v2504 = vld [vmem:[%s2448 + $0xdc] sm:$0xf]
    %v2505 = vld [vmem:[%s2448 + $0xe0] sm:$0xf]
    %v2506 = vld [vmem:[%s2448 + $0xe4] sm:$0xf]
    %v2507 = vld [vmem:[%s2448 + $0xe8] sm:$0xf]
    %v2508 = vld [vmem:[%s2448 + $0xec] sm:$0xf]
    %v2509 = vld [vmem:[%s2448 + $0xf0] sm:$0xf]
    %v2510 = vld [vmem:[%s2448 + $0xf4] sm:$0xf]
    %v2511 = vld [vmem:[%s2448 + $0xf8] sm:$0xf]
    %v2512 = vld [vmem:[%s2448 + $0xfc] sm:$0xf]
    %v2577 = vunpack.c.l.b16 %v2449
    %v2578 = vunpack.c.l.b16 %v2450
    %v2579 = vunpack.c.l.b16 %v2451
    %v2580 = vunpack.c.l.b16 %v2452
    %v2581 = vunpack.c.l.b16 %v2453
    %v2582 = vunpack.c.l.b16 %v2454
    %v2583 = vunpack.c.l.b16 %v2455
    %v2584 = vunpack.c.l.b16 %v2456
    %v2585 = vunpack.c.l.b16 %v2457
    %v2586 = vunpack.c.l.b16 %v2458
    %v2587 = vunpack.c.l.b16 %v2459
    %v2588 = vunpack.c.l.b16 %v2460
    %v2589 = vunpack.c.l.b16 %v2461
    %v2590 = vunpack.c.l.b16 %v2462
    %v2591 = vunpack.c.l.b16 %v2463
    %v2592 = vunpack.c.l.b16 %v2464
    %v2593 = vunpack.c.l.b16 %v2465
    %v2594 = vunpack.c.l.b16 %v2466
    %v2595 = vunpack.c.l.b16 %v2467
    %v2596 = vunpack.c.l.b16 %v2468
    %v2597 = vunpack.c.l.b16 %v2469
    %v2598 = vunpack.c.l.b16 %v2470
    %v2599 = vunpack.c.l.b16 %v2471
    %v2600 = vunpack.c.l.b16 %v2472
    %v2601 = vunpack.c.l.b16 %v2473
    %v2602 = vunpack.c.l.b16 %v2474
    %v2603 = vunpack.c.l.b16 %v2475
    %v2604 = vunpack.c.l.b16 %v2476
    %v2605 = vunpack.c.l.b16 %v2477
    %v2606 = vunpack.c.l.b16 %v2478
    %v2607 = vunpack.c.l.b16 %v2479
    %v2608 = vunpack.c.l.b16 %v2480
    %v2609 = vunpack.c.l.b16 %v2481
    %v2610 = vunpack.c.l.b16 %v2482
    %v2611 = vunpack.c.l.b16 %v2483
    %v2612 = vunpack.c.l.b16 %v2484
    %v2613 = vunpack.c.l.b16 %v2485
    %v2614 = vunpack.c.l.b16 %v2486
    %v2615 = vunpack.c.l.b16 %v2487
    %v2616 = vunpack.c.l.b16 %v2488
    %v2617 = vunpack.c.l.b16 %v2489
    %v2618 = vunpack.c.l.b16 %v2490
    %v2619 = vunpack.c.l.b16 %v2491
    %v2620 = vunpack.c.l.b16 %v2492
    %v2621 = vunpack.c.l.b16 %v2493
    %v2622 = vunpack.c.l.b16 %v2494
    %v2623 = vunpack.c.l.b16 %v2495
    %v2624 = vunpack.c.l.b16 %v2496
    %v2625 = vunpack.c.l.b16 %v2497
    %v2626 = vunpack.c.l.b16 %v2498
    %v2627 = vunpack.c.l.b16 %v2499
    %v2628 = vunpack.c.l.b16 %v2500
    %v2629 = vunpack.c.l.b16 %v2501
    %v2630 = vunpack.c.l.b16 %v2502
    %v2631 = vunpack.c.l.b16 %v2503
    %v2632 = vunpack.c.l.b16 %v2504
    %v2633 = vunpack.c.l.b16 %v2505
    %v2634 = vunpack.c.l.b16 %v2506
    %v2635 = vunpack.c.l.b16 %v2507
    %v2636 = vunpack.c.l.b16 %v2508
    %v2637 = vunpack.c.l.b16 %v2509
    %v2638 = vunpack.c.l.b16 %v2510
    %v2639 = vunpack.c.l.b16 %v2511
    %v2640 = vunpack.c.l.b16 %v2512
    %v2641 = vpack.c.b16 %v2578, %v2577
    %v2642 = vpack.c.b16 %v2580, %v2579
    %v2643 = vpack.c.b16 %v2582, %v2581
    %v2644 = vpack.c.b16 %v2584, %v2583
    %v2645 = vpack.c.b16 %v2586, %v2585
    %v2646 = vpack.c.b16 %v2588, %v2587
    %v2647 = vpack.c.b16 %v2590, %v2589
    %v2648 = vpack.c.b16 %v2592, %v2591
    %v2649 = vpack.c.b16 %v2594, %v2593
    %v2650 = vpack.c.b16 %v2596, %v2595
    %v2651 = vpack.c.b16 %v2598, %v2597
    %v2652 = vpack.c.b16 %v2600, %v2599
    %v2653 = vpack.c.b16 %v2602, %v2601
    %v2654 = vpack.c.b16 %v2604, %v2603
    %v2655 = vpack.c.b16 %v2606, %v2605
    %v2656 = vpack.c.b16 %v2608, %v2607
    %v2657 = vpack.c.b16 %v2610, %v2609
    %v2658 = vpack.c.b16 %v2612, %v2611
    %v2659 = vpack.c.b16 %v2614, %v2613
    %v2660 = vpack.c.b16 %v2616, %v2615
    %v2661 = vpack.c.b16 %v2618, %v2617
    %v2662 = vpack.c.b16 %v2620, %v2619
    %v2663 = vpack.c.b16 %v2622, %v2621
    %v2664 = vpack.c.b16 %v2624, %v2623
    %v2665 = vpack.c.b16 %v2626, %v2625
    %v2666 = vpack.c.b16 %v2628, %v2627
    %v2667 = vpack.c.b16 %v2630, %v2629
    %v2668 = vpack.c.b16 %v2632, %v2631
    %v2669 = vpack.c.b16 %v2634, %v2633
    %v2670 = vpack.c.b16 %v2636, %v2635
    %v2671 = vpack.c.b16 %v2638, %v2637
    %v2672 = vpack.c.b16 %v2640, %v2639
    %2705 = vmatprep.subr.bf16.mxu0 0
    %2706 = vmatpush1.bf16.msra.mxu0 %v2641
    %2707 = vmatprep.subr.bf16.mxu0 0
    %2708 = vmatpush1.bf16.msra.mxu0 %v2642
    %2709 = vmatprep.subr.bf16.mxu0 0
    %2710 = vmatpush1.bf16.msra.mxu0 %v2643
    %2711 = vmatprep.subr.bf16.mxu0 0
    %2712 = vmatpush1.bf16.msra.mxu0 %v2644
    %2713 = vmatprep.subr.bf16.mxu0 0
    %2714 = vmatpush1.bf16.msra.mxu0 %v2645
    %2715 = vmatprep.subr.bf16.mxu0 0
    %2716 = vmatpush1.bf16.msra.mxu0 %v2646
    %2717 = vmatprep.subr.bf16.mxu0 0
    %2718 = vmatpush1.bf16.msra.mxu0 %v2647
    %2719 = vmatprep.subr.bf16.mxu0 0
    %2720 = vmatpush1.bf16.msra.mxu0 %v2648
    %2721 = vmatprep.subr.bf16.mxu0 0
    %2722 = vmatpush1.bf16.msra.mxu0 %v2649
    %2723 = vmatprep.subr.bf16.mxu0 0
    %2724 = vmatpush1.bf16.msra.mxu0 %v2650
    %2725 = vmatprep.subr.bf16.mxu0 0
    %2726 = vmatpush1.bf16.msra.mxu0 %v2651
    %2727 = vmatprep.subr.bf16.mxu0 0
    %2728 = vmatpush1.bf16.msra.mxu0 %v2652
    %2729 = vmatprep.subr.bf16.mxu0 0
    %2730 = vmatpush1.bf16.msra.mxu0 %v2653
    %2731 = vmatprep.subr.bf16.mxu0 0
    %2732 = vmatpush1.bf16.msra.mxu0 %v2654
    %2733 = vmatprep.subr.bf16.mxu0 0
    %2734 = vmatpush1.bf16.msra.mxu0 %v2655
    %2735 = vmatprep.subr.bf16.mxu0 0
    %2736 = vmatpush1.bf16.msra.mxu0 %v2656
    %2737 = vmatprep.mubr.bf16.mxu0 %v2445
    %2738 = vmatmul.mubr.bf16.gmra.mrb[0].mxu0 %v2444
    %v2739 = vpop.f32.mrb[0].mxu0
    %v2740 = vadd.f32 0.0, %v2739
    %v2741 = vpop.f32.mrb[0].mxu0
    %v2742 = vpop.f32.mrb[0].mxu0
    %v2743 = vpop.f32.mrb[0].mxu0
    %2744 = vdwg.mxu0
    %2745 = vmatprep.subr.bf16.mxu0 0
    %2746 = vmatpush1.bf16.msra.mxu0 %v2657
    %2747 = vmatprep.subr.bf16.mxu0 0
    %2748 = vmatpush1.bf16.msra.mxu0 %v2658
    %2749 = vmatprep.subr.bf16.mxu0 0
    %2750 = vmatpush1.bf16.msra.mxu0 %v2659
    %2751 = vmatprep.subr.bf16.mxu0 0
    %2752 = vmatpush1.bf16.msra.mxu0 %v2660
    %2753 = vmatprep.subr.bf16.mxu0 0
    %2754 = vmatpush1.bf16.msra.mxu0 %v2661
    %2755 = vmatprep.subr.bf16.mxu0 0
    %2756 = vmatpush1.bf16.msra.mxu0 %v2662
    %2757 = vmatprep.subr.bf16.mxu0 0
    %2758 = vmatpush1.bf16.msra.mxu0 %v2663
    %2759 = vmatprep.subr.bf16.mxu0 0
    %2760 = vmatpush1.bf16.msra.mxu0 %v2664
    %2761 = vmatprep.subr.bf16.mxu0 0
    %2762 = vmatpush1.bf16.msra.mxu0 %v2665
    %2763 = vmatprep.subr.bf16.mxu0 0
    %2764 = vmatpush1.bf16.msra.mxu0 %v2666
    %2765 = vmatprep.subr.bf16.mxu0 0
    %2766 = vmatpush1.bf16.msra.mxu0 %v2667
    %2767 = vmatprep.subr.bf16.mxu0 0
    %2768 = vmatpush1.bf16.msra.mxu0 %v2668
    %2769 = vmatprep.subr.bf16.mxu0 0
    %2770 = vmatpush1.bf16.msra.mxu0 %v2669
    %2771 = vmatprep.subr.bf16.mxu0 0
    %2772 = vmatpush1.bf16.msra.mxu0 %v2670
    %2773 = vmatprep.subr.bf16.mxu0 0
    %2774 = vmatpush1.bf16.msra.mxu0 %v2671
    %2775 = vmatprep.subr.bf16.mxu0 0
    %2776 = vmatpush1.bf16.msra.mxu0 %v2672
    %2777 = vmatprep.mubr.bf16.mxu0 %v2447
    %2778 = vmatmul.mubr.bf16.gmra.mrb[0].mxu0 %v2446
    %v2779 = vpop.f32.mrb[0].mxu0
    %v2780 = vadd.f32 %v2740, %v2779
    %v2781 = vpop.f32.mrb[0].mxu0
    %v2782 = vpop.f32.mrb[0].mxu0
    %v2783 = vpop.f32.mrb[0].mxu0
    %2784 = vdwg.mxu0
    %v2785 = vadd.f32 %v2443, %v2780
    %v2786 = vpack.c.bf16 %v238, %v238
    %v2787 = vpack.c.bf16 %v240, %v240
    %v2788 = vpack.c.bf16 %v351, %v351
    %v2789 = vpack.c.bf16 %v353, %v353
    %s2790 = scalar_lea.vmem [#allocation4], 1792
    %v2791 = vld [vmem:[%s2790] sm:$0xf]
    %v2792 = vld [vmem:[%s2790 + $0x4] sm:$0xf]
    %v2793 = vld [vmem:[%s2790 + $0x8] sm:$0xf]
    %v2794 = vld [vmem:[%s2790 + $0xc] sm:$0xf]
    %v2795 = vld [vmem:[%s2790 + $0x10] sm:$0xf]
    %v2796 = vld [vmem:[%s2790 + $0x14] sm:$0xf]
    %v2797 = vld [vmem:[%s2790 + $0x18] sm:$0xf]
    %v2798 = vld [vmem:[%s2790 + $0x1c] sm:$0xf]
    %v2799 = vld [vmem:[%s2790 + $0x20] sm:$0xf]
    %v2800 = vld [vmem:[%s2790 + $0x24] sm:$0xf]
    %v2801 = vld [vmem:[%s2790 + $0x28] sm:$0xf]
    %v2802 = vld [vmem:[%s2790 + $0x2c] sm:$0xf]
    %v2803 = vld [vmem:[%s2790 + $0x30] sm:$0xf]
    %v2804 = vld [vmem:[%s2790 + $0x34] sm:$0xf]
    %v2805 = vld [vmem:[%s2790 + $0x38] sm:$0xf]
    %v2806 = vld [vmem:[%s2790 + $0x3c] sm:$0xf]
    %v2807 = vld [vmem:[%s2790 + $0x40] sm:$0xf]
    %v2808 = vld [vmem:[%s2790 + $0x44] sm:$0xf]
    %v2809 = vld [vmem:[%s2790 + $0x48] sm:$0xf]
    %v2810 = vld [vmem:[%s2790 + $0x4c] sm:$0xf]
    %v2811 = vld [vmem:[%s2790 + $0x50] sm:$0xf]
    %v2812 = vld [vmem:[%s2790 + $0x54] sm:$0xf]
    %v2813 = vld [vmem:[%s2790 + $0x58] sm:$0xf]
    %v2814 = vld [vmem:[%s2790 + $0x5c] sm:$0xf]
    %v2815 = vld [vmem:[%s2790 + $0x60] sm:$0xf]
    %v2816 = vld [vmem:[%s2790 + $0x64] sm:$0xf]
    %v2817 = vld [vmem:[%s2790 + $0x68] sm:$0xf]
    %v2818 = vld [vmem:[%s2790 + $0x6c] sm:$0xf]
    %v2819 = vld [vmem:[%s2790 + $0x70] sm:$0xf]
    %v2820 = vld [vmem:[%s2790 + $0x74] sm:$0xf]
    %v2821 = vld [vmem:[%s2790 + $0x78] sm:$0xf]
    %v2822 = vld [vmem:[%s2790 + $0x7c] sm:$0xf]
    %v2823 = vld [vmem:[%s2790 + $0x80] sm:$0xf]
    %v2824 = vld [vmem:[%s2790 + $0x84] sm:$0xf]
    %v2825 = vld [vmem:[%s2790 + $0x88] sm:$0xf]
    %v2826 = vld [vmem:[%s2790 + $0x8c] sm:$0xf]
    %v2827 = vld [vmem:[%s2790 + $0x90] sm:$0xf]
    %v2828 = vld [vmem:[%s2790 + $0x94] sm:$0xf]
    %v2829 = vld [vmem:[%s2790 + $0x98] sm:$0xf]
    %v2830 = vld [vmem:[%s2790 + $0x9c] sm:$0xf]
    %v2831 = vld [vmem:[%s2790 + $0xa0] sm:$0xf]
    %v2832 = vld [vmem:[%s2790 + $0xa4] sm:$0xf]
    %v2833 = vld [vmem:[%s2790 + $0xa8] sm:$0xf]
    %v2834 = vld [vmem:[%s2790 + $0xac] sm:$0xf]
    %v2835 = vld [vmem:[%s2790 + $0xb0] sm:$0xf]
    %v2836 = vld [vmem:[%s2790 + $0xb4] sm:$0xf]
    %v2837 = vld [vmem:[%s2790 + $0xb8] sm:$0xf]
    %v2838 = vld [vmem:[%s2790 + $0xbc] sm:$0xf]
    %v2839 = vld [vmem:[%s2790 + $0xc0] sm:$0xf]
    %v2840 = vld [vmem:[%s2790 + $0xc4] sm:$0xf]
    %v2841 = vld [vmem:[%s2790 + $0xc8] sm:$0xf]
    %v2842 = vld [vmem:[%s2790 + $0xcc] sm:$0xf]
    %v2843 = vld [vmem:[%s2790 + $0xd0] sm:$0xf]
    %v2844 = vld [vmem:[%s2790 + $0xd4] sm:$0xf]
    %v2845 = vld [vmem:[%s2790 + $0xd8] sm:$0xf]
    %v2846 = vld [vmem:[%s2790 + $0xdc] sm:$0xf]
    %v2847 = vld [vmem:[%s2790 + $0xe0] sm:$0xf]
    %v2848 = vld [vmem:[%s2790 + $0xe4] sm:$0xf]
    %v2849 = vld [vmem:[%s2790 + $0xe8] sm:$0xf]
    %v2850 = vld [vmem:[%s2790 + $0xec] sm:$0xf]
    %v2851 = vld [vmem:[%s2790 + $0xf0] sm:$0xf]
    %v2852 = vld [vmem:[%s2790 + $0xf4] sm:$0xf]
    %v2853 = vld [vmem:[%s2790 + $0xf8] sm:$0xf]
    %v2854 = vld [vmem:[%s2790 + $0xfc] sm:$0xf]
    %v2919 = vunpack.c.l.b16 %v2791
    %v2920 = vunpack.c.l.b16 %v2792
    %v2921 = vunpack.c.l.b16 %v2793
    %v2922 = vunpack.c.l.b16 %v2794
    %v2923 = vunpack.c.l.b16 %v2795
    %v2924 = vunpack.c.l.b16 %v2796
    %v2925 = vunpack.c.l.b16 %v2797
    %v2926 = vunpack.c.l.b16 %v2798
    %v2927 = vunpack.c.l.b16 %v2799
    %v2928 = vunpack.c.l.b16 %v2800
    %v2929 = vunpack.c.l.b16 %v2801
    %v2930 = vunpack.c.l.b16 %v2802
    %v2931 = vunpack.c.l.b16 %v2803
    %v2932 = vunpack.c.l.b16 %v2804
    %v2933 = vunpack.c.l.b16 %v2805
    %v2934 = vunpack.c.l.b16 %v2806
    %v2935 = vunpack.c.l.b16 %v2807
    %v2936 = vunpack.c.l.b16 %v2808
    %v2937 = vunpack.c.l.b16 %v2809
    %v2938 = vunpack.c.l.b16 %v2810
    %v2939 = vunpack.c.l.b16 %v2811
    %v2940 = vunpack.c.l.b16 %v2812
    %v2941 = vunpack.c.l.b16 %v2813
    %v2942 = vunpack.c.l.b16 %v2814
    %v2943 = vunpack.c.l.b16 %v2815
    %v2944 = vunpack.c.l.b16 %v2816
    %v2945 = vunpack.c.l.b16 %v2817
    %v2946 = vunpack.c.l.b16 %v2818
    %v2947 = vunpack.c.l.b16 %v2819
    %v2948 = vunpack.c.l.b16 %v2820
    %v2949 = vunpack.c.l.b16 %v2821
    %v2950 = vunpack.c.l.b16 %v2822
    %v2951 = vunpack.c.l.b16 %v2823
    %v2952 = vunpack.c.l.b16 %v2824
    %v2953 = vunpack.c.l.b16 %v2825
    %v2954 = vunpack.c.l.b16 %v2826
    %v2955 = vunpack.c.l.b16 %v2827
    %v2956 = vunpack.c.l.b16 %v2828
    %v2957 = vunpack.c.l.b16 %v2829
    %v2958 = vunpack.c.l.b16 %v2830
    %v2959 = vunpack.c.l.b16 %v2831
    %v2960 = vunpack.c.l.b16 %v2832
    %v2961 = vunpack.c.l.b16 %v2833
    %v2962 = vunpack.c.l.b16 %v2834
    %v2963 = vunpack.c.l.b16 %v2835
    %v2964 = vunpack.c.l.b16 %v2836
    %v2965 = vunpack.c.l.b16 %v2837
    %v2966 = vunpack.c.l.b16 %v2838
    %v2967 = vunpack.c.l.b16 %v2839
    %v2968 = vunpack.c.l.b16 %v2840
    %v2969 = vunpack.c.l.b16 %v2841
    %v2970 = vunpack.c.l.b16 %v2842
    %v2971 = vunpack.c.l.b16 %v2843
    %v2972 = vunpack.c.l.b16 %v2844
    %v2973 = vunpack.c.l.b16 %v2845
    %v2974 = vunpack.c.l.b16 %v2846
    %v2975 = vunpack.c.l.b16 %v2847
    %v2976 = vunpack.c.l.b16 %v2848
    %v2977 = vunpack.c.l.b16 %v2849
    %v2978 = vunpack.c.l.b16 %v2850
    %v2979 = vunpack.c.l.b16 %v2851
    %v2980 = vunpack.c.l.b16 %v2852
    %v2981 = vunpack.c.l.b16 %v2853
    %v2982 = vunpack.c.l.b16 %v2854
    %v2983 = vpack.c.b16 %v2920, %v2919
    %v2984 = vpack.c.b16 %v2922, %v2921
    %v2985 = vpack.c.b16 %v2924, %v2923
    %v2986 = vpack.c.b16 %v2926, %v2925
    %v2987 = vpack.c.b16 %v2928, %v2927
    %v2988 = vpack.c.b16 %v2930, %v2929
    %v2989 = vpack.c.b16 %v2932, %v2931
    %v2990 = vpack.c.b16 %v2934, %v2933
    %v2991 = vpack.c.b16 %v2936, %v2935
    %v2992 = vpack.c.b16 %v2938, %v2937
    %v2993 = vpack.c.b16 %v2940, %v2939
    %v2994 = vpack.c.b16 %v2942, %v2941
    %v2995 = vpack.c.b16 %v2944, %v2943
    %v2996 = vpack.c.b16 %v2946, %v2945
    %v2997 = vpack.c.b16 %v2948, %v2947
    %v2998 = vpack.c.b16 %v2950, %v2949
    %v2999 = vpack.c.b16 %v2952, %v2951
    %v3000 = vpack.c.b16 %v2954, %v2953
    %v3001 = vpack.c.b16 %v2956, %v2955
    %v3002 = vpack.c.b16 %v2958, %v2957
    %v3003 = vpack.c.b16 %v2960, %v2959
    %v3004 = vpack.c.b16 %v2962, %v2961
    %v3005 = vpack.c.b16 %v2964, %v2963
    %v3006 = vpack.c.b16 %v2966, %v2965
    %v3007 = vpack.c.b16 %v2968, %v2967
    %v3008 = vpack.c.b16 %v2970, %v2969
    %v3009 = vpack.c.b16 %v2972, %v2971
    %v3010 = vpack.c.b16 %v2974, %v2973
    %v3011 = vpack.c.b16 %v2976, %v2975
    %v3012 = vpack.c.b16 %v2978, %v2977
    %v3013 = vpack.c.b16 %v2980, %v2979
    %v3014 = vpack.c.b16 %v2982, %v2981
    %3047 = vmatprep.subr.bf16.mxu0 0
    %3048 = vmatpush1.bf16.msra.mxu0 %v2983
    %3049 = vmatprep.subr.bf16.mxu0 0
    %3050 = vmatpush1.bf16.msra.mxu0 %v2984
    %3051 = vmatprep.subr.bf16.mxu0 0
    %3052 = vmatpush1.bf16.msra.mxu0 %v2985
    %3053 = vmatprep.subr.bf16.mxu0 0
    %3054 = vmatpush1.bf16.msra.mxu0 %v2986
    %3055 = vmatprep.subr.bf16.mxu0 0
    %3056 = vmatpush1.bf16.msra.mxu0 %v2987
    %3057 = vmatprep.subr.bf16.mxu0 0
    %3058 = vmatpush1.bf16.msra.mxu0 %v2988
    %3059 = vmatprep.subr.bf16.mxu0 0
    %3060 = vmatpush1.bf16.msra.mxu0 %v2989
    %3061 = vmatprep.subr.bf16.mxu0 0
    %3062 = vmatpush1.bf16.msra.mxu0 %v2990
    %3063 = vmatprep.subr.bf16.mxu0 0
    %3064 = vmatpush1.bf16.msra.mxu0 %v2991
    %3065 = vmatprep.subr.bf16.mxu0 0
    %3066 = vmatpush1.bf16.msra.mxu0 %v2992
    %3067 = vmatprep.subr.bf16.mxu0 0
    %3068 = vmatpush1.bf16.msra.mxu0 %v2993
    %3069 = vmatprep.subr.bf16.mxu0 0
    %3070 = vmatpush1.bf16.msra.mxu0 %v2994
    %3071 = vmatprep.subr.bf16.mxu0 0
    %3072 = vmatpush1.bf16.msra.mxu0 %v2995
    %3073 = vmatprep.subr.bf16.mxu0 0
    %3074 = vmatpush1.bf16.msra.mxu0 %v2996
    %3075 = vmatprep.subr.bf16.mxu0 0
    %3076 = vmatpush1.bf16.msra.mxu0 %v2997
    %3077 = vmatprep.subr.bf16.mxu0 0
    %3078 = vmatpush1.bf16.msra.mxu0 %v2998
    %3079 = vmatprep.mubr.bf16.mxu0 %v2787
    %3080 = vmatmul.mubr.bf16.gmra.mrb[0].mxu0 %v2786
    %v3081 = vpop.f32.mrb[0].mxu0
    %v3082 = vadd.f32 0.0, %v3081
    %v3083 = vpop.f32.mrb[0].mxu0
    %v3084 = vpop.f32.mrb[0].mxu0
    %v3085 = vpop.f32.mrb[0].mxu0
    %3086 = vdwg.mxu0
    %3087 = vmatprep.subr.bf16.mxu0 0
    %3088 = vmatpush1.bf16.msra.mxu0 %v2999
    %3089 = vmatprep.subr.bf16.mxu0 0
    %3090 = vmatpush1.bf16.msra.mxu0 %v3000
    %3091 = vmatprep.subr.bf16.mxu0 0
    %3092 = vmatpush1.bf16.msra.mxu0 %v3001
    %3093 = vmatprep.subr.bf16.mxu0 0
    %3094 = vmatpush1.bf16.msra.mxu0 %v3002
    %3095 = vmatprep.subr.bf16.mxu0 0
    %3096 = vmatpush1.bf16.msra.mxu0 %v3003
    %3097 = vmatprep.subr.bf16.mxu0 0
    %3098 = vmatpush1.bf16.msra.mxu0 %v3004
    %3099 = vmatprep.subr.bf16.mxu0 0
    %3100 = vmatpush1.bf16.msra.mxu0 %v3005
    %3101 = vmatprep.subr.bf16.mxu0 0
    %3102 = vmatpush1.bf16.msra.mxu0 %v3006
    %3103 = vmatprep.subr.bf16.mxu0 0
    %3104 = vmatpush1.bf16.msra.mxu0 %v3007
    %3105 = vmatprep.subr.bf16.mxu0 0
    %3106 = vmatpush1.bf16.msra.mxu0 %v3008
    %3107 = vmatprep.subr.bf16.mxu0 0
    %3108 = vmatpush1.bf16.msra.mxu0 %v3009
    %3109 = vmatprep.subr.bf16.mxu0 0
    %3110 = vmatpush1.bf16.msra.mxu0 %v3010
    %3111 = vmatprep.subr.bf16.mxu0 0
    %3112 = vmatpush1.bf16.msra.mxu0 %v3011
    %3113 = vmatprep.subr.bf16.mxu0 0
    %3114 = vmatpush1.bf16.msra.mxu0 %v3012
    %3115 = vmatprep.subr.bf16.mxu0 0
    %3116 = vmatpush1.bf16.msra.mxu0 %v3013
    %3117 = vmatprep.subr.bf16.mxu0 0
    %3118 = vmatpush1.bf16.msra.mxu0 %v3014
    %3119 = vmatprep.mubr.bf16.mxu0 %v2789
    %3120 = vmatmul.mubr.bf16.gmra.mrb[0].mxu0 %v2788
    %v3121 = vpop.f32.mrb[0].mxu0
    %v3122 = vadd.f32 %v3082, %v3121
    %v3123 = vpop.f32.mrb[0].mxu0
    %v3124 = vpop.f32.mrb[0].mxu0
    %v3125 = vpop.f32.mrb[0].mxu0
    %3126 = vdwg.mxu0
    %v3127 = vadd.f32 %v2785, %v3122
    %v3128 = vpack.c.bf16 %v244, %v244
    %v3129 = vpack.c.bf16 %v246, %v246
    %v3130 = vpack.c.bf16 %v357, %v357
    %v3131 = vpack.c.bf16 %v359, %v359
    %s3132 = scalar_lea.vmem [#allocation4], 2048
    %v3133 = vld [vmem:[%s3132] sm:$0xf]
    %v3134 = vld [vmem:[%s3132 + $0x4] sm:$0xf]
    %v3135 = vld [vmem:[%s3132 + $0x8] sm:$0xf]
    %v3136 = vld [vmem:[%s3132 + $0xc] sm:$0xf]
    %v3137 = vld [vmem:[%s3132 + $0x10] sm:$0xf]
    %v3138 = vld [vmem:[%s3132 + $0x14] sm:$0xf]
    %v3139 = vld [vmem:[%s3132 + $0x18] sm:$0xf]
    %v3140 = vld [vmem:[%s3132 + $0x1c] sm:$0xf]
    %v3141 = vld [vmem:[%s3132 + $0x20] sm:$0xf]
    %v3142 = vld [vmem:[%s3132 + $0x24] sm:$0xf]
    %v3143 = vld [vmem:[%s3132 + $0x28] sm:$0xf]
    %v3144 = vld [vmem:[%s3132 + $0x2c] sm:$0xf]
    %v3145 = vld [vmem:[%s3132 + $0x30] sm:$0xf]
    %v3146 = vld [vmem:[%s3132 + $0x34] sm:$0xf]
    %v3147 = vld [vmem:[%s3132 + $0x38] sm:$0xf]
    %v3148 = vld [vmem:[%s3132 + $0x3c] sm:$0xf]
    %v3149 = vld [vmem:[%s3132 + $0x40] sm:$0xf]
    %v3150 = vld [vmem:[%s3132 + $0x44] sm:$0xf]
    %v3151 = vld [vmem:[%s3132 + $0x48] sm:$0xf]
    %v3152 = vld [vmem:[%s3132 + $0x4c] sm:$0xf]
    %v3153 = vld [vmem:[%s3132 + $0x50] sm:$0xf]
    %v3154 = vld [vmem:[%s3132 + $0x54] sm:$0xf]
    %v3155 = vld [vmem:[%s3132 + $0x58] sm:$0xf]
    %v3156 = vld [vmem:[%s3132 + $0x5c] sm:$0xf]
    %v3157 = vld [vmem:[%s3132 + $0x60] sm:$0xf]
    %v3158 = vld [vmem:[%s3132 + $0x64] sm:$0xf]
    %v3159 = vld [vmem:[%s3132 + $0x68] sm:$0xf]
    %v3160 = vld [vmem:[%s3132 + $0x6c] sm:$0xf]
    %v3161 = vld [vmem:[%s3132 + $0x70] sm:$0xf]
    %v3162 = vld [vmem:[%s3132 + $0x74] sm:$0xf]
    %v3163 = vld [vmem:[%s3132 + $0x78] sm:$0xf]
    %v3164 = vld [vmem:[%s3132 + $0x7c] sm:$0xf]
    %v3165 = vld [vmem:[%s3132 + $0x80] sm:$0xf]
    %v3166 = vld [vmem:[%s3132 + $0x84] sm:$0xf]
    %v3167 = vld [vmem:[%s3132 + $0x88] sm:$0xf]
    %v3168 = vld [vmem:[%s3132 + $0x8c] sm:$0xf]
    %v3169 = vld [vmem:[%s3132 + $0x90] sm:$0xf]
    %v3170 = vld [vmem:[%s3132 + $0x94] sm:$0xf]
    %v3171 = vld [vmem:[%s3132 + $0x98] sm:$0xf]
    %v3172 = vld [vmem:[%s3132 + $0x9c] sm:$0xf]
    %v3173 = vld [vmem:[%s3132 + $0xa0] sm:$0xf]
    %v3174 = vld [vmem:[%s3132 + $0xa4] sm:$0xf]
    %v3175 = vld [vmem:[%s3132 + $0xa8] sm:$0xf]
    %v3176 = vld [vmem:[%s3132 + $0xac] sm:$0xf]
    %v3177 = vld [vmem:[%s3132 + $0xb0] sm:$0xf]
    %v3178 = vld [vmem:[%s3132 + $0xb4] sm:$0xf]
    %v3179 = vld [vmem:[%s3132 + $0xb8] sm:$0xf]
    %v3180 = vld [vmem:[%s3132 + $0xbc] sm:$0xf]
    %v3181 = vld [vmem:[%s3132 + $0xc0] sm:$0xf]
    %v3182 = vld [vmem:[%s3132 + $0xc4] sm:$0xf]
    %v3183 = vld [vmem:[%s3132 + $0xc8] sm:$0xf]
    %v3184 = vld [vmem:[%s3132 + $0xcc] sm:$0xf]
    %v3185 = vld [vmem:[%s3132 + $0xd0] sm:$0xf]
    %v3186 = vld [vmem:[%s3132 + $0xd4] sm:$0xf]
    %v3187 = vld [vmem:[%s3132 + $0xd8] sm:$0xf]
    %v3188 = vld [vmem:[%s3132 + $0xdc] sm:$0xf]
    %v3189 = vld [vmem:[%s3132 + $0xe0] sm:$0xf]
    %v3190 = vld [vmem:[%s3132 + $0xe4] sm:$0xf]
    %v3191 = vld [vmem:[%s3132 + $0xe8] sm:$0xf]
    %v3192 = vld [vmem:[%s3132 + $0xec] sm:$0xf]
    %v3193 = vld [vmem:[%s3132 + $0xf0] sm:$0xf]
    %v3194 = vld [vmem:[%s3132 + $0xf4] sm:$0xf]
    %v3195 = vld [vmem:[%s3132 + $0xf8] sm:$0xf]
    %v3196 = vld [vmem:[%s3132 + $0xfc] sm:$0xf]
    %v3261 = vunpack.c.l.b16 %v3133
    %v3262 = vunpack.c.l.b16 %v3134
    %v3263 = vunpack.c.l.b16 %v3135
    %v3264 = vunpack.c.l.b16 %v3136
    %v3265 = vunpack.c.l.b16 %v3137
    %v3266 = vunpack.c.l.b16 %v3138
    %v3267 = vunpack.c.l.b16 %v3139
    %v3268 = vunpack.c.l.b16 %v3140
    %v3269 = vunpack.c.l.b16 %v3141
    %v3270 = vunpack.c.l.b16 %v3142
    %v3271 = vunpack.c.l.b16 %v3143
    %v3272 = vunpack.c.l.b16 %v3144
    %v3273 = vunpack.c.l.b16 %v3145
    %v3274 = vunpack.c.l.b16 %v3146
    %v3275 = vunpack.c.l.b16 %v3147
    %v3276 = vunpack.c.l.b16 %v3148
    %v3277 = vunpack.c.l.b16 %v3149
    %v3278 = vunpack.c.l.b16 %v3150
    %v3279 = vunpack.c.l.b16 %v3151
    %v3280 = vunpack.c.l.b16 %v3152
    %v3281 = vunpack.c.l.b16 %v3153
    %v3282 = vunpack.c.l.b16 %v3154
    %v3283 = vunpack.c.l.b16 %v3155
    %v3284 = vunpack.c.l.b16 %v3156
    %v3285 = vunpack.c.l.b16 %v3157
    %v3286 = vunpack.c.l.b16 %v3158
    %v3287 = vunpack.c.l.b16 %v3159
    %v3288 = vunpack.c.l.b16 %v3160
    %v3289 = vunpack.c.l.b16 %v3161
    %v3290 = vunpack.c.l.b16 %v3162
    %v3291 = vunpack.c.l.b16 %v3163
    %v3292 = vunpack.c.l.b16 %v3164
    %v3293 = vunpack.c.l.b16 %v3165
    %v3294 = vunpack.c.l.b16 %v3166
    %v3295 = vunpack.c.l.b16 %v3167
    %v3296 = vunpack.c.l.b16 %v3168
    %v3297 = vunpack.c.l.b16 %v3169
    %v3298 = vunpack.c.l.b16 %v3170
    %v3299 = vunpack.c.l.b16 %v3171
    %v3300 = vunpack.c.l.b16 %v3172
    %v3301 = vunpack.c.l.b16 %v3173
    %v3302 = vunpack.c.l.b16 %v3174
    %v3303 = vunpack.c.l.b16 %v3175
    %v3304 = vunpack.c.l.b16 %v3176
    %v3305 = vunpack.c.l.b16 %v3177
    %v3306 = vunpack.c.l.b16 %v3178
    %v3307 = vunpack.c.l.b16 %v3179
    %v3308 = vunpack.c.l.b16 %v3180
    %v3309 = vunpack.c.l.b16 %v3181
    %v3310 = vunpack.c.l.b16 %v3182
    %v3311 = vunpack.c.l.b16 %v3183
    %v3312 = vunpack.c.l.b16 %v3184
    %v3313 = vunpack.c.l.b16 %v3185
    %v3314 = vunpack.c.l.b16 %v3186
    %v3315 = vunpack.c.l.b16 %v3187
    %v3316 = vunpack.c.l.b16 %v3188
    %v3317 = vunpack.c.l.b16 %v3189
    %v3318 = vunpack.c.l.b16 %v3190
    %v3319 = vunpack.c.l.b16 %v3191
    %v3320 = vunpack.c.l.b16 %v3192
    %v3321 = vunpack.c.l.b16 %v3193
    %v3322 = vunpack.c.l.b16 %v3194
    %v3323 = vunpack.c.l.b16 %v3195
    %v3324 = vunpack.c.l.b16 %v3196
    %v3325 = vpack.c.b16 %v3262, %v3261
    %v3326 = vpack.c.b16 %v3264, %v3263
    %v3327 = vpack.c.b16 %v3266, %v3265
    %v3328 = vpack.c.b16 %v3268, %v3267
    %v3329 = vpack.c.b16 %v3270, %v3269
    %v3330 = vpack.c.b16 %v3272, %v3271
    %v3331 = vpack.c.b16 %v3274, %v3273
    %v3332 = vpack.c.b16 %v3276, %v3275
    %v3333 = vpack.c.b16 %v3278, %v3277
    %v3334 = vpack.c.b16 %v3280, %v3279
    %v3335 = vpack.c.b16 %v3282, %v3281
    %v3336 = vpack.c.b16 %v3284, %v3283
    %v3337 = vpack.c.b16 %v3286, %v3285
    %v3338 = vpack.c.b16 %v3288, %v3287
    %v3339 = vpack.c.b16 %v3290, %v3289
    %v3340 = vpack.c.b16 %v3292, %v3291
    %v3341 = vpack.c.b16 %v3294, %v3293
    %v3342 = vpack.c.b16 %v3296, %v3295
    %v3343 = vpack.c.b16 %v3298, %v3297
    %v3344 = vpack.c.b16 %v3300, %v3299
    %v3345 = vpack.c.b16 %v3302, %v3301
    %v3346 = vpack.c.b16 %v3304, %v3303
    %v3347 = vpack.c.b16 %v3306, %v3305
    %v3348 = vpack.c.b16 %v3308, %v3307
    %v3349 = vpack.c.b16 %v3310, %v3309
    %v3350 = vpack.c.b16 %v3312, %v3311
    %v3351 = vpack.c.b16 %v3314, %v3313
    %v3352 = vpack.c.b16 %v3316, %v3315
    %v3353 = vpack.c.b16 %v3318, %v3317
    %v3354 = vpack.c.b16 %v3320, %v3319
    %v3355 = vpack.c.b16 %v3322, %v3321
    %v3356 = vpack.c.b16 %v3324, %v3323
    %3389 = vmatprep.subr.bf16.mxu0 0
    %3390 = vmatpush1.bf16.msra.mxu0 %v3325
    %3391 = vmatprep.subr.bf16.mxu0 0
    %3392 = vmatpush1.bf16.msra.mxu0 %v3326
    %3393 = vmatprep.subr.bf16.mxu0 0
    %3394 = vmatpush1.bf16.msra.mxu0 %v3327
    %3395 = vmatprep.subr.bf16.mxu0 0
    %3396 = vmatpush1.bf16.msra.mxu0 %v3328
    %3397 = vmatprep.subr.bf16.mxu0 0
    %3398 = vmatpush1.bf16.msra.mxu0 %v3329
    %3399 = vmatprep.subr.bf16.mxu0 0
    %3400 = vmatpush1.bf16.msra.mxu0 %v3330
    %3401 = vmatprep.subr.bf16.mxu0 0
    %3402 = vmatpush1.bf16.msra.mxu0 %v3331
    %3403 = vmatprep.subr.bf16.mxu0 0
    %3404 = vmatpush1.bf16.msra.mxu0 %v3332
    %3405 = vmatprep.subr.bf16.mxu0 0
    %3406 = vmatpush1.bf16.msra.mxu0 %v3333
    %3407 = vmatprep.subr.bf16.mxu0 0
    %3408 = vmatpush1.bf16.msra.mxu0 %v3334
    %3409 = vmatprep.subr.bf16.mxu0 0
    %3410 = vmatpush1.bf16.msra.mxu0 %v3335
    %3411 = vmatprep.subr.bf16.mxu0 0
    %3412 = vmatpush1.bf16.msra.mxu0 %v3336
    %3413 = vmatprep.subr.bf16.mxu0 0
    %3414 = vmatpush1.bf16.msra.mxu0 %v3337
    %3415 = vmatprep.subr.bf16.mxu0 0
    %3416 = vmatpush1.bf16.msra.mxu0 %v3338
    %3417 = vmatprep.subr.bf16.mxu0 0
    %3418 = vmatpush1.bf16.msra.mxu0 %v3339
    %3419 = vmatprep.subr.bf16.mxu0 0
    %3420 = vmatpush1.bf16.msra.mxu0 %v3340
    %3421 = vmatprep.mubr.bf16.mxu0 %v3129
    %3422 = vmatmul.mubr.bf16.gmra.mrb[0].mxu0 %v3128
    %v3423 = vpop.f32.mrb[0].mxu0
    %v3424 = vadd.f32 0.0, %v3423
    %v3425 = vpop.f32.mrb[0].mxu0
    %v3426 = vpop.f32.mrb[0].mxu0
    %v3427 = vpop.f32.mrb[0].mxu0
    %3428 = vdwg.mxu0
    %3429 = vmatprep.subr.bf16.mxu0 0
    %3430 = vmatpush1.bf16.msra.mxu0 %v3341
    %3431 = vmatprep.subr.bf16.mxu0 0
    %3432 = vmatpush1.bf16.msra.mxu0 %v3342
    %3433 = vmatprep.subr.bf16.mxu0 0
    %3434 = vmatpush1.bf16.msra.mxu0 %v3343
    %3435 = vmatprep.subr.bf16.mxu0 0
    %3436 = vmatpush1.bf16.msra.mxu0 %v3344
    %3437 = vmatprep.subr.bf16.mxu0 0
    %3438 = vmatpush1.bf16.msra.mxu0 %v3345
    %3439 = vmatprep.subr.bf16.mxu0 0
    %3440 = vmatpush1.bf16.msra.mxu0 %v3346
    %3441 = vmatprep.subr.bf16.mxu0 0
    %3442 = vmatpush1.bf16.msra.mxu0 %v3347
    %3443 = vmatprep.subr.bf16.mxu0 0
    %3444 = vmatpush1.bf16.msra.mxu0 %v3348
    %3445 = vmatprep.subr.bf16.mxu0 0
    %3446 = vmatpush1.bf16.msra.mxu0 %v3349
    %3447 = vmatprep.subr.bf16.mxu0 0
    %3448 = vmatpush1.bf16.msra.mxu0 %v3350
    %3449 = vmatprep.subr.bf16.mxu0 0
    %3450 = vmatpush1.bf16.msra.mxu0 %v3351
    %3451 = vmatprep.subr.bf16.mxu0 0
    %3452 = vmatpush1.bf16.msra.mxu0 %v3352
    %3453 = vmatprep.subr.bf16.mxu0 0
    %3454 = vmatpush1.bf16.msra.mxu0 %v3353
    %3455 = vmatprep.subr.bf16.mxu0 0
    %3456 = vmatpush1.bf16.msra.mxu0 %v3354
    %3457 = vmatprep.subr.bf16.mxu0 0
    %3458 = vmatpush1.bf16.msra.mxu0 %v3355
    %3459 = vmatprep.subr.bf16.mxu0 0
    %3460 = vmatpush1.bf16.msra.mxu0 %v3356
    %3461 = vmatprep.mubr.bf16.mxu0 %v3131
    %3462 = vmatmul.mubr.bf16.gmra.mrb[0].mxu0 %v3130
    %v3463 = vpop.f32.mrb[0].mxu0
    %v3464 = vadd.f32 %v3424, %v3463
    %v3465 = vpop.f32.mrb[0].mxu0
    %v3466 = vpop.f32.mrb[0].mxu0
    %v3467 = vpop.f32.mrb[0].mxu0
    %3468 = vdwg.mxu0
    %v3469 = vadd.f32 %v3127, %v3464
    %v3470 = vpack.c.bf16 %v248, %v248
    %v3471 = vpack.c.bf16 %v250, %v250
    %v3472 = vpack.c.bf16 %v361, %v361
    %v3473 = vpack.c.bf16 %v363, %v363
    %s3474 = scalar_lea.vmem [#allocation4], 2304
    %v3475 = vld [vmem:[%s3474] sm:$0xf]
    %v3476 = vld [vmem:[%s3474 + $0x4] sm:$0xf]
    %v3477 = vld [vmem:[%s3474 + $0x8] sm:$0xf]
    %v3478 = vld [vmem:[%s3474 + $0xc] sm:$0xf]
    %v3479 = vld [vmem:[%s3474 + $0x10] sm:$0xf]
    %v3480 = vld [vmem:[%s3474 + $0x14] sm:$0xf]
    %v3481 = vld [vmem:[%s3474 + $0x18] sm:$0xf]
    %v3482 = vld [vmem:[%s3474 + $0x1c] sm:$0xf]
    %v3483 = vld [vmem:[%s3474 + $0x20] sm:$0xf]
    %v3484 = vld [vmem:[%s3474 + $0x24] sm:$0xf]
    %v3485 = vld [vmem:[%s3474 + $0x28] sm:$0xf]
    %v3486 = vld [vmem:[%s3474 + $0x2c] sm:$0xf]
    %v3487 = vld [vmem:[%s3474 + $0x30] sm:$0xf]
    %v3488 = vld [vmem:[%s3474 + $0x34] sm:$0xf]
    %v3489 = vld [vmem:[%s3474 + $0x38] sm:$0xf]
    %v3490 = vld [vmem:[%s3474 + $0x3c] sm:$0xf]
    %v3491 = vld [vmem:[%s3474 + $0x40] sm:$0xf]
    %v3492 = vld [vmem:[%s3474 + $0x44] sm:$0xf]
    %v3493 = vld [vmem:[%s3474 + $0x48] sm:$0xf]
    %v3494 = vld [vmem:[%s3474 + $0x4c] sm:$0xf]
    %v3495 = vld [vmem:[%s3474 + $0x50] sm:$0xf]
    %v3496 = vld [vmem:[%s3474 + $0x54] sm:$0xf]
    %v3497 = vld [vmem:[%s3474 + $0x58] sm:$0xf]
    %v3498 = vld [vmem:[%s3474 + $0x5c] sm:$0xf]
    %v3499 = vld [vmem:[%s3474 + $0x60] sm:$0xf]
    %v3500 = vld [vmem:[%s3474 + $0x64] sm:$0xf]
    %v3501 = vld [vmem:[%s3474 + $0x68] sm:$0xf]
    %v3502 = vld [vmem:[%s3474 + $0x6c] sm:$0xf]
    %v3503 = vld [vmem:[%s3474 + $0x70] sm:$0xf]
    %v3504 = vld [vmem:[%s3474 + $0x74] sm:$0xf]
    %v3505 = vld [vmem:[%s3474 + $0x78] sm:$0xf]
    %v3506 = vld [vmem:[%s3474 + $0x7c] sm:$0xf]
    %v3507 = vld [vmem:[%s3474 + $0x80] sm:$0xf]
    %v3508 = vld [vmem:[%s3474 + $0x84] sm:$0xf]
    %v3509 = vld [vmem:[%s3474 + $0x88] sm:$0xf]
    %v3510 = vld [vmem:[%s3474 + $0x8c] sm:$0xf]
    %v3511 = vld [vmem:[%s3474 + $0x90] sm:$0xf]
    %v3512 = vld [vmem:[%s3474 + $0x94] sm:$0xf]
    %v3513 = vld [vmem:[%s3474 + $0x98] sm:$0xf]
    %v3514 = vld [vmem:[%s3474 + $0x9c] sm:$0xf]
    %v3515 = vld [vmem:[%s3474 + $0xa0] sm:$0xf]
    %v3516 = vld [vmem:[%s3474 + $0xa4] sm:$0xf]
    %v3517 = vld [vmem:[%s3474 + $0xa8] sm:$0xf]
    %v3518 = vld [vmem:[%s3474 + $0xac] sm:$0xf]
    %v3519 = vld [vmem:[%s3474 + $0xb0] sm:$0xf]
    %v3520 = vld [vmem:[%s3474 + $0xb4] sm:$0xf]
    %v3521 = vld [vmem:[%s3474 + $0xb8] sm:$0xf]
    %v3522 = vld [vmem:[%s3474 + $0xbc] sm:$0xf]
    %v3523 = vld [vmem:[%s3474 + $0xc0] sm:$0xf]
    %v3524 = vld [vmem:[%s3474 + $0xc4] sm:$0xf]
    %v3525 = vld [vmem:[%s3474 + $0xc8] sm:$0xf]
    %v3526 = vld [vmem:[%s3474 + $0xcc] sm:$0xf]
    %v3527 = vld [vmem:[%s3474 + $0xd0] sm:$0xf]
    %v3528 = vld [vmem:[%s3474 + $0xd4] sm:$0xf]
    %v3529 = vld [vmem:[%s3474 + $0xd8] sm:$0xf]
    %v3530 = vld [vmem:[%s3474 + $0xdc] sm:$0xf]
    %v3531 = vld [vmem:[%s3474 + $0xe0] sm:$0xf]
    %v3532 = vld [vmem:[%s3474 + $0xe4] sm:$0xf]
    %v3533 = vld [vmem:[%s3474 + $0xe8] sm:$0xf]
    %v3534 = vld [vmem:[%s3474 + $0xec] sm:$0xf]
    %v3535 = vld [vmem:[%s3474 + $0xf0] sm:$0xf]
    %v3536 = vld [vmem:[%s3474 + $0xf4] sm:$0xf]
    %v3537 = vld [vmem:[%s3474 + $0xf8] sm:$0xf]
    %v3538 = vld [vmem:[%s3474 + $0xfc] sm:$0xf]
    %v3603 = vunpack.c.l.b16 %v3475
    %v3604 = vunpack.c.l.b16 %v3476
    %v3605 = vunpack.c.l.b16 %v3477
    %v3606 = vunpack.c.l.b16 %v3478
    %v3607 = vunpack.c.l.b16 %v3479
    %v3608 = vunpack.c.l.b16 %v3480
    %v3609 = vunpack.c.l.b16 %v3481
    %v3610 = vunpack.c.l.b16 %v3482
    %v3611 = vunpack.c.l.b16 %v3483
    %v3612 = vunpack.c.l.b16 %v3484
    %v3613 = vunpack.c.l.b16 %v3485
    %v3614 = vunpack.c.l.b16 %v3486
    %v3615 = vunpack.c.l.b16 %v3487
    %v3616 = vunpack.c.l.b16 %v3488
    %v3617 = vunpack.c.l.b16 %v3489
    %v3618 = vunpack.c.l.b16 %v3490
    %v3619 = vunpack.c.l.b16 %v3491
    %v3620 = vunpack.c.l.b16 %v3492
    %v3621 = vunpack.c.l.b16 %v3493
    %v3622 = vunpack.c.l.b16 %v3494
    %v3623 = vunpack.c.l.b16 %v3495
    %v3624 = vunpack.c.l.b16 %v3496
    %v3625 = vunpack.c.l.b16 %v3497
    %v3626 = vunpack.c.l.b16 %v3498
    %v3627 = vunpack.c.l.b16 %v3499
    %v3628 = vunpack.c.l.b16 %v3500
    %v3629 = vunpack.c.l.b16 %v3501
    %v3630 = vunpack.c.l.b16 %v3502
    %v3631 = vunpack.c.l.b16 %v3503
    %v3632 = vunpack.c.l.b16 %v3504
    %v3633 = vunpack.c.l.b16 %v3505
    %v3634 = vunpack.c.l.b16 %v3506
    %v3635 = vunpack.c.l.b16 %v3507
    %v3636 = vunpack.c.l.b16 %v3508
    %v3637 = vunpack.c.l.b16 %v3509
    %v3638 = vunpack.c.l.b16 %v3510
    %v3639 = vunpack.c.l.b16 %v3511
    %v3640 = vunpack.c.l.b16 %v3512
    %v3641 = vunpack.c.l.b16 %v3513
    %v3642 = vunpack.c.l.b16 %v3514
    %v3643 = vunpack.c.l.b16 %v3515
    %v3644 = vunpack.c.l.b16 %v3516
    %v3645 = vunpack.c.l.b16 %v3517
    %v3646 = vunpack.c.l.b16 %v3518
    %v3647 = vunpack.c.l.b16 %v3519
    %v3648 = vunpack.c.l.b16 %v3520
    %v3649 = vunpack.c.l.b16 %v3521
    %v3650 = vunpack.c.l.b16 %v3522
    %v3651 = vunpack.c.l.b16 %v3523
    %v3652 = vunpack.c.l.b16 %v3524
    %v3653 = vunpack.c.l.b16 %v3525
    %v3654 = vunpack.c.l.b16 %v3526
    %v3655 = vunpack.c.l.b16 %v3527
    %v3656 = vunpack.c.l.b16 %v3528
    %v3657 = vunpack.c.l.b16 %v3529
    %v3658 = vunpack.c.l.b16 %v3530
    %v3659 = vunpack.c.l.b16 %v3531
    %v3660 = vunpack.c.l.b16 %v3532
    %v3661 = vunpack.c.l.b16 %v3533
    %v3662 = vunpack.c.l.b16 %v3534
    %v3663 = vunpack.c.l.b16 %v3535
    %v3664 = vunpack.c.l.b16 %v3536
    %v3665 = vunpack.c.l.b16 %v3537
    %v3666 = vunpack.c.l.b16 %v3538
    %v3667 = vpack.c.b16 %v3604, %v3603
    %v3668 = vpack.c.b16 %v3606, %v3605
    %v3669 = vpack.c.b16 %v3608, %v3607
    %v3670 = vpack.c.b16 %v3610, %v3609
    %v3671 = vpack.c.b16 %v3612, %v3611
    %v3672 = vpack.c.b16 %v3614, %v3613
    %v3673 = vpack.c.b16 %v3616, %v3615
    %v3674 = vpack.c.b16 %v3618, %v3617
    %v3675 = vpack.c.b16 %v3620, %v3619
    %v3676 = vpack.c.b16 %v3622, %v3621
    %v3677 = vpack.c.b16 %v3624, %v3623
    %v3678 = vpack.c.b16 %v3626, %v3625
    %v3679 = vpack.c.b16 %v3628, %v3627
    %v3680 = vpack.c.b16 %v3630, %v3629
    %v3681 = vpack.c.b16 %v3632, %v3631
    %v3682 = vpack.c.b16 %v3634, %v3633
    %v3683 = vpack.c.b16 %v3636, %v3635
    %v3684 = vpack.c.b16 %v3638, %v3637
    %v3685 = vpack.c.b16 %v3640, %v3639
    %v3686 = vpack.c.b16 %v3642, %v3641
    %v3687 = vpack.c.b16 %v3644, %v3643
    %v3688 = vpack.c.b16 %v3646, %v3645
    %v3689 = vpack.c.b16 %v3648, %v3647
    %v3690 = vpack.c.b16 %v3650, %v3649
    %v3691 = vpack.c.b16 %v3652, %v3651
    %v3692 = vpack.c.b16 %v3654, %v3653
    %v3693 = vpack.c.b16 %v3656, %v3655
    %v3694 = vpack.c.b16 %v3658, %v3657
    %v3695 = vpack.c.b16 %v3660, %v3659
    %v3696 = vpack.c.b16 %v3662, %v3661
    %v3697 = vpack.c.b16 %v3664, %v3663
    %v3698 = vpack.c.b16 %v3666, %v3665
    %3731 = vmatprep.subr.bf16.mxu0 0
    %3732 = vmatpush1.bf16.msra.mxu0 %v3667
    %3733 = vmatprep.subr.bf16.mxu0 0
    %3734 = vmatpush1.bf16.msra.mxu0 %v3668
    %3735 = vmatprep.subr.bf16.mxu0 0
    %3736 = vmatpush1.bf16.msra.mxu0 %v3669
    %3737 = vmatprep.subr.bf16.mxu0 0
    %3738 = vmatpush1.bf16.msra.mxu0 %v3670
    %3739 = vmatprep.subr.bf16.mxu0 0
    %3740 = vmatpush1.bf16.msra.mxu0 %v3671
    %3741 = vmatprep.subr.bf16.mxu0 0
    %3742 = vmatpush1.bf16.msra.mxu0 %v3672
    %3743 = vmatprep.subr.bf16.mxu0 0
    %3744 = vmatpush1.bf16.msra.mxu0 %v3673
    %3745 = vmatprep.subr.bf16.mxu0 0
    %3746 = vmatpush1.bf16.msra.mxu0 %v3674
    %3747 = vmatprep.subr.bf16.mxu0 0
    %3748 = vmatpush1.bf16.msra.mxu0 %v3675
    %3749 = vmatprep.subr.bf16.mxu0 0
    %3750 = vmatpush1.bf16.msra.mxu0 %v3676
    %3751 = vmatprep.subr.bf16.mxu0 0
    %3752 = vmatpush1.bf16.msra.mxu0 %v3677
    %3753 = vmatprep.subr.bf16.mxu0 0
    %3754 = vmatpush1.bf16.msra.mxu0 %v3678
    %3755 = vmatprep.subr.bf16.mxu0 0
    %3756 = vmatpush1.bf16.msra.mxu0 %v3679
    %3757 = vmatprep.subr.bf16.mxu0 0
    %3758 = vmatpush1.bf16.msra.mxu0 %v3680
    %3759 = vmatprep.subr.bf16.mxu0 0
    %3760 = vmatpush1.bf16.msra.mxu0 %v3681
    %3761 = vmatprep.subr.bf16.mxu0 0
    %3762 = vmatpush1.bf16.msra.mxu0 %v3682
    %3763 = vmatprep.mubr.bf16.mxu0 %v3471
    %3764 = vmatmul.mubr.bf16.gmra.mrb[0].mxu0 %v3470
    %v3765 = vpop.f32.mrb[0].mxu0
    %v3766 = vadd.f32 0.0, %v3765
    %v3767 = vpop.f32.mrb[0].mxu0
    %v3768 = vpop.f32.mrb[0].mxu0
    %v3769 = vpop.f32.mrb[0].mxu0
    %3770 = vdwg.mxu0
    %3771 = vmatprep.subr.bf16.mxu0 0
    %3772 = vmatpush1.bf16.msra.mxu0 %v3683
    %3773 = vmatprep.subr.bf16.mxu0 0
    %3774 = vmatpush1.bf16.msra.mxu0 %v3684
    %3775 = vmatprep.subr.bf16.mxu0 0
    %3776 = vmatpush1.bf16.msra.mxu0 %v3685
    %3777 = vmatprep.subr.bf16.mxu0 0
    %3778 = vmatpush1.bf16.msra.mxu0 %v3686
    %3779 = vmatprep.subr.bf16.mxu0 0
    %3780 = vmatpush1.bf16.msra.mxu0 %v3687
    %3781 = vmatprep.subr.bf16.mxu0 0
    %3782 = vmatpush1.bf16.msra.mxu0 %v3688
    %3783 = vmatprep.subr.bf16.mxu0 0
    %3784 = vmatpush1.bf16.msra.mxu0 %v3689
    %3785 = vmatprep.subr.bf16.mxu0 0
    %3786 = vmatpush1.bf16.msra.mxu0 %v3690
    %3787 = vmatprep.subr.bf16.mxu0 0
    %3788 = vmatpush1.bf16.msra.mxu0 %v3691
    %3789 = vmatprep.subr.bf16.mxu0 0
    %3790 = vmatpush1.bf16.msra.mxu0 %v3692
    %3791 = vmatprep.subr.bf16.mxu0 0
    %3792 = vmatpush1.bf16.msra.mxu0 %v3693
    %3793 = vmatprep.subr.bf16.mxu0 0
    %3794 = vmatpush1.bf16.msra.mxu0 %v3694
    %3795 = vmatprep.subr.bf16.mxu0 0
    %3796 = vmatpush1.bf16.msra.mxu0 %v3695
    %3797 = vmatprep.subr.bf16.mxu0 0
    %3798 = vmatpush1.bf16.msra.mxu0 %v3696
    %3799 = vmatprep.subr.bf16.mxu0 0
    %3800 = vmatpush1.bf16.msra.mxu0 %v3697
    %3801 = vmatprep.subr.bf16.mxu0 0
    %3802 = vmatpush1.bf16.msra.mxu0 %v3698
    %3803 = vmatprep.mubr.bf16.mxu0 %v3473
    %3804 = vmatmul.mubr.bf16.gmra.mrb[0].mxu0 %v3472
    %v3805 = vpop.f32.mrb[0].mxu0
    %v3806 = vadd.f32 %v3766, %v3805
    %v3807 = vpop.f32.mrb[0].mxu0
    %v3808 = vpop.f32.mrb[0].mxu0
    %v3809 = vpop.f32.mrb[0].mxu0
    %3810 = vdwg.mxu0
    %v3811 = vadd.f32 %v3469, %v3806
    %v3812 = vpack.c.bf16 %v254, %v254
    %v3813 = vpack.c.bf16 %v256, %v256
    %v3814 = vpack.c.bf16 %v367, %v367
    %v3815 = vpack.c.bf16 %v369, %v369
    %s3816 = scalar_lea.vmem [#allocation4], 2560
    %v3817 = vld [vmem:[%s3816] sm:$0xf]
    %v3818 = vld [vmem:[%s3816 + $0x4] sm:$0xf]
    %v3819 = vld [vmem:[%s3816 + $0x8] sm:$0xf]
    %v3820 = vld [vmem:[%s3816 + $0xc] sm:$0xf]
    %v3821 = vld [vmem:[%s3816 + $0x10] sm:$0xf]
    %v3822 = vld [vmem:[%s3816 + $0x14] sm:$0xf]
    %v3823 = vld [vmem:[%s3816 + $0x18] sm:$0xf]
    %v3824 = vld [vmem:[%s3816 + $0x1c] sm:$0xf]
    %v3825 = vld [vmem:[%s3816 + $0x20] sm:$0xf]
    %v3826 = vld [vmem:[%s3816 + $0x24] sm:$0xf]
    %v3827 = vld [vmem:[%s3816 + $0x28] sm:$0xf]
    %v3828 = vld [vmem:[%s3816 + $0x2c] sm:$0xf]
    %v3829 = vld [vmem:[%s3816 + $0x30] sm:$0xf]
    %v3830 = vld [vmem:[%s3816 + $0x34] sm:$0xf]
    %v3831 = vld [vmem:[%s3816 + $0x38] sm:$0xf]
    %v3832 = vld [vmem:[%s3816 + $0x3c] sm:$0xf]
    %v3833 = vld [vmem:[%s3816 + $0x40] sm:$0xf]
    %v3834 = vld [vmem:[%s3816 + $0x44] sm:$0xf]
    %v3835 = vld [vmem:[%s3816 + $0x48] sm:$0xf]
    %v3836 = vld [vmem:[%s3816 + $0x4c] sm:$0xf]
    %v3837 = vld [vmem:[%s3816 + $0x50] sm:$0xf]
    %v3838 = vld [vmem:[%s3816 + $0x54] sm:$0xf]
    %v3839 = vld [vmem:[%s3816 + $0x58] sm:$0xf]
    %v3840 = vld [vmem:[%s3816 + $0x5c] sm:$0xf]
    %v3841 = vld [vmem:[%s3816 + $0x60] sm:$0xf]
    %v3842 = vld [vmem:[%s3816 + $0x64] sm:$0xf]
    %v3843 = vld [vmem:[%s3816 + $0x68] sm:$0xf]
    %v3844 = vld [vmem:[%s3816 + $0x6c] sm:$0xf]
    %v3845 = vld [vmem:[%s3816 + $0x70] sm:$0xf]
    %v3846 = vld [vmem:[%s3816 + $0x74] sm:$0xf]
    %v3847 = vld [vmem:[%s3816 + $0x78] sm:$0xf]
    %v3848 = vld [vmem:[%s3816 + $0x7c] sm:$0xf]
    %v3849 = vld [vmem:[%s3816 + $0x80] sm:$0xf]
    %v3850 = vld [vmem:[%s3816 + $0x84] sm:$0xf]
    %v3851 = vld [vmem:[%s3816 + $0x88] sm:$0xf]
    %v3852 = vld [vmem:[%s3816 + $0x8c] sm:$0xf]
    %v3853 = vld [vmem:[%s3816 + $0x90] sm:$0xf]
    %v3854 = vld [vmem:[%s3816 + $0x94] sm:$0xf]
    %v3855 = vld [vmem:[%s3816 + $0x98] sm:$0xf]
    %v3856 = vld [vmem:[%s3816 + $0x9c] sm:$0xf]
    %v3857 = vld [vmem:[%s3816 + $0xa0] sm:$0xf]
    %v3858 = vld [vmem:[%s3816 + $0xa4] sm:$0xf]
    %v3859 = vld [vmem:[%s3816 + $0xa8] sm:$0xf]
    %v3860 = vld [vmem:[%s3816 + $0xac] sm:$0xf]
    %v3861 = vld [vmem:[%s3816 + $0xb0] sm:$0xf]
    %v3862 = vld [vmem:[%s3816 + $0xb4] sm:$0xf]
    %v3863 = vld [vmem:[%s3816 + $0xb8] sm:$0xf]
    %v3864 = vld [vmem:[%s3816 + $0xbc] sm:$0xf]
    %v3865 = vld [vmem:[%s3816 + $0xc0] sm:$0xf]
    %v3866 = vld [vmem:[%s3816 + $0xc4] sm:$0xf]
    %v3867 = vld [vmem:[%s3816 + $0xc8] sm:$0xf]
    %v3868 = vld [vmem:[%s3816 + $0xcc] sm:$0xf]
    %v3869 = vld [vmem:[%s3816 + $0xd0] sm:$0xf]
    %v3870 = vld [vmem:[%s3816 + $0xd4] sm:$0xf]
    %v3871 = vld [vmem:[%s3816 + $0xd8] sm:$0xf]
    %v3872 = vld [vmem:[%s3816 + $0xdc] sm:$0xf]
    %v3873 = vld [vmem:[%s3816 + $0xe0] sm:$0xf]
    %v3874 = vld [vmem:[%s3816 + $0xe4] sm:$0xf]
    %v3875 = vld [vmem:[%s3816 + $0xe8] sm:$0xf]
    %v3876 = vld [vmem:[%s3816 + $0xec] sm:$0xf]
    %v3877 = vld [vmem:[%s3816 + $0xf0] sm:$0xf]
    %v3878 = vld [vmem:[%s3816 + $0xf4] sm:$0xf]
    %v3879 = vld [vmem:[%s3816 + $0xf8] sm:$0xf]
    %v3880 = vld [vmem:[%s3816 + $0xfc] sm:$0xf]
    %v3945 = vunpack.c.l.b16 %v3817
    %v3946 = vunpack.c.l.b16 %v3818
    %v3947 = vunpack.c.l.b16 %v3819
    %v3948 = vunpack.c.l.b16 %v3820
    %v3949 = vunpack.c.l.b16 %v3821
    %v3950 = vunpack.c.l.b16 %v3822
    %v3951 = vunpack.c.l.b16 %v3823
    %v3952 = vunpack.c.l.b16 %v3824
    %v3953 = vunpack.c.l.b16 %v3825
    %v3954 = vunpack.c.l.b16 %v3826
    %v3955 = vunpack.c.l.b16 %v3827
    %v3956 = vunpack.c.l.b16 %v3828
    %v3957 = vunpack.c.l.b16 %v3829
    %v3958 = vunpack.c.l.b16 %v3830
    %v3959 = vunpack.c.l.b16 %v3831
    %v3960 = vunpack.c.l.b16 %v3832
    %v3961 = vunpack.c.l.b16 %v3833
    %v3962 = vunpack.c.l.b16 %v3834
    %v3963 = vunpack.c.l.b16 %v3835
    %v3964 = vunpack.c.l.b16 %v3836
    %v3965 = vunpack.c.l.b16 %v3837
    %v3966 = vunpack.c.l.b16 %v3838
    %v3967 = vunpack.c.l.b16 %v3839
    %v3968 = vunpack.c.l.b16 %v3840
    %v3969 = vunpack.c.l.b16 %v3841
    %v3970 = vunpack.c.l.b16 %v3842
    %v3971 = vunpack.c.l.b16 %v3843
    %v3972 = vunpack.c.l.b16 %v3844
    %v3973 = vunpack.c.l.b16 %v3845
    %v3974 = vunpack.c.l.b16 %v3846
    %v3975 = vunpack.c.l.b16 %v3847
    %v3976 = vunpack.c.l.b16 %v3848
    %v3977 = vunpack.c.l.b16 %v3849
    %v3978 = vunpack.c.l.b16 %v3850
    %v3979 = vunpack.c.l.b16 %v3851
    %v3980 = vunpack.c.l.b16 %v3852
    %v3981 = vunpack.c.l.b16 %v3853
    %v3982 = vunpack.c.l.b16 %v3854
    %v3983 = vunpack.c.l.b16 %v3855
    %v3984 = vunpack.c.l.b16 %v3856
    %v3985 = vunpack.c.l.b16 %v3857
    %v3986 = vunpack.c.l.b16 %v3858
    %v3987 = vunpack.c.l.b16 %v3859
    %v3988 = vunpack.c.l.b16 %v3860
    %v3989 = vunpack.c.l.b16 %v3861
    %v3990 = vunpack.c.l.b16 %v3862
    %v3991 = vunpack.c.l.b16 %v3863
    %v3992 = vunpack.c.l.b16 %v3864
    %v3993 = vunpack.c.l.b16 %v3865
    %v3994 = vunpack.c.l.b16 %v3866
    %v3995 = vunpack.c.l.b16 %v3867
    %v3996 = vunpack.c.l.b16 %v3868
    %v3997 = vunpack.c.l.b16 %v3869
    %v3998 = vunpack.c.l.b16 %v3870
    %v3999 = vunpack.c.l.b16 %v3871
    %v4000 = vunpack.c.l.b16 %v3872
    %v4001 = vunpack.c.l.b16 %v3873
    %v4002 = vunpack.c.l.b16 %v3874
    %v4003 = vunpack.c.l.b16 %v3875
    %v4004 = vunpack.c.l.b16 %v3876
    %v4005 = vunpack.c.l.b16 %v3877
    %v4006 = vunpack.c.l.b16 %v3878
    %v4007 = vunpack.c.l.b16 %v3879
    %v4008 = vunpack.c.l.b16 %v3880
    %v4009 = vpack.c.b16 %v3946, %v3945
    %v4010 = vpack.c.b16 %v3948, %v3947
    %v4011 = vpack.c.b16 %v3950, %v3949
    %v4012 = vpack.c.b16 %v3952, %v3951
    %v4013 = vpack.c.b16 %v3954, %v3953
    %v4014 = vpack.c.b16 %v3956, %v3955
    %v4015 = vpack.c.b16 %v3958, %v3957
    %v4016 = vpack.c.b16 %v3960, %v3959
    %v4017 = vpack.c.b16 %v3962, %v3961
    %v4018 = vpack.c.b16 %v3964, %v3963
    %v4019 = vpack.c.b16 %v3966, %v3965
    %v4020 = vpack.c.b16 %v3968, %v3967
    %v4021 = vpack.c.b16 %v3970, %v3969
    %v4022 = vpack.c.b16 %v3972, %v3971
    %v4023 = vpack.c.b16 %v3974, %v3973
    %v4024 = vpack.c.b16 %v3976, %v3975
    %v4025 = vpack.c.b16 %v3978, %v3977
    %v4026 = vpack.c.b16 %v3980, %v3979
    %v4027 = vpack.c.b16 %v3982, %v3981
    %v4028 = vpack.c.b16 %v3984, %v3983
    %v4029 = vpack.c.b16 %v3986, %v3985
    %v4030 = vpack.c.b16 %v3988, %v3987
    %v4031 = vpack.c.b16 %v3990, %v3989
    %v4032 = vpack.c.b16 %v3992, %v3991
    %v4033 = vpack.c.b16 %v3994, %v3993
    %v4034 = vpack.c.b16 %v3996, %v3995
    %v4035 = vpack.c.b16 %v3998, %v3997
    %v4036 = vpack.c.b16 %v4000, %v3999
    %v4037 = vpack.c.b16 %v4002, %v4001
    %v4038 = vpack.c.b16 %v4004, %v4003
    %v4039 = vpack.c.b16 %v4006, %v4005
    %v4040 = vpack.c.b16 %v4008, %v4007
    %4073 = vmatprep.subr.bf16.mxu0 0
    %4074 = vmatpush1.bf16.msra.mxu0 %v4009
    %4075 = vmatprep.subr.bf16.mxu0 0
    %4076 = vmatpush1.bf16.msra.mxu0 %v4010
    %4077 = vmatprep.subr.bf16.mxu0 0
    %4078 = vmatpush1.bf16.msra.mxu0 %v4011
    %4079 = vmatprep.subr.bf16.mxu0 0
    %4080 = vmatpush1.bf16.msra.mxu0 %v4012
    %4081 = vmatprep.subr.bf16.mxu0 0
    %4082 = vmatpush1.bf16.msra.mxu0 %v4013
    %4083 = vmatprep.subr.bf16.mxu0 0
    %4084 = vmatpush1.bf16.msra.mxu0 %v4014
    %4085 = vmatprep.subr.bf16.mxu0 0
    %4086 = vmatpush1.bf16.msra.mxu0 %v4015
    %4087 = vmatprep.subr.bf16.mxu0 0
    %4088 = vmatpush1.bf16.msra.mxu0 %v4016
    %4089 = vmatprep.subr.bf16.mxu0 0
    %4090 = vmatpush1.bf16.msra.mxu0 %v4017
    %4091 = vmatprep.subr.bf16.mxu0 0
    %4092 = vmatpush1.bf16.msra.mxu0 %v4018
    %4093 = vmatprep.subr.bf16.mxu0 0
    %4094 = vmatpush1.bf16.msra.mxu0 %v4019
    %4095 = vmatprep.subr.bf16.mxu0 0
    %4096 = vmatpush1.bf16.msra.mxu0 %v4020
    %4097 = vmatprep.subr.bf16.mxu0 0
    %4098 = vmatpush1.bf16.msra.mxu0 %v4021
    %4099 = vmatprep.subr.bf16.mxu0 0
    %4100 = vmatpush1.bf16.msra.mxu0 %v4022
    %4101 = vmatprep.subr.bf16.mxu0 0
    %4102 = vmatpush1.bf16.msra.mxu0 %v4023
    %4103 = vmatprep.subr.bf16.mxu0 0
    %4104 = vmatpush1.bf16.msra.mxu0 %v4024
    %4105 = vmatprep.mubr.bf16.mxu0 %v3813
    %4106 = vmatmul.mubr.bf16.gmra.mrb[0].mxu0 %v3812
    %v4107 = vpop.f32.mrb[0].mxu0
    %v4108 = vadd.f32 0.0, %v4107
    %v4109 = vpop.f32.mrb[0].mxu0
    %v4110 = vpop.f32.mrb[0].mxu0
    %v4111 = vpop.f32.mrb[0].mxu0
    %4112 = vdwg.mxu0
    %4113 = vmatprep.subr.bf16.mxu0 0
    %4114 = vmatpush1.bf16.msra.mxu0 %v4025
    %4115 = vmatprep.subr.bf16.mxu0 0
    %4116 = vmatpush1.bf16.msra.mxu0 %v4026
    %4117 = vmatprep.subr.bf16.mxu0 0
    %4118 = vmatpush1.bf16.msra.mxu0 %v4027
    %4119 = vmatprep.subr.bf16.mxu0 0
    %4120 = vmatpush1.bf16.msra.mxu0 %v4028
    %4121 = vmatprep.subr.bf16.mxu0 0
    %4122 = vmatpush1.bf16.msra.mxu0 %v4029
    %4123 = vmatprep.subr.bf16.mxu0 0
    %4124 = vmatpush1.bf16.msra.mxu0 %v4030
    %4125 = vmatprep.subr.bf16.mxu0 0
    %4126 = vmatpush1.bf16.msra.mxu0 %v4031
    %4127 = vmatprep.subr.bf16.mxu0 0
    %4128 = vmatpush1.bf16.msra.mxu0 %v4032
    %4129 = vmatprep.subr.bf16.mxu0 0
    %4130 = vmatpush1.bf16.msra.mxu0 %v4033
    %4131 = vmatprep.subr.bf16.mxu0 0
    %4132 = vmatpush1.bf16.msra.mxu0 %v4034
    %4133 = vmatprep.subr.bf16.mxu0 0
    %4134 = vmatpush1.bf16.msra.mxu0 %v4035
    %4135 = vmatprep.subr.bf16.mxu0 0
    %4136 = vmatpush1.bf16.msra.mxu0 %v4036
    %4137 = vmatprep.subr.bf16.mxu0 0
    %4138 = vmatpush1.bf16.msra.mxu0 %v4037
    %4139 = vmatprep.subr.bf16.mxu0 0
    %4140 = vmatpush1.bf16.msra.mxu0 %v4038
    %4141 = vmatprep.subr.bf16.mxu0 0
    %4142 = vmatpush1.bf16.msra.mxu0 %v4039
    %4143 = vmatprep.subr.bf16.mxu0 0
    %4144 = vmatpush1.bf16.msra.mxu0 %v4040
    %4145 = vmatprep.mubr.bf16.mxu0 %v3815
    %4146 = vmatmul.mubr.bf16.gmra.mrb[0].mxu0 %v3814
    %v4147 = vpop.f32.mrb[0].mxu0
    %v4148 = vadd.f32 %v4108, %v4147
    %v4149 = vpop.f32.mrb[0].mxu0
    %v4150 = vpop.f32.mrb[0].mxu0
    %v4151 = vpop.f32.mrb[0].mxu0
    %4152 = vdwg.mxu0
    %v4153 = vadd.f32 %v3811, %v4148
    %v4154 = vpack.c.bf16 %v258, %v258
    %v4155 = vpack.c.bf16 %v260, %v260
    %v4156 = vpack.c.bf16 %v371, %v371
    %v4157 = vpack.c.bf16 %v373, %v373
    %s4158 = scalar_lea.vmem [#allocation4], 2816
    %v4159 = vld [vmem:[%s4158] sm:$0xf]
    %v4160 = vld [vmem:[%s4158 + $0x4] sm:$0xf]
    %v4161 = vld [vmem:[%s4158 + $0x8] sm:$0xf]
    %v4162 = vld [vmem:[%s4158 + $0xc] sm:$0xf]
    %v4163 = vld [vmem:[%s4158 + $0x10] sm:$0xf]
    %v4164 = vld [vmem:[%s4158 + $0x14] sm:$0xf]
    %v4165 = vld [vmem:[%s4158 + $0x18] sm:$0xf]
    %v4166 = vld [vmem:[%s4158 + $0x1c] sm:$0xf]
    %v4167 = vld [vmem:[%s4158 + $0x20] sm:$0xf]
    %v4168 = vld [vmem:[%s4158 + $0x24] sm:$0xf]
    %v4169 = vld [vmem:[%s4158 + $0x28] sm:$0xf]
    %v4170 = vld [vmem:[%s4158 + $0x2c] sm:$0xf]
    %v4171 = vld [vmem:[%s4158 + $0x30] sm:$0xf]
    %v4172 = vld [vmem:[%s4158 + $0x34] sm:$0xf]
    %v4173 = vld [vmem:[%s4158 + $0x38] sm:$0xf]
    %v4174 = vld [vmem:[%s4158 + $0x3c] sm:$0xf]
    %v4175 = vld [vmem:[%s4158 + $0x40] sm:$0xf]
    %v4176 = vld [vmem:[%s4158 + $0x44] sm:$0xf]
    %v4177 = vld [vmem:[%s4158 + $0x48] sm:$0xf]
    %v4178 = vld [vmem:[%s4158 + $0x4c] sm:$0xf]
    %v4179 = vld [vmem:[%s4158 + $0x50] sm:$0xf]
    %v4180 = vld [vmem:[%s4158 + $0x54] sm:$0xf]
    %v4181 = vld [vmem:[%s4158 + $0x58] sm:$0xf]
    %v4182 = vld [vmem:[%s4158 + $0x5c] sm:$0xf]
    %v4183 = vld [vmem:[%s4158 + $0x60] sm:$0xf]
    %v4184 = vld [vmem:[%s4158 + $0x64] sm:$0xf]
    %v4185 = vld [vmem:[%s4158 + $0x68] sm:$0xf]
    %v4186 = vld [vmem:[%s4158 + $0x6c] sm:$0xf]
    %v4187 = vld [vmem:[%s4158 + $0x70] sm:$0xf]
    %v4188 = vld [vmem:[%s4158 + $0x74] sm:$0xf]
    %v4189 = vld [vmem:[%s4158 + $0x78] sm:$0xf]
    %v4190 = vld [vmem:[%s4158 + $0x7c] sm:$0xf]
    %v4191 = vld [vmem:[%s4158 + $0x80] sm:$0xf]
    %v4192 = vld [vmem:[%s4158 + $0x84] sm:$0xf]
    %v4193 = vld [vmem:[%s4158 + $0x88] sm:$0xf]
    %v4194 = vld [vmem:[%s4158 + $0x8c] sm:$0xf]
    %v4195 = vld [vmem:[%s4158 + $0x90] sm:$0xf]
    %v4196 = vld [vmem:[%s4158 + $0x94] sm:$0xf]
    %v4197 = vld [vmem:[%s4158 + $0x98] sm:$0xf]
    %v4198 = vld [vmem:[%s4158 + $0x9c] sm:$0xf]
    %v4199 = vld [vmem:[%s4158 + $0xa0] sm:$0xf]
    %v4200 = vld [vmem:[%s4158 + $0xa4] sm:$0xf]
    %v4201 = vld [vmem:[%s4158 + $0xa8] sm:$0xf]
    %v4202 = vld [vmem:[%s4158 + $0xac] sm:$0xf]
    %v4203 = vld [vmem:[%s4158 + $0xb0] sm:$0xf]
    %v4204 = vld [vmem:[%s4158 + $0xb4] sm:$0xf]
    %v4205 = vld [vmem:[%s4158 + $0xb8] sm:$0xf]
    %v4206 = vld [vmem:[%s4158 + $0xbc] sm:$0xf]
    %v4207 = vld [vmem:[%s4158 + $0xc0] sm:$0xf]
    %v4208 = vld [vmem:[%s4158 + $0xc4] sm:$0xf]
    %v4209 = vld [vmem:[%s4158 + $0xc8] sm:$0xf]
    %v4210 = vld [vmem:[%s4158 + $0xcc] sm:$0xf]
    %v4211 = vld [vmem:[%s4158 + $0xd0] sm:$0xf]
    %v4212 = vld [vmem:[%s4158 + $0xd4] sm:$0xf]
    %v4213 = vld [vmem:[%s4158 + $0xd8] sm:$0xf]
    %v4214 = vld [vmem:[%s4158 + $0xdc] sm:$0xf]
    %v4215 = vld [vmem:[%s4158 + $0xe0] sm:$0xf]
    %v4216 = vld [vmem:[%s4158 + $0xe4] sm:$0xf]
    %v4217 = vld [vmem:[%s4158 + $0xe8] sm:$0xf]
    %v4218 = vld [vmem:[%s4158 + $0xec] sm:$0xf]
    %v4219 = vld [vmem:[%s4158 + $0xf0] sm:$0xf]
    %v4220 = vld [vmem:[%s4158 + $0xf4] sm:$0xf]
    %v4221 = vld [vmem:[%s4158 + $0xf8] sm:$0xf]
    %v4222 = vld [vmem:[%s4158 + $0xfc] sm:$0xf]
    %v4287 = vunpack.c.l.b16 %v4159
    %v4288 = vunpack.c.l.b16 %v4160
    %v4289 = vunpack.c.l.b16 %v4161
    %v4290 = vunpack.c.l.b16 %v4162
    %v4291 = vunpack.c.l.b16 %v4163
    %v4292 = vunpack.c.l.b16 %v4164
    %v4293 = vunpack.c.l.b16 %v4165
    %v4294 = vunpack.c.l.b16 %v4166
    %v4295 = vunpack.c.l.b16 %v4167
    %v4296 = vunpack.c.l.b16 %v4168
    %v4297 = vunpack.c.l.b16 %v4169
    %v4298 = vunpack.c.l.b16 %v4170
    %v4299 = vunpack.c.l.b16 %v4171
    %v4300 = vunpack.c.l.b16 %v4172
    %v4301 = vunpack.c.l.b16 %v4173
    %v4302 = vunpack.c.l.b16 %v4174
    %v4303 = vunpack.c.l.b16 %v4175
    %v4304 = vunpack.c.l.b16 %v4176
    %v4305 = vunpack.c.l.b16 %v4177
    %v4306 = vunpack.c.l.b16 %v4178
    %v4307 = vunpack.c.l.b16 %v4179
    %v4308 = vunpack.c.l.b16 %v4180
    %v4309 = vunpack.c.l.b16 %v4181
    %v4310 = vunpack.c.l.b16 %v4182
    %v4311 = vunpack.c.l.b16 %v4183
    %v4312 = vunpack.c.l.b16 %v4184
    %v4313 = vunpack.c.l.b16 %v4185
    %v4314 = vunpack.c.l.b16 %v4186
    %v4315 = vunpack.c.l.b16 %v4187
    %v4316 = vunpack.c.l.b16 %v4188
    %v4317 = vunpack.c.l.b16 %v4189
    %v4318 = vunpack.c.l.b16 %v4190
    %v4319 = vunpack.c.l.b16 %v4191
    %v4320 = vunpack.c.l.b16 %v4192
    %v4321 = vunpack.c.l.b16 %v4193
    %v4322 = vunpack.c.l.b16 %v4194
    %v4323 = vunpack.c.l.b16 %v4195
    %v4324 = vunpack.c.l.b16 %v4196
    %v4325 = vunpack.c.l.b16 %v4197
    %v4326 = vunpack.c.l.b16 %v4198
    %v4327 = vunpack.c.l.b16 %v4199
    %v4328 = vunpack.c.l.b16 %v4200
    %v4329 = vunpack.c.l.b16 %v4201
    %v4330 = vunpack.c.l.b16 %v4202
    %v4331 = vunpack.c.l.b16 %v4203
    %v4332 = vunpack.c.l.b16 %v4204
    %v4333 = vunpack.c.l.b16 %v4205
    %v4334 = vunpack.c.l.b16 %v4206
    %v4335 = vunpack.c.l.b16 %v4207
    %v4336 = vunpack.c.l.b16 %v4208
    %v4337 = vunpack.c.l.b16 %v4209
    %v4338 = vunpack.c.l.b16 %v4210
    %v4339 = vunpack.c.l.b16 %v4211
    %v4340 = vunpack.c.l.b16 %v4212
    %v4341 = vunpack.c.l.b16 %v4213
    %v4342 = vunpack.c.l.b16 %v4214
    %v4343 = vunpack.c.l.b16 %v4215
    %v4344 = vunpack.c.l.b16 %v4216
    %v4345 = vunpack.c.l.b16 %v4217
    %v4346 = vunpack.c.l.b16 %v4218
    %v4347 = vunpack.c.l.b16 %v4219
    %v4348 = vunpack.c.l.b16 %v4220
    %v4349 = vunpack.c.l.b16 %v4221
    %v4350 = vunpack.c.l.b16 %v4222
    %v4351 = vpack.c.b16 %v4288, %v4287
    %v4352 = vpack.c.b16 %v4290, %v4289
    %v4353 = vpack.c.b16 %v4292, %v4291
    %v4354 = vpack.c.b16 %v4294, %v4293
    %v4355 = vpack.c.b16 %v4296, %v4295
    %v4356 = vpack.c.b16 %v4298, %v4297
    %v4357 = vpack.c.b16 %v4300, %v4299
    %v4358 = vpack.c.b16 %v4302, %v4301
    %v4359 = vpack.c.b16 %v4304, %v4303
    %v4360 = vpack.c.b16 %v4306, %v4305
    %v4361 = vpack.c.b16 %v4308, %v4307
    %v4362 = vpack.c.b16 %v4310, %v4309
    %v4363 = vpack.c.b16 %v4312, %v4311
    %v4364 = vpack.c.b16 %v4314, %v4313
    %v4365 = vpack.c.b16 %v4316, %v4315
    %v4366 = vpack.c.b16 %v4318, %v4317
    %v4367 = vpack.c.b16 %v4320, %v4319
    %v4368 = vpack.c.b16 %v4322, %v4321
    %v4369 = vpack.c.b16 %v4324, %v4323
    %v4370 = vpack.c.b16 %v4326, %v4325
    %v4371 = vpack.c.b16 %v4328, %v4327
    %v4372 = vpack.c.b16 %v4330, %v4329
    %v4373 = vpack.c.b16 %v4332, %v4331
    %v4374 = vpack.c.b16 %v4334, %v4333
    %v4375 = vpack.c.b16 %v4336, %v4335
    %v4376 = vpack.c.b16 %v4338, %v4337
    %v4377 = vpack.c.b16 %v4340, %v4339
    %v4378 = vpack.c.b16 %v4342, %v4341
    %v4379 = vpack.c.b16 %v4344, %v4343
    %v4380 = vpack.c.b16 %v4346, %v4345
    %v4381 = vpack.c.b16 %v4348, %v4347
    %v4382 = vpack.c.b16 %v4350, %v4349
    %4415 = vmatprep.subr.bf16.mxu0 0
    %4416 = vmatpush1.bf16.msra.mxu0 %v4351
    %4417 = vmatprep.subr.bf16.mxu0 0
    %4418 = vmatpush1.bf16.msra.mxu0 %v4352
    %4419 = vmatprep.subr.bf16.mxu0 0
    %4420 = vmatpush1.bf16.msra.mxu0 %v4353
    %4421 = vmatprep.subr.bf16.mxu0 0
    %4422 = vmatpush1.bf16.msra.mxu0 %v4354
    %4423 = vmatprep.subr.bf16.mxu0 0
    %4424 = vmatpush1.bf16.msra.mxu0 %v4355
    %4425 = vmatprep.subr.bf16.mxu0 0
    %4426 = vmatpush1.bf16.msra.mxu0 %v4356
    %4427 = vmatprep.subr.bf16.mxu0 0
    %4428 = vmatpush1.bf16.msra.mxu0 %v4357
    %4429 = vmatprep.subr.bf16.mxu0 0
    %4430 = vmatpush1.bf16.msra.mxu0 %v4358
    %4431 = vmatprep.subr.bf16.mxu0 0
    %4432 = vmatpush1.bf16.msra.mxu0 %v4359
    %4433 = vmatprep.subr.bf16.mxu0 0
    %4434 = vmatpush1.bf16.msra.mxu0 %v4360
    %4435 = vmatprep.subr.bf16.mxu0 0
    %4436 = vmatpush1.bf16.msra.mxu0 %v4361
    %4437 = vmatprep.subr.bf16.mxu0 0
    %4438 = vmatpush1.bf16.msra.mxu0 %v4362
    %4439 = vmatprep.subr.bf16.mxu0 0
    %4440 = vmatpush1.bf16.msra.mxu0 %v4363
    %4441 = vmatprep.subr.bf16.mxu0 0
    %4442 = vmatpush1.bf16.msra.mxu0 %v4364
    %4443 = vmatprep.subr.bf16.mxu0 0
    %4444 = vmatpush1.bf16.msra.mxu0 %v4365
    %4445 = vmatprep.subr.bf16.mxu0 0
    %4446 = vmatpush1.bf16.msra.mxu0 %v4366
    %4447 = vmatprep.mubr.bf16.mxu0 %v4155
    %4448 = vmatmul.mubr.bf16.gmra.mrb[0].mxu0 %v4154
    %v4449 = vpop.f32.mrb[0].mxu0
    %v4450 = vadd.f32 0.0, %v4449
    %v4451 = vpop.f32.mrb[0].mxu0
    %v4452 = vpop.f32.mrb[0].mxu0
    %v4453 = vpop.f32.mrb[0].mxu0
    %4454 = vdwg.mxu0
    %4455 = vmatprep.subr.bf16.mxu0 0
    %4456 = vmatpush1.bf16.msra.mxu0 %v4367
    %4457 = vmatprep.subr.bf16.mxu0 0
    %4458 = vmatpush1.bf16.msra.mxu0 %v4368
    %4459 = vmatprep.subr.bf16.mxu0 0
    %4460 = vmatpush1.bf16.msra.mxu0 %v4369
    %4461 = vmatprep.subr.bf16.mxu0 0
    %4462 = vmatpush1.bf16.msra.mxu0 %v4370
    %4463 = vmatprep.subr.bf16.mxu0 0
    %4464 = vmatpush1.bf16.msra.mxu0 %v4371
    %4465 = vmatprep.subr.bf16.mxu0 0
    %4466 = vmatpush1.bf16.msra.mxu0 %v4372
    %4467 = vmatprep.subr.bf16.mxu0 0
    %4468 = vmatpush1.bf16.msra.mxu0 %v4373
    %4469 = vmatprep.subr.bf16.mxu0 0
    %4470 = vmatpush1.bf16.msra.mxu0 %v4374
    %4471 = vmatprep.subr.bf16.mxu0 0
    %4472 = vmatpush1.bf16.msra.mxu0 %v4375
    %4473 = vmatprep.subr.bf16.mxu0 0
    %4474 = vmatpush1.bf16.msra.mxu0 %v4376
    %4475 = vmatprep.subr.bf16.mxu0 0
    %4476 = vmatpush1.bf16.msra.mxu0 %v4377
    %4477 = vmatprep.subr.bf16.mxu0 0
    %4478 = vmatpush1.bf16.msra.mxu0 %v4378
    %4479 = vmatprep.subr.bf16.mxu0 0
    %4480 = vmatpush1.bf16.msra.mxu0 %v4379
    %4481 = vmatprep.subr.bf16.mxu0 0
    %4482 = vmatpush1.bf16.msra.mxu0 %v4380
    %4483 = vmatprep.subr.bf16.mxu0 0
    %4484 = vmatpush1.bf16.msra.mxu0 %v4381
    %4485 = vmatprep.subr.bf16.mxu0 0
    %4486 = vmatpush1.bf16.msra.mxu0 %v4382
    %4487 = vmatprep.mubr.bf16.mxu0 %v4157
    %4488 = vmatmul.mubr.bf16.gmra.mrb[0].mxu0 %v4156
    %v4489 = vpop.f32.mrb[0].mxu0
    %v4490 = vadd.f32 %v4450, %v4489
    %v4491 = vpop.f32.mrb[0].mxu0
    %v4492 = vpop.f32.mrb[0].mxu0
    %v4493 = vpop.f32.mrb[0].mxu0
    %4494 = vdwg.mxu0
    %v4495 = vadd.f32 %v4153, %v4490
    %v4496 = vpack.c.bf16 %v264, %v264
    %v4497 = vpack.c.bf16 %v266, %v266
    %v4498 = vpack.c.bf16 %v377, %v377
    %v4499 = vpack.c.bf16 %v379, %v379
    %s4500 = scalar_lea.vmem [#allocation4], 3072
    %v4501 = vld [vmem:[%s4500] sm:$0xf]
    %v4502 = vld [vmem:[%s4500 + $0x4] sm:$0xf]
    %v4503 = vld [vmem:[%s4500 + $0x8] sm:$0xf]
    %v4504 = vld [vmem:[%s4500 + $0xc] sm:$0xf]
    %v4505 = vld [vmem:[%s4500 + $0x10] sm:$0xf]
    %v4506 = vld [vmem:[%s4500 + $0x14] sm:$0xf]
    %v4507 = vld [vmem:[%s4500 + $0x18] sm:$0xf]
    %v4508 = vld [vmem:[%s4500 + $0x1c] sm:$0xf]
    %v4509 = vld [vmem:[%s4500 + $0x20] sm:$0xf]
    %v4510 = vld [vmem:[%s4500 + $0x24] sm:$0xf]
    %v4511 = vld [vmem:[%s4500 + $0x28] sm:$0xf]
    %v4512 = vld [vmem:[%s4500 + $0x2c] sm:$0xf]
    %v4513 = vld [vmem:[%s4500 + $0x30] sm:$0xf]
    %v4514 = vld [vmem:[%s4500 + $0x34] sm:$0xf]
    %v4515 = vld [vmem:[%s4500 + $0x38] sm:$0xf]
    %v4516 = vld [vmem:[%s4500 + $0x3c] sm:$0xf]
    %v4517 = vld [vmem:[%s4500 + $0x40] sm:$0xf]
    %v4518 = vld [vmem:[%s4500 + $0x44] sm:$0xf]
    %v4519 = vld [vmem:[%s4500 + $0x48] sm:$0xf]
    %v4520 = vld [vmem:[%s4500 + $0x4c] sm:$0xf]
    %v4521 = vld [vmem:[%s4500 + $0x50] sm:$0xf]
    %v4522 = vld [vmem:[%s4500 + $0x54] sm:$0xf]
    %v4523 = vld [vmem:[%s4500 + $0x58] sm:$0xf]
    %v4524 = vld [vmem:[%s4500 + $0x5c] sm:$0xf]
    %v4525 = vld [vmem:[%s4500 + $0x60] sm:$0xf]
    %v4526 = vld [vmem:[%s4500 + $0x64] sm:$0xf]
    %v4527 = vld [vmem:[%s4500 + $0x68] sm:$0xf]
    %v4528 = vld [vmem:[%s4500 + $0x6c] sm:$0xf]
    %v4529 = vld [vmem:[%s4500 + $0x70] sm:$0xf]
    %v4530 = vld [vmem:[%s4500 + $0x74] sm:$0xf]
    %v4531 = vld [vmem:[%s4500 + $0x78] sm:$0xf]
    %v4532 = vld [vmem:[%s4500 + $0x7c] sm:$0xf]
    %v4533 = vld [vmem:[%s4500 + $0x80] sm:$0xf]
    %v4534 = vld [vmem:[%s4500 + $0x84] sm:$0xf]
    %v4535 = vld [vmem:[%s4500 + $0x88] sm:$0xf]
    %v4536 = vld [vmem:[%s4500 + $0x8c] sm:$0xf]
    %v4537 = vld [vmem:[%s4500 + $0x90] sm:$0xf]
    %v4538 = vld [vmem:[%s4500 + $0x94] sm:$0xf]
    %v4539 = vld [vmem:[%s4500 + $0x98] sm:$0xf]
    %v4540 = vld [vmem:[%s4500 + $0x9c] sm:$0xf]
    %v4541 = vld [vmem:[%s4500 + $0xa0] sm:$0xf]
    %v4542 = vld [vmem:[%s4500 + $0xa4] sm:$0xf]
    %v4543 = vld [vmem:[%s4500 + $0xa8] sm:$0xf]
    %v4544 = vld [vmem:[%s4500 + $0xac] sm:$0xf]
    %v4545 = vld [vmem:[%s4500 + $0xb0] sm:$0xf]
    %v4546 = vld [vmem:[%s4500 + $0xb4] sm:$0xf]
    %v4547 = vld [vmem:[%s4500 + $0xb8] sm:$0xf]
    %v4548 = vld [vmem:[%s4500 + $0xbc] sm:$0xf]
    %v4549 = vld [vmem:[%s4500 + $0xc0] sm:$0xf]
    %v4550 = vld [vmem:[%s4500 + $0xc4] sm:$0xf]
    %v4551 = vld [vmem:[%s4500 + $0xc8] sm:$0xf]
    %v4552 = vld [vmem:[%s4500 + $0xcc] sm:$0xf]
    %v4553 = vld [vmem:[%s4500 + $0xd0] sm:$0xf]
    %v4554 = vld [vmem:[%s4500 + $0xd4] sm:$0xf]
    %v4555 = vld [vmem:[%s4500 + $0xd8] sm:$0xf]
    %v4556 = vld [vmem:[%s4500 + $0xdc] sm:$0xf]
    %v4557 = vld [vmem:[%s4500 + $0xe0] sm:$0xf]
    %v4558 = vld [vmem:[%s4500 + $0xe4] sm:$0xf]
    %v4559 = vld [vmem:[%s4500 + $0xe8] sm:$0xf]
    %v4560 = vld [vmem:[%s4500 + $0xec] sm:$0xf]
    %v4561 = vld [vmem:[%s4500 + $0xf0] sm:$0xf]
    %v4562 = vld [vmem:[%s4500 + $0xf4] sm:$0xf]
    %v4563 = vld [vmem:[%s4500 + $0xf8] sm:$0xf]
    %v4564 = vld [vmem:[%s4500 + $0xfc] sm:$0xf]
    %v4629 = vunpack.c.l.b16 %v4501
    %v4630 = vunpack.c.l.b16 %v4502
    %v4631 = vunpack.c.l.b16 %v4503
    %v4632 = vunpack.c.l.b16 %v4504
    %v4633 = vunpack.c.l.b16 %v4505
    %v4634 = vunpack.c.l.b16 %v4506
    %v4635 = vunpack.c.l.b16 %v4507
    %v4636 = vunpack.c.l.b16 %v4508
    %v4637 = vunpack.c.l.b16 %v4509
    %v4638 = vunpack.c.l.b16 %v4510
    %v4639 = vunpack.c.l.b16 %v4511
    %v4640 = vunpack.c.l.b16 %v4512
    %v4641 = vunpack.c.l.b16 %v4513
    %v4642 = vunpack.c.l.b16 %v4514
    %v4643 = vunpack.c.l.b16 %v4515
    %v4644 = vunpack.c.l.b16 %v4516
    %v4645 = vunpack.c.l.b16 %v4517
    %v4646 = vunpack.c.l.b16 %v4518
    %v4647 = vunpack.c.l.b16 %v4519
    %v4648 = vunpack.c.l.b16 %v4520
    %v4649 = vunpack.c.l.b16 %v4521
    %v4650 = vunpack.c.l.b16 %v4522
    %v4651 = vunpack.c.l.b16 %v4523
    %v4652 = vunpack.c.l.b16 %v4524
    %v4653 = vunpack.c.l.b16 %v4525
    %v4654 = vunpack.c.l.b16 %v4526
    %v4655 = vunpack.c.l.b16 %v4527
    %v4656 = vunpack.c.l.b16 %v4528
    %v4657 = vunpack.c.l.b16 %v4529
    %v4658 = vunpack.c.l.b16 %v4530
    %v4659 = vunpack.c.l.b16 %v4531
    %v4660 = vunpack.c.l.b16 %v4532
    %v4661 = vunpack.c.l.b16 %v4533
    %v4662 = vunpack.c.l.b16 %v4534
    %v4663 = vunpack.c.l.b16 %v4535
    %v4664 = vunpack.c.l.b16 %v4536
    %v4665 = vunpack.c.l.b16 %v4537
    %v4666 = vunpack.c.l.b16 %v4538
    %v4667 = vunpack.c.l.b16 %v4539
    %v4668 = vunpack.c.l.b16 %v4540
    %v4669 = vunpack.c.l.b16 %v4541
    %v4670 = vunpack.c.l.b16 %v4542
    %v4671 = vunpack.c.l.b16 %v4543
    %v4672 = vunpack.c.l.b16 %v4544
    %v4673 = vunpack.c.l.b16 %v4545
    %v4674 = vunpack.c.l.b16 %v4546
    %v4675 = vunpack.c.l.b16 %v4547
    %v4676 = vunpack.c.l.b16 %v4548
    %v4677 = vunpack.c.l.b16 %v4549
    %v4678 = vunpack.c.l.b16 %v4550
    %v4679 = vunpack.c.l.b16 %v4551
    %v4680 = vunpack.c.l.b16 %v4552
    %v4681 = vunpack.c.l.b16 %v4553
    %v4682 = vunpack.c.l.b16 %v4554
    %v4683 = vunpack.c.l.b16 %v4555
    %v4684 = vunpack.c.l.b16 %v4556
    %v4685 = vunpack.c.l.b16 %v4557
    %v4686 = vunpack.c.l.b16 %v4558
    %v4687 = vunpack.c.l.b16 %v4559
    %v4688 = vunpack.c.l.b16 %v4560
    %v4689 = vunpack.c.l.b16 %v4561
    %v4690 = vunpack.c.l.b16 %v4562
    %v4691 = vunpack.c.l.b16 %v4563
    %v4692 = vunpack.c.l.b16 %v4564
    %v4693 = vpack.c.b16 %v4630, %v4629
    %v4694 = vpack.c.b16 %v4632, %v4631
    %v4695 = vpack.c.b16 %v4634, %v4633
    %v4696 = vpack.c.b16 %v4636, %v4635
    %v4697 = vpack.c.b16 %v4638, %v4637
    %v4698 = vpack.c.b16 %v4640, %v4639
    %v4699 = vpack.c.b16 %v4642, %v4641
    %v4700 = vpack.c.b16 %v4644, %v4643
    %v4701 = vpack.c.b16 %v4646, %v4645
    %v4702 = vpack.c.b16 %v4648, %v4647
    %v4703 = vpack.c.b16 %v4650, %v4649
    %v4704 = vpack.c.b16 %v4652, %v4651
    %v4705 = vpack.c.b16 %v4654, %v4653
    %v4706 = vpack.c.b16 %v4656, %v4655
    %v4707 = vpack.c.b16 %v4658, %v4657
    %v4708 = vpack.c.b16 %v4660, %v4659
    %v4709 = vpack.c.b16 %v4662, %v4661
    %v4710 = vpack.c.b16 %v4664, %v4663
    %v4711 = vpack.c.b16 %v4666, %v4665
    %v4712 = vpack.c.b16 %v4668, %v4667
    %v4713 = vpack.c.b16 %v4670, %v4669
    %v4714 = vpack.c.b16 %v4672, %v4671
    %v4715 = vpack.c.b16 %v4674, %v4673
    %v4716 = vpack.c.b16 %v4676, %v4675
    %v4717 = vpack.c.b16 %v4678, %v4677
    %v4718 = vpack.c.b16 %v4680, %v4679
    %v4719 = vpack.c.b16 %v4682, %v4681
    %v4720 = vpack.c.b16 %v4684, %v4683
    %v4721 = vpack.c.b16 %v4686, %v4685
    %v4722 = vpack.c.b16 %v4688, %v4687
    %v4723 = vpack.c.b16 %v4690, %v4689
    %v4724 = vpack.c.b16 %v4692, %v4691
    %4757 = vmatprep.subr.bf16.mxu0 0
    %4758 = vmatpush1.bf16.msra.mxu0 %v4693
    %4759 = vmatprep.subr.bf16.mxu0 0
    %4760 = vmatpush1.bf16.msra.mxu0 %v4694
    %4761 = vmatprep.subr.bf16.mxu0 0
    %4762 = vmatpush1.bf16.msra.mxu0 %v4695
    %4763 = vmatprep.subr.bf16.mxu0 0
    %4764 = vmatpush1.bf16.msra.mxu0 %v4696
    %4765 = vmatprep.subr.bf16.mxu0 0
    %4766 = vmatpush1.bf16.msra.mxu0 %v4697
    %4767 = vmatprep.subr.bf16.mxu0 0
    %4768 = vmatpush1.bf16.msra.mxu0 %v4698
    %4769 = vmatprep.subr.bf16.mxu0 0
    %4770 = vmatpush1.bf16.msra.mxu0 %v4699
    %4771 = vmatprep.subr.bf16.mxu0 0
    %4772 = vmatpush1.bf16.msra.mxu0 %v4700
    %4773 = vmatprep.subr.bf16.mxu0 0
    %4774 = vmatpush1.bf16.msra.mxu0 %v4701
    %4775 = vmatprep.subr.bf16.mxu0 0
    %4776 = vmatpush1.bf16.msra.mxu0 %v4702
    %4777 = vmatprep.subr.bf16.mxu0 0
    %4778 = vmatpush1.bf16.msra.mxu0 %v4703
    %4779 = vmatprep.subr.bf16.mxu0 0
    %4780 = vmatpush1.bf16.msra.mxu0 %v4704
    %4781 = vmatprep.subr.bf16.mxu0 0
    %4782 = vmatpush1.bf16.msra.mxu0 %v4705
    %4783 = vmatprep.subr.bf16.mxu0 0
    %4784 = vmatpush1.bf16.msra.mxu0 %v4706
    %4785 = vmatprep.subr.bf16.mxu0 0
    %4786 = vmatpush1.bf16.msra.mxu0 %v4707
    %4787 = vmatprep.subr.bf16.mxu0 0
    %4788 = vmatpush1.bf16.msra.mxu0 %v4708
    %4789 = vmatprep.mubr.bf16.mxu0 %v4497
    %4790 = vmatmul.mubr.bf16.gmra.mrb[0].mxu0 %v4496
    %v4791 = vpop.f32.mrb[0].mxu0
    %v4792 = vadd.f32 0.0, %v4791
    %v4793 = vpop.f32.mrb[0].mxu0
    %v4794 = vpop.f32.mrb[0].mxu0
    %v4795 = vpop.f32.mrb[0].mxu0
    %4796 = vdwg.mxu0
    %4797 = vmatprep.subr.bf16.mxu0 0
    %4798 = vmatpush1.bf16.msra.mxu0 %v4709
    %4799 = vmatprep.subr.bf16.mxu0 0
    %4800 = vmatpush1.bf16.msra.mxu0 %v4710
    %4801 = vmatprep.subr.bf16.mxu0 0
    %4802 = vmatpush1.bf16.msra.mxu0 %v4711
    %4803 = vmatprep.subr.bf16.mxu0 0
    %4804 = vmatpush1.bf16.msra.mxu0 %v4712
    %4805 = vmatprep.subr.bf16.mxu0 0
    %4806 = vmatpush1.bf16.msra.mxu0 %v4713
    %4807 = vmatprep.subr.bf16.mxu0 0
    %4808 = vmatpush1.bf16.msra.mxu0 %v4714
    %4809 = vmatprep.subr.bf16.mxu0 0
    %4810 = vmatpush1.bf16.msra.mxu0 %v4715
    %4811 = vmatprep.subr.bf16.mxu0 0
    %4812 = vmatpush1.bf16.msra.mxu0 %v4716
    %4813 = vmatprep.subr.bf16.mxu0 0
    %4814 = vmatpush1.bf16.msra.mxu0 %v4717
    %4815 = vmatprep.subr.bf16.mxu0 0
    %4816 = vmatpush1.bf16.msra.mxu0 %v4718
    %4817 = vmatprep.subr.bf16.mxu0 0
    %4818 = vmatpush1.bf16.msra.mxu0 %v4719
    %4819 = vmatprep.subr.bf16.mxu0 0
    %4820 = vmatpush1.bf16.msra.mxu0 %v4720
    %4821 = vmatprep.subr.bf16.mxu0 0
    %4822 = vmatpush1.bf16.msra.mxu0 %v4721
    %4823 = vmatprep.subr.bf16.mxu0 0
    %4824 = vmatpush1.bf16.msra.mxu0 %v4722
    %4825 = vmatprep.subr.bf16.mxu0 0
    %4826 = vmatpush1.bf16.msra.mxu0 %v4723
    %4827 = vmatprep.subr.bf16.mxu0 0
    %4828 = vmatpush1.bf16.msra.mxu0 %v4724
    %4829 = vmatprep.mubr.bf16.mxu0 %v4499
    %4830 = vmatmul.mubr.bf16.gmra.mrb[0].mxu0 %v4498
    %v4831 = vpop.f32.mrb[0].mxu0
    %v4832 = vadd.f32 %v4792, %v4831
    %v4833 = vpop.f32.mrb[0].mxu0
    %v4834 = vpop.f32.mrb[0].mxu0
    %v4835 = vpop.f32.mrb[0].mxu0
    %4836 = vdwg.mxu0
    %v4837 = vadd.f32 %v4495, %v4832
    %v4838 = vpack.c.bf16 %v268, %v268
    %v4839 = vpack.c.bf16 %v270, %v270
    %v4840 = vpack.c.bf16 %v381, %v381
    %v4841 = vpack.c.bf16 %v383, %v383
    %s4842 = scalar_lea.vmem [#allocation4], 3328
    %v4843 = vld [vmem:[%s4842] sm:$0xf]
    %v4844 = vld [vmem:[%s4842 + $0x4] sm:$0xf]
    %v4845 = vld [vmem:[%s4842 + $0x8] sm:$0xf]
    %v4846 = vld [vmem:[%s4842 + $0xc] sm:$0xf]
    %v4847 = vld [vmem:[%s4842 + $0x10] sm:$0xf]
    %v4848 = vld [vmem:[%s4842 + $0x14] sm:$0xf]
    %v4849 = vld [vmem:[%s4842 + $0x18] sm:$0xf]
    %v4850 = vld [vmem:[%s4842 + $0x1c] sm:$0xf]
    %v4851 = vld [vmem:[%s4842 + $0x20] sm:$0xf]
    %v4852 = vld [vmem:[%s4842 + $0x24] sm:$0xf]
    %v4853 = vld [vmem:[%s4842 + $0x28] sm:$0xf]
    %v4854 = vld [vmem:[%s4842 + $0x2c] sm:$0xf]
    %v4855 = vld [vmem:[%s4842 + $0x30] sm:$0xf]
    %v4856 = vld [vmem:[%s4842 + $0x34] sm:$0xf]
    %v4857 = vld [vmem:[%s4842 + $0x38] sm:$0xf]
    %v4858 = vld [vmem:[%s4842 + $0x3c] sm:$0xf]
    %v4859 = vld [vmem:[%s4842 + $0x40] sm:$0xf]
    %v4860 = vld [vmem:[%s4842 + $0x44] sm:$0xf]
    %v4861 = vld [vmem:[%s4842 + $0x48] sm:$0xf]
    %v4862 = vld [vmem:[%s4842 + $0x4c] sm:$0xf]
    %v4863 = vld [vmem:[%s4842 + $0x50] sm:$0xf]
    %v4864 = vld [vmem:[%s4842 + $0x54] sm:$0xf]
    %v4865 = vld [vmem:[%s4842 + $0x58] sm:$0xf]
    %v4866 = vld [vmem:[%s4842 + $0x5c] sm:$0xf]
    %v4867 = vld [vmem:[%s4842 + $0x60] sm:$0xf]
    %v4868 = vld [vmem:[%s4842 + $0x64] sm:$0xf]
    %v4869 = vld [vmem:[%s4842 + $0x68] sm:$0xf]
    %v4870 = vld [vmem:[%s4842 + $0x6c] sm:$0xf]
    %v4871 = vld [vmem:[%s4842 + $0x70] sm:$0xf]
    %v4872 = vld [vmem:[%s4842 + $0x74] sm:$0xf]
    %v4873 = vld [vmem:[%s4842 + $0x78] sm:$0xf]
    %v4874 = vld [vmem:[%s4842 + $0x7c] sm:$0xf]
    %v4875 = vld [vmem:[%s4842 + $0x80] sm:$0xf]
    %v4876 = vld [vmem:[%s4842 + $0x84] sm:$0xf]
    %v4877 = vld [vmem:[%s4842 + $0x88] sm:$0xf]
    %v4878 = vld [vmem:[%s4842 + $0x8c] sm:$0xf]
    %v4879 = vld [vmem:[%s4842 + $0x90] sm:$0xf]
    %v4880 = vld [vmem:[%s4842 + $0x94] sm:$0xf]
    %v4881 = vld [vmem:[%s4842 + $0x98] sm:$0xf]
    %v4882 = vld [vmem:[%s4842 + $0x9c] sm:$0xf]
    %v4883 = vld [vmem:[%s4842 + $0xa0] sm:$0xf]
    %v4884 = vld [vmem:[%s4842 + $0xa4] sm:$0xf]
    %v4885 = vld [vmem:[%s4842 + $0xa8] sm:$0xf]
    %v4886 = vld [vmem:[%s4842 + $0xac] sm:$0xf]
    %v4887 = vld [vmem:[%s4842 + $0xb0] sm:$0xf]
    %v4888 = vld [vmem:[%s4842 + $0xb4] sm:$0xf]
    %v4889 = vld [vmem:[%s4842 + $0xb8] sm:$0xf]
    %v4890 = vld [vmem:[%s4842 + $0xbc] sm:$0xf]
    %v4891 = vld [vmem:[%s4842 + $0xc0] sm:$0xf]
    %v4892 = vld [vmem:[%s4842 + $0xc4] sm:$0xf]
    %v4893 = vld [vmem:[%s4842 + $0xc8] sm:$0xf]
    %v4894 = vld [vmem:[%s4842 + $0xcc] sm:$0xf]
    %v4895 = vld [vmem:[%s4842 + $0xd0] sm:$0xf]
    %v4896 = vld [vmem:[%s4842 + $0xd4] sm:$0xf]
    %v4897 = vld [vmem:[%s4842 + $0xd8] sm:$0xf]
    %v4898 = vld [vmem:[%s4842 + $0xdc] sm:$0xf]
    %v4899 = vld [vmem:[%s4842 + $0xe0] sm:$0xf]
    %v4900 = vld [vmem:[%s4842 + $0xe4] sm:$0xf]
    %v4901 = vld [vmem:[%s4842 + $0xe8] sm:$0xf]
    %v4902 = vld [vmem:[%s4842 + $0xec] sm:$0xf]
    %v4903 = vld [vmem:[%s4842 + $0xf0] sm:$0xf]
    %v4904 = vld [vmem:[%s4842 + $0xf4] sm:$0xf]
    %v4905 = vld [vmem:[%s4842 + $0xf8] sm:$0xf]
    %v4906 = vld [vmem:[%s4842 + $0xfc] sm:$0xf]
    %v4971 = vunpack.c.l.b16 %v4843
    %v4972 = vunpack.c.l.b16 %v4844
    %v4973 = vunpack.c.l.b16 %v4845
    %v4974 = vunpack.c.l.b16 %v4846
    %v4975 = vunpack.c.l.b16 %v4847
    %v4976 = vunpack.c.l.b16 %v4848
    %v4977 = vunpack.c.l.b16 %v4849
    %v4978 = vunpack.c.l.b16 %v4850
    %v4979 = vunpack.c.l.b16 %v4851
    %v4980 = vunpack.c.l.b16 %v4852
    %v4981 = vunpack.c.l.b16 %v4853
    %v4982 = vunpack.c.l.b16 %v4854
    %v4983 = vunpack.c.l.b16 %v4855
    %v4984 = vunpack.c.l.b16 %v4856
    %v4985 = vunpack.c.l.b16 %v4857
    %v4986 = vunpack.c.l.b16 %v4858
    %v4987 = vunpack.c.l.b16 %v4859
    %v4988 = vunpack.c.l.b16 %v4860
    %v4989 = vunpack.c.l.b16 %v4861
    %v4990 = vunpack.c.l.b16 %v4862
    %v4991 = vunpack.c.l.b16 %v4863
    %v4992 = vunpack.c.l.b16 %v4864
    %v4993 = vunpack.c.l.b16 %v4865
    %v4994 = vunpack.c.l.b16 %v4866
    %v4995 = vunpack.c.l.b16 %v4867
    %v4996 = vunpack.c.l.b16 %v4868
    %v4997 = vunpack.c.l.b16 %v4869
    %v4998 = vunpack.c.l.b16 %v4870
    %v4999 = vunpack.c.l.b16 %v4871
    %v5000 = vunpack.c.l.b16 %v4872
    %v5001 = vunpack.c.l.b16 %v4873
    %v5002 = vunpack.c.l.b16 %v4874
    %v5003 = vunpack.c.l.b16 %v4875
    %v5004 = vunpack.c.l.b16 %v4876
    %v5005 = vunpack.c.l.b16 %v4877
    %v5006 = vunpack.c.l.b16 %v4878
    %v5007 = vunpack.c.l.b16 %v4879
    %v5008 = vunpack.c.l.b16 %v4880
    %v5009 = vunpack.c.l.b16 %v4881
    %v5010 = vunpack.c.l.b16 %v4882
    %v5011 = vunpack.c.l.b16 %v4883
    %v5012 = vunpack.c.l.b16 %v4884
    %v5013 = vunpack.c.l.b16 %v4885
    %v5014 = vunpack.c.l.b16 %v4886
    %v5015 = vunpack.c.l.b16 %v4887
    %v5016 = vunpack.c.l.b16 %v4888
    %v5017 = vunpack.c.l.b16 %v4889
    %v5018 = vunpack.c.l.b16 %v4890
    %v5019 = vunpack.c.l.b16 %v4891
    %v5020 = vunpack.c.l.b16 %v4892
    %v5021 = vunpack.c.l.b16 %v4893
    %v5022 = vunpack.c.l.b16 %v4894
    %v5023 = vunpack.c.l.b16 %v4895
    %v5024 = vunpack.c.l.b16 %v4896
    %v5025 = vunpack.c.l.b16 %v4897
    %v5026 = vunpack.c.l.b16 %v4898
    %v5027 = vunpack.c.l.b16 %v4899
    %v5028 = vunpack.c.l.b16 %v4900
    %v5029 = vunpack.c.l.b16 %v4901
    %v5030 = vunpack.c.l.b16 %v4902
    %v5031 = vunpack.c.l.b16 %v4903
    %v5032 = vunpack.c.l.b16 %v4904
    %v5033 = vunpack.c.l.b16 %v4905
    %v5034 = vunpack.c.l.b16 %v4906
    %v5035 = vpack.c.b16 %v4972, %v4971
    %v5036 = vpack.c.b16 %v4974, %v4973
    %v5037 = vpack.c.b16 %v4976, %v4975
    %v5038 = vpack.c.b16 %v4978, %v4977
    %v5039 = vpack.c.b16 %v4980, %v4979
    %v5040 = vpack.c.b16 %v4982, %v4981
    %v5041 = vpack.c.b16 %v4984, %v4983
    %v5042 = vpack.c.b16 %v4986, %v4985
    %v5043 = vpack.c.b16 %v4988, %v4987
    %v5044 = vpack.c.b16 %v4990, %v4989
    %v5045 = vpack.c.b16 %v4992, %v4991
    %v5046 = vpack.c.b16 %v4994, %v4993
    %v5047 = vpack.c.b16 %v4996, %v4995
    %v5048 = vpack.c.b16 %v4998, %v4997
    %v5049 = vpack.c.b16 %v5000, %v4999
    %v5050 = vpack.c.b16 %v5002, %v5001
    %v5051 = vpack.c.b16 %v5004, %v5003
    %v5052 = vpack.c.b16 %v5006, %v5005
    %v5053 = vpack.c.b16 %v5008, %v5007
    %v5054 = vpack.c.b16 %v5010, %v5009
    %v5055 = vpack.c.b16 %v5012, %v5011
    %v5056 = vpack.c.b16 %v5014, %v5013
    %v5057 = vpack.c.b16 %v5016, %v5015
    %v5058 = vpack.c.b16 %v5018, %v5017
    %v5059 = vpack.c.b16 %v5020, %v5019
    %v5060 = vpack.c.b16 %v5022, %v5021
    %v5061 = vpack.c.b16 %v5024, %v5023
    %v5062 = vpack.c.b16 %v5026, %v5025
    %v5063 = vpack.c.b16 %v5028, %v5027
    %v5064 = vpack.c.b16 %v5030, %v5029
    %v5065 = vpack.c.b16 %v5032, %v5031
    %v5066 = vpack.c.b16 %v5034, %v5033
    %5099 = vmatprep.subr.bf16.mxu0 0
    %5100 = vmatpush1.bf16.msra.mxu0 %v5035
    %5101 = vmatprep.subr.bf16.mxu0 0
    %5102 = vmatpush1.bf16.msra.mxu0 %v5036
    %5103 = vmatprep.subr.bf16.mxu0 0
    %5104 = vmatpush1.bf16.msra.mxu0 %v5037
    %5105 = vmatprep.subr.bf16.mxu0 0
    %5106 = vmatpush1.bf16.msra.mxu0 %v5038
    %5107 = vmatprep.subr.bf16.mxu0 0
    %5108 = vmatpush1.bf16.msra.mxu0 %v5039
    %5109 = vmatprep.subr.bf16.mxu0 0
    %5110 = vmatpush1.bf16.msra.mxu0 %v5040
    %5111 = vmatprep.subr.bf16.mxu0 0
    %5112 = vmatpush1.bf16.msra.mxu0 %v5041
    %5113 = vmatprep.subr.bf16.mxu0 0
    %5114 = vmatpush1.bf16.msra.mxu0 %v5042
    %5115 = vmatprep.subr.bf16.mxu0 0
    %5116 = vmatpush1.bf16.msra.mxu0 %v5043
    %5117 = vmatprep.subr.bf16.mxu0 0
    %5118 = vmatpush1.bf16.msra.mxu0 %v5044
    %5119 = vmatprep.subr.bf16.mxu0 0
    %5120 = vmatpush1.bf16.msra.mxu0 %v5045
    %5121 = vmatprep.subr.bf16.mxu0 0
    %5122 = vmatpush1.bf16.msra.mxu0 %v5046
    %5123 = vmatprep.subr.bf16.mxu0 0
    %5124 = vmatpush1.bf16.msra.mxu0 %v5047
    %5125 = vmatprep.subr.bf16.mxu0 0
    %5126 = vmatpush1.bf16.msra.mxu0 %v5048
    %5127 = vmatprep.subr.bf16.mxu0 0
    %5128 = vmatpush1.bf16.msra.mxu0 %v5049
    %5129 = vmatprep.subr.bf16.mxu0 0
    %5130 = vmatpush1.bf16.msra.mxu0 %v5050
    %5131 = vmatprep.mubr.bf16.mxu0 %v4839
    %5132 = vmatmul.mubr.bf16.gmra.mrb[0].mxu0 %v4838
    %v5133 = vpop.f32.mrb[0].mxu0
    %v5134 = vadd.f32 0.0, %v5133
    %v5135 = vpop.f32.mrb[0].mxu0
    %v5136 = vpop.f32.mrb[0].mxu0
    %v5137 = vpop.f32.mrb[0].mxu0
    %5138 = vdwg.mxu0
    %5139 = vmatprep.subr.bf16.mxu0 0
    %5140 = vmatpush1.bf16.msra.mxu0 %v5051
    %5141 = vmatprep.subr.bf16.mxu0 0
    %5142 = vmatpush1.bf16.msra.mxu0 %v5052
    %5143 = vmatprep.subr.bf16.mxu0 0
    %5144 = vmatpush1.bf16.msra.mxu0 %v5053
    %5145 = vmatprep.subr.bf16.mxu0 0
    %5146 = vmatpush1.bf16.msra.mxu0 %v5054
    %5147 = vmatprep.subr.bf16.mxu0 0
    %5148 = vmatpush1.bf16.msra.mxu0 %v5055
    %5149 = vmatprep.subr.bf16.mxu0 0
    %5150 = vmatpush1.bf16.msra.mxu0 %v5056
    %5151 = vmatprep.subr.bf16.mxu0 0
    %5152 = vmatpush1.bf16.msra.mxu0 %v5057
    %5153 = vmatprep.subr.bf16.mxu0 0
    %5154 = vmatpush1.bf16.msra.mxu0 %v5058
    %5155 = vmatprep.subr.bf16.mxu0 0
    %5156 = vmatpush1.bf16.msra.mxu0 %v5059
    %5157 = vmatprep.subr.bf16.mxu0 0
    %5158 = vmatpush1.bf16.msra.mxu0 %v5060
    %5159 = vmatprep.subr.bf16.mxu0 0
    %5160 = vmatpush1.bf16.msra.mxu0 %v5061
    %5161 = vmatprep.subr.bf16.mxu0 0
    %5162 = vmatpush1.bf16.msra.mxu0 %v5062
    %5163 = vmatprep.subr.bf16.mxu0 0
    %5164 = vmatpush1.bf16.msra.mxu0 %v5063
    %5165 = vmatprep.subr.bf16.mxu0 0
    %5166 = vmatpush1.bf16.msra.mxu0 %v5064
    %5167 = vmatprep.subr.bf16.mxu0 0
    %5168 = vmatpush1.bf16.msra.mxu0 %v5065
    %5169 = vmatprep.subr.bf16.mxu0 0
    %5170 = vmatpush1.bf16.msra.mxu0 %v5066
    %5171 = vmatprep.mubr.bf16.mxu0 %v4841
    %5172 = vmatmul.mubr.bf16.gmra.mrb[0].mxu0 %v4840
    %v5173 = vpop.f32.mrb[0].mxu0
    %v5174 = vadd.f32 %v5134, %v5173
    %v5175 = vpop.f32.mrb[0].mxu0
    %v5176 = vpop.f32.mrb[0].mxu0
    %v5177 = vpop.f32.mrb[0].mxu0
    %5178 = vdwg.mxu0
    %v5179 = vadd.f32 %v4837, %v5174
    %v5180 = vpack.c.bf16 %v274, %v274
    %v5181 = vpack.c.bf16 %v276, %v276
    %v5182 = vpack.c.bf16 %v387, %v387
    %v5183 = vpack.c.bf16 %v389, %v389
    %s5184 = scalar_lea.vmem [#allocation4], 3584
    %v5185 = vld [vmem:[%s5184] sm:$0xf]
    %v5186 = vld [vmem:[%s5184 + $0x4] sm:$0xf]
    %v5187 = vld [vmem:[%s5184 + $0x8] sm:$0xf]
    %v5188 = vld [vmem:[%s5184 + $0xc] sm:$0xf]
    %v5189 = vld [vmem:[%s5184 + $0x10] sm:$0xf]
    %v5190 = vld [vmem:[%s5184 + $0x14] sm:$0xf]
    %v5191 = vld [vmem:[%s5184 + $0x18] sm:$0xf]
    %v5192 = vld [vmem:[%s5184 + $0x1c] sm:$0xf]
    %v5193 = vld [vmem:[%s5184 + $0x20] sm:$0xf]
    %v5194 = vld [vmem:[%s5184 + $0x24] sm:$0xf]
    %v5195 = vld [vmem:[%s5184 + $0x28] sm:$0xf]
    %v5196 = vld [vmem:[%s5184 + $0x2c] sm:$0xf]
    %v5197 = vld [vmem:[%s5184 + $0x30] sm:$0xf]
    %v5198 = vld [vmem:[%s5184 + $0x34] sm:$0xf]
    %v5199 = vld [vmem:[%s5184 + $0x38] sm:$0xf]
    %v5200 = vld [vmem:[%s5184 + $0x3c] sm:$0xf]
    %v5201 = vld [vmem:[%s5184 + $0x40] sm:$0xf]
    %v5202 = vld [vmem:[%s5184 + $0x44] sm:$0xf]
    %v5203 = vld [vmem:[%s5184 + $0x48] sm:$0xf]
    %v5204 = vld [vmem:[%s5184 + $0x4c] sm:$0xf]
    %v5205 = vld [vmem:[%s5184 + $0x50] sm:$0xf]
    %v5206 = vld [vmem:[%s5184 + $0x54] sm:$0xf]
    %v5207 = vld [vmem:[%s5184 + $0x58] sm:$0xf]
    %v5208 = vld [vmem:[%s5184 + $0x5c] sm:$0xf]
    %v5209 = vld [vmem:[%s5184 + $0x60] sm:$0xf]
    %v5210 = vld [vmem:[%s5184 + $0x64] sm:$0xf]
    %v5211 = vld [vmem:[%s5184 + $0x68] sm:$0xf]
    %v5212 = vld [vmem:[%s5184 + $0x6c] sm:$0xf]
    %v5213 = vld [vmem:[%s5184 + $0x70] sm:$0xf]
    %v5214 = vld [vmem:[%s5184 + $0x74] sm:$0xf]
    %v5215 = vld [vmem:[%s5184 + $0x78] sm:$0xf]
    %v5216 = vld [vmem:[%s5184 + $0x7c] sm:$0xf]
    %v5217 = vld [vmem:[%s5184 + $0x80] sm:$0xf]
    %v5218 = vld [vmem:[%s5184 + $0x84] sm:$0xf]
    %v5219 = vld [vmem:[%s5184 + $0x88] sm:$0xf]
    %v5220 = vld [vmem:[%s5184 + $0x8c] sm:$0xf]
    %v5221 = vld [vmem:[%s5184 + $0x90] sm:$0xf]
    %v5222 = vld [vmem:[%s5184 + $0x94] sm:$0xf]
    %v5223 = vld [vmem:[%s5184 + $0x98] sm:$0xf]
    %v5224 = vld [vmem:[%s5184 + $0x9c] sm:$0xf]
    %v5225 = vld [vmem:[%s5184 + $0xa0] sm:$0xf]
    %v5226 = vld [vmem:[%s5184 + $0xa4] sm:$0xf]
    %v5227 = vld [vmem:[%s5184 + $0xa8] sm:$0xf]
    %v5228 = vld [vmem:[%s5184 + $0xac] sm:$0xf]
    %v5229 = vld [vmem:[%s5184 + $0xb0] sm:$0xf]
    %v5230 = vld [vmem:[%s5184 + $0xb4] sm:$0xf]
    %v5231 = vld [vmem:[%s5184 + $0xb8] sm:$0xf]
    %v5232 = vld [vmem:[%s5184 + $0xbc] sm:$0xf]
    %v5233 = vld [vmem:[%s5184 + $0xc0] sm:$0xf]
    %v5234 = vld [vmem:[%s5184 + $0xc4] sm:$0xf]
    %v5235 = vld [vmem:[%s5184 + $0xc8] sm:$0xf]
    %v5236 = vld [vmem:[%s5184 + $0xcc] sm:$0xf]
    %v5237 = vld [vmem:[%s5184 + $0xd0] sm:$0xf]
    %v5238 = vld [vmem:[%s5184 + $0xd4] sm:$0xf]
    %v5239 = vld [vmem:[%s5184 + $0xd8] sm:$0xf]
    %v5240 = vld [vmem:[%s5184 + $0xdc] sm:$0xf]
    %v5241 = vld [vmem:[%s5184 + $0xe0] sm:$0xf]
    %v5242 = vld [vmem:[%s5184 + $0xe4] sm:$0xf]
    %v5243 = vld [vmem:[%s5184 + $0xe8] sm:$0xf]
    %v5244 = vld [vmem:[%s5184 + $0xec] sm:$0xf]
    %v5245 = vld [vmem:[%s5184 + $0xf0] sm:$0xf]
    %v5246 = vld [vmem:[%s5184 + $0xf4] sm:$0xf]
    %v5247 = vld [vmem:[%s5184 + $0xf8] sm:$0xf]
    %v5248 = vld [vmem:[%s5184 + $0xfc] sm:$0xf]
    %v5313 = vunpack.c.l.b16 %v5185
    %v5314 = vunpack.c.l.b16 %v5186
    %v5315 = vunpack.c.l.b16 %v5187
    %v5316 = vunpack.c.l.b16 %v5188
    %v5317 = vunpack.c.l.b16 %v5189
    %v5318 = vunpack.c.l.b16 %v5190
    %v5319 = vunpack.c.l.b16 %v5191
    %v5320 = vunpack.c.l.b16 %v5192
    %v5321 = vunpack.c.l.b16 %v5193
    %v5322 = vunpack.c.l.b16 %v5194
    %v5323 = vunpack.c.l.b16 %v5195
    %v5324 = vunpack.c.l.b16 %v5196
    %v5325 = vunpack.c.l.b16 %v5197
    %v5326 = vunpack.c.l.b16 %v5198
    %v5327 = vunpack.c.l.b16 %v5199
    %v5328 = vunpack.c.l.b16 %v5200
    %v5329 = vunpack.c.l.b16 %v5201
    %v5330 = vunpack.c.l.b16 %v5202
    %v5331 = vunpack.c.l.b16 %v5203
    %v5332 = vunpack.c.l.b16 %v5204
    %v5333 = vunpack.c.l.b16 %v5205
    %v5334 = vunpack.c.l.b16 %v5206
    %v5335 = vunpack.c.l.b16 %v5207
    %v5336 = vunpack.c.l.b16 %v5208
    %v5337 = vunpack.c.l.b16 %v5209
    %v5338 = vunpack.c.l.b16 %v5210
    %v5339 = vunpack.c.l.b16 %v5211
    %v5340 = vunpack.c.l.b16 %v5212
    %v5341 = vunpack.c.l.b16 %v5213
    %v5342 = vunpack.c.l.b16 %v5214
    %v5343 = vunpack.c.l.b16 %v5215
    %v5344 = vunpack.c.l.b16 %v5216
    %v5345 = vunpack.c.l.b16 %v5217
    %v5346 = vunpack.c.l.b16 %v5218
    %v5347 = vunpack.c.l.b16 %v5219
    %v5348 = vunpack.c.l.b16 %v5220
    %v5349 = vunpack.c.l.b16 %v5221
    %v5350 = vunpack.c.l.b16 %v5222
    %v5351 = vunpack.c.l.b16 %v5223
    %v5352 = vunpack.c.l.b16 %v5224
    %v5353 = vunpack.c.l.b16 %v5225
    %v5354 = vunpack.c.l.b16 %v5226
    %v5355 = vunpack.c.l.b16 %v5227
    %v5356 = vunpack.c.l.b16 %v5228
    %v5357 = vunpack.c.l.b16 %v5229
    %v5358 = vunpack.c.l.b16 %v5230
    %v5359 = vunpack.c.l.b16 %v5231
    %v5360 = vunpack.c.l.b16 %v5232
    %v5361 = vunpack.c.l.b16 %v5233
    %v5362 = vunpack.c.l.b16 %v5234
    %v5363 = vunpack.c.l.b16 %v5235
    %v5364 = vunpack.c.l.b16 %v5236
    %v5365 = vunpack.c.l.b16 %v5237
    %v5366 = vunpack.c.l.b16 %v5238
    %v5367 = vunpack.c.l.b16 %v5239
    %v5368 = vunpack.c.l.b16 %v5240
    %v5369 = vunpack.c.l.b16 %v5241
    %v5370 = vunpack.c.l.b16 %v5242
    %v5371 = vunpack.c.l.b16 %v5243
    %v5372 = vunpack.c.l.b16 %v5244
    %v5373 = vunpack.c.l.b16 %v5245
    %v5374 = vunpack.c.l.b16 %v5246
    %v5375 = vunpack.c.l.b16 %v5247
    %v5376 = vunpack.c.l.b16 %v5248
    %v5377 = vpack.c.b16 %v5314, %v5313
    %v5378 = vpack.c.b16 %v5316, %v5315
    %v5379 = vpack.c.b16 %v5318, %v5317
    %v5380 = vpack.c.b16 %v5320, %v5319
    %v5381 = vpack.c.b16 %v5322, %v5321
    %v5382 = vpack.c.b16 %v5324, %v5323
    %v5383 = vpack.c.b16 %v5326, %v5325
    %v5384 = vpack.c.b16 %v5328, %v5327
    %v5385 = vpack.c.b16 %v5330, %v5329
    %v5386 = vpack.c.b16 %v5332, %v5331
    %v5387 = vpack.c.b16 %v5334, %v5333
    %v5388 = vpack.c.b16 %v5336, %v5335
    %v5389 = vpack.c.b16 %v5338, %v5337
    %v5390 = vpack.c.b16 %v5340, %v5339
    %v5391 = vpack.c.b16 %v5342, %v5341
    %v5392 = vpack.c.b16 %v5344, %v5343
    %v5393 = vpack.c.b16 %v5346, %v5345
    %v5394 = vpack.c.b16 %v5348, %v5347
    %v5395 = vpack.c.b16 %v5350, %v5349
    %v5396 = vpack.c.b16 %v5352, %v5351
    %v5397 = vpack.c.b16 %v5354, %v5353
    %v5398 = vpack.c.b16 %v5356, %v5355
    %v5399 = vpack.c.b16 %v5358, %v5357
    %v5400 = vpack.c.b16 %v5360, %v5359
    %v5401 = vpack.c.b16 %v5362, %v5361
    %v5402 = vpack.c.b16 %v5364, %v5363
    %v5403 = vpack.c.b16 %v5366, %v5365
    %v5404 = vpack.c.b16 %v5368, %v5367
    %v5405 = vpack.c.b16 %v5370, %v5369
    %v5406 = vpack.c.b16 %v5372, %v5371
    %v5407 = vpack.c.b16 %v5374, %v5373
    %v5408 = vpack.c.b16 %v5376, %v5375
    %5441 = vmatprep.subr.bf16.mxu0 0
    %5442 = vmatpush1.bf16.msra.mxu0 %v5377
    %5443 = vmatprep.subr.bf16.mxu0 0
    %5444 = vmatpush1.bf16.msra.mxu0 %v5378
    %5445 = vmatprep.subr.bf16.mxu0 0
    %5446 = vmatpush1.bf16.msra.mxu0 %v5379
    %5447 = vmatprep.subr.bf16.mxu0 0
    %5448 = vmatpush1.bf16.msra.mxu0 %v5380
    %5449 = vmatprep.subr.bf16.mxu0 0
    %5450 = vmatpush1.bf16.msra.mxu0 %v5381
    %5451 = vmatprep.subr.bf16.mxu0 0
    %5452 = vmatpush1.bf16.msra.mxu0 %v5382
    %5453 = vmatprep.subr.bf16.mxu0 0
    %5454 = vmatpush1.bf16.msra.mxu0 %v5383
    %5455 = vmatprep.subr.bf16.mxu0 0
    %5456 = vmatpush1.bf16.msra.mxu0 %v5384
    %5457 = vmatprep.subr.bf16.mxu0 0
    %5458 = vmatpush1.bf16.msra.mxu0 %v5385
    %5459 = vmatprep.subr.bf16.mxu0 0
    %5460 = vmatpush1.bf16.msra.mxu0 %v5386
    %5461 = vmatprep.subr.bf16.mxu0 0
    %5462 = vmatpush1.bf16.msra.mxu0 %v5387
    %5463 = vmatprep.subr.bf16.mxu0 0
    %5464 = vmatpush1.bf16.msra.mxu0 %v5388
    %5465 = vmatprep.subr.bf16.mxu0 0
    %5466 = vmatpush1.bf16.msra.mxu0 %v5389
    %5467 = vmatprep.subr.bf16.mxu0 0
    %5468 = vmatpush1.bf16.msra.mxu0 %v5390
    %5469 = vmatprep.subr.bf16.mxu0 0
    %5470 = vmatpush1.bf16.msra.mxu0 %v5391
    %5471 = vmatprep.subr.bf16.mxu0 0
    %5472 = vmatpush1.bf16.msra.mxu0 %v5392
    %5473 = vmatprep.mubr.bf16.mxu0 %v5181
    %5474 = vmatmul.mubr.bf16.gmra.mrb[0].mxu0 %v5180
    %v5475 = vpop.f32.mrb[0].mxu0
    %v5476 = vadd.f32 0.0, %v5475
    %v5477 = vpop.f32.mrb[0].mxu0
    %v5478 = vpop.f32.mrb[0].mxu0
    %v5479 = vpop.f32.mrb[0].mxu0
    %5480 = vdwg.mxu0
    %5481 = vmatprep.subr.bf16.mxu0 0
    %5482 = vmatpush1.bf16.msra.mxu0 %v5393
    %5483 = vmatprep.subr.bf16.mxu0 0
    %5484 = vmatpush1.bf16.msra.mxu0 %v5394
    %5485 = vmatprep.subr.bf16.mxu0 0
    %5486 = vmatpush1.bf16.msra.mxu0 %v5395
    %5487 = vmatprep.subr.bf16.mxu0 0
    %5488 = vmatpush1.bf16.msra.mxu0 %v5396
    %5489 = vmatprep.subr.bf16.mxu0 0
    %5490 = vmatpush1.bf16.msra.mxu0 %v5397
    %5491 = vmatprep.subr.bf16.mxu0 0
    %5492 = vmatpush1.bf16.msra.mxu0 %v5398
    %5493 = vmatprep.subr.bf16.mxu0 0
    %5494 = vmatpush1.bf16.msra.mxu0 %v5399
    %5495 = vmatprep.subr.bf16.mxu0 0
    %5496 = vmatpush1.bf16.msra.mxu0 %v5400
    %5497 = vmatprep.subr.bf16.mxu0 0
    %5498 = vmatpush1.bf16.msra.mxu0 %v5401
    %5499 = vmatprep.subr.bf16.mxu0 0
    %5500 = vmatpush1.bf16.msra.mxu0 %v5402
    %5501 = vmatprep.subr.bf16.mxu0 0
    %5502 = vmatpush1.bf16.msra.mxu0 %v5403
    %5503 = vmatprep.subr.bf16.mxu0 0
    %5504 = vmatpush1.bf16.msra.mxu0 %v5404
    %5505 = vmatprep.subr.bf16.mxu0 0
    %5506 = vmatpush1.bf16.msra.mxu0 %v5405
    %5507 = vmatprep.subr.bf16.mxu0 0
    %5508 = vmatpush1.bf16.msra.mxu0 %v5406
    %5509 = vmatprep.subr.bf16.mxu0 0
    %5510 = vmatpush1.bf16.msra.mxu0 %v5407
    %5511 = vmatprep.subr.bf16.mxu0 0
    %5512 = vmatpush1.bf16.msra.mxu0 %v5408
    %5513 = vmatprep.mubr.bf16.mxu0 %v5183
    %5514 = vmatmul.mubr.bf16.gmra.mrb[0].mxu0 %v5182
    %v5515 = vpop.f32.mrb[0].mxu0
    %v5516 = vadd.f32 %v5476, %v5515
    %v5517 = vpop.f32.mrb[0].mxu0
    %v5518 = vpop.f32.mrb[0].mxu0
    %v5519 = vpop.f32.mrb[0].mxu0
    %5520 = vdwg.mxu0
    %v5521 = vadd.f32 %v5179, %v5516
    %v5522 = vpack.c.bf16 %v278, %v278
    %v5523 = vpack.c.bf16 %v280, %v280
    %v5524 = vpack.c.bf16 %v391, %v391
    %v5525 = vpack.c.bf16 %v393, %v393
    %s5526 = scalar_lea.vmem [#allocation4], 3840
    %v5527 = vld [vmem:[%s5526] sm:$0xf]
    %v5528 = vld [vmem:[%s5526 + $0x4] sm:$0xf]
    %v5529 = vld [vmem:[%s5526 + $0x8] sm:$0xf]
    %v5530 = vld [vmem:[%s5526 + $0xc] sm:$0xf]
    %v5531 = vld [vmem:[%s5526 + $0x10] sm:$0xf]
    %v5532 = vld [vmem:[%s5526 + $0x14] sm:$0xf]
    %v5533 = vld [vmem:[%s5526 + $0x18] sm:$0xf]
    %v5534 = vld [vmem:[%s5526 + $0x1c] sm:$0xf]
    %v5535 = vld [vmem:[%s5526 + $0x20] sm:$0xf]
    %v5536 = vld [vmem:[%s5526 + $0x24] sm:$0xf]
    %v5537 = vld [vmem:[%s5526 + $0x28] sm:$0xf]
    %v5538 = vld [vmem:[%s5526 + $0x2c] sm:$0xf]
    %v5539 = vld [vmem:[%s5526 + $0x30] sm:$0xf]
    %v5540 = vld [vmem:[%s5526 + $0x34] sm:$0xf]
    %v5541 = vld [vmem:[%s5526 + $0x38] sm:$0xf]
    %v5542 = vld [vmem:[%s5526 + $0x3c] sm:$0xf]
    %v5543 = vld [vmem:[%s5526 + $0x40] sm:$0xf]
    %v5544 = vld [vmem:[%s5526 + $0x44] sm:$0xf]
    %v5545 = vld [vmem:[%s5526 + $0x48] sm:$0xf]
    %v5546 = vld [vmem:[%s5526 + $0x4c] sm:$0xf]
    %v5547 = vld [vmem:[%s5526 + $0x50] sm:$0xf]
    %v5548 = vld [vmem:[%s5526 + $0x54] sm:$0xf]
    %v5549 = vld [vmem:[%s5526 + $0x58] sm:$0xf]
    %v5550 = vld [vmem:[%s5526 + $0x5c] sm:$0xf]
    %v5551 = vld [vmem:[%s5526 + $0x60] sm:$0xf]
    %v5552 = vld [vmem:[%s5526 + $0x64] sm:$0xf]
    %v5553 = vld [vmem:[%s5526 + $0x68] sm:$0xf]
    %v5554 = vld [vmem:[%s5526 + $0x6c] sm:$0xf]
    %v5555 = vld [vmem:[%s5526 + $0x70] sm:$0xf]
    %v5556 = vld [vmem:[%s5526 + $0x74] sm:$0xf]
    %v5557 = vld [vmem:[%s5526 + $0x78] sm:$0xf]
    %v5558 = vld [vmem:[%s5526 + $0x7c] sm:$0xf]
    %v5559 = vld [vmem:[%s5526 + $0x80] sm:$0xf]
    %v5560 = vld [vmem:[%s5526 + $0x84] sm:$0xf]
    %v5561 = vld [vmem:[%s5526 + $0x88] sm:$0xf]
    %v5562 = vld [vmem:[%s5526 + $0x8c] sm:$0xf]
    %v5563 = vld [vmem:[%s5526 + $0x90] sm:$0xf]
    %v5564 = vld [vmem:[%s5526 + $0x94] sm:$0xf]
    %v5565 = vld [vmem:[%s5526 + $0x98] sm:$0xf]
    %v5566 = vld [vmem:[%s5526 + $0x9c] sm:$0xf]
    %v5567 = vld [vmem:[%s5526 + $0xa0] sm:$0xf]
    %v5568 = vld [vmem:[%s5526 + $0xa4] sm:$0xf]
    %v5569 = vld [vmem:[%s5526 + $0xa8] sm:$0xf]
    %v5570 = vld [vmem:[%s5526 + $0xac] sm:$0xf]
    %v5571 = vld [vmem:[%s5526 + $0xb0] sm:$0xf]
    %v5572 = vld [vmem:[%s5526 + $0xb4] sm:$0xf]
    %v5573 = vld [vmem:[%s5526 + $0xb8] sm:$0xf]
    %v5574 = vld [vmem:[%s5526 + $0xbc] sm:$0xf]
    %v5575 = vld [vmem:[%s5526 + $0xc0] sm:$0xf]
    %v5576 = vld [vmem:[%s5526 + $0xc4] sm:$0xf]
    %v5577 = vld [vmem:[%s5526 + $0xc8] sm:$0xf]
    %v5578 = vld [vmem:[%s5526 + $0xcc] sm:$0xf]
    %v5579 = vld [vmem:[%s5526 + $0xd0] sm:$0xf]
    %v5580 = vld [vmem:[%s5526 + $0xd4] sm:$0xf]
    %v5581 = vld [vmem:[%s5526 + $0xd8] sm:$0xf]
    %v5582 = vld [vmem:[%s5526 + $0xdc] sm:$0xf]
    %v5583 = vld [vmem:[%s5526 + $0xe0] sm:$0xf]
    %v5584 = vld [vmem:[%s5526 + $0xe4] sm:$0xf]
    %v5585 = vld [vmem:[%s5526 + $0xe8] sm:$0xf]
    %v5586 = vld [vmem:[%s5526 + $0xec] sm:$0xf]
    %v5587 = vld [vmem:[%s5526 + $0xf0] sm:$0xf]
    %v5588 = vld [vmem:[%s5526 + $0xf4] sm:$0xf]
    %v5589 = vld [vmem:[%s5526 + $0xf8] sm:$0xf]
    %v5590 = vld [vmem:[%s5526 + $0xfc] sm:$0xf]
    %v5655 = vunpack.c.l.b16 %v5527
    %v5656 = vunpack.c.l.b16 %v5528
    %v5657 = vunpack.c.l.b16 %v5529
    %v5658 = vunpack.c.l.b16 %v5530
    %v5659 = vunpack.c.l.b16 %v5531
    %v5660 = vunpack.c.l.b16 %v5532
    %v5661 = vunpack.c.l.b16 %v5533
    %v5662 = vunpack.c.l.b16 %v5534
    %v5663 = vunpack.c.l.b16 %v5535
    %v5664 = vunpack.c.l.b16 %v5536
    %v5665 = vunpack.c.l.b16 %v5537
    %v5666 = vunpack.c.l.b16 %v5538
    %v5667 = vunpack.c.l.b16 %v5539
    %v5668 = vunpack.c.l.b16 %v5540
    %v5669 = vunpack.c.l.b16 %v5541
    %v5670 = vunpack.c.l.b16 %v5542
    %v5671 = vunpack.c.l.b16 %v5543
    %v5672 = vunpack.c.l.b16 %v5544
    %v5673 = vunpack.c.l.b16 %v5545
    %v5674 = vunpack.c.l.b16 %v5546
    %v5675 = vunpack.c.l.b16 %v5547
    %v5676 = vunpack.c.l.b16 %v5548
    %v5677 = vunpack.c.l.b16 %v5549
    %v5678 = vunpack.c.l.b16 %v5550
    %v5679 = vunpack.c.l.b16 %v5551
    %v5680 = vunpack.c.l.b16 %v5552
    %v5681 = vunpack.c.l.b16 %v5553
    %v5682 = vunpack.c.l.b16 %v5554
    %v5683 = vunpack.c.l.b16 %v5555
    %v5684 = vunpack.c.l.b16 %v5556
    %v5685 = vunpack.c.l.b16 %v5557
    %v5686 = vunpack.c.l.b16 %v5558
    %v5687 = vunpack.c.l.b16 %v5559
    %v5688 = vunpack.c.l.b16 %v5560
    %v5689 = vunpack.c.l.b16 %v5561
    %v5690 = vunpack.c.l.b16 %v5562
    %v5691 = vunpack.c.l.b16 %v5563
    %v5692 = vunpack.c.l.b16 %v5564
    %v5693 = vunpack.c.l.b16 %v5565
    %v5694 = vunpack.c.l.b16 %v5566
    %v5695 = vunpack.c.l.b16 %v5567
    %v5696 = vunpack.c.l.b16 %v5568
    %v5697 = vunpack.c.l.b16 %v5569
    %v5698 = vunpack.c.l.b16 %v5570
    %v5699 = vunpack.c.l.b16 %v5571
    %v5700 = vunpack.c.l.b16 %v5572
    %v5701 = vunpack.c.l.b16 %v5573
    %v5702 = vunpack.c.l.b16 %v5574
    %v5703 = vunpack.c.l.b16 %v5575
    %v5704 = vunpack.c.l.b16 %v5576
    %v5705 = vunpack.c.l.b16 %v5577
    %v5706 = vunpack.c.l.b16 %v5578
    %v5707 = vunpack.c.l.b16 %v5579
    %v5708 = vunpack.c.l.b16 %v5580
    %v5709 = vunpack.c.l.b16 %v5581
    %v5710 = vunpack.c.l.b16 %v5582
    %v5711 = vunpack.c.l.b16 %v5583
    %v5712 = vunpack.c.l.b16 %v5584
    %v5713 = vunpack.c.l.b16 %v5585
    %v5714 = vunpack.c.l.b16 %v5586
    %v5715 = vunpack.c.l.b16 %v5587
    %v5716 = vunpack.c.l.b16 %v5588
    %v5717 = vunpack.c.l.b16 %v5589
    %v5718 = vunpack.c.l.b16 %v5590
    %v5719 = vpack.c.b16 %v5656, %v5655
    %v5720 = vpack.c.b16 %v5658, %v5657
    %v5721 = vpack.c.b16 %v5660, %v5659
    %v5722 = vpack.c.b16 %v5662, %v5661
    %v5723 = vpack.c.b16 %v5664, %v5663
    %v5724 = vpack.c.b16 %v5666, %v5665
    %v5725 = vpack.c.b16 %v5668, %v5667
    %v5726 = vpack.c.b16 %v5670, %v5669
    %v5727 = vpack.c.b16 %v5672, %v5671
    %v5728 = vpack.c.b16 %v5674, %v5673
    %v5729 = vpack.c.b16 %v5676, %v5675
    %v5730 = vpack.c.b16 %v5678, %v5677
    %v5731 = vpack.c.b16 %v5680, %v5679
    %v5732 = vpack.c.b16 %v5682, %v5681
    %v5733 = vpack.c.b16 %v5684, %v5683
    %v5734 = vpack.c.b16 %v5686, %v5685
    %v5735 = vpack.c.b16 %v5688, %v5687
    %v5736 = vpack.c.b16 %v5690, %v5689
    %v5737 = vpack.c.b16 %v5692, %v5691
    %v5738 = vpack.c.b16 %v5694, %v5693
    %v5739 = vpack.c.b16 %v5696, %v5695
    %v5740 = vpack.c.b16 %v5698, %v5697
    %v5741 = vpack.c.b16 %v5700, %v5699
    %v5742 = vpack.c.b16 %v5702, %v5701
    %v5743 = vpack.c.b16 %v5704, %v5703
    %v5744 = vpack.c.b16 %v5706, %v5705
    %v5745 = vpack.c.b16 %v5708, %v5707
    %v5746 = vpack.c.b16 %v5710, %v5709
    %v5747 = vpack.c.b16 %v5712, %v5711
    %v5748 = vpack.c.b16 %v5714, %v5713
    %v5749 = vpack.c.b16 %v5716, %v5715
    %v5750 = vpack.c.b16 %v5718, %v5717
    %5783 = vmatprep.subr.bf16.mxu0 0
    %5784 = vmatpush1.bf16.msra.mxu0 %v5719
    %5785 = vmatprep.subr.bf16.mxu0 0
    %5786 = vmatpush1.bf16.msra.mxu0 %v5720
    %5787 = vmatprep.subr.bf16.mxu0 0
    %5788 = vmatpush1.bf16.msra.mxu0 %v5721
    %5789 = vmatprep.subr.bf16.mxu0 0
    %5790 = vmatpush1.bf16.msra.mxu0 %v5722
    %5791 = vmatprep.subr.bf16.mxu0 0
    %5792 = vmatpush1.bf16.msra.mxu0 %v5723
    %5793 = vmatprep.subr.bf16.mxu0 0
    %5794 = vmatpush1.bf16.msra.mxu0 %v5724
    %5795 = vmatprep.subr.bf16.mxu0 0
    %5796 = vmatpush1.bf16.msra.mxu0 %v5725
    %5797 = vmatprep.subr.bf16.mxu0 0
    %5798 = vmatpush1.bf16.msra.mxu0 %v5726
    %5799 = vmatprep.subr.bf16.mxu0 0
    %5800 = vmatpush1.bf16.msra.mxu0 %v5727
    %5801 = vmatprep.subr.bf16.mxu0 0
    %5802 = vmatpush1.bf16.msra.mxu0 %v5728
    %5803 = vmatprep.subr.bf16.mxu0 0
    %5804 = vmatpush1.bf16.msra.mxu0 %v5729
    %5805 = vmatprep.subr.bf16.mxu0 0
    %5806 = vmatpush1.bf16.msra.mxu0 %v5730
    %5807 = vmatprep.subr.bf16.mxu0 0
    %5808 = vmatpush1.bf16.msra.mxu0 %v5731
    %5809 = vmatprep.subr.bf16.mxu0 0
    %5810 = vmatpush1.bf16.msra.mxu0 %v5732
    %5811 = vmatprep.subr.bf16.mxu0 0
    %5812 = vmatpush1.bf16.msra.mxu0 %v5733
    %5813 = vmatprep.subr.bf16.mxu0 0
    %5814 = vmatpush1.bf16.msra.mxu0 %v5734
    %5815 = vmatprep.mubr.bf16.mxu0 %v5523
    %5816 = vmatmul.mubr.bf16.gmra.mrb[0].mxu0 %v5522
    %v5817 = vpop.f32.mrb[0].mxu0
    %v5818 = vadd.f32 0.0, %v5817
    %v5819 = vpop.f32.mrb[0].mxu0
    %v5820 = vpop.f32.mrb[0].mxu0
    %v5821 = vpop.f32.mrb[0].mxu0
    %5822 = vdwg.mxu0
    %5823 = vmatprep.subr.bf16.mxu0 0
    %5824 = vmatpush1.bf16.msra.mxu0 %v5735
    %5825 = vmatprep.subr.bf16.mxu0 0
    %5826 = vmatpush1.bf16.msra.mxu0 %v5736
    %5827 = vmatprep.subr.bf16.mxu0 0
    %5828 = vmatpush1.bf16.msra.mxu0 %v5737
    %5829 = vmatprep.subr.bf16.mxu0 0
    %5830 = vmatpush1.bf16.msra.mxu0 %v5738
    %5831 = vmatprep.subr.bf16.mxu0 0
    %5832 = vmatpush1.bf16.msra.mxu0 %v5739
    %5833 = vmatprep.subr.bf16.mxu0 0
    %5834 = vmatpush1.bf16.msra.mxu0 %v5740
    %5835 = vmatprep.subr.bf16.mxu0 0
    %5836 = vmatpush1.bf16.msra.mxu0 %v5741
    %5837 = vmatprep.subr.bf16.mxu0 0
    %5838 = vmatpush1.bf16.msra.mxu0 %v5742
    %5839 = vmatprep.subr.bf16.mxu0 0
    %5840 = vmatpush1.bf16.msra.mxu0 %v5743
    %5841 = vmatprep.subr.bf16.mxu0 0
    %5842 = vmatpush1.bf16.msra.mxu0 %v5744
    %5843 = vmatprep.subr.bf16.mxu0 0
    %5844 = vmatpush1.bf16.msra.mxu0 %v5745
    %5845 = vmatprep.subr.bf16.mxu0 0
    %5846 = vmatpush1.bf16.msra.mxu0 %v5746
    %5847 = vmatprep.subr.bf16.mxu0 0
    %5848 = vmatpush1.bf16.msra.mxu0 %v5747
    %5849 = vmatprep.subr.bf16.mxu0 0
    %5850 = vmatpush1.bf16.msra.mxu0 %v5748
    %5851 = vmatprep.subr.bf16.mxu0 0
    %5852 = vmatpush1.bf16.msra.mxu0 %v5749
    %5853 = vmatprep.subr.bf16.mxu0 0
    %5854 = vmatpush1.bf16.msra.mxu0 %v5750
    %5855 = vmatprep.mubr.bf16.mxu0 %v5525
    %5856 = vmatmul.mubr.bf16.gmra.mrb[0].mxu0 %v5524
    %v5857 = vpop.f32.mrb[0].mxu0
    %v5858 = vadd.f32 %v5818, %v5857
    %v5859 = vpop.f32.mrb[0].mxu0
    %v5860 = vpop.f32.mrb[0].mxu0
    %v5861 = vpop.f32.mrb[0].mxu0
    %5862 = vdwg.mxu0
    %v5863 = vadd.f32 %v5521, %v5858
    %vm5864 = vcmp.ge.f32.partialorder %v5863, 0.0
    %v5865 = vmul.f32 %v5863, 0.05
    %v5866 = vsel %vm5864, %v5863, %v5865
    %v5867 = vpack.c.bf16 %v5866, %v5866
    %v5868 = vld [vmem:[%s3] sm:$0xf]
    %v5869 = vld [vmem:[%s3 + $0x4] sm:$0xf]
    %v5870 = vld [vmem:[%s3 + $0x8] sm:$0xf]
    %v5871 = vld [vmem:[%s3 + $0xc] sm:$0xf]
    %v5872 = vld [vmem:[%s3 + $0x10] sm:$0xf]
    %v5873 = vld [vmem:[%s3 + $0x14] sm:$0xf]
    %v5874 = vld [vmem:[%s3 + $0x18] sm:$0xf]
    %v5875 = vld [vmem:[%s3 + $0x1c] sm:$0xf]
    %v5876 = vld [vmem:[%s3 + $0x20] sm:$0xf]
    %v5877 = vld [vmem:[%s3 + $0x24] sm:$0xf]
    %v5878 = vld [vmem:[%s3 + $0x28] sm:$0xf]
    %v5879 = vld [vmem:[%s3 + $0x2c] sm:$0xf]
    %v5880 = vld [vmem:[%s3 + $0x30] sm:$0xf]
    %v5881 = vld [vmem:[%s3 + $0x34] sm:$0xf]
    %v5882 = vld [vmem:[%s3 + $0x38] sm:$0xf]
    %v5883 = vld [vmem:[%s3 + $0x3c] sm:$0xf]
    %v5884 = vld [vmem:[%s3 + $0x40] sm:$0xf]
    %v5885 = vld [vmem:[%s3 + $0x44] sm:$0xf]
    %v5886 = vld [vmem:[%s3 + $0x48] sm:$0xf]
    %v5887 = vld [vmem:[%s3 + $0x4c] sm:$0xf]
    %v5888 = vld [vmem:[%s3 + $0x50] sm:$0xf]
    %v5889 = vld [vmem:[%s3 + $0x54] sm:$0xf]
    %v5890 = vld [vmem:[%s3 + $0x58] sm:$0xf]
    %v5891 = vld [vmem:[%s3 + $0x5c] sm:$0xf]
    %v5892 = vld [vmem:[%s3 + $0x60] sm:$0xf]
    %v5893 = vld [vmem:[%s3 + $0x64] sm:$0xf]
    %v5894 = vld [vmem:[%s3 + $0x68] sm:$0xf]
    %v5895 = vld [vmem:[%s3 + $0x6c] sm:$0xf]
    %v5896 = vld [vmem:[%s3 + $0x70] sm:$0xf]
    %v5897 = vld [vmem:[%s3 + $0x74] sm:$0xf]
    %v5898 = vld [vmem:[%s3 + $0x78] sm:$0xf]
    %v5899 = vld [vmem:[%s3 + $0x7c] sm:$0xf]
    %v5932 = vunpack.c.l.b16 %v5868
    %v5933 = vunpack.c.l.b16 %v5869
    %v5934 = vunpack.c.l.b16 %v5870
    %v5935 = vunpack.c.l.b16 %v5871
    %v5936 = vunpack.c.l.b16 %v5872
    %v5937 = vunpack.c.l.b16 %v5873
    %v5938 = vunpack.c.l.b16 %v5874
    %v5939 = vunpack.c.l.b16 %v5875
    %v5940 = vunpack.c.l.b16 %v5876
    %v5941 = vunpack.c.l.b16 %v5877
    %v5942 = vunpack.c.l.b16 %v5878
    %v5943 = vunpack.c.l.b16 %v5879
    %v5944 = vunpack.c.l.b16 %v5880
    %v5945 = vunpack.c.l.b16 %v5881
    %v5946 = vunpack.c.l.b16 %v5882
    %v5947 = vunpack.c.l.b16 %v5883
    %v5948 = vunpack.c.l.b16 %v5884
    %v5949 = vunpack.c.l.b16 %v5885
    %v5950 = vunpack.c.l.b16 %v5886
    %v5951 = vunpack.c.l.b16 %v5887
    %v5952 = vunpack.c.l.b16 %v5888
    %v5953 = vunpack.c.l.b16 %v5889
    %v5954 = vunpack.c.l.b16 %v5890
    %v5955 = vunpack.c.l.b16 %v5891
    %v5956 = vunpack.c.l.b16 %v5892
    %v5957 = vunpack.c.l.b16 %v5893
    %v5958 = vunpack.c.l.b16 %v5894
    %v5959 = vunpack.c.l.b16 %v5895
    %v5960 = vunpack.c.l.b16 %v5896
    %v5961 = vunpack.c.l.b16 %v5897
    %v5962 = vunpack.c.l.b16 %v5898
    %v5963 = vunpack.c.l.b16 %v5899
    %v5964 = vpack.c.b16 %v5933, %v5932
    %v5965 = vpack.c.b16 %v5935, %v5934
    %v5966 = vpack.c.b16 %v5937, %v5936
    %v5967 = vpack.c.b16 %v5939, %v5938
    %v5968 = vpack.c.b16 %v5941, %v5940
    %v5969 = vpack.c.b16 %v5943, %v5942
    %v5970 = vpack.c.b16 %v5945, %v5944
    %v5971 = vpack.c.b16 %v5947, %v5946
    %v5972 = vpack.c.b16 %v5949, %v5948
    %v5973 = vpack.c.b16 %v5951, %v5950
    %v5974 = vpack.c.b16 %v5953, %v5952
    %v5975 = vpack.c.b16 %v5955, %v5954
    %v5976 = vpack.c.b16 %v5957, %v5956
    %v5977 = vpack.c.b16 %v5959, %v5958
    %v5978 = vpack.c.b16 %v5961, %v5960
    %v5979 = vpack.c.b16 %v5963, %v5962
    %vm5980 = vcmask 64512
    %v5982 = vsel %vm5980, %v5964, 0
    %v5985 = vsel %vm5980, %v5965, 0
    %v5988 = vsel %vm5980, %v5966, 0
    %v5991 = vsel %vm5980, %v5967, 0
    %v5994 = vsel %vm5980, %v5968, 0
    %v5997 = vsel %vm5980, %v5969, 0
    %v6000 = vsel %vm5980, %v5970, 0
    %v6003 = vsel %vm5980, %v5971, 0
    %v6006 = vsel %vm5980, %v5972, 0
    %v6009 = vsel %vm5980, %v5973, 0
    %v6012 = vsel %vm5980, %v5974, 0
    %v6015 = vsel %vm5980, %v5975, 0
    %v6018 = vsel %vm5980, %v5976, 0
    %v6021 = vsel %vm5980, %v5977, 0
    %v6024 = vsel %vm5980, %v5978, 0
    %v6027 = vsel %vm5980, %v5979, 0
    %vm6029 = vcmask 1043456
    %v6031 = vsel %vm6029, %v5867, 0
    %6033 = vmatprep.subr.bf16.mxu0 0
    %6034 = vmatpush1.bf16.msra.mxu0 %v6031
    %6035 = vmatprep.subr.bf16.mxu0 0
    %6036 = vmatpush1.bf16.msra.mxu0 0
    %6037 = vmatprep.subr.bf16.mxu0 0
    %6038 = vmatpush1.bf16.msra.mxu0 0
    %6039 = vmatprep.subr.bf16.mxu0 0
    %6040 = vmatpush1.bf16.msra.mxu0 0
    %6041 = vmatprep.subr.bf16.mxu0 0
    %6042 = vmatpush1.bf16.msra.mxu0 0
    %6043 = vmatprep.subr.bf16.mxu0 0
    %6044 = vmatpush1.bf16.msra.mxu0 0
    %6045 = vmatprep.subr.bf16.mxu0 0
    %6046 = vmatpush1.bf16.msra.mxu0 0
    %6047 = vmatprep.subr.bf16.mxu0 0
    %6048 = vmatpush1.bf16.msra.mxu0 0
    %6049 = vmatprep.subr.bf16.mxu0 0
    %6050 = vmatpush1.bf16.msra.mxu0 0
    %6051 = vmatprep.subr.bf16.mxu0 0
    %6052 = vmatpush1.bf16.msra.mxu0 0
    %6053 = vmatprep.subr.bf16.mxu0 0
    %6054 = vmatpush1.bf16.msra.mxu0 0
    %6055 = vmatprep.subr.bf16.mxu0 0
    %6056 = vmatpush1.bf16.msra.mxu0 0
    %6057 = vmatprep.subr.bf16.mxu0 0
    %6058 = vmatpush1.bf16.msra.mxu0 0
    %6059 = vmatprep.subr.bf16.mxu0 0
    %6060 = vmatpush1.bf16.msra.mxu0 0
    %6061 = vmatprep.subr.bf16.mxu0 0
    %6062 = vmatpush1.bf16.msra.mxu0 0
    %6063 = vmatprep.subr.bf16.mxu0 0
    %6064 = vmatpush1.bf16.msra.mxu0 0
    %6065 = vmatprep.mubr.bf16.mxu0 0
    %6066 = vmatmul.mubr.bf16.gmra.mrb[0].mxu0 %v5982
    %v6067 = vpop.f32.mrb[0].mxu0
    %v6068 = vadd.f32 0.0, %v6067
    %v6069 = vpop.f32.mrb[0].mxu0
    %v6070 = vpop.f32.mrb[0].mxu0
    %v6071 = vadd.f32 0.0, %v6070
    %v6072 = vpop.f32.mrb[0].mxu0
    %6073 = vmatprep.mubr.bf16.mxu0 0
    %6074 = vmatmul.mubr.bf16.gmra.mrb[0].mxu0 %v5985
    %v6075 = vpop.f32.mrb[0].mxu0
    %v6076 = vadd.f32 0.0, %v6075
    %v6077 = vpop.f32.mrb[0].mxu0
    %v6078 = vpop.f32.mrb[0].mxu0
    %v6079 = vadd.f32 0.0, %v6078
    %v6080 = vpop.f32.mrb[0].mxu0
    %6081 = vmatprep.mubr.bf16.mxu0 0
    %6082 = vmatmul.mubr.bf16.gmra.mrb[0].mxu0 %v5988
    %v6083 = vpop.f32.mrb[0].mxu0
    %v6084 = vadd.f32 0.0, %v6083
    %v6085 = vpop.f32.mrb[0].mxu0
    %v6086 = vpop.f32.mrb[0].mxu0
    %v6087 = vadd.f32 0.0, %v6086
    %v6088 = vpop.f32.mrb[0].mxu0
    %6089 = vmatprep.mubr.bf16.mxu0 0
    %6090 = vmatmul.mubr.bf16.gmra.mrb[0].mxu0 %v5991
    %v6091 = vpop.f32.mrb[0].mxu0
    %v6092 = vadd.f32 0.0, %v6091
    %v6093 = vpop.f32.mrb[0].mxu0
    %v6094 = vpop.f32.mrb[0].mxu0
    %v6095 = vadd.f32 0.0, %v6094
    %v6096 = vpop.f32.mrb[0].mxu0
    %6097 = vmatprep.mubr.bf16.mxu0 0
    %6098 = vmatmul.mubr.bf16.gmra.mrb[0].mxu0 %v5994
    %v6099 = vpop.f32.mrb[0].mxu0
    %v6100 = vadd.f32 0.0, %v6099
    %v6101 = vpop.f32.mrb[0].mxu0
    %v6102 = vpop.f32.mrb[0].mxu0
    %v6103 = vadd.f32 0.0, %v6102
    %v6104 = vpop.f32.mrb[0].mxu0
    %6105 = vmatprep.mubr.bf16.mxu0 0
    %6106 = vmatmul.mubr.bf16.gmra.mrb[0].mxu0 %v5997
    %v6107 = vpop.f32.mrb[0].mxu0
    %v6108 = vadd.f32 0.0, %v6107
    %v6109 = vpop.f32.mrb[0].mxu0
    %v6110 = vpop.f32.mrb[0].mxu0
    %v6111 = vadd.f32 0.0, %v6110
    %v6112 = vpop.f32.mrb[0].mxu0
    %6113 = vmatprep.mubr.bf16.mxu0 0
    %6114 = vmatmul.mubr.bf16.gmra.mrb[0].mxu0 %v6000
    %v6115 = vpop.f32.mrb[0].mxu0
    %v6116 = vadd.f32 0.0, %v6115
    %v6117 = vpop.f32.mrb[0].mxu0
    %v6118 = vpop.f32.mrb[0].mxu0
    %v6119 = vadd.f32 0.0, %v6118
    %v6120 = vpop.f32.mrb[0].mxu0
    %6121 = vmatprep.mubr.bf16.mxu0 0
    %6122 = vmatmul.mubr.bf16.gmra.mrb[0].mxu0 %v6003
    %v6123 = vpop.f32.mrb[0].mxu0
    %v6124 = vadd.f32 0.0, %v6123
    %v6125 = vpop.f32.mrb[0].mxu0
    %v6126 = vpop.f32.mrb[0].mxu0
    %v6127 = vadd.f32 0.0, %v6126
    %v6128 = vpop.f32.mrb[0].mxu0
    %6129 = vmatprep.mubr.bf16.mxu0 0
    %6130 = vmatmul.mubr.bf16.gmra.mrb[0].mxu0 %v6006
    %v6131 = vpop.f32.mrb[0].mxu0
    %v6132 = vadd.f32 0.0, %v6131
    %v6133 = vpop.f32.mrb[0].mxu0
    %v6134 = vpop.f32.mrb[0].mxu0
    %v6135 = vadd.f32 0.0, %v6134
    %v6136 = vpop.f32.mrb[0].mxu0
    %6137 = vmatprep.mubr.bf16.mxu0 0
    %6138 = vmatmul.mubr.bf16.gmra.mrb[0].mxu0 %v6009
    %v6139 = vpop.f32.mrb[0].mxu0
    %v6140 = vadd.f32 0.0, %v6139
    %v6141 = vpop.f32.mrb[0].mxu0
    %v6142 = vpop.f32.mrb[0].mxu0
    %v6143 = vadd.f32 0.0, %v6142
    %v6144 = vpop.f32.mrb[0].mxu0
    %6145 = vmatprep.mubr.bf16.mxu0 0
    %6146 = vmatmul.mubr.bf16.gmra.mrb[0].mxu0 %v6012
    %v6147 = vpop.f32.mrb[0].mxu0
    %v6148 = vadd.f32 0.0, %v6147
    %v6149 = vpop.f32.mrb[0].mxu0
    %v6150 = vpop.f32.mrb[0].mxu0
    %v6151 = vadd.f32 0.0, %v6150
    %v6152 = vpop.f32.mrb[0].mxu0
    %6153 = vmatprep.mubr.bf16.mxu0 0
    %6154 = vmatmul.mubr.bf16.gmra.mrb[0].mxu0 %v6015
    %v6155 = vpop.f32.mrb[0].mxu0
    %v6156 = vadd.f32 0.0, %v6155
    %v6157 = vpop.f32.mrb[0].mxu0
    %v6158 = vpop.f32.mrb[0].mxu0
    %v6159 = vadd.f32 0.0, %v6158
    %v6160 = vpop.f32.mrb[0].mxu0
    %6161 = vmatprep.mubr.bf16.mxu0 0
    %6162 = vmatmul.mubr.bf16.gmra.mrb[0].mxu0 %v6018
    %v6163 = vpop.f32.mrb[0].mxu0
    %v6164 = vadd.f32 0.0, %v6163
    %v6165 = vpop.f32.mrb[0].mxu0
    %v6166 = vpop.f32.mrb[0].mxu0
    %v6167 = vadd.f32 0.0, %v6166
    %v6168 = vpop.f32.mrb[0].mxu0
    %6169 = vmatprep.mubr.bf16.mxu0 0
    %6170 = vmatmul.mubr.bf16.gmra.mrb[0].mxu0 %v6021
    %v6171 = vpop.f32.mrb[0].mxu0
    %v6172 = vadd.f32 0.0, %v6171
    %v6173 = vpop.f32.mrb[0].mxu0
    %v6174 = vpop.f32.mrb[0].mxu0
    %v6175 = vadd.f32 0.0, %v6174
    %v6176 = vpop.f32.mrb[0].mxu0
    %6177 = vmatprep.mubr.bf16.mxu0 0
    %6178 = vmatmul.mubr.bf16.gmra.mrb[0].mxu0 %v6024
    %v6179 = vpop.f32.mrb[0].mxu0
    %v6180 = vadd.f32 0.0, %v6179
    %v6181 = vpop.f32.mrb[0].mxu0
    %v6182 = vpop.f32.mrb[0].mxu0
    %v6183 = vadd.f32 0.0, %v6182
    %v6184 = vpop.f32.mrb[0].mxu0
    %6185 = vmatprep.mubr.bf16.mxu0 0
    %6186 = vmatmul.mubr.bf16.gmra.mrb[0].mxu0 %v6027
    %v6187 = vpop.f32.mrb[0].mxu0
    %v6188 = vadd.f32 0.0, %v6187
    %v6189 = vpop.f32.mrb[0].mxu0
    %v6190 = vpop.f32.mrb[0].mxu0
    %v6191 = vadd.f32 0.0, %v6190
    %v6192 = vpop.f32.mrb[0].mxu0
    %6193 = vdwg.mxu0
    %v6194 = vpack.c.bf16 %v6071, %v6068
    %v6195 = vld [vmem:[%s4] sm:$0xf]
    %v6196 = vld [vmem:[%s4 + $0x4] sm:$0xf]
    %v6197 = vld [vmem:[%s4 + $0x8] sm:$0xf]
    %v6198 = vld [vmem:[%s4 + $0xc] sm:$0xf]
    %v6199 = vld [vmem:[%s4 + $0x10] sm:$0xf]
    %v6200 = vld [vmem:[%s4 + $0x14] sm:$0xf]
    %v6201 = vld [vmem:[%s4 + $0x18] sm:$0xf]
    %v6202 = vld [vmem:[%s4 + $0x1c] sm:$0xf]
    %v6203 = vld [vmem:[%s4 + $0x20] sm:$0xf]
    %v6204 = vld [vmem:[%s4 + $0x24] sm:$0xf]
    %v6205 = vld [vmem:[%s4 + $0x28] sm:$0xf]
    %v6206 = vld [vmem:[%s4 + $0x2c] sm:$0xf]
    %v6207 = vld [vmem:[%s4 + $0x30] sm:$0xf]
    %v6208 = vld [vmem:[%s4 + $0x34] sm:$0xf]
    %v6209 = vld [vmem:[%s4 + $0x38] sm:$0xf]
    %v6210 = vld [vmem:[%s4 + $0x3c] sm:$0xf]
    %v6211 = vpack.c.bf16 %v6079, %v6076
    %s6212 = scalar_lea.vmem %s4, 64
    %v6213 = vld [vmem:[%s6212] sm:$0xf]
    %v6214 = vld [vmem:[%s6212 + $0x4] sm:$0xf]
    %v6215 = vld [vmem:[%s6212 + $0x8] sm:$0xf]
    %v6216 = vld [vmem:[%s6212 + $0xc] sm:$0xf]
    %v6217 = vld [vmem:[%s6212 + $0x10] sm:$0xf]
    %v6218 = vld [vmem:[%s6212 + $0x14] sm:$0xf]
    %v6219 = vld [vmem:[%s6212 + $0x18] sm:$0xf]
    %v6220 = vld [vmem:[%s6212 + $0x1c] sm:$0xf]
    %v6221 = vld [vmem:[%s6212 + $0x20] sm:$0xf]
    %v6222 = vld [vmem:[%s6212 + $0x24] sm:$0xf]
    %v6223 = vld [vmem:[%s6212 + $0x28] sm:$0xf]
    %v6224 = vld [vmem:[%s6212 + $0x2c] sm:$0xf]
    %v6225 = vld [vmem:[%s6212 + $0x30] sm:$0xf]
    %v6226 = vld [vmem:[%s6212 + $0x34] sm:$0xf]
    %v6227 = vld [vmem:[%s6212 + $0x38] sm:$0xf]
    %v6228 = vld [vmem:[%s6212 + $0x3c] sm:$0xf]
    %v6245 = vunpack.c.l.b16 %v6213
    %v6246 = vunpack.c.l.b16 %v6214
    %v6247 = vunpack.c.l.b16 %v6215
    %v6248 = vunpack.c.l.b16 %v6216
    %v6249 = vunpack.c.l.b16 %v6217
    %v6250 = vunpack.c.l.b16 %v6218
    %v6251 = vunpack.c.l.b16 %v6219
    %v6252 = vunpack.c.l.b16 %v6220
    %v6253 = vunpack.c.l.b16 %v6221
    %v6254 = vunpack.c.l.b16 %v6222
    %v6255 = vunpack.c.l.b16 %v6223
    %v6256 = vunpack.c.l.b16 %v6224
    %v6257 = vunpack.c.l.b16 %v6225
    %v6258 = vunpack.c.l.b16 %v6226
    %v6259 = vunpack.c.l.b16 %v6227
    %v6260 = vunpack.c.l.b16 %v6228
    %v6261 = vpack.c.b16 %v6246, %v6245
    %v6262 = vpack.c.b16 %v6248, %v6247
    %v6263 = vpack.c.b16 %v6250, %v6249
    %v6264 = vpack.c.b16 %v6252, %v6251
    %v6265 = vpack.c.b16 %v6254, %v6253
    %v6266 = vpack.c.b16 %v6256, %v6255
    %v6267 = vpack.c.b16 %v6258, %v6257
    %v6268 = vpack.c.b16 %v6260, %v6259
    %6277 = vmatprep.subr.bf16.mxu0 0
    %6278 = vmatpush1.bf16.msra.mxu0 %v6261
    %6279 = vmatprep.subr.bf16.mxu0 0
    %6280 = vmatpush1.bf16.msra.mxu0 %v6262
    %6281 = vmatprep.subr.bf16.mxu0 0
    %6282 = vmatpush1.bf16.msra.mxu0 %v6263
    %6283 = vmatprep.subr.bf16.mxu0 0
    %6284 = vmatpush1.bf16.msra.mxu0 %v6264
    %6285 = vmatprep.subr.bf16.mxu0 0
    %6286 = vmatpush1.bf16.msra.mxu0 %v6265
    %6287 = vmatprep.subr.bf16.mxu0 0
    %6288 = vmatpush1.bf16.msra.mxu0 %v6266
    %6289 = vmatprep.subr.bf16.mxu0 0
    %6290 = vmatpush1.bf16.msra.mxu0 %v6267
    %6291 = vmatprep.subr.bf16.mxu0 0
    %6292 = vmatpush1.bf16.msra.mxu0 %v6268
    %6293 = vmatprep.subr.bf16.mxu0 0
    %6294 = vmatpush1.bf16.msra.mxu0 0
    %6295 = vmatprep.subr.bf16.mxu0 0
    %6296 = vmatpush1.bf16.msra.mxu0 0
    %6297 = vmatprep.subr.bf16.mxu0 0
    %6298 = vmatpush1.bf16.msra.mxu0 0
    %6299 = vmatprep.subr.bf16.mxu0 0
    %6300 = vmatpush1.bf16.msra.mxu0 0
    %6301 = vmatprep.subr.bf16.mxu0 0
    %6302 = vmatpush1.bf16.msra.mxu0 0
    %6303 = vmatprep.subr.bf16.mxu0 0
    %6304 = vmatpush1.bf16.msra.mxu0 0
    %6305 = vmatprep.subr.bf16.mxu0 0
    %6306 = vmatpush1.bf16.msra.mxu0 0
    %6307 = vmatprep.subr.bf16.mxu0 0
    %6308 = vmatpush1.bf16.msra.mxu0 0
    %6309 = vmatprep.mubr.bf16.mxu0 0
    %6310 = vmatmul.mubr.bf16.gmra.mrb[0].mxu0 %v6211
    %v6311 = vpop.f32.mrb[0].mxu0
    %v6312 = vadd.f32 0.0, %v6311
    %v6313 = vpop.f32.mrb[0].mxu0
    %v6314 = vpop.f32.mrb[0].mxu0
    %v6315 = vadd.f32 0.0, %v6314
    %v6316 = vpop.f32.mrb[0].mxu0
    %6317 = vdwg.mxu0
    %v6334 = vunpack.c.l.b16 %v6195
    %v6335 = vunpack.c.l.b16 %v6196
    %v6336 = vunpack.c.l.b16 %v6197
    %v6337 = vunpack.c.l.b16 %v6198
    %v6338 = vunpack.c.l.b16 %v6199
    %v6339 = vunpack.c.l.b16 %v6200
    %v6340 = vunpack.c.l.b16 %v6201
    %v6341 = vunpack.c.l.b16 %v6202
    %v6342 = vunpack.c.l.b16 %v6203
    %v6343 = vunpack.c.l.b16 %v6204
    %v6344 = vunpack.c.l.b16 %v6205
    %v6345 = vunpack.c.l.b16 %v6206
    %v6346 = vunpack.c.l.b16 %v6207
    %v6347 = vunpack.c.l.b16 %v6208
    %v6348 = vunpack.c.l.b16 %v6209
    %v6349 = vunpack.c.l.b16 %v6210
    %v6350 = vpack.c.b16 %v6335, %v6334
    %v6351 = vpack.c.b16 %v6337, %v6336
    %v6352 = vpack.c.b16 %v6339, %v6338
    %v6353 = vpack.c.b16 %v6341, %v6340
    %v6354 = vpack.c.b16 %v6343, %v6342
    %v6355 = vpack.c.b16 %v6345, %v6344
    %v6356 = vpack.c.b16 %v6347, %v6346
    %v6357 = vpack.c.b16 %v6349, %v6348
    %6366 = vmatprep.subr.bf16.mxu0 0
    %6367 = vmatpush1.bf16.msra.mxu0 %v6350
    %6368 = vmatprep.subr.bf16.mxu0 0
    %6369 = vmatpush1.bf16.msra.mxu0 %v6351
    %6370 = vmatprep.subr.bf16.mxu0 0
    %6371 = vmatpush1.bf16.msra.mxu0 %v6352
    %6372 = vmatprep.subr.bf16.mxu0 0
    %6373 = vmatpush1.bf16.msra.mxu0 %v6353
    %6374 = vmatprep.subr.bf16.mxu0 0
    %6375 = vmatpush1.bf16.msra.mxu0 %v6354
    %6376 = vmatprep.subr.bf16.mxu0 0
    %6377 = vmatpush1.bf16.msra.mxu0 %v6355
    %6378 = vmatprep.subr.bf16.mxu0 0
    %6379 = vmatpush1.bf16.msra.mxu0 %v6356
    %6380 = vmatprep.subr.bf16.mxu0 0
    %6381 = vmatpush1.bf16.msra.mxu0 %v6357
    %6382 = vmatprep.subr.bf16.mxu0 0
    %6383 = vmatpush1.bf16.msra.mxu0 0
    %6384 = vmatprep.subr.bf16.mxu0 0
    %6385 = vmatpush1.bf16.msra.mxu0 0
    %6386 = vmatprep.subr.bf16.mxu0 0
    %6387 = vmatpush1.bf16.msra.mxu0 0
    %6388 = vmatprep.subr.bf16.mxu0 0
    %6389 = vmatpush1.bf16.msra.mxu0 0
    %6390 = vmatprep.subr.bf16.mxu0 0
    %6391 = vmatpush1.bf16.msra.mxu0 0
    %6392 = vmatprep.subr.bf16.mxu0 0
    %6393 = vmatpush1.bf16.msra.mxu0 0
    %6394 = vmatprep.subr.bf16.mxu0 0
    %6395 = vmatpush1.bf16.msra.mxu0 0
    %6396 = vmatprep.subr.bf16.mxu0 0
    %6397 = vmatpush1.bf16.msra.mxu0 0
    %6398 = vmatprep.mubr.bf16.mxu0 0
    %6399 = vmatmul.mubr.bf16.gmra.mrb[0].mxu0 %v6194
    %v6400 = vpop.f32.mrb[0].mxu0
    %v6401 = vadd.f32 %v6312, %v6400
    %v6402 = vpop.f32.mrb[0].mxu0
    %v6403 = vpop.f32.mrb[0].mxu0
    %v6404 = vadd.f32 %v6315, %v6403
    %v6405 = vpop.f32.mrb[0].mxu0
    %6406 = vdwg.mxu0
    %v6407 = vpack.c.bf16 %v6087, %v6084
    %s6408 = scalar_lea.vmem %s4, 128
    %v6409 = vld [vmem:[%s6408] sm:$0xf]
    %v6410 = vld [vmem:[%s6408 + $0x4] sm:$0xf]
    %v6411 = vld [vmem:[%s6408 + $0x8] sm:$0xf]
    %v6412 = vld [vmem:[%s6408 + $0xc] sm:$0xf]
    %v6413 = vld [vmem:[%s6408 + $0x10] sm:$0xf]
    %v6414 = vld [vmem:[%s6408 + $0x14] sm:$0xf]
    %v6415 = vld [vmem:[%s6408 + $0x18] sm:$0xf]
    %v6416 = vld [vmem:[%s6408 + $0x1c] sm:$0xf]
    %v6417 = vld [vmem:[%s6408 + $0x20] sm:$0xf]
    %v6418 = vld [vmem:[%s6408 + $0x24] sm:$0xf]
    %v6419 = vld [vmem:[%s6408 + $0x28] sm:$0xf]
    %v6420 = vld [vmem:[%s6408 + $0x2c] sm:$0xf]
    %v6421 = vld [vmem:[%s6408 + $0x30] sm:$0xf]
    %v6422 = vld [vmem:[%s6408 + $0x34] sm:$0xf]
    %v6423 = vld [vmem:[%s6408 + $0x38] sm:$0xf]
    %v6424 = vld [vmem:[%s6408 + $0x3c] sm:$0xf]
    %v6441 = vunpack.c.l.b16 %v6409
    %v6442 = vunpack.c.l.b16 %v6410
    %v6443 = vunpack.c.l.b16 %v6411
    %v6444 = vunpack.c.l.b16 %v6412
    %v6445 = vunpack.c.l.b16 %v6413
    %v6446 = vunpack.c.l.b16 %v6414
    %v6447 = vunpack.c.l.b16 %v6415
    %v6448 = vunpack.c.l.b16 %v6416
    %v6449 = vunpack.c.l.b16 %v6417
    %v6450 = vunpack.c.l.b16 %v6418
    %v6451 = vunpack.c.l.b16 %v6419
    %v6452 = vunpack.c.l.b16 %v6420
    %v6453 = vunpack.c.l.b16 %v6421
    %v6454 = vunpack.c.l.b16 %v6422
    %v6455 = vunpack.c.l.b16 %v6423
    %v6456 = vunpack.c.l.b16 %v6424
    %v6457 = vpack.c.b16 %v6442, %v6441
    %v6458 = vpack.c.b16 %v6444, %v6443
    %v6459 = vpack.c.b16 %v6446, %v6445
    %v6460 = vpack.c.b16 %v6448, %v6447
    %v6461 = vpack.c.b16 %v6450, %v6449
    %v6462 = vpack.c.b16 %v6452, %v6451
    %v6463 = vpack.c.b16 %v6454, %v6453
    %v6464 = vpack.c.b16 %v6456, %v6455
    %6473 = vmatprep.subr.bf16.mxu0 0
    %6474 = vmatpush1.bf16.msra.mxu0 %v6457
    %6475 = vmatprep.subr.bf16.mxu0 0
    %6476 = vmatpush1.bf16.msra.mxu0 %v6458
    %6477 = vmatprep.subr.bf16.mxu0 0
    %6478 = vmatpush1.bf16.msra.mxu0 %v6459
    %6479 = vmatprep.subr.bf16.mxu0 0
    %6480 = vmatpush1.bf16.msra.mxu0 %v6460
    %6481 = vmatprep.subr.bf16.mxu0 0
    %6482 = vmatpush1.bf16.msra.mxu0 %v6461
    %6483 = vmatprep.subr.bf16.mxu0 0
    %6484 = vmatpush1.bf16.msra.mxu0 %v6462
    %6485 = vmatprep.subr.bf16.mxu0 0
    %6486 = vmatpush1.bf16.msra.mxu0 %v6463
    %6487 = vmatprep.subr.bf16.mxu0 0
    %6488 = vmatpush1.bf16.msra.mxu0 %v6464
    %6489 = vmatprep.subr.bf16.mxu0 0
    %6490 = vmatpush1.bf16.msra.mxu0 0
    %6491 = vmatprep.subr.bf16.mxu0 0
    %6492 = vmatpush1.bf16.msra.mxu0 0
    %6493 = vmatprep.subr.bf16.mxu0 0
    %6494 = vmatpush1.bf16.msra.mxu0 0
    %6495 = vmatprep.subr.bf16.mxu0 0
    %6496 = vmatpush1.bf16.msra.mxu0 0
    %6497 = vmatprep.subr.bf16.mxu0 0
    %6498 = vmatpush1.bf16.msra.mxu0 0
    %6499 = vmatprep.subr.bf16.mxu0 0
    %6500 = vmatpush1.bf16.msra.mxu0 0
    %6501 = vmatprep.subr.bf16.mxu0 0
    %6502 = vmatpush1.bf16.msra.mxu0 0
    %6503 = vmatprep.subr.bf16.mxu0 0
    %6504 = vmatpush1.bf16.msra.mxu0 0
    %6505 = vmatprep.mubr.bf16.mxu0 0
    %6506 = vmatmul.mubr.bf16.gmra.mrb[0].mxu0 %v6407
    %v6507 = vpop.f32.mrb[0].mxu0
    %v6508 = vadd.f32 0.0, %v6507
    %v6509 = vpop.f32.mrb[0].mxu0
    %v6510 = vpop.f32.mrb[0].mxu0
    %v6511 = vadd.f32 0.0, %v6510
    %v6512 = vpop.f32.mrb[0].mxu0
    %6513 = vdwg.mxu0
    %v6514 = vadd.f32 %v6401, %v6508
    %v6515 = vadd.f32 %v6404, %v6511
    %v6516 = vpack.c.bf16 %v6095, %v6092
    %s6517 = scalar_lea.vmem %s4, 192
    %v6518 = vld [vmem:[%s6517] sm:$0xf]
    %v6519 = vld [vmem:[%s6517 + $0x4] sm:$0xf]
    %v6520 = vld [vmem:[%s6517 + $0x8] sm:$0xf]
    %v6521 = vld [vmem:[%s6517 + $0xc] sm:$0xf]
    %v6522 = vld [vmem:[%s6517 + $0x10] sm:$0xf]
    %v6523 = vld [vmem:[%s6517 + $0x14] sm:$0xf]
    %v6524 = vld [vmem:[%s6517 + $0x18] sm:$0xf]
    %v6525 = vld [vmem:[%s6517 + $0x1c] sm:$0xf]
    %v6526 = vld [vmem:[%s6517 + $0x20] sm:$0xf]
    %v6527 = vld [vmem:[%s6517 + $0x24] sm:$0xf]
    %v6528 = vld [vmem:[%s6517 + $0x28] sm:$0xf]
    %v6529 = vld [vmem:[%s6517 + $0x2c] sm:$0xf]
    %v6530 = vld [vmem:[%s6517 + $0x30] sm:$0xf]
    %v6531 = vld [vmem:[%s6517 + $0x34] sm:$0xf]
    %v6532 = vld [vmem:[%s6517 + $0x38] sm:$0xf]
    %v6533 = vld [vmem:[%s6517 + $0x3c] sm:$0xf]
    %v6550 = vunpack.c.l.b16 %v6518
    %v6551 = vunpack.c.l.b16 %v6519
    %v6552 = vunpack.c.l.b16 %v6520
    %v6553 = vunpack.c.l.b16 %v6521
    %v6554 = vunpack.c.l.b16 %v6522
    %v6555 = vunpack.c.l.b16 %v6523
    %v6556 = vunpack.c.l.b16 %v6524
    %v6557 = vunpack.c.l.b16 %v6525
    %v6558 = vunpack.c.l.b16 %v6526
    %v6559 = vunpack.c.l.b16 %v6527
    %v6560 = vunpack.c.l.b16 %v6528
    %v6561 = vunpack.c.l.b16 %v6529
    %v6562 = vunpack.c.l.b16 %v6530
    %v6563 = vunpack.c.l.b16 %v6531
    %v6564 = vunpack.c.l.b16 %v6532
    %v6565 = vunpack.c.l.b16 %v6533
    %v6566 = vpack.c.b16 %v6551, %v6550
    %v6567 = vpack.c.b16 %v6553, %v6552
    %v6568 = vpack.c.b16 %v6555, %v6554
    %v6569 = vpack.c.b16 %v6557, %v6556
    %v6570 = vpack.c.b16 %v6559, %v6558
    %v6571 = vpack.c.b16 %v6561, %v6560
    %v6572 = vpack.c.b16 %v6563, %v6562
    %v6573 = vpack.c.b16 %v6565, %v6564
    %6582 = vmatprep.subr.bf16.mxu0 0
    %6583 = vmatpush1.bf16.msra.mxu0 %v6566
    %6584 = vmatprep.subr.bf16.mxu0 0
    %6585 = vmatpush1.bf16.msra.mxu0 %v6567
    %6586 = vmatprep.subr.bf16.mxu0 0
    %6587 = vmatpush1.bf16.msra.mxu0 %v6568
    %6588 = vmatprep.subr.bf16.mxu0 0
    %6589 = vmatpush1.bf16.msra.mxu0 %v6569
    %6590 = vmatprep.subr.bf16.mxu0 0
    %6591 = vmatpush1.bf16.msra.mxu0 %v6570
    %6592 = vmatprep.subr.bf16.mxu0 0
    %6593 = vmatpush1.bf16.msra.mxu0 %v6571
    %6594 = vmatprep.subr.bf16.mxu0 0
    %6595 = vmatpush1.bf16.msra.mxu0 %v6572
    %6596 = vmatprep.subr.bf16.mxu0 0
    %6597 = vmatpush1.bf16.msra.mxu0 %v6573
    %6598 = vmatprep.subr.bf16.mxu0 0
    %6599 = vmatpush1.bf16.msra.mxu0 0
    %6600 = vmatprep.subr.bf16.mxu0 0
    %6601 = vmatpush1.bf16.msra.mxu0 0
    %6602 = vmatprep.subr.bf16.mxu0 0
    %6603 = vmatpush1.bf16.msra.mxu0 0
    %6604 = vmatprep.subr.bf16.mxu0 0
    %6605 = vmatpush1.bf16.msra.mxu0 0
    %6606 = vmatprep.subr.bf16.mxu0 0
    %6607 = vmatpush1.bf16.msra.mxu0 0
    %6608 = vmatprep.subr.bf16.mxu0 0
    %6609 = vmatpush1.bf16.msra.mxu0 0
    %6610 = vmatprep.subr.bf16.mxu0 0
    %6611 = vmatpush1.bf16.msra.mxu0 0
    %6612 = vmatprep.subr.bf16.mxu0 0
    %6613 = vmatpush1.bf16.msra.mxu0 0
    %6614 = vmatprep.mubr.bf16.mxu0 0
    %6615 = vmatmul.mubr.bf16.gmra.mrb[0].mxu0 %v6516
    %v6616 = vpop.f32.mrb[0].mxu0
    %v6617 = vadd.f32 0.0, %v6616
    %v6618 = vpop.f32.mrb[0].mxu0
    %v6619 = vpop.f32.mrb[0].mxu0
    %v6620 = vadd.f32 0.0, %v6619
    %v6621 = vpop.f32.mrb[0].mxu0
    %6622 = vdwg.mxu0
    %v6623 = vadd.f32 %v6514, %v6617
    %v6624 = vadd.f32 %v6515, %v6620
    %v6625 = vpack.c.bf16 %v6103, %v6100
    %s6626 = scalar_lea.vmem %s4, 256
    %v6627 = vld [vmem:[%s6626] sm:$0xf]
    %v6628 = vld [vmem:[%s6626 + $0x4] sm:$0xf]
    %v6629 = vld [vmem:[%s6626 + $0x8] sm:$0xf]
    %v6630 = vld [vmem:[%s6626 + $0xc] sm:$0xf]
    %v6631 = vld [vmem:[%s6626 + $0x10] sm:$0xf]
    %v6632 = vld [vmem:[%s6626 + $0x14] sm:$0xf]
    %v6633 = vld [vmem:[%s6626 + $0x18] sm:$0xf]
    %v6634 = vld [vmem:[%s6626 + $0x1c] sm:$0xf]
    %v6635 = vld [vmem:[%s6626 + $0x20] sm:$0xf]
    %v6636 = vld [vmem:[%s6626 + $0x24] sm:$0xf]
    %v6637 = vld [vmem:[%s6626 + $0x28] sm:$0xf]
    %v6638 = vld [vmem:[%s6626 + $0x2c] sm:$0xf]
    %v6639 = vld [vmem:[%s6626 + $0x30] sm:$0xf]
    %v6640 = vld [vmem:[%s6626 + $0x34] sm:$0xf]
    %v6641 = vld [vmem:[%s6626 + $0x38] sm:$0xf]
    %v6642 = vld [vmem:[%s6626 + $0x3c] sm:$0xf]
    %v6659 = vunpack.c.l.b16 %v6627
    %v6660 = vunpack.c.l.b16 %v6628
    %v6661 = vunpack.c.l.b16 %v6629
    %v6662 = vunpack.c.l.b16 %v6630
    %v6663 = vunpack.c.l.b16 %v6631
    %v6664 = vunpack.c.l.b16 %v6632
    %v6665 = vunpack.c.l.b16 %v6633
    %v6666 = vunpack.c.l.b16 %v6634
    %v6667 = vunpack.c.l.b16 %v6635
    %v6668 = vunpack.c.l.b16 %v6636
    %v6669 = vunpack.c.l.b16 %v6637
    %v6670 = vunpack.c.l.b16 %v6638
    %v6671 = vunpack.c.l.b16 %v6639
    %v6672 = vunpack.c.l.b16 %v6640
    %v6673 = vunpack.c.l.b16 %v6641
    %v6674 = vunpack.c.l.b16 %v6642
    %v6675 = vpack.c.b16 %v6660, %v6659
    %v6676 = vpack.c.b16 %v6662, %v6661
    %v6677 = vpack.c.b16 %v6664, %v6663
    %v6678 = vpack.c.b16 %v6666, %v6665
    %v6679 = vpack.c.b16 %v6668, %v6667
    %v6680 = vpack.c.b16 %v6670, %v6669
    %v6681 = vpack.c.b16 %v6672, %v6671
    %v6682 = vpack.c.b16 %v6674, %v6673
    %6691 = vmatprep.subr.bf16.mxu0 0
    %6692 = vmatpush1.bf16.msra.mxu0 %v6675
    %6693 = vmatprep.subr.bf16.mxu0 0
    %6694 = vmatpush1.bf16.msra.mxu0 %v6676
    %6695 = vmatprep.subr.bf16.mxu0 0
    %6696 = vmatpush1.bf16.msra.mxu0 %v6677
    %6697 = vmatprep.subr.bf16.mxu0 0
    %6698 = vmatpush1.bf16.msra.mxu0 %v6678
    %6699 = vmatprep.subr.bf16.mxu0 0
    %6700 = vmatpush1.bf16.msra.mxu0 %v6679
    %6701 = vmatprep.subr.bf16.mxu0 0
    %6702 = vmatpush1.bf16.msra.mxu0 %v6680
    %6703 = vmatprep.subr.bf16.mxu0 0
    %6704 = vmatpush1.bf16.msra.mxu0 %v6681
    %6705 = vmatprep.subr.bf16.mxu0 0
    %6706 = vmatpush1.bf16.msra.mxu0 %v6682
    %6707 = vmatprep.subr.bf16.mxu0 0
    %6708 = vmatpush1.bf16.msra.mxu0 0
    %6709 = vmatprep.subr.bf16.mxu0 0
    %6710 = vmatpush1.bf16.msra.mxu0 0
    %6711 = vmatprep.subr.bf16.mxu0 0
    %6712 = vmatpush1.bf16.msra.mxu0 0
    %6713 = vmatprep.subr.bf16.mxu0 0
    %6714 = vmatpush1.bf16.msra.mxu0 0
    %6715 = vmatprep.subr.bf16.mxu0 0
    %6716 = vmatpush1.bf16.msra.mxu0 0
    %6717 = vmatprep.subr.bf16.mxu0 0
    %6718 = vmatpush1.bf16.msra.mxu0 0
    %6719 = vmatprep.subr.bf16.mxu0 0
    %6720 = vmatpush1.bf16.msra.mxu0 0
    %6721 = vmatprep.subr.bf16.mxu0 0
    %6722 = vmatpush1.bf16.msra.mxu0 0
    %6723 = vmatprep.mubr.bf16.mxu0 0
    %6724 = vmatmul.mubr.bf16.gmra.mrb[0].mxu0 %v6625
    %v6725 = vpop.f32.mrb[0].mxu0
    %v6726 = vadd.f32 0.0, %v6725
    %v6727 = vpop.f32.mrb[0].mxu0
    %v6728 = vpop.f32.mrb[0].mxu0
    %v6729 = vadd.f32 0.0, %v6728
    %v6730 = vpop.f32.mrb[0].mxu0
    %6731 = vdwg.mxu0
    %v6732 = vadd.f32 %v6623, %v6726
    %v6733 = vadd.f32 %v6624, %v6729
    %v6734 = vpack.c.bf16 %v6111, %v6108
    %s6735 = scalar_lea.vmem %s4, 320
    %v6736 = vld [vmem:[%s6735] sm:$0xf]
    %v6737 = vld [vmem:[%s6735 + $0x4] sm:$0xf]
    %v6738 = vld [vmem:[%s6735 + $0x8] sm:$0xf]
    %v6739 = vld [vmem:[%s6735 + $0xc] sm:$0xf]
    %v6740 = vld [vmem:[%s6735 + $0x10] sm:$0xf]
    %v6741 = vld [vmem:[%s6735 + $0x14] sm:$0xf]
    %v6742 = vld [vmem:[%s6735 + $0x18] sm:$0xf]
    %v6743 = vld [vmem:[%s6735 + $0x1c] sm:$0xf]
    %v6744 = vld [vmem:[%s6735 + $0x20] sm:$0xf]
    %v6745 = vld [vmem:[%s6735 + $0x24] sm:$0xf]
    %v6746 = vld [vmem:[%s6735 + $0x28] sm:$0xf]
    %v6747 = vld [vmem:[%s6735 + $0x2c] sm:$0xf]
    %v6748 = vld [vmem:[%s6735 + $0x30] sm:$0xf]
    %v6749 = vld [vmem:[%s6735 + $0x34] sm:$0xf]
    %v6750 = vld [vmem:[%s6735 + $0x38] sm:$0xf]
    %v6751 = vld [vmem:[%s6735 + $0x3c] sm:$0xf]
    %v6768 = vunpack.c.l.b16 %v6736
    %v6769 = vunpack.c.l.b16 %v6737
    %v6770 = vunpack.c.l.b16 %v6738
    %v6771 = vunpack.c.l.b16 %v6739
    %v6772 = vunpack.c.l.b16 %v6740
    %v6773 = vunpack.c.l.b16 %v6741
    %v6774 = vunpack.c.l.b16 %v6742
    %v6775 = vunpack.c.l.b16 %v6743
    %v6776 = vunpack.c.l.b16 %v6744
    %v6777 = vunpack.c.l.b16 %v6745
    %v6778 = vunpack.c.l.b16 %v6746
    %v6779 = vunpack.c.l.b16 %v6747
    %v6780 = vunpack.c.l.b16 %v6748
    %v6781 = vunpack.c.l.b16 %v6749
    %v6782 = vunpack.c.l.b16 %v6750
    %v6783 = vunpack.c.l.b16 %v6751
    %v6784 = vpack.c.b16 %v6769, %v6768
    %v6785 = vpack.c.b16 %v6771, %v6770
    %v6786 = vpack.c.b16 %v6773, %v6772
    %v6787 = vpack.c.b16 %v6775, %v6774
    %v6788 = vpack.c.b16 %v6777, %v6776
    %v6789 = vpack.c.b16 %v6779, %v6778
    %v6790 = vpack.c.b16 %v6781, %v6780
    %v6791 = vpack.c.b16 %v6783, %v6782
    %6800 = vmatprep.subr.bf16.mxu0 0
    %6801 = vmatpush1.bf16.msra.mxu0 %v6784
    %6802 = vmatprep.subr.bf16.mxu0 0
    %6803 = vmatpush1.bf16.msra.mxu0 %v6785
    %6804 = vmatprep.subr.bf16.mxu0 0
    %6805 = vmatpush1.bf16.msra.mxu0 %v6786
    %6806 = vmatprep.subr.bf16.mxu0 0
    %6807 = vmatpush1.bf16.msra.mxu0 %v6787
    %6808 = vmatprep.subr.bf16.mxu0 0
    %6809 = vmatpush1.bf16.msra.mxu0 %v6788
    %6810 = vmatprep.subr.bf16.mxu0 0
    %6811 = vmatpush1.bf16.msra.mxu0 %v6789
    %6812 = vmatprep.subr.bf16.mxu0 0
    %6813 = vmatpush1.bf16.msra.mxu0 %v6790
    %6814 = vmatprep.subr.bf16.mxu0 0
    %6815 = vmatpush1.bf16.msra.mxu0 %v6791
    %6816 = vmatprep.subr.bf16.mxu0 0
    %6817 = vmatpush1.bf16.msra.mxu0 0
    %6818 = vmatprep.subr.bf16.mxu0 0
    %6819 = vmatpush1.bf16.msra.mxu0 0
    %6820 = vmatprep.subr.bf16.mxu0 0
    %6821 = vmatpush1.bf16.msra.mxu0 0
    %6822 = vmatprep.subr.bf16.mxu0 0
    %6823 = vmatpush1.bf16.msra.mxu0 0
    %6824 = vmatprep.subr.bf16.mxu0 0
    %6825 = vmatpush1.bf16.msra.mxu0 0
    %6826 = vmatprep.subr.bf16.mxu0 0
    %6827 = vmatpush1.bf16.msra.mxu0 0
    %6828 = vmatprep.subr.bf16.mxu0 0
    %6829 = vmatpush1.bf16.msra.mxu0 0
    %6830 = vmatprep.subr.bf16.mxu0 0
    %6831 = vmatpush1.bf16.msra.mxu0 0
    %6832 = vmatprep.mubr.bf16.mxu0 0
    %6833 = vmatmul.mubr.bf16.gmra.mrb[0].mxu0 %v6734
    %v6834 = vpop.f32.mrb[0].mxu0
    %v6835 = vadd.f32 0.0, %v6834
    %v6836 = vpop.f32.mrb[0].mxu0
    %v6837 = vpop.f32.mrb[0].mxu0
    %v6838 = vadd.f32 0.0, %v6837
    %v6839 = vpop.f32.mrb[0].mxu0
    %6840 = vdwg.mxu0
    %v6841 = vadd.f32 %v6732, %v6835
    %v6842 = vadd.f32 %v6733, %v6838
    %v6843 = vpack.c.bf16 %v6119, %v6116
    %s6844 = scalar_lea.vmem %s4, 384
    %v6845 = vld [vmem:[%s6844] sm:$0xf]
    %v6846 = vld [vmem:[%s6844 + $0x4] sm:$0xf]
    %v6847 = vld [vmem:[%s6844 + $0x8] sm:$0xf]
    %v6848 = vld [vmem:[%s6844 + $0xc] sm:$0xf]
    %v6849 = vld [vmem:[%s6844 + $0x10] sm:$0xf]
    %v6850 = vld [vmem:[%s6844 + $0x14] sm:$0xf]
    %v6851 = vld [vmem:[%s6844 + $0x18] sm:$0xf]
    %v6852 = vld [vmem:[%s6844 + $0x1c] sm:$0xf]
    %v6853 = vld [vmem:[%s6844 + $0x20] sm:$0xf]
    %v6854 = vld [vmem:[%s6844 + $0x24] sm:$0xf]
    %v6855 = vld [vmem:[%s6844 + $0x28] sm:$0xf]
    %v6856 = vld [vmem:[%s6844 + $0x2c] sm:$0xf]
    %v6857 = vld [vmem:[%s6844 + $0x30] sm:$0xf]
    %v6858 = vld [vmem:[%s6844 + $0x34] sm:$0xf]
    %v6859 = vld [vmem:[%s6844 + $0x38] sm:$0xf]
    %v6860 = vld [vmem:[%s6844 + $0x3c] sm:$0xf]
    %v6877 = vunpack.c.l.b16 %v6845
    %v6878 = vunpack.c.l.b16 %v6846
    %v6879 = vunpack.c.l.b16 %v6847
    %v6880 = vunpack.c.l.b16 %v6848
    %v6881 = vunpack.c.l.b16 %v6849
    %v6882 = vunpack.c.l.b16 %v6850
    %v6883 = vunpack.c.l.b16 %v6851
    %v6884 = vunpack.c.l.b16 %v6852
    %v6885 = vunpack.c.l.b16 %v6853
    %v6886 = vunpack.c.l.b16 %v6854
    %v6887 = vunpack.c.l.b16 %v6855
    %v6888 = vunpack.c.l.b16 %v6856
    %v6889 = vunpack.c.l.b16 %v6857
    %v6890 = vunpack.c.l.b16 %v6858
    %v6891 = vunpack.c.l.b16 %v6859
    %v6892 = vunpack.c.l.b16 %v6860
    %v6893 = vpack.c.b16 %v6878, %v6877
    %v6894 = vpack.c.b16 %v6880, %v6879
    %v6895 = vpack.c.b16 %v6882, %v6881
    %v6896 = vpack.c.b16 %v6884, %v6883
    %v6897 = vpack.c.b16 %v6886, %v6885
    %v6898 = vpack.c.b16 %v6888, %v6887
    %v6899 = vpack.c.b16 %v6890, %v6889
    %v6900 = vpack.c.b16 %v6892, %v6891
    %6909 = vmatprep.subr.bf16.mxu0 0
    %6910 = vmatpush1.bf16.msra.mxu0 %v6893
    %6911 = vmatprep.subr.bf16.mxu0 0
    %6912 = vmatpush1.bf16.msra.mxu0 %v6894
    %6913 = vmatprep.subr.bf16.mxu0 0
    %6914 = vmatpush1.bf16.msra.mxu0 %v6895
    %6915 = vmatprep.subr.bf16.mxu0 0
    %6916 = vmatpush1.bf16.msra.mxu0 %v6896
    %6917 = vmatprep.subr.bf16.mxu0 0
    %6918 = vmatpush1.bf16.msra.mxu0 %v6897
    %6919 = vmatprep.subr.bf16.mxu0 0
    %6920 = vmatpush1.bf16.msra.mxu0 %v6898
    %6921 = vmatprep.subr.bf16.mxu0 0
    %6922 = vmatpush1.bf16.msra.mxu0 %v6899
    %6923 = vmatprep.subr.bf16.mxu0 0
    %6924 = vmatpush1.bf16.msra.mxu0 %v6900
    %6925 = vmatprep.subr.bf16.mxu0 0
    %6926 = vmatpush1.bf16.msra.mxu0 0
    %6927 = vmatprep.subr.bf16.mxu0 0
    %6928 = vmatpush1.bf16.msra.mxu0 0
    %6929 = vmatprep.subr.bf16.mxu0 0
    %6930 = vmatpush1.bf16.msra.mxu0 0
    %6931 = vmatprep.subr.bf16.mxu0 0
    %6932 = vmatpush1.bf16.msra.mxu0 0
    %6933 = vmatprep.subr.bf16.mxu0 0
    %6934 = vmatpush1.bf16.msra.mxu0 0
    %6935 = vmatprep.subr.bf16.mxu0 0
    %6936 = vmatpush1.bf16.msra.mxu0 0
    %6937 = vmatprep.subr.bf16.mxu0 0
    %6938 = vmatpush1.bf16.msra.mxu0 0
    %6939 = vmatprep.subr.bf16.mxu0 0
    %6940 = vmatpush1.bf16.msra.mxu0 0
    %6941 = vmatprep.mubr.bf16.mxu0 0
    %6942 = vmatmul.mubr.bf16.gmra.mrb[0].mxu0 %v6843
    %v6943 = vpop.f32.mrb[0].mxu0
    %v6944 = vadd.f32 0.0, %v6943
    %v6945 = vpop.f32.mrb[0].mxu0
    %v6946 = vpop.f32.mrb[0].mxu0
    %v6947 = vadd.f32 0.0, %v6946
    %v6948 = vpop.f32.mrb[0].mxu0
    %6949 = vdwg.mxu0
    %v6950 = vadd.f32 %v6841, %v6944
    %v6951 = vadd.f32 %v6842, %v6947
    %v6952 = vpack.c.bf16 %v6127, %v6124
    %s6953 = scalar_lea.vmem %s4, 448
    %v6954 = vld [vmem:[%s6953] sm:$0xf]
    %v6955 = vld [vmem:[%s6953 + $0x4] sm:$0xf]
    %v6956 = vld [vmem:[%s6953 + $0x8] sm:$0xf]
    %v6957 = vld [vmem:[%s6953 + $0xc] sm:$0xf]
    %v6958 = vld [vmem:[%s6953 + $0x10] sm:$0xf]
    %v6959 = vld [vmem:[%s6953 + $0x14] sm:$0xf]
    %v6960 = vld [vmem:[%s6953 + $0x18] sm:$0xf]
    %v6961 = vld [vmem:[%s6953 + $0x1c] sm:$0xf]
    %v6962 = vld [vmem:[%s6953 + $0x20] sm:$0xf]
    %v6963 = vld [vmem:[%s6953 + $0x24] sm:$0xf]
    %v6964 = vld [vmem:[%s6953 + $0x28] sm:$0xf]
    %v6965 = vld [vmem:[%s6953 + $0x2c] sm:$0xf]
    %v6966 = vld [vmem:[%s6953 + $0x30] sm:$0xf]
    %v6967 = vld [vmem:[%s6953 + $0x34] sm:$0xf]
    %v6968 = vld [vmem:[%s6953 + $0x38] sm:$0xf]
    %v6969 = vld [vmem:[%s6953 + $0x3c] sm:$0xf]
    %v6986 = vunpack.c.l.b16 %v6954
    %v6987 = vunpack.c.l.b16 %v6955
    %v6988 = vunpack.c.l.b16 %v6956
    %v6989 = vunpack.c.l.b16 %v6957
    %v6990 = vunpack.c.l.b16 %v6958
    %v6991 = vunpack.c.l.b16 %v6959
    %v6992 = vunpack.c.l.b16 %v6960
    %v6993 = vunpack.c.l.b16 %v6961
    %v6994 = vunpack.c.l.b16 %v6962
    %v6995 = vunpack.c.l.b16 %v6963
    %v6996 = vunpack.c.l.b16 %v6964
    %v6997 = vunpack.c.l.b16 %v6965
    %v6998 = vunpack.c.l.b16 %v6966
    %v6999 = vunpack.c.l.b16 %v6967
    %v7000 = vunpack.c.l.b16 %v6968
    %v7001 = vunpack.c.l.b16 %v6969
    %v7002 = vpack.c.b16 %v6987, %v6986
    %v7003 = vpack.c.b16 %v6989, %v6988
    %v7004 = vpack.c.b16 %v6991, %v6990
    %v7005 = vpack.c.b16 %v6993, %v6992
    %v7006 = vpack.c.b16 %v6995, %v6994
    %v7007 = vpack.c.b16 %v6997, %v6996
    %v7008 = vpack.c.b16 %v6999, %v6998
    %v7009 = vpack.c.b16 %v7001, %v7000
    %7018 = vmatprep.subr.bf16.mxu0 0
    %7019 = vmatpush1.bf16.msra.mxu0 %v7002
    %7020 = vmatprep.subr.bf16.mxu0 0
    %7021 = vmatpush1.bf16.msra.mxu0 %v7003
    %7022 = vmatprep.subr.bf16.mxu0 0
    %7023 = vmatpush1.bf16.msra.mxu0 %v7004
    %7024 = vmatprep.subr.bf16.mxu0 0
    %7025 = vmatpush1.bf16.msra.mxu0 %v7005
    %7026 = vmatprep.subr.bf16.mxu0 0
    %7027 = vmatpush1.bf16.msra.mxu0 %v7006
    %7028 = vmatprep.subr.bf16.mxu0 0
    %7029 = vmatpush1.bf16.msra.mxu0 %v7007
    %7030 = vmatprep.subr.bf16.mxu0 0
    %7031 = vmatpush1.bf16.msra.mxu0 %v7008
    %7032 = vmatprep.subr.bf16.mxu0 0
    %7033 = vmatpush1.bf16.msra.mxu0 %v7009
    %7034 = vmatprep.subr.bf16.mxu0 0
    %7035 = vmatpush1.bf16.msra.mxu0 0
    %7036 = vmatprep.subr.bf16.mxu0 0
    %7037 = vmatpush1.bf16.msra.mxu0 0
    %7038 = vmatprep.subr.bf16.mxu0 0
    %7039 = vmatpush1.bf16.msra.mxu0 0
    %7040 = vmatprep.subr.bf16.mxu0 0
    %7041 = vmatpush1.bf16.msra.mxu0 0
    %7042 = vmatprep.subr.bf16.mxu0 0
    %7043 = vmatpush1.bf16.msra.mxu0 0
    %7044 = vmatprep.subr.bf16.mxu0 0
    %7045 = vmatpush1.bf16.msra.mxu0 0
    %7046 = vmatprep.subr.bf16.mxu0 0
    %7047 = vmatpush1.bf16.msra.mxu0 0
    %7048 = vmatprep.subr.bf16.mxu0 0
    %7049 = vmatpush1.bf16.msra.mxu0 0
    %7050 = vmatprep.mubr.bf16.mxu0 0
    %7051 = vmatmul.mubr.bf16.gmra.mrb[0].mxu0 %v6952
    %v7052 = vpop.f32.mrb[0].mxu0
    %v7053 = vadd.f32 0.0, %v7052
    %v7054 = vpop.f32.mrb[0].mxu0
    %v7055 = vpop.f32.mrb[0].mxu0
    %v7056 = vadd.f32 0.0, %v7055
    %v7057 = vpop.f32.mrb[0].mxu0
    %7058 = vdwg.mxu0
    %v7059 = vadd.f32 %v6950, %v7053
    %v7060 = vadd.f32 %v6951, %v7056
    %v7061 = vpack.c.bf16 %v6135, %v6132
    %s7062 = scalar_lea.vmem %s4, 512
    %v7063 = vld [vmem:[%s7062] sm:$0xf]
    %v7064 = vld [vmem:[%s7062 + $0x4] sm:$0xf]
    %v7065 = vld [vmem:[%s7062 + $0x8] sm:$0xf]
    %v7066 = vld [vmem:[%s7062 + $0xc] sm:$0xf]
    %v7067 = vld [vmem:[%s7062 + $0x10] sm:$0xf]
    %v7068 = vld [vmem:[%s7062 + $0x14] sm:$0xf]
    %v7069 = vld [vmem:[%s7062 + $0x18] sm:$0xf]
    %v7070 = vld [vmem:[%s7062 + $0x1c] sm:$0xf]
    %v7071 = vld [vmem:[%s7062 + $0x20] sm:$0xf]
    %v7072 = vld [vmem:[%s7062 + $0x24] sm:$0xf]
    %v7073 = vld [vmem:[%s7062 + $0x28] sm:$0xf]
    %v7074 = vld [vmem:[%s7062 + $0x2c] sm:$0xf]
    %v7075 = vld [vmem:[%s7062 + $0x30] sm:$0xf]
    %v7076 = vld [vmem:[%s7062 + $0x34] sm:$0xf]
    %v7077 = vld [vmem:[%s7062 + $0x38] sm:$0xf]
    %v7078 = vld [vmem:[%s7062 + $0x3c] sm:$0xf]
    %v7095 = vunpack.c.l.b16 %v7063
    %v7096 = vunpack.c.l.b16 %v7064
    %v7097 = vunpack.c.l.b16 %v7065
    %v7098 = vunpack.c.l.b16 %v7066
    %v7099 = vunpack.c.l.b16 %v7067
    %v7100 = vunpack.c.l.b16 %v7068
    %v7101 = vunpack.c.l.b16 %v7069
    %v7102 = vunpack.c.l.b16 %v7070
    %v7103 = vunpack.c.l.b16 %v7071
    %v7104 = vunpack.c.l.b16 %v7072
    %v7105 = vunpack.c.l.b16 %v7073
    %v7106 = vunpack.c.l.b16 %v7074
    %v7107 = vunpack.c.l.b16 %v7075
    %v7108 = vunpack.c.l.b16 %v7076
    %v7109 = vunpack.c.l.b16 %v7077
    %v7110 = vunpack.c.l.b16 %v7078
    %v7111 = vpack.c.b16 %v7096, %v7095
    %v7112 = vpack.c.b16 %v7098, %v7097
    %v7113 = vpack.c.b16 %v7100, %v7099
    %v7114 = vpack.c.b16 %v7102, %v7101
    %v7115 = vpack.c.b16 %v7104, %v7103
    %v7116 = vpack.c.b16 %v7106, %v7105
    %v7117 = vpack.c.b16 %v7108, %v7107
    %v7118 = vpack.c.b16 %v7110, %v7109
    %7127 = vmatprep.subr.bf16.mxu0 0
    %7128 = vmatpush1.bf16.msra.mxu0 %v7111
    %7129 = vmatprep.subr.bf16.mxu0 0
    %7130 = vmatpush1.bf16.msra.mxu0 %v7112
    %7131 = vmatprep.subr.bf16.mxu0 0
    %7132 = vmatpush1.bf16.msra.mxu0 %v7113
    %7133 = vmatprep.subr.bf16.mxu0 0
    %7134 = vmatpush1.bf16.msra.mxu0 %v7114
    %7135 = vmatprep.subr.bf16.mxu0 0
    %7136 = vmatpush1.bf16.msra.mxu0 %v7115
    %7137 = vmatprep.subr.bf16.mxu0 0
    %7138 = vmatpush1.bf16.msra.mxu0 %v7116
    %7139 = vmatprep.subr.bf16.mxu0 0
    %7140 = vmatpush1.bf16.msra.mxu0 %v7117
    %7141 = vmatprep.subr.bf16.mxu0 0
    %7142 = vmatpush1.bf16.msra.mxu0 %v7118
    %7143 = vmatprep.subr.bf16.mxu0 0
    %7144 = vmatpush1.bf16.msra.mxu0 0
    %7145 = vmatprep.subr.bf16.mxu0 0
    %7146 = vmatpush1.bf16.msra.mxu0 0
    %7147 = vmatprep.subr.bf16.mxu0 0
    %7148 = vmatpush1.bf16.msra.mxu0 0
    %7149 = vmatprep.subr.bf16.mxu0 0
    %7150 = vmatpush1.bf16.msra.mxu0 0
    %7151 = vmatprep.subr.bf16.mxu0 0
    %7152 = vmatpush1.bf16.msra.mxu0 0
    %7153 = vmatprep.subr.bf16.mxu0 0
    %7154 = vmatpush1.bf16.msra.mxu0 0
    %7155 = vmatprep.subr.bf16.mxu0 0
    %7156 = vmatpush1.bf16.msra.mxu0 0
    %7157 = vmatprep.subr.bf16.mxu0 0
    %7158 = vmatpush1.bf16.msra.mxu0 0
    %7159 = vmatprep.mubr.bf16.mxu0 0
    %7160 = vmatmul.mubr.bf16.gmra.mrb[0].mxu0 %v7061
    %v7161 = vpop.f32.mrb[0].mxu0
    %v7162 = vadd.f32 0.0, %v7161
    %v7163 = vpop.f32.mrb[0].mxu0
    %v7164 = vpop.f32.mrb[0].mxu0
    %v7165 = vadd.f32 0.0, %v7164
    %v7166 = vpop.f32.mrb[0].mxu0
    %7167 = vdwg.mxu0
    %v7168 = vadd.f32 %v7059, %v7162
    %v7169 = vadd.f32 %v7060, %v7165
    %v7170 = vpack.c.bf16 %v6143, %v6140
    %s7171 = scalar_lea.vmem %s4, 576
    %v7172 = vld [vmem:[%s7171] sm:$0xf]
    %v7173 = vld [vmem:[%s7171 + $0x4] sm:$0xf]
    %v7174 = vld [vmem:[%s7171 + $0x8] sm:$0xf]
    %v7175 = vld [vmem:[%s7171 + $0xc] sm:$0xf]
    %v7176 = vld [vmem:[%s7171 + $0x10] sm:$0xf]
    %v7177 = vld [vmem:[%s7171 + $0x14] sm:$0xf]
    %v7178 = vld [vmem:[%s7171 + $0x18] sm:$0xf]
    %v7179 = vld [vmem:[%s7171 + $0x1c] sm:$0xf]
    %v7180 = vld [vmem:[%s7171 + $0x20] sm:$0xf]
    %v7181 = vld [vmem:[%s7171 + $0x24] sm:$0xf]
    %v7182 = vld [vmem:[%s7171 + $0x28] sm:$0xf]
    %v7183 = vld [vmem:[%s7171 + $0x2c] sm:$0xf]
    %v7184 = vld [vmem:[%s7171 + $0x30] sm:$0xf]
    %v7185 = vld [vmem:[%s7171 + $0x34] sm:$0xf]
    %v7186 = vld [vmem:[%s7171 + $0x38] sm:$0xf]
    %v7187 = vld [vmem:[%s7171 + $0x3c] sm:$0xf]
    %v7204 = vunpack.c.l.b16 %v7172
    %v7205 = vunpack.c.l.b16 %v7173
    %v7206 = vunpack.c.l.b16 %v7174
    %v7207 = vunpack.c.l.b16 %v7175
    %v7208 = vunpack.c.l.b16 %v7176
    %v7209 = vunpack.c.l.b16 %v7177
    %v7210 = vunpack.c.l.b16 %v7178
    %v7211 = vunpack.c.l.b16 %v7179
    %v7212 = vunpack.c.l.b16 %v7180
    %v7213 = vunpack.c.l.b16 %v7181
    %v7214 = vunpack.c.l.b16 %v7182
    %v7215 = vunpack.c.l.b16 %v7183
    %v7216 = vunpack.c.l.b16 %v7184
    %v7217 = vunpack.c.l.b16 %v7185
    %v7218 = vunpack.c.l.b16 %v7186
    %v7219 = vunpack.c.l.b16 %v7187
    %v7220 = vpack.c.b16 %v7205, %v7204
    %v7221 = vpack.c.b16 %v7207, %v7206
    %v7222 = vpack.c.b16 %v7209, %v7208
    %v7223 = vpack.c.b16 %v7211, %v7210
    %v7224 = vpack.c.b16 %v7213, %v7212
    %v7225 = vpack.c.b16 %v7215, %v7214
    %v7226 = vpack.c.b16 %v7217, %v7216
    %v7227 = vpack.c.b16 %v7219, %v7218
    %7236 = vmatprep.subr.bf16.mxu0 0
    %7237 = vmatpush1.bf16.msra.mxu0 %v7220
    %7238 = vmatprep.subr.bf16.mxu0 0
    %7239 = vmatpush1.bf16.msra.mxu0 %v7221
    %7240 = vmatprep.subr.bf16.mxu0 0
    %7241 = vmatpush1.bf16.msra.mxu0 %v7222
    %7242 = vmatprep.subr.bf16.mxu0 0
    %7243 = vmatpush1.bf16.msra.mxu0 %v7223
    %7244 = vmatprep.subr.bf16.mxu0 0
    %7245 = vmatpush1.bf16.msra.mxu0 %v7224
    %7246 = vmatprep.subr.bf16.mxu0 0
    %7247 = vmatpush1.bf16.msra.mxu0 %v7225
    %7248 = vmatprep.subr.bf16.mxu0 0
    %7249 = vmatpush1.bf16.msra.mxu0 %v7226
    %7250 = vmatprep.subr.bf16.mxu0 0
    %7251 = vmatpush1.bf16.msra.mxu0 %v7227
    %7252 = vmatprep.subr.bf16.mxu0 0
    %7253 = vmatpush1.bf16.msra.mxu0 0
    %7254 = vmatprep.subr.bf16.mxu0 0
    %7255 = vmatpush1.bf16.msra.mxu0 0
    %7256 = vmatprep.subr.bf16.mxu0 0
    %7257 = vmatpush1.bf16.msra.mxu0 0
    %7258 = vmatprep.subr.bf16.mxu0 0
    %7259 = vmatpush1.bf16.msra.mxu0 0
    %7260 = vmatprep.subr.bf16.mxu0 0
    %7261 = vmatpush1.bf16.msra.mxu0 0
    %7262 = vmatprep.subr.bf16.mxu0 0
    %7263 = vmatpush1.bf16.msra.mxu0 0
    %7264 = vmatprep.subr.bf16.mxu0 0
    %7265 = vmatpush1.bf16.msra.mxu0 0
    %7266 = vmatprep.subr.bf16.mxu0 0
    %7267 = vmatpush1.bf16.msra.mxu0 0
    %7268 = vmatprep.mubr.bf16.mxu0 0
    %7269 = vmatmul.mubr.bf16.gmra.mrb[0].mxu0 %v7170
    %v7270 = vpop.f32.mrb[0].mxu0
    %v7271 = vadd.f32 0.0, %v7270
    %v7272 = vpop.f32.mrb[0].mxu0
    %v7273 = vpop.f32.mrb[0].mxu0
    %v7274 = vadd.f32 0.0, %v7273
    %v7275 = vpop.f32.mrb[0].mxu0
    %7276 = vdwg.mxu0
    %v7277 = vadd.f32 %v7168, %v7271
    %v7278 = vadd.f32 %v7169, %v7274
    %v7279 = vpack.c.bf16 %v6151, %v6148
    %s7280 = scalar_lea.vmem %s4, 640
    %v7281 = vld [vmem:[%s7280] sm:$0xf]
    %v7282 = vld [vmem:[%s7280 + $0x4] sm:$0xf]
    %v7283 = vld [vmem:[%s7280 + $0x8] sm:$0xf]
    %v7284 = vld [vmem:[%s7280 + $0xc] sm:$0xf]
    %v7285 = vld [vmem:[%s7280 + $0x10] sm:$0xf]
    %v7286 = vld [vmem:[%s7280 + $0x14] sm:$0xf]
    %v7287 = vld [vmem:[%s7280 + $0x18] sm:$0xf]
    %v7288 = vld [vmem:[%s7280 + $0x1c] sm:$0xf]
    %v7289 = vld [vmem:[%s7280 + $0x20] sm:$0xf]
    %v7290 = vld [vmem:[%s7280 + $0x24] sm:$0xf]
    %v7291 = vld [vmem:[%s7280 + $0x28] sm:$0xf]
    %v7292 = vld [vmem:[%s7280 + $0x2c] sm:$0xf]
    %v7293 = vld [vmem:[%s7280 + $0x30] sm:$0xf]
    %v7294 = vld [vmem:[%s7280 + $0x34] sm:$0xf]
    %v7295 = vld [vmem:[%s7280 + $0x38] sm:$0xf]
    %v7296 = vld [vmem:[%s7280 + $0x3c] sm:$0xf]
    %v7313 = vunpack.c.l.b16 %v7281
    %v7314 = vunpack.c.l.b16 %v7282
    %v7315 = vunpack.c.l.b16 %v7283
    %v7316 = vunpack.c.l.b16 %v7284
    %v7317 = vunpack.c.l.b16 %v7285
    %v7318 = vunpack.c.l.b16 %v7286
    %v7319 = vunpack.c.l.b16 %v7287
    %v7320 = vunpack.c.l.b16 %v7288
    %v7321 = vunpack.c.l.b16 %v7289
    %v7322 = vunpack.c.l.b16 %v7290
    %v7323 = vunpack.c.l.b16 %v7291
    %v7324 = vunpack.c.l.b16 %v7292
    %v7325 = vunpack.c.l.b16 %v7293
    %v7326 = vunpack.c.l.b16 %v7294
    %v7327 = vunpack.c.l.b16 %v7295
    %v7328 = vunpack.c.l.b16 %v7296
    %v7329 = vpack.c.b16 %v7314, %v7313
    %v7330 = vpack.c.b16 %v7316, %v7315
    %v7331 = vpack.c.b16 %v7318, %v7317
    %v7332 = vpack.c.b16 %v7320, %v7319
    %v7333 = vpack.c.b16 %v7322, %v7321
    %v7334 = vpack.c.b16 %v7324, %v7323
    %v7335 = vpack.c.b16 %v7326, %v7325
    %v7336 = vpack.c.b16 %v7328, %v7327
    %7345 = vmatprep.subr.bf16.mxu0 0
    %7346 = vmatpush1.bf16.msra.mxu0 %v7329
    %7347 = vmatprep.subr.bf16.mxu0 0
    %7348 = vmatpush1.bf16.msra.mxu0 %v7330
    %7349 = vmatprep.subr.bf16.mxu0 0
    %7350 = vmatpush1.bf16.msra.mxu0 %v7331
    %7351 = vmatprep.subr.bf16.mxu0 0
    %7352 = vmatpush1.bf16.msra.mxu0 %v7332
    %7353 = vmatprep.subr.bf16.mxu0 0
    %7354 = vmatpush1.bf16.msra.mxu0 %v7333
    %7355 = vmatprep.subr.bf16.mxu0 0
    %7356 = vmatpush1.bf16.msra.mxu0 %v7334
    %7357 = vmatprep.subr.bf16.mxu0 0
    %7358 = vmatpush1.bf16.msra.mxu0 %v7335
    %7359 = vmatprep.subr.bf16.mxu0 0
    %7360 = vmatpush1.bf16.msra.mxu0 %v7336
    %7361 = vmatprep.subr.bf16.mxu0 0
    %7362 = vmatpush1.bf16.msra.mxu0 0
    %7363 = vmatprep.subr.bf16.mxu0 0
    %7364 = vmatpush1.bf16.msra.mxu0 0
    %7365 = vmatprep.subr.bf16.mxu0 0
    %7366 = vmatpush1.bf16.msra.mxu0 0
    %7367 = vmatprep.subr.bf16.mxu0 0
    %7368 = vmatpush1.bf16.msra.mxu0 0
    %7369 = vmatprep.subr.bf16.mxu0 0
    %7370 = vmatpush1.bf16.msra.mxu0 0
    %7371 = vmatprep.subr.bf16.mxu0 0
    %7372 = vmatpush1.bf16.msra.mxu0 0
    %7373 = vmatprep.subr.bf16.mxu0 0
    %7374 = vmatpush1.bf16.msra.mxu0 0
    %7375 = vmatprep.subr.bf16.mxu0 0
    %7376 = vmatpush1.bf16.msra.mxu0 0
    %7377 = vmatprep.mubr.bf16.mxu0 0
    %7378 = vmatmul.mubr.bf16.gmra.mrb[0].mxu0 %v7279
    %v7379 = vpop.f32.mrb[0].mxu0
    %v7380 = vadd.f32 0.0, %v7379
    %v7381 = vpop.f32.mrb[0].mxu0
    %v7382 = vpop.f32.mrb[0].mxu0
    %v7383 = vadd.f32 0.0, %v7382
    %v7384 = vpop.f32.mrb[0].mxu0
    %7385 = vdwg.mxu0
    %v7386 = vadd.f32 %v7277, %v7380
    %v7387 = vadd.f32 %v7278, %v7383
    %v7388 = vpack.c.bf16 %v6159, %v6156
    %s7389 = scalar_lea.vmem %s4, 704
    %v7390 = vld [vmem:[%s7389] sm:$0xf]
    %v7391 = vld [vmem:[%s7389 + $0x4] sm:$0xf]
    %v7392 = vld [vmem:[%s7389 + $0x8] sm:$0xf]
    %v7393 = vld [vmem:[%s7389 + $0xc] sm:$0xf]
    %v7394 = vld [vmem:[%s7389 + $0x10] sm:$0xf]
    %v7395 = vld [vmem:[%s7389 + $0x14] sm:$0xf]
    %v7396 = vld [vmem:[%s7389 + $0x18] sm:$0xf]
    %v7397 = vld [vmem:[%s7389 + $0x1c] sm:$0xf]
    %v7398 = vld [vmem:[%s7389 + $0x20] sm:$0xf]
    %v7399 = vld [vmem:[%s7389 + $0x24] sm:$0xf]
    %v7400 = vld [vmem:[%s7389 + $0x28] sm:$0xf]
    %v7401 = vld [vmem:[%s7389 + $0x2c] sm:$0xf]
    %v7402 = vld [vmem:[%s7389 + $0x30] sm:$0xf]
    %v7403 = vld [vmem:[%s7389 + $0x34] sm:$0xf]
    %v7404 = vld [vmem:[%s7389 + $0x38] sm:$0xf]
    %v7405 = vld [vmem:[%s7389 + $0x3c] sm:$0xf]
    %v7422 = vunpack.c.l.b16 %v7390
    %v7423 = vunpack.c.l.b16 %v7391
    %v7424 = vunpack.c.l.b16 %v7392
    %v7425 = vunpack.c.l.b16 %v7393
    %v7426 = vunpack.c.l.b16 %v7394
    %v7427 = vunpack.c.l.b16 %v7395
    %v7428 = vunpack.c.l.b16 %v7396
    %v7429 = vunpack.c.l.b16 %v7397
    %v7430 = vunpack.c.l.b16 %v7398
    %v7431 = vunpack.c.l.b16 %v7399
    %v7432 = vunpack.c.l.b16 %v7400
    %v7433 = vunpack.c.l.b16 %v7401
    %v7434 = vunpack.c.l.b16 %v7402
    %v7435 = vunpack.c.l.b16 %v7403
    %v7436 = vunpack.c.l.b16 %v7404
    %v7437 = vunpack.c.l.b16 %v7405
    %v7438 = vpack.c.b16 %v7423, %v7422
    %v7439 = vpack.c.b16 %v7425, %v7424
    %v7440 = vpack.c.b16 %v7427, %v7426
    %v7441 = vpack.c.b16 %v7429, %v7428
    %v7442 = vpack.c.b16 %v7431, %v7430
    %v7443 = vpack.c.b16 %v7433, %v7432
    %v7444 = vpack.c.b16 %v7435, %v7434
    %v7445 = vpack.c.b16 %v7437, %v7436
    %7454 = vmatprep.subr.bf16.mxu0 0
    %7455 = vmatpush1.bf16.msra.mxu0 %v7438
    %7456 = vmatprep.subr.bf16.mxu0 0
    %7457 = vmatpush1.bf16.msra.mxu0 %v7439
    %7458 = vmatprep.subr.bf16.mxu0 0
    %7459 = vmatpush1.bf16.msra.mxu0 %v7440
    %7460 = vmatprep.subr.bf16.mxu0 0
    %7461 = vmatpush1.bf16.msra.mxu0 %v7441
    %7462 = vmatprep.subr.bf16.mxu0 0
    %7463 = vmatpush1.bf16.msra.mxu0 %v7442
    %7464 = vmatprep.subr.bf16.mxu0 0
    %7465 = vmatpush1.bf16.msra.mxu0 %v7443
    %7466 = vmatprep.subr.bf16.mxu0 0
    %7467 = vmatpush1.bf16.msra.mxu0 %v7444
    %7468 = vmatprep.subr.bf16.mxu0 0
    %7469 = vmatpush1.bf16.msra.mxu0 %v7445
    %7470 = vmatprep.subr.bf16.mxu0 0
    %7471 = vmatpush1.bf16.msra.mxu0 0
    %7472 = vmatprep.subr.bf16.mxu0 0
    %7473 = vmatpush1.bf16.msra.mxu0 0
    %7474 = vmatprep.subr.bf16.mxu0 0
    %7475 = vmatpush1.bf16.msra.mxu0 0
    %7476 = vmatprep.subr.bf16.mxu0 0
    %7477 = vmatpush1.bf16.msra.mxu0 0
    %7478 = vmatprep.subr.bf16.mxu0 0
    %7479 = vmatpush1.bf16.msra.mxu0 0
    %7480 = vmatprep.subr.bf16.mxu0 0
    %7481 = vmatpush1.bf16.msra.mxu0 0
    %7482 = vmatprep.subr.bf16.mxu0 0
    %7483 = vmatpush1.bf16.msra.mxu0 0
    %7484 = vmatprep.subr.bf16.mxu0 0
    %7485 = vmatpush1.bf16.msra.mxu0 0
    %7486 = vmatprep.mubr.bf16.mxu0 0
    %7487 = vmatmul.mubr.bf16.gmra.mrb[0].mxu0 %v7388
    %v7488 = vpop.f32.mrb[0].mxu0
    %v7489 = vadd.f32 0.0, %v7488
    %v7490 = vpop.f32.mrb[0].mxu0
    %v7491 = vpop.f32.mrb[0].mxu0
    %v7492 = vadd.f32 0.0, %v7491
    %v7493 = vpop.f32.mrb[0].mxu0
    %7494 = vdwg.mxu0
    %v7495 = vadd.f32 %v7386, %v7489
    %v7496 = vadd.f32 %v7387, %v7492
    %v7497 = vpack.c.bf16 %v6167, %v6164
    %s7498 = scalar_lea.vmem %s4, 768
    %v7499 = vld [vmem:[%s7498] sm:$0xf]
    %v7500 = vld [vmem:[%s7498 + $0x4] sm:$0xf]
    %v7501 = vld [vmem:[%s7498 + $0x8] sm:$0xf]
    %v7502 = vld [vmem:[%s7498 + $0xc] sm:$0xf]
    %v7503 = vld [vmem:[%s7498 + $0x10] sm:$0xf]
    %v7504 = vld [vmem:[%s7498 + $0x14] sm:$0xf]
    %v7505 = vld [vmem:[%s7498 + $0x18] sm:$0xf]
    %v7506 = vld [vmem:[%s7498 + $0x1c] sm:$0xf]
    %v7507 = vld [vmem:[%s7498 + $0x20] sm:$0xf]
    %v7508 = vld [vmem:[%s7498 + $0x24] sm:$0xf]
    %v7509 = vld [vmem:[%s7498 + $0x28] sm:$0xf]
    %v7510 = vld [vmem:[%s7498 + $0x2c] sm:$0xf]
    %v7511 = vld [vmem:[%s7498 + $0x30] sm:$0xf]
    %v7512 = vld [vmem:[%s7498 + $0x34] sm:$0xf]
    %v7513 = vld [vmem:[%s7498 + $0x38] sm:$0xf]
    %v7514 = vld [vmem:[%s7498 + $0x3c] sm:$0xf]
    %v7531 = vunpack.c.l.b16 %v7499
    %v7532 = vunpack.c.l.b16 %v7500
    %v7533 = vunpack.c.l.b16 %v7501
    %v7534 = vunpack.c.l.b16 %v7502
    %v7535 = vunpack.c.l.b16 %v7503
    %v7536 = vunpack.c.l.b16 %v7504
    %v7537 = vunpack.c.l.b16 %v7505
    %v7538 = vunpack.c.l.b16 %v7506
    %v7539 = vunpack.c.l.b16 %v7507
    %v7540 = vunpack.c.l.b16 %v7508
    %v7541 = vunpack.c.l.b16 %v7509
    %v7542 = vunpack.c.l.b16 %v7510
    %v7543 = vunpack.c.l.b16 %v7511
    %v7544 = vunpack.c.l.b16 %v7512
    %v7545 = vunpack.c.l.b16 %v7513
    %v7546 = vunpack.c.l.b16 %v7514
    %v7547 = vpack.c.b16 %v7532, %v7531
    %v7548 = vpack.c.b16 %v7534, %v7533
    %v7549 = vpack.c.b16 %v7536, %v7535
    %v7550 = vpack.c.b16 %v7538, %v7537
    %v7551 = vpack.c.b16 %v7540, %v7539
    %v7552 = vpack.c.b16 %v7542, %v7541
    %v7553 = vpack.c.b16 %v7544, %v7543
    %v7554 = vpack.c.b16 %v7546, %v7545
    %7563 = vmatprep.subr.bf16.mxu0 0
    %7564 = vmatpush1.bf16.msra.mxu0 %v7547
    %7565 = vmatprep.subr.bf16.mxu0 0
    %7566 = vmatpush1.bf16.msra.mxu0 %v7548
    %7567 = vmatprep.subr.bf16.mxu0 0
    %7568 = vmatpush1.bf16.msra.mxu0 %v7549
    %7569 = vmatprep.subr.bf16.mxu0 0
    %7570 = vmatpush1.bf16.msra.mxu0 %v7550
    %7571 = vmatprep.subr.bf16.mxu0 0
    %7572 = vmatpush1.bf16.msra.mxu0 %v7551
    %7573 = vmatprep.subr.bf16.mxu0 0
    %7574 = vmatpush1.bf16.msra.mxu0 %v7552
    %7575 = vmatprep.subr.bf16.mxu0 0
    %7576 = vmatpush1.bf16.msra.mxu0 %v7553
    %7577 = vmatprep.subr.bf16.mxu0 0
    %7578 = vmatpush1.bf16.msra.mxu0 %v7554
    %7579 = vmatprep.subr.bf16.mxu0 0
    %7580 = vmatpush1.bf16.msra.mxu0 0
    %7581 = vmatprep.subr.bf16.mxu0 0
    %7582 = vmatpush1.bf16.msra.mxu0 0
    %7583 = vmatprep.subr.bf16.mxu0 0
    %7584 = vmatpush1.bf16.msra.mxu0 0
    %7585 = vmatprep.subr.bf16.mxu0 0
    %7586 = vmatpush1.bf16.msra.mxu0 0
    %7587 = vmatprep.subr.bf16.mxu0 0
    %7588 = vmatpush1.bf16.msra.mxu0 0
    %7589 = vmatprep.subr.bf16.mxu0 0
    %7590 = vmatpush1.bf16.msra.mxu0 0
    %7591 = vmatprep.subr.bf16.mxu0 0
    %7592 = vmatpush1.bf16.msra.mxu0 0
    %7593 = vmatprep.subr.bf16.mxu0 0
    %7594 = vmatpush1.bf16.msra.mxu0 0
    %7595 = vmatprep.mubr.bf16.mxu0 0
    %7596 = vmatmul.mubr.bf16.gmra.mrb[0].mxu0 %v7497
    %v7597 = vpop.f32.mrb[0].mxu0
    %v7598 = vadd.f32 0.0, %v7597
    %v7599 = vpop.f32.mrb[0].mxu0
    %v7600 = vpop.f32.mrb[0].mxu0
    %v7601 = vadd.f32 0.0, %v7600
    %v7602 = vpop.f32.mrb[0].mxu0
    %7603 = vdwg.mxu0
    %v7604 = vadd.f32 %v7495, %v7598
    %v7605 = vadd.f32 %v7496, %v7601
    %v7606 = vpack.c.bf16 %v6175, %v6172
    %s7607 = scalar_lea.vmem %s4, 832
    %v7608 = vld [vmem:[%s7607] sm:$0xf]
    %v7609 = vld [vmem:[%s7607 + $0x4] sm:$0xf]
    %v7610 = vld [vmem:[%s7607 + $0x8] sm:$0xf]
    %v7611 = vld [vmem:[%s7607 + $0xc] sm:$0xf]
    %v7612 = vld [vmem:[%s7607 + $0x10] sm:$0xf]
    %v7613 = vld [vmem:[%s7607 + $0x14] sm:$0xf]
    %v7614 = vld [vmem:[%s7607 + $0x18] sm:$0xf]
    %v7615 = vld [vmem:[%s7607 + $0x1c] sm:$0xf]
    %v7616 = vld [vmem:[%s7607 + $0x20] sm:$0xf]
    %v7617 = vld [vmem:[%s7607 + $0x24] sm:$0xf]
    %v7618 = vld [vmem:[%s7607 + $0x28] sm:$0xf]
    %v7619 = vld [vmem:[%s7607 + $0x2c] sm:$0xf]
    %v7620 = vld [vmem:[%s7607 + $0x30] sm:$0xf]
    %v7621 = vld [vmem:[%s7607 + $0x34] sm:$0xf]
    %v7622 = vld [vmem:[%s7607 + $0x38] sm:$0xf]
    %v7623 = vld [vmem:[%s7607 + $0x3c] sm:$0xf]
    %v7640 = vunpack.c.l.b16 %v7608
    %v7641 = vunpack.c.l.b16 %v7609
    %v7642 = vunpack.c.l.b16 %v7610
    %v7643 = vunpack.c.l.b16 %v7611
    %v7644 = vunpack.c.l.b16 %v7612
    %v7645 = vunpack.c.l.b16 %v7613
    %v7646 = vunpack.c.l.b16 %v7614
    %v7647 = vunpack.c.l.b16 %v7615
    %v7648 = vunpack.c.l.b16 %v7616
    %v7649 = vunpack.c.l.b16 %v7617
    %v7650 = vunpack.c.l.b16 %v7618
    %v7651 = vunpack.c.l.b16 %v7619
    %v7652 = vunpack.c.l.b16 %v7620
    %v7653 = vunpack.c.l.b16 %v7621
    %v7654 = vunpack.c.l.b16 %v7622
    %v7655 = vunpack.c.l.b16 %v7623
    %v7656 = vpack.c.b16 %v7641, %v7640
    %v7657 = vpack.c.b16 %v7643, %v7642
    %v7658 = vpack.c.b16 %v7645, %v7644
    %v7659 = vpack.c.b16 %v7647, %v7646
    %v7660 = vpack.c.b16 %v7649, %v7648
    %v7661 = vpack.c.b16 %v7651, %v7650
    %v7662 = vpack.c.b16 %v7653, %v7652
    %v7663 = vpack.c.b16 %v7655, %v7654
    %7672 = vmatprep.subr.bf16.mxu0 0
    %7673 = vmatpush1.bf16.msra.mxu0 %v7656
    %7674 = vmatprep.subr.bf16.mxu0 0
    %7675 = vmatpush1.bf16.msra.mxu0 %v7657
    %7676 = vmatprep.subr.bf16.mxu0 0
    %7677 = vmatpush1.bf16.msra.mxu0 %v7658
    %7678 = vmatprep.subr.bf16.mxu0 0
    %7679 = vmatpush1.bf16.msra.mxu0 %v7659
    %7680 = vmatprep.subr.bf16.mxu0 0
    %7681 = vmatpush1.bf16.msra.mxu0 %v7660
    %7682 = vmatprep.subr.bf16.mxu0 0
    %7683 = vmatpush1.bf16.msra.mxu0 %v7661
    %7684 = vmatprep.subr.bf16.mxu0 0
    %7685 = vmatpush1.bf16.msra.mxu0 %v7662
    %7686 = vmatprep.subr.bf16.mxu0 0
    %7687 = vmatpush1.bf16.msra.mxu0 %v7663
    %7688 = vmatprep.subr.bf16.mxu0 0
    %7689 = vmatpush1.bf16.msra.mxu0 0
    %7690 = vmatprep.subr.bf16.mxu0 0
    %7691 = vmatpush1.bf16.msra.mxu0 0
    %7692 = vmatprep.subr.bf16.mxu0 0
    %7693 = vmatpush1.bf16.msra.mxu0 0
    %7694 = vmatprep.subr.bf16.mxu0 0
    %7695 = vmatpush1.bf16.msra.mxu0 0
    %7696 = vmatprep.subr.bf16.mxu0 0
    %7697 = vmatpush1.bf16.msra.mxu0 0
    %7698 = vmatprep.subr.bf16.mxu0 0
    %7699 = vmatpush1.bf16.msra.mxu0 0
    %7700 = vmatprep.subr.bf16.mxu0 0
    %7701 = vmatpush1.bf16.msra.mxu0 0
    %7702 = vmatprep.subr.bf16.mxu0 0
    %7703 = vmatpush1.bf16.msra.mxu0 0
    %7704 = vmatprep.mubr.bf16.mxu0 0
    %7705 = vmatmul.mubr.bf16.gmra.mrb[0].mxu0 %v7606
    %v7706 = vpop.f32.mrb[0].mxu0
    %v7707 = vadd.f32 0.0, %v7706
    %v7708 = vpop.f32.mrb[0].mxu0
    %v7709 = vpop.f32.mrb[0].mxu0
    %v7710 = vadd.f32 0.0, %v7709
    %v7711 = vpop.f32.mrb[0].mxu0
    %7712 = vdwg.mxu0
    %v7713 = vadd.f32 %v7604, %v7707
    %v7714 = vadd.f32 %v7605, %v7710
    %v7715 = vpack.c.bf16 %v6183, %v6180
    %s7716 = scalar_lea.vmem %s4, 896
    %v7717 = vld [vmem:[%s7716] sm:$0xf]
    %v7718 = vld [vmem:[%s7716 + $0x4] sm:$0xf]
    %v7719 = vld [vmem:[%s7716 + $0x8] sm:$0xf]
    %v7720 = vld [vmem:[%s7716 + $0xc] sm:$0xf]
    %v7721 = vld [vmem:[%s7716 + $0x10] sm:$0xf]
    %v7722 = vld [vmem:[%s7716 + $0x14] sm:$0xf]
    %v7723 = vld [vmem:[%s7716 + $0x18] sm:$0xf]
    %v7724 = vld [vmem:[%s7716 + $0x1c] sm:$0xf]
    %v7725 = vld [vmem:[%s7716 + $0x20] sm:$0xf]
    %v7726 = vld [vmem:[%s7716 + $0x24] sm:$0xf]
    %v7727 = vld [vmem:[%s7716 + $0x28] sm:$0xf]
    %v7728 = vld [vmem:[%s7716 + $0x2c] sm:$0xf]
    %v7729 = vld [vmem:[%s7716 + $0x30] sm:$0xf]
    %v7730 = vld [vmem:[%s7716 + $0x34] sm:$0xf]
    %v7731 = vld [vmem:[%s7716 + $0x38] sm:$0xf]
    %v7732 = vld [vmem:[%s7716 + $0x3c] sm:$0xf]
    %v7749 = vunpack.c.l.b16 %v7717
    %v7750 = vunpack.c.l.b16 %v7718
    %v7751 = vunpack.c.l.b16 %v7719
    %v7752 = vunpack.c.l.b16 %v7720
    %v7753 = vunpack.c.l.b16 %v7721
    %v7754 = vunpack.c.l.b16 %v7722
    %v7755 = vunpack.c.l.b16 %v7723
    %v7756 = vunpack.c.l.b16 %v7724
    %v7757 = vunpack.c.l.b16 %v7725
    %v7758 = vunpack.c.l.b16 %v7726
    %v7759 = vunpack.c.l.b16 %v7727
    %v7760 = vunpack.c.l.b16 %v7728
    %v7761 = vunpack.c.l.b16 %v7729
    %v7762 = vunpack.c.l.b16 %v7730
    %v7763 = vunpack.c.l.b16 %v7731
    %v7764 = vunpack.c.l.b16 %v7732
    %v7765 = vpack.c.b16 %v7750, %v7749
    %v7766 = vpack.c.b16 %v7752, %v7751
    %v7767 = vpack.c.b16 %v7754, %v7753
    %v7768 = vpack.c.b16 %v7756, %v7755
    %v7769 = vpack.c.b16 %v7758, %v7757
    %v7770 = vpack.c.b16 %v7760, %v7759
    %v7771 = vpack.c.b16 %v7762, %v7761
    %v7772 = vpack.c.b16 %v7764, %v7763
    %7781 = vmatprep.subr.bf16.mxu0 0
    %7782 = vmatpush1.bf16.msra.mxu0 %v7765
    %7783 = vmatprep.subr.bf16.mxu0 0
    %7784 = vmatpush1.bf16.msra.mxu0 %v7766
    %7785 = vmatprep.subr.bf16.mxu0 0
    %7786 = vmatpush1.bf16.msra.mxu0 %v7767
    %7787 = vmatprep.subr.bf16.mxu0 0
    %7788 = vmatpush1.bf16.msra.mxu0 %v7768
    %7789 = vmatprep.subr.bf16.mxu0 0
    %7790 = vmatpush1.bf16.msra.mxu0 %v7769
    %7791 = vmatprep.subr.bf16.mxu0 0
    %7792 = vmatpush1.bf16.msra.mxu0 %v7770
    %7793 = vmatprep.subr.bf16.mxu0 0
    %7794 = vmatpush1.bf16.msra.mxu0 %v7771
    %7795 = vmatprep.subr.bf16.mxu0 0
    %7796 = vmatpush1.bf16.msra.mxu0 %v7772
    %7797 = vmatprep.subr.bf16.mxu0 0
    %7798 = vmatpush1.bf16.msra.mxu0 0
    %7799 = vmatprep.subr.bf16.mxu0 0
    %7800 = vmatpush1.bf16.msra.mxu0 0
    %7801 = vmatprep.subr.bf16.mxu0 0
    %7802 = vmatpush1.bf16.msra.mxu0 0
    %7803 = vmatprep.subr.bf16.mxu0 0
    %7804 = vmatpush1.bf16.msra.mxu0 0
    %7805 = vmatprep.subr.bf16.mxu0 0
    %7806 = vmatpush1.bf16.msra.mxu0 0
    %7807 = vmatprep.subr.bf16.mxu0 0
    %7808 = vmatpush1.bf16.msra.mxu0 0
    %7809 = vmatprep.subr.bf16.mxu0 0
    %7810 = vmatpush1.bf16.msra.mxu0 0
    %7811 = vmatprep.subr.bf16.mxu0 0
    %7812 = vmatpush1.bf16.msra.mxu0 0
    %7813 = vmatprep.mubr.bf16.mxu0 0
    %7814 = vmatmul.mubr.bf16.gmra.mrb[0].mxu0 %v7715
    %v7815 = vpop.f32.mrb[0].mxu0
    %v7816 = vadd.f32 0.0, %v7815
    %v7817 = vpop.f32.mrb[0].mxu0
    %v7818 = vpop.f32.mrb[0].mxu0
    %v7819 = vadd.f32 0.0, %v7818
    %v7820 = vpop.f32.mrb[0].mxu0
    %7821 = vdwg.mxu0
    %v7822 = vadd.f32 %v7713, %v7816
    %v7823 = vadd.f32 %v7714, %v7819
    %v7824 = vpack.c.bf16 %v6191, %v6188
    %s7825 = scalar_lea.vmem %s4, 960
    %v7826 = vld [vmem:[%s7825] sm:$0xf]
    %v7827 = vld [vmem:[%s7825 + $0x4] sm:$0xf]
    %v7828 = vld [vmem:[%s7825 + $0x8] sm:$0xf]
    %v7829 = vld [vmem:[%s7825 + $0xc] sm:$0xf]
    %v7830 = vld [vmem:[%s7825 + $0x10] sm:$0xf]
    %v7831 = vld [vmem:[%s7825 + $0x14] sm:$0xf]
    %v7832 = vld [vmem:[%s7825 + $0x18] sm:$0xf]
    %v7833 = vld [vmem:[%s7825 + $0x1c] sm:$0xf]
    %v7834 = vld [vmem:[%s7825 + $0x20] sm:$0xf]
    %v7835 = vld [vmem:[%s7825 + $0x24] sm:$0xf]
    %v7836 = vld [vmem:[%s7825 + $0x28] sm:$0xf]
    %v7837 = vld [vmem:[%s7825 + $0x2c] sm:$0xf]
    %v7838 = vld [vmem:[%s7825 + $0x30] sm:$0xf]
    %v7839 = vld [vmem:[%s7825 + $0x34] sm:$0xf]
    %v7840 = vld [vmem:[%s7825 + $0x38] sm:$0xf]
    %v7841 = vld [vmem:[%s7825 + $0x3c] sm:$0xf]
    %v7858 = vunpack.c.l.b16 %v7826
    %v7859 = vunpack.c.l.b16 %v7827
    %v7860 = vunpack.c.l.b16 %v7828
    %v7861 = vunpack.c.l.b16 %v7829
    %v7862 = vunpack.c.l.b16 %v7830
    %v7863 = vunpack.c.l.b16 %v7831
    %v7864 = vunpack.c.l.b16 %v7832
    %v7865 = vunpack.c.l.b16 %v7833
    %v7866 = vunpack.c.l.b16 %v7834
    %v7867 = vunpack.c.l.b16 %v7835
    %v7868 = vunpack.c.l.b16 %v7836
    %v7869 = vunpack.c.l.b16 %v7837
    %v7870 = vunpack.c.l.b16 %v7838
    %v7871 = vunpack.c.l.b16 %v7839
    %v7872 = vunpack.c.l.b16 %v7840
    %v7873 = vunpack.c.l.b16 %v7841
    %v7874 = vpack.c.b16 %v7859, %v7858
    %v7875 = vpack.c.b16 %v7861, %v7860
    %v7876 = vpack.c.b16 %v7863, %v7862
    %v7877 = vpack.c.b16 %v7865, %v7864
    %v7878 = vpack.c.b16 %v7867, %v7866
    %v7879 = vpack.c.b16 %v7869, %v7868
    %v7880 = vpack.c.b16 %v7871, %v7870
    %v7881 = vpack.c.b16 %v7873, %v7872
    %7890 = vmatprep.subr.bf16.mxu0 0
    %7891 = vmatpush1.bf16.msra.mxu0 %v7874
    %7892 = vmatprep.subr.bf16.mxu0 0
    %7893 = vmatpush1.bf16.msra.mxu0 %v7875
    %7894 = vmatprep.subr.bf16.mxu0 0
    %7895 = vmatpush1.bf16.msra.mxu0 %v7876
    %7896 = vmatprep.subr.bf16.mxu0 0
    %7897 = vmatpush1.bf16.msra.mxu0 %v7877
    %7898 = vmatprep.subr.bf16.mxu0 0
    %7899 = vmatpush1.bf16.msra.mxu0 %v7878
    %7900 = vmatprep.subr.bf16.mxu0 0
    %7901 = vmatpush1.bf16.msra.mxu0 %v7879
    %7902 = vmatprep.subr.bf16.mxu0 0
    %7903 = vmatpush1.bf16.msra.mxu0 %v7880
    %7904 = vmatprep.subr.bf16.mxu0 0
    %7905 = vmatpush1.bf16.msra.mxu0 %v7881
    %7906 = vmatprep.subr.bf16.mxu0 0
    %7907 = vmatpush1.bf16.msra.mxu0 0
    %7908 = vmatprep.subr.bf16.mxu0 0
    %7909 = vmatpush1.bf16.msra.mxu0 0
    %7910 = vmatprep.subr.bf16.mxu0 0
    %7911 = vmatpush1.bf16.msra.mxu0 0
    %7912 = vmatprep.subr.bf16.mxu0 0
    %7913 = vmatpush1.bf16.msra.mxu0 0
    %7914 = vmatprep.subr.bf16.mxu0 0
    %7915 = vmatpush1.bf16.msra.mxu0 0
    %7916 = vmatprep.subr.bf16.mxu0 0
    %7917 = vmatpush1.bf16.msra.mxu0 0
    %7918 = vmatprep.subr.bf16.mxu0 0
    %7919 = vmatpush1.bf16.msra.mxu0 0
    %7920 = vmatprep.subr.bf16.mxu0 0
    %7921 = vmatpush1.bf16.msra.mxu0 0
    %7922 = vmatprep.mubr.bf16.mxu0 0
    %7923 = vmatmul.mubr.bf16.gmra.mrb[0].mxu0 %v7824
    %v7924 = vpop.f32.mrb[0].mxu0
    %v7925 = vadd.f32 0.0, %v7924
    %v7926 = vpop.f32.mrb[0].mxu0
    %v7927 = vpop.f32.mrb[0].mxu0
    %v7928 = vadd.f32 0.0, %v7927
    %v7929 = vpop.f32.mrb[0].mxu0
    %7930 = vdwg.mxu0
    %v7931 = vadd.f32 %v7822, %v7925
    %v7932 = vadd.f32 %v7823, %v7928
    %vm7933 = vcmp.ge.f32.partialorder %v7931, 0.0
    %vm7934 = vcmp.ge.f32.partialorder %v7932, 0.0
    %v7935 = vmul.f32 %v7931, 0.05
    %v7936 = vmul.f32 %v7932, 0.05
    %v7937 = vsel %vm7933, %v7931, %v7935
    %v7938 = vsel %vm7934, %v7932, %v7936
    %v7939 = vpack.c.bf16 %v7938, %v7937
    %v7940 = vld [vmem:[%s5] sm:$0xf]
    %v7941 = vld [vmem:[%s5 + $0x4] sm:$0xf]
    %v7942 = vld [vmem:[%s5 + $0x8] sm:$0xf]
    %v7943 = vld [vmem:[%s5 + $0xc] sm:$0xf]
    %v7944 = vld [vmem:[%s5 + $0x10] sm:$0xf]
    %v7945 = vld [vmem:[%s5 + $0x14] sm:$0xf]
    %v7946 = vld [vmem:[%s5 + $0x18] sm:$0xf]
    %v7947 = vld [vmem:[%s5 + $0x1c] sm:$0xf]
    %v7948 = vld [vmem:[%s5 + $0x20] sm:$0xf]
    %v7949 = vld [vmem:[%s5 + $0x24] sm:$0xf]
    %v7950 = vld [vmem:[%s5 + $0x28] sm:$0xf]
    %v7951 = vld [vmem:[%s5 + $0x2c] sm:$0xf]
    %v7952 = vld [vmem:[%s5 + $0x30] sm:$0xf]
    %v7953 = vld [vmem:[%s5 + $0x34] sm:$0xf]
    %v7954 = vld [vmem:[%s5 + $0x38] sm:$0xf]
    %v7955 = vld [vmem:[%s5 + $0x3c] sm:$0xf]
    %v7956 = vld [vmem:[%s5 + $0x40] sm:$0xf]
    %v7957 = vld [vmem:[%s5 + $0x44] sm:$0xf]
    %v7958 = vld [vmem:[%s5 + $0x48] sm:$0xf]
    %v7959 = vld [vmem:[%s5 + $0x4c] sm:$0xf]
    %v7960 = vld [vmem:[%s5 + $0x50] sm:$0xf]
    %v7961 = vld [vmem:[%s5 + $0x54] sm:$0xf]
    %v7962 = vld [vmem:[%s5 + $0x58] sm:$0xf]
    %v7963 = vld [vmem:[%s5 + $0x5c] sm:$0xf]
    %v7964 = vld [vmem:[%s5 + $0x60] sm:$0xf]
    %v7965 = vld [vmem:[%s5 + $0x64] sm:$0xf]
    %v7966 = vld [vmem:[%s5 + $0x68] sm:$0xf]
    %v7967 = vld [vmem:[%s5 + $0x6c] sm:$0xf]
    %v7968 = vld [vmem:[%s5 + $0x70] sm:$0xf]
    %v7969 = vld [vmem:[%s5 + $0x74] sm:$0xf]
    %v7970 = vld [vmem:[%s5 + $0x78] sm:$0xf]
    %v7971 = vld [vmem:[%s5 + $0x7c] sm:$0xf]
    %v7972 = vld [vmem:[%s5 + $0x80] sm:$0xf]
    %v7973 = vld [vmem:[%s5 + $0x84] sm:$0xf]
    %v7974 = vld [vmem:[%s5 + $0x88] sm:$0xf]
    %v7975 = vld [vmem:[%s5 + $0x8c] sm:$0xf]
    %v7976 = vld [vmem:[%s5 + $0x90] sm:$0xf]
    %v7977 = vld [vmem:[%s5 + $0x94] sm:$0xf]
    %v7978 = vld [vmem:[%s5 + $0x98] sm:$0xf]
    %v7979 = vld [vmem:[%s5 + $0x9c] sm:$0xf]
    %v7980 = vld [vmem:[%s5 + $0xa0] sm:$0xf]
    %v7981 = vld [vmem:[%s5 + $0xa4] sm:$0xf]
    %v7982 = vld [vmem:[%s5 + $0xa8] sm:$0xf]
    %v7983 = vld [vmem:[%s5 + $0xac] sm:$0xf]
    %v7984 = vld [vmem:[%s5 + $0xb0] sm:$0xf]
    %v7985 = vld [vmem:[%s5 + $0xb4] sm:$0xf]
    %v7986 = vld [vmem:[%s5 + $0xb8] sm:$0xf]
    %v7987 = vld [vmem:[%s5 + $0xbc] sm:$0xf]
    %v7988 = vld [vmem:[%s5 + $0xc0] sm:$0xf]
    %v7989 = vld [vmem:[%s5 + $0xc4] sm:$0xf]
    %v7990 = vld [vmem:[%s5 + $0xc8] sm:$0xf]
    %v7991 = vld [vmem:[%s5 + $0xcc] sm:$0xf]
    %v7992 = vld [vmem:[%s5 + $0xd0] sm:$0xf]
    %v7993 = vld [vmem:[%s5 + $0xd4] sm:$0xf]
    %v7994 = vld [vmem:[%s5 + $0xd8] sm:$0xf]
    %v7995 = vld [vmem:[%s5 + $0xdc] sm:$0xf]
    %v7996 = vld [vmem:[%s5 + $0xe0] sm:$0xf]
    %v7997 = vld [vmem:[%s5 + $0xe4] sm:$0xf]
    %v7998 = vld [vmem:[%s5 + $0xe8] sm:$0xf]
    %v7999 = vld [vmem:[%s5 + $0xec] sm:$0xf]
    %v8000 = vld [vmem:[%s5 + $0xf0] sm:$0xf]
    %v8001 = vld [vmem:[%s5 + $0xf4] sm:$0xf]
    %v8002 = vld [vmem:[%s5 + $0xf8] sm:$0xf]
    %v8003 = vld [vmem:[%s5 + $0xfc] sm:$0xf]
    %v8068 = vunpack.c.l.b16 %v7940
    %v8069 = vunpack.c.l.b16 %v7941
    %v8070 = vunpack.c.l.b16 %v7942
    %v8071 = vunpack.c.l.b16 %v7943
    %v8072 = vunpack.c.l.b16 %v7944
    %v8073 = vunpack.c.l.b16 %v7945
    %v8074 = vunpack.c.l.b16 %v7946
    %v8075 = vunpack.c.l.b16 %v7947
    %v8076 = vunpack.c.l.b16 %v7948
    %v8077 = vunpack.c.l.b16 %v7949
    %v8078 = vunpack.c.l.b16 %v7950
    %v8079 = vunpack.c.l.b16 %v7951
    %v8080 = vunpack.c.l.b16 %v7952
    %v8081 = vunpack.c.l.b16 %v7953
    %v8082 = vunpack.c.l.b16 %v7954
    %v8083 = vunpack.c.l.b16 %v7955
    %v8084 = vunpack.c.l.b16 %v7956
    %v8085 = vunpack.c.l.b16 %v7957
    %v8086 = vunpack.c.l.b16 %v7958
    %v8087 = vunpack.c.l.b16 %v7959
    %v8088 = vunpack.c.l.b16 %v7960
    %v8089 = vunpack.c.l.b16 %v7961
    %v8090 = vunpack.c.l.b16 %v7962
    %v8091 = vunpack.c.l.b16 %v7963
    %v8092 = vunpack.c.l.b16 %v7964
    %v8093 = vunpack.c.l.b16 %v7965
    %v8094 = vunpack.c.l.b16 %v7966
    %v8095 = vunpack.c.l.b16 %v7967
    %v8096 = vunpack.c.l.b16 %v7968
    %v8097 = vunpack.c.l.b16 %v7969
    %v8098 = vunpack.c.l.b16 %v7970
    %v8099 = vunpack.c.l.b16 %v7971
    %v8100 = vunpack.c.l.b16 %v7972
    %v8101 = vunpack.c.l.b16 %v7973
    %v8102 = vunpack.c.l.b16 %v7974
    %v8103 = vunpack.c.l.b16 %v7975
    %v8104 = vunpack.c.l.b16 %v7976
    %v8105 = vunpack.c.l.b16 %v7977
    %v8106 = vunpack.c.l.b16 %v7978
    %v8107 = vunpack.c.l.b16 %v7979
    %v8108 = vunpack.c.l.b16 %v7980
    %v8109 = vunpack.c.l.b16 %v7981
    %v8110 = vunpack.c.l.b16 %v7982
    %v8111 = vunpack.c.l.b16 %v7983
    %v8112 = vunpack.c.l.b16 %v7984
    %v8113 = vunpack.c.l.b16 %v7985
    %v8114 = vunpack.c.l.b16 %v7986
    %v8115 = vunpack.c.l.b16 %v7987
    %v8116 = vunpack.c.l.b16 %v7988
    %v8117 = vunpack.c.l.b16 %v7989
    %v8118 = vunpack.c.l.b16 %v7990
    %v8119 = vunpack.c.l.b16 %v7991
    %v8120 = vunpack.c.l.b16 %v7992
    %v8121 = vunpack.c.l.b16 %v7993
    %v8122 = vunpack.c.l.b16 %v7994
    %v8123 = vunpack.c.l.b16 %v7995
    %v8124 = vunpack.c.l.b16 %v7996
    %v8125 = vunpack.c.l.b16 %v7997
    %v8126 = vunpack.c.l.b16 %v7998
    %v8127 = vunpack.c.l.b16 %v7999
    %v8128 = vunpack.c.l.b16 %v8000
    %v8129 = vunpack.c.l.b16 %v8001
    %v8130 = vunpack.c.l.b16 %v8002
    %v8131 = vunpack.c.l.b16 %v8003
    %v8132 = vpack.c.b16 %v8069, %v8068
    %v8133 = vpack.c.b16 %v8071, %v8070
    %v8134 = vpack.c.b16 %v8073, %v8072
    %v8135 = vpack.c.b16 %v8075, %v8074
    %v8136 = vpack.c.b16 %v8077, %v8076
    %v8137 = vpack.c.b16 %v8079, %v8078
    %v8138 = vpack.c.b16 %v8081, %v8080
    %v8139 = vpack.c.b16 %v8083, %v8082
    %v8140 = vpack.c.b16 %v8085, %v8084
    %v8141 = vpack.c.b16 %v8087, %v8086
    %v8142 = vpack.c.b16 %v8089, %v8088
    %v8143 = vpack.c.b16 %v8091, %v8090
    %v8144 = vpack.c.b16 %v8093, %v8092
    %v8145 = vpack.c.b16 %v8095, %v8094
    %v8146 = vpack.c.b16 %v8097, %v8096
    %v8147 = vpack.c.b16 %v8099, %v8098
    %v8148 = vpack.c.b16 %v8101, %v8100
    %v8149 = vpack.c.b16 %v8103, %v8102
    %v8150 = vpack.c.b16 %v8105, %v8104
    %v8151 = vpack.c.b16 %v8107, %v8106
    %v8152 = vpack.c.b16 %v8109, %v8108
    %v8153 = vpack.c.b16 %v8111, %v8110
    %v8154 = vpack.c.b16 %v8113, %v8112
    %v8155 = vpack.c.b16 %v8115, %v8114
    %v8156 = vpack.c.b16 %v8117, %v8116
    %v8157 = vpack.c.b16 %v8119, %v8118
    %v8158 = vpack.c.b16 %v8121, %v8120
    %v8159 = vpack.c.b16 %v8123, %v8122
    %v8160 = vpack.c.b16 %v8125, %v8124
    %v8161 = vpack.c.b16 %v8127, %v8126
    %v8162 = vpack.c.b16 %v8129, %v8128
    %v8163 = vpack.c.b16 %v8131, %v8130
    %vm8164 = vcmask 130048
    %v8166 = vsel %vm8164, %v8132, 0
    %v8169 = vsel %vm8164, %v8133, 0
    %v8172 = vsel %vm8164, %v8134, 0
    %v8175 = vsel %vm8164, %v8135, 0
    %v8178 = vsel %vm8164, %v8136, 0
    %v8181 = vsel %vm8164, %v8137, 0
    %v8184 = vsel %vm8164, %v8138, 0
    %v8187 = vsel %vm8164, %v8139, 0
    %v8190 = vsel %vm8164, %v8140, 0
    %v8193 = vsel %vm8164, %v8141, 0
    %v8196 = vsel %vm8164, %v8142, 0
    %v8199 = vsel %vm8164, %v8143, 0
    %v8202 = vsel %vm8164, %v8144, 0
    %v8205 = vsel %vm8164, %v8145, 0
    %v8208 = vsel %vm8164, %v8146, 0
    %v8211 = vsel %vm8164, %v8147, 0
    %v8214 = vsel %vm8164, %v8148, 0
    %v8217 = vsel %vm8164, %v8149, 0
    %v8220 = vsel %vm8164, %v8150, 0
    %v8223 = vsel %vm8164, %v8151, 0
    %v8226 = vsel %vm8164, %v8152, 0
    %v8229 = vsel %vm8164, %v8153, 0
    %v8232 = vsel %vm8164, %v8154, 0
    %v8235 = vsel %vm8164, %v8155, 0
    %v8238 = vsel %vm8164, %v8156, 0
    %v8241 = vsel %vm8164, %v8157, 0
    %v8244 = vsel %vm8164, %v8158, 0
    %v8247 = vsel %vm8164, %v8159, 0
    %v8250 = vsel %vm8164, %v8160, 0
    %v8253 = vsel %vm8164, %v8161, 0
    %v8256 = vsel %vm8164, %v8162, 0
    %v8259 = vsel %vm8164, %v8163, 0
    %8261 = vmatprep.subr.bf16.mxu0 0
    %8262 = vmatpush1.bf16.msra.mxu0 %v7939
    %8263 = vmatprep.subr.bf16.mxu0 0
    %8264 = vmatpush1.bf16.msra.mxu0 0
    %8265 = vmatprep.subr.bf16.mxu0 0
    %8266 = vmatpush1.bf16.msra.mxu0 0
    %8267 = vmatprep.subr.bf16.mxu0 0
    %8268 = vmatpush1.bf16.msra.mxu0 0
    %8269 = vmatprep.subr.bf16.mxu0 0
    %8270 = vmatpush1.bf16.msra.mxu0 0
    %8271 = vmatprep.subr.bf16.mxu0 0
    %8272 = vmatpush1.bf16.msra.mxu0 0
    %8273 = vmatprep.subr.bf16.mxu0 0
    %8274 = vmatpush1.bf16.msra.mxu0 0
    %8275 = vmatprep.subr.bf16.mxu0 0
    %8276 = vmatpush1.bf16.msra.mxu0 0
    %8277 = vmatprep.subr.bf16.mxu0 0
    %8278 = vmatpush1.bf16.msra.mxu0 0
    %8279 = vmatprep.subr.bf16.mxu0 0
    %8280 = vmatpush1.bf16.msra.mxu0 0
    %8281 = vmatprep.subr.bf16.mxu0 0
    %8282 = vmatpush1.bf16.msra.mxu0 0
    %8283 = vmatprep.subr.bf16.mxu0 0
    %8284 = vmatpush1.bf16.msra.mxu0 0
    %8285 = vmatprep.subr.bf16.mxu0 0
    %8286 = vmatpush1.bf16.msra.mxu0 0
    %8287 = vmatprep.subr.bf16.mxu0 0
    %8288 = vmatpush1.bf16.msra.mxu0 0
    %8289 = vmatprep.subr.bf16.mxu0 0
    %8290 = vmatpush1.bf16.msra.mxu0 0
    %8291 = vmatprep.subr.bf16.mxu0 0
    %8292 = vmatpush1.bf16.msra.mxu0 0
    %8293 = vmatprep.mubr.bf16.mxu0 0
    %8294 = vmatmul.mubr.bf16.gmra.mrb[0].mxu0 %v8166
    %v8295 = vpop.f32.mrb[0].mxu0
    %v8296 = vadd.f32 0.0, %v8295
    %v8297 = vpop.f32.mrb[0].mxu0
    %v8298 = vpop.f32.mrb[0].mxu0
    %v8299 = vadd.f32 0.0, %v8298
    %v8300 = vpop.f32.mrb[0].mxu0
    %8301 = vmatprep.mubr.bf16.mxu0 0
    %8302 = vmatmul.mubr.bf16.gmra.mrb[0].mxu0 %v8169
    %v8303 = vpop.f32.mrb[0].mxu0
    %v8304 = vadd.f32 0.0, %v8303
    %v8305 = vpop.f32.mrb[0].mxu0
    %v8306 = vpop.f32.mrb[0].mxu0
    %v8307 = vadd.f32 0.0, %v8306
    %v8308 = vpop.f32.mrb[0].mxu0
    %8309 = vmatprep.mubr.bf16.mxu0 0
    %8310 = vmatmul.mubr.bf16.gmra.mrb[0].mxu0 %v8172
    %v8311 = vpop.f32.mrb[0].mxu0
    %v8312 = vadd.f32 0.0, %v8311
    %v8313 = vpop.f32.mrb[0].mxu0
    %v8314 = vpop.f32.mrb[0].mxu0
    %v8315 = vadd.f32 0.0, %v8314
    %v8316 = vpop.f32.mrb[0].mxu0
    %8317 = vmatprep.mubr.bf16.mxu0 0
    %8318 = vmatmul.mubr.bf16.gmra.mrb[0].mxu0 %v8175
    %v8319 = vpop.f32.mrb[0].mxu0
    %v8320 = vadd.f32 0.0, %v8319
    %v8321 = vpop.f32.mrb[0].mxu0
    %v8322 = vpop.f32.mrb[0].mxu0
    %v8323 = vadd.f32 0.0, %v8322
    %v8324 = vpop.f32.mrb[0].mxu0
    %8325 = vmatprep.mubr.bf16.mxu0 0
    %8326 = vmatmul.mubr.bf16.gmra.mrb[0].mxu0 %v8178
    %v8327 = vpop.f32.mrb[0].mxu0
    %v8328 = vadd.f32 0.0, %v8327
    %v8329 = vpop.f32.mrb[0].mxu0
    %v8330 = vpop.f32.mrb[0].mxu0
    %v8331 = vadd.f32 0.0, %v8330
    %v8332 = vpop.f32.mrb[0].mxu0
    %8333 = vmatprep.mubr.bf16.mxu0 0
    %8334 = vmatmul.mubr.bf16.gmra.mrb[0].mxu0 %v8181
    %v8335 = vpop.f32.mrb[0].mxu0
    %v8336 = vadd.f32 0.0, %v8335
    %v8337 = vpop.f32.mrb[0].mxu0
    %v8338 = vpop.f32.mrb[0].mxu0
    %v8339 = vadd.f32 0.0, %v8338
    %v8340 = vpop.f32.mrb[0].mxu0
    %8341 = vmatprep.mubr.bf16.mxu0 0
    %8342 = vmatmul.mubr.bf16.gmra.mrb[0].mxu0 %v8184
    %v8343 = vpop.f32.mrb[0].mxu0
    %v8344 = vadd.f32 0.0, %v8343
    %v8345 = vpop.f32.mrb[0].mxu0
    %v8346 = vpop.f32.mrb[0].mxu0
    %v8347 = vadd.f32 0.0, %v8346
    %v8348 = vpop.f32.mrb[0].mxu0
    %8349 = vmatprep.mubr.bf16.mxu0 0
    %8350 = vmatmul.mubr.bf16.gmra.mrb[0].mxu0 %v8187
    %v8351 = vpop.f32.mrb[0].mxu0
    %v8352 = vadd.f32 0.0, %v8351
    %v8353 = vpop.f32.mrb[0].mxu0
    %v8354 = vpop.f32.mrb[0].mxu0
    %v8355 = vadd.f32 0.0, %v8354
    %v8356 = vpop.f32.mrb[0].mxu0
    %8357 = vmatprep.mubr.bf16.mxu0 0
    %8358 = vmatmul.mubr.bf16.gmra.mrb[0].mxu0 %v8190
    %v8359 = vpop.f32.mrb[0].mxu0
    %v8360 = vadd.f32 0.0, %v8359
    %v8361 = vpop.f32.mrb[0].mxu0
    %v8362 = vpop.f32.mrb[0].mxu0
    %v8363 = vadd.f32 0.0, %v8362
    %v8364 = vpop.f32.mrb[0].mxu0
    %8365 = vmatprep.mubr.bf16.mxu0 0
    %8366 = vmatmul.mubr.bf16.gmra.mrb[0].mxu0 %v8193
    %v8367 = vpop.f32.mrb[0].mxu0
    %v8368 = vadd.f32 0.0, %v8367
    %v8369 = vpop.f32.mrb[0].mxu0
    %v8370 = vpop.f32.mrb[0].mxu0
    %v8371 = vadd.f32 0.0, %v8370
    %v8372 = vpop.f32.mrb[0].mxu0
    %8373 = vmatprep.mubr.bf16.mxu0 0
    %8374 = vmatmul.mubr.bf16.gmra.mrb[0].mxu0 %v8196
    %v8375 = vpop.f32.mrb[0].mxu0
    %v8376 = vadd.f32 0.0, %v8375
    %v8377 = vpop.f32.mrb[0].mxu0
    %v8378 = vpop.f32.mrb[0].mxu0
    %v8379 = vadd.f32 0.0, %v8378
    %v8380 = vpop.f32.mrb[0].mxu0
    %8381 = vmatprep.mubr.bf16.mxu0 0
    %8382 = vmatmul.mubr.bf16.gmra.mrb[0].mxu0 %v8199
    %v8383 = vpop.f32.mrb[0].mxu0
    %v8384 = vadd.f32 0.0, %v8383
    %v8385 = vpop.f32.mrb[0].mxu0
    %v8386 = vpop.f32.mrb[0].mxu0
    %v8387 = vadd.f32 0.0, %v8386
    %v8388 = vpop.f32.mrb[0].mxu0
    %8389 = vmatprep.mubr.bf16.mxu0 0
    %8390 = vmatmul.mubr.bf16.gmra.mrb[0].mxu0 %v8202
    %v8391 = vpop.f32.mrb[0].mxu0
    %v8392 = vadd.f32 0.0, %v8391
    %v8393 = vpop.f32.mrb[0].mxu0
    %v8394 = vpop.f32.mrb[0].mxu0
    %v8395 = vadd.f32 0.0, %v8394
    %v8396 = vpop.f32.mrb[0].mxu0
    %8397 = vmatprep.mubr.bf16.mxu0 0
    %8398 = vmatmul.mubr.bf16.gmra.mrb[0].mxu0 %v8205
    %v8399 = vpop.f32.mrb[0].mxu0
    %v8400 = vadd.f32 0.0, %v8399
    %v8401 = vpop.f32.mrb[0].mxu0
    %v8402 = vpop.f32.mrb[0].mxu0
    %v8403 = vadd.f32 0.0, %v8402
    %v8404 = vpop.f32.mrb[0].mxu0
    %8405 = vmatprep.mubr.bf16.mxu0 0
    %8406 = vmatmul.mubr.bf16.gmra.mrb[0].mxu0 %v8208
    %v8407 = vpop.f32.mrb[0].mxu0
    %v8408 = vadd.f32 0.0, %v8407
    %v8409 = vpop.f32.mrb[0].mxu0
    %v8410 = vpop.f32.mrb[0].mxu0
    %v8411 = vadd.f32 0.0, %v8410
    %v8412 = vpop.f32.mrb[0].mxu0
    %8413 = vmatprep.mubr.bf16.mxu0 0
    %8414 = vmatmul.mubr.bf16.gmra.mrb[0].mxu0 %v8211
    %v8415 = vpop.f32.mrb[0].mxu0
    %v8416 = vadd.f32 0.0, %v8415
    %v8417 = vpop.f32.mrb[0].mxu0
    %v8418 = vpop.f32.mrb[0].mxu0
    %v8419 = vadd.f32 0.0, %v8418
    %v8420 = vpop.f32.mrb[0].mxu0
    %8421 = vmatprep.mubr.bf16.mxu0 0
    %8422 = vmatmul.mubr.bf16.gmra.mrb[0].mxu0 %v8214
    %v8423 = vpop.f32.mrb[0].mxu0
    %v8424 = vadd.f32 0.0, %v8423
    %v8425 = vpop.f32.mrb[0].mxu0
    %v8426 = vpop.f32.mrb[0].mxu0
    %v8427 = vadd.f32 0.0, %v8426
    %v8428 = vpop.f32.mrb[0].mxu0
    %8429 = vmatprep.mubr.bf16.mxu0 0
    %8430 = vmatmul.mubr.bf16.gmra.mrb[0].mxu0 %v8217
    %v8431 = vpop.f32.mrb[0].mxu0
    %v8432 = vadd.f32 0.0, %v8431
    %v8433 = vpop.f32.mrb[0].mxu0
    %v8434 = vpop.f32.mrb[0].mxu0
    %v8435 = vadd.f32 0.0, %v8434
    %v8436 = vpop.f32.mrb[0].mxu0
    %8437 = vmatprep.mubr.bf16.mxu0 0
    %8438 = vmatmul.mubr.bf16.gmra.mrb[0].mxu0 %v8220
    %v8439 = vpop.f32.mrb[0].mxu0
    %v8440 = vadd.f32 0.0, %v8439
    %v8441 = vpop.f32.mrb[0].mxu0
    %v8442 = vpop.f32.mrb[0].mxu0
    %v8443 = vadd.f32 0.0, %v8442
    %v8444 = vpop.f32.mrb[0].mxu0
    %8445 = vmatprep.mubr.bf16.mxu0 0
    %8446 = vmatmul.mubr.bf16.gmra.mrb[0].mxu0 %v8223
    %v8447 = vpop.f32.mrb[0].mxu0
    %v8448 = vadd.f32 0.0, %v8447
    %v8449 = vpop.f32.mrb[0].mxu0
    %v8450 = vpop.f32.mrb[0].mxu0
    %v8451 = vadd.f32 0.0, %v8450
    %v8452 = vpop.f32.mrb[0].mxu0
    %8453 = vmatprep.mubr.bf16.mxu0 0
    %8454 = vmatmul.mubr.bf16.gmra.mrb[0].mxu0 %v8226
    %v8455 = vpop.f32.mrb[0].mxu0
    %v8456 = vadd.f32 0.0, %v8455
    %v8457 = vpop.f32.mrb[0].mxu0
    %v8458 = vpop.f32.mrb[0].mxu0
    %v8459 = vadd.f32 0.0, %v8458
    %v8460 = vpop.f32.mrb[0].mxu0
    %8461 = vmatprep.mubr.bf16.mxu0 0
    %8462 = vmatmul.mubr.bf16.gmra.mrb[0].mxu0 %v8229
    %v8463 = vpop.f32.mrb[0].mxu0
    %v8464 = vadd.f32 0.0, %v8463
    %v8465 = vpop.f32.mrb[0].mxu0
    %v8466 = vpop.f32.mrb[0].mxu0
    %v8467 = vadd.f32 0.0, %v8466
    %v8468 = vpop.f32.mrb[0].mxu0
    %8469 = vmatprep.mubr.bf16.mxu0 0
    %8470 = vmatmul.mubr.bf16.gmra.mrb[0].mxu0 %v8232
    %v8471 = vpop.f32.mrb[0].mxu0
    %v8472 = vadd.f32 0.0, %v8471
    %v8473 = vpop.f32.mrb[0].mxu0
    %v8474 = vpop.f32.mrb[0].mxu0
    %v8475 = vadd.f32 0.0, %v8474
    %v8476 = vpop.f32.mrb[0].mxu0
    %8477 = vmatprep.mubr.bf16.mxu0 0
    %8478 = vmatmul.mubr.bf16.gmra.mrb[0].mxu0 %v8235
    %v8479 = vpop.f32.mrb[0].mxu0
    %v8480 = vadd.f32 0.0, %v8479
    %v8481 = vpop.f32.mrb[0].mxu0
    %v8482 = vpop.f32.mrb[0].mxu0
    %v8483 = vadd.f32 0.0, %v8482
    %v8484 = vpop.f32.mrb[0].mxu0
    %8485 = vmatprep.mubr.bf16.mxu0 0
    %8486 = vmatmul.mubr.bf16.gmra.mrb[0].mxu0 %v8238
    %v8487 = vpop.f32.mrb[0].mxu0
    %v8488 = vadd.f32 0.0, %v8487
    %v8489 = vpop.f32.mrb[0].mxu0
    %v8490 = vpop.f32.mrb[0].mxu0
    %v8491 = vadd.f32 0.0, %v8490
    %v8492 = vpop.f32.mrb[0].mxu0
    %8493 = vmatprep.mubr.bf16.mxu0 0
    %8494 = vmatmul.mubr.bf16.gmra.mrb[0].mxu0 %v8241
    %v8495 = vpop.f32.mrb[0].mxu0
    %v8496 = vadd.f32 0.0, %v8495
    %v8497 = vpop.f32.mrb[0].mxu0
    %v8498 = vpop.f32.mrb[0].mxu0
    %v8499 = vadd.f32 0.0, %v8498
    %v8500 = vpop.f32.mrb[0].mxu0
    %8501 = vmatprep.mubr.bf16.mxu0 0
    %8502 = vmatmul.mubr.bf16.gmra.mrb[0].mxu0 %v8244
    %v8503 = vpop.f32.mrb[0].mxu0
    %v8504 = vadd.f32 0.0, %v8503
    %v8505 = vpop.f32.mrb[0].mxu0
    %v8506 = vpop.f32.mrb[0].mxu0
    %v8507 = vadd.f32 0.0, %v8506
    %v8508 = vpop.f32.mrb[0].mxu0
    %8509 = vmatprep.mubr.bf16.mxu0 0
    %8510 = vmatmul.mubr.bf16.gmra.mrb[0].mxu0 %v8247
    %v8511 = vpop.f32.mrb[0].mxu0
    %v8512 = vadd.f32 0.0, %v8511
    %v8513 = vpop.f32.mrb[0].mxu0
    %v8514 = vpop.f32.mrb[0].mxu0
    %v8515 = vadd.f32 0.0, %v8514
    %v8516 = vpop.f32.mrb[0].mxu0
    %8517 = vmatprep.mubr.bf16.mxu0 0
    %8518 = vmatmul.mubr.bf16.gmra.mrb[0].mxu0 %v8250
    %v8519 = vpop.f32.mrb[0].mxu0
    %v8520 = vadd.f32 0.0, %v8519
    %v8521 = vpop.f32.mrb[0].mxu0
    %v8522 = vpop.f32.mrb[0].mxu0
    %v8523 = vadd.f32 0.0, %v8522
    %v8524 = vpop.f32.mrb[0].mxu0
    %8525 = vmatprep.mubr.bf16.mxu0 0
    %8526 = vmatmul.mubr.bf16.gmra.mrb[0].mxu0 %v8253
    %v8527 = vpop.f32.mrb[0].mxu0
    %v8528 = vadd.f32 0.0, %v8527
    %v8529 = vpop.f32.mrb[0].mxu0
    %v8530 = vpop.f32.mrb[0].mxu0
    %v8531 = vadd.f32 0.0, %v8530
    %v8532 = vpop.f32.mrb[0].mxu0
    %8533 = vmatprep.mubr.bf16.mxu0 0
    %8534 = vmatmul.mubr.bf16.gmra.mrb[0].mxu0 %v8256
    %v8535 = vpop.f32.mrb[0].mxu0
    %v8536 = vadd.f32 0.0, %v8535
    %v8537 = vpop.f32.mrb[0].mxu0
    %v8538 = vpop.f32.mrb[0].mxu0
    %v8539 = vadd.f32 0.0, %v8538
    %v8540 = vpop.f32.mrb[0].mxu0
    %8541 = vmatprep.mubr.bf16.mxu0 0
    %8542 = vmatmul.mubr.bf16.gmra.mrb[0].mxu0 %v8259
    %v8543 = vpop.f32.mrb[0].mxu0
    %v8544 = vadd.f32 0.0, %v8543
    %v8545 = vpop.f32.mrb[0].mxu0
    %v8546 = vpop.f32.mrb[0].mxu0
    %v8547 = vadd.f32 0.0, %v8546
    %v8548 = vpop.f32.mrb[0].mxu0
    %8549 = vdwg.mxu0
    %v8550 = vpack.c.bf16 %v8299, %v8296
    %v8551 = vpack.c.bf16 %v8307, %v8304
    %v8552 = vld [vmem:[%s6] sm:$0xf]
    %v8553 = vld [vmem:[%s6 + $0x4] sm:$0xf]
    %v8554 = vld [vmem:[%s6 + $0x8] sm:$0xf]
    %v8555 = vld [vmem:[%s6 + $0xc] sm:$0xf]
    %v8556 = vpack.c.bf16 %v8315, %v8312
    %v8557 = vpack.c.bf16 %v8323, %v8320
    %s8558 = scalar_lea.vmem %s6, 16
    %v8559 = vld [vmem:[%s8558] sm:$0xf]
    %v8560 = vld [vmem:[%s8558 + $0x4] sm:$0xf]
    %v8561 = vld [vmem:[%s8558 + $0x8] sm:$0xf]
    %v8562 = vld [vmem:[%s8558 + $0xc] sm:$0xf]
    %v8567 = vunpack.c.l.b16 %v8559
    %v8568 = vunpack.c.l.b16 %v8560
    %v8569 = vunpack.c.l.b16 %v8561
    %v8570 = vunpack.c.l.b16 %v8562
    %v8571 = vpack.c.b16 %v8568, %v8567
    %v8572 = vpack.c.b16 %v8570, %v8569
    %vm8575 = vcmask 261120
    %v8577 = vsel %vm8575, %v8556, 0
    %v8580 = vsel %vm8575, %v8557, 0
    %8582 = vmatprep.subr.bf16.mxu0 0
    %8583 = vmatpush1.bf16.msra.mxu0 %v8571
    %8584 = vmatprep.subr.bf16.mxu0 0
    %8585 = vmatpush1.bf16.msra.mxu0 %v8572
    %8586 = vmatprep.subr.bf16.mxu0 0
    %8587 = vmatpush1.bf16.msra.mxu0 0
    %8588 = vmatprep.subr.bf16.mxu0 0
    %8589 = vmatpush1.bf16.msra.mxu0 0
    %8590 = vmatprep.subr.bf16.mxu0 0
    %8591 = vmatpush1.bf16.msra.mxu0 0
    %8592 = vmatprep.subr.bf16.mxu0 0
    %8593 = vmatpush1.bf16.msra.mxu0 0
    %8594 = vmatprep.subr.bf16.mxu0 0
    %8595 = vmatpush1.bf16.msra.mxu0 0
    %8596 = vmatprep.subr.bf16.mxu0 0
    %8597 = vmatpush1.bf16.msra.mxu0 0
    %8598 = vmatprep.subr.bf16.mxu0 0
    %8599 = vmatpush1.bf16.msra.mxu0 0
    %8600 = vmatprep.subr.bf16.mxu0 0
    %8601 = vmatpush1.bf16.msra.mxu0 0
    %8602 = vmatprep.subr.bf16.mxu0 0
    %8603 = vmatpush1.bf16.msra.mxu0 0
    %8604 = vmatprep.subr.bf16.mxu0 0
    %8605 = vmatpush1.bf16.msra.mxu0 0
    %8606 = vmatprep.subr.bf16.mxu0 0
    %8607 = vmatpush1.bf16.msra.mxu0 0
    %8608 = vmatprep.subr.bf16.mxu0 0
    %8609 = vmatpush1.bf16.msra.mxu0 0
    %8610 = vmatprep.subr.bf16.mxu0 0
    %8611 = vmatpush1.bf16.msra.mxu0 0
    %8612 = vmatprep.subr.bf16.mxu0 0
    %8613 = vmatpush1.bf16.msra.mxu0 0
    %8614 = vmatprep.mubr.bf16.mxu0 0
    %8615 = vmatmul.mubr.bf16.gmra.mrb[0].mxu0 %v8577
    %v8616 = vpop.f32.mrb[0].mxu0
    %v8617 = vadd.f32 0.0, %v8616
    %v8618 = vpop.f32.mrb[0].mxu0
    %v8619 = vpop.f32.mrb[0].mxu0
    %v8620 = vadd.f32 0.0, %v8619
    %v8621 = vpop.f32.mrb[0].mxu0
    %8622 = vmatprep.mubr.bf16.mxu0 0
    %8623 = vmatmul.mubr.bf16.gmra.mrb[0].mxu0 %v8580
    %v8624 = vpop.f32.mrb[0].mxu0
    %v8625 = vadd.f32 0.0, %v8624
    %v8626 = vpop.f32.mrb[0].mxu0
    %v8627 = vpop.f32.mrb[0].mxu0
    %v8628 = vadd.f32 0.0, %v8627
    %v8629 = vpop.f32.mrb[0].mxu0
    %8630 = vdwg.mxu0
    %v8635 = vunpack.c.l.b16 %v8552
    %v8636 = vunpack.c.l.b16 %v8553
    %v8637 = vunpack.c.l.b16 %v8554
    %v8638 = vunpack.c.l.b16 %v8555
    %v8639 = vpack.c.b16 %v8636, %v8635
    %v8640 = vpack.c.b16 %v8638, %v8637
    %v8644 = vsel %vm8575, %v8550, 0
    %v8647 = vsel %vm8575, %v8551, 0
    %8649 = vmatprep.subr.bf16.mxu0 0
    %8650 = vmatpush1.bf16.msra.mxu0 %v8639
    %8651 = vmatprep.subr.bf16.mxu0 0
    %8652 = vmatpush1.bf16.msra.mxu0 %v8640
    %8653 = vmatprep.subr.bf16.mxu0 0
    %8654 = vmatpush1.bf16.msra.mxu0 0
    %8655 = vmatprep.subr.bf16.mxu0 0
    %8656 = vmatpush1.bf16.msra.mxu0 0
    %8657 = vmatprep.subr.bf16.mxu0 0
    %8658 = vmatpush1.bf16.msra.mxu0 0
    %8659 = vmatprep.subr.bf16.mxu0 0
    %8660 = vmatpush1.bf16.msra.mxu0 0
    %8661 = vmatprep.subr.bf16.mxu0 0
    %8662 = vmatpush1.bf16.msra.mxu0 0
    %8663 = vmatprep.subr.bf16.mxu0 0
    %8664 = vmatpush1.bf16.msra.mxu0 0
    %8665 = vmatprep.subr.bf16.mxu0 0
    %8666 = vmatpush1.bf16.msra.mxu0 0
    %8667 = vmatprep.subr.bf16.mxu0 0
    %8668 = vmatpush1.bf16.msra.mxu0 0
    %8669 = vmatprep.subr.bf16.mxu0 0
    %8670 = vmatpush1.bf16.msra.mxu0 0
    %8671 = vmatprep.subr.bf16.mxu0 0
    %8672 = vmatpush1.bf16.msra.mxu0 0
    %8673 = vmatprep.subr.bf16.mxu0 0
    %8674 = vmatpush1.bf16.msra.mxu0 0
    %8675 = vmatprep.subr.bf16.mxu0 0
    %8676 = vmatpush1.bf16.msra.mxu0 0
    %8677 = vmatprep.subr.bf16.mxu0 0
    %8678 = vmatpush1.bf16.msra.mxu0 0
    %8679 = vmatprep.subr.bf16.mxu0 0
    %8680 = vmatpush1.bf16.msra.mxu0 0
    %8681 = vmatprep.mubr.bf16.mxu0 0
    %8682 = vmatmul.mubr.bf16.gmra.mrb[0].mxu0 %v8644
    %v8683 = vpop.f32.mrb[0].mxu0
    %v8684 = vadd.f32 %v8617, %v8683
    %v8685 = vpop.f32.mrb[0].mxu0
    %v8686 = vpop.f32.mrb[0].mxu0
    %v8687 = vadd.f32 %v8620, %v8686
    %v8688 = vpop.f32.mrb[0].mxu0
    %8689 = vmatprep.mubr.bf16.mxu0 0
    %8690 = vmatmul.mubr.bf16.gmra.mrb[0].mxu0 %v8647
    %v8691 = vpop.f32.mrb[0].mxu0
    %v8692 = vadd.f32 %v8625, %v8691
    %v8693 = vpop.f32.mrb[0].mxu0
    %v8694 = vpop.f32.mrb[0].mxu0
    %v8695 = vadd.f32 %v8628, %v8694
    %v8696 = vpop.f32.mrb[0].mxu0
    %8697 = vdwg.mxu0
    %v8698 = vpack.c.bf16 %v8331, %v8328
    %v8699 = vpack.c.bf16 %v8339, %v8336
    %s8700 = scalar_lea.vmem %s6, 32
    %v8701 = vld [vmem:[%s8700] sm:$0xf]
    %v8702 = vld [vmem:[%s8700 + $0x4] sm:$0xf]
    %v8703 = vld [vmem:[%s8700 + $0x8] sm:$0xf]
    %v8704 = vld [vmem:[%s8700 + $0xc] sm:$0xf]
    %v8709 = vunpack.c.l.b16 %v8701
    %v8710 = vunpack.c.l.b16 %v8702
    %v8711 = vunpack.c.l.b16 %v8703
    %v8712 = vunpack.c.l.b16 %v8704
    %v8713 = vpack.c.b16 %v8710, %v8709
    %v8714 = vpack.c.b16 %v8712, %v8711
    %v8718 = vsel %vm8575, %v8698, 0
    %v8721 = vsel %vm8575, %v8699, 0
    %8723 = vmatprep.subr.bf16.mxu0 0
    %8724 = vmatpush1.bf16.msra.mxu0 %v8713
    %8725 = vmatprep.subr.bf16.mxu0 0
    %8726 = vmatpush1.bf16.msra.mxu0 %v8714
    %8727 = vmatprep.subr.bf16.mxu0 0
    %8728 = vmatpush1.bf16.msra.mxu0 0
    %8729 = vmatprep.subr.bf16.mxu0 0
    %8730 = vmatpush1.bf16.msra.mxu0 0
    %8731 = vmatprep.subr.bf16.mxu0 0
    %8732 = vmatpush1.bf16.msra.mxu0 0
    %8733 = vmatprep.subr.bf16.mxu0 0
    %8734 = vmatpush1.bf16.msra.mxu0 0
    %8735 = vmatprep.subr.bf16.mxu0 0
    %8736 = vmatpush1.bf16.msra.mxu0 0
    %8737 = vmatprep.subr.bf16.mxu0 0
    %8738 = vmatpush1.bf16.msra.mxu0 0
    %8739 = vmatprep.subr.bf16.mxu0 0
    %8740 = vmatpush1.bf16.msra.mxu0 0
    %8741 = vmatprep.subr.bf16.mxu0 0
    %8742 = vmatpush1.bf16.msra.mxu0 0
    %8743 = vmatprep.subr.bf16.mxu0 0
    %8744 = vmatpush1.bf16.msra.mxu0 0
    %8745 = vmatprep.subr.bf16.mxu0 0
    %8746 = vmatpush1.bf16.msra.mxu0 0
    %8747 = vmatprep.subr.bf16.mxu0 0
    %8748 = vmatpush1.bf16.msra.mxu0 0
    %8749 = vmatprep.subr.bf16.mxu0 0
    %8750 = vmatpush1.bf16.msra.mxu0 0
    %8751 = vmatprep.subr.bf16.mxu0 0
    %8752 = vmatpush1.bf16.msra.mxu0 0
    %8753 = vmatprep.subr.bf16.mxu0 0
    %8754 = vmatpush1.bf16.msra.mxu0 0
    %8755 = vmatprep.mubr.bf16.mxu0 0
    %8756 = vmatmul.mubr.bf16.gmra.mrb[0].mxu0 %v8718
    %v8757 = vpop.f32.mrb[0].mxu0
    %v8758 = vadd.f32 0.0, %v8757
    %v8759 = vpop.f32.mrb[0].mxu0
    %v8760 = vpop.f32.mrb[0].mxu0
    %v8761 = vadd.f32 0.0, %v8760
    %v8762 = vpop.f32.mrb[0].mxu0
    %8763 = vmatprep.mubr.bf16.mxu0 0
    %8764 = vmatmul.mubr.bf16.gmra.mrb[0].mxu0 %v8721
    %v8765 = vpop.f32.mrb[0].mxu0
    %v8766 = vadd.f32 0.0, %v8765
    %v8767 = vpop.f32.mrb[0].mxu0
    %v8768 = vpop.f32.mrb[0].mxu0
    %v8769 = vadd.f32 0.0, %v8768
    %v8770 = vpop.f32.mrb[0].mxu0
    %8771 = vdwg.mxu0
    %v8772 = vadd.f32 %v8684, %v8758
    %v8773 = vadd.f32 %v8687, %v8761
    %v8774 = vadd.f32 %v8692, %v8766
    %v8775 = vadd.f32 %v8695, %v8769
    %v8776 = vpack.c.bf16 %v8347, %v8344
    %v8777 = vpack.c.bf16 %v8355, %v8352
    %s8778 = scalar_lea.vmem %s6, 48
    %v8779 = vld [vmem:[%s8778] sm:$0xf]
    %v8780 = vld [vmem:[%s8778 + $0x4] sm:$0xf]
    %v8781 = vld [vmem:[%s8778 + $0x8] sm:$0xf]
    %v8782 = vld [vmem:[%s8778 + $0xc] sm:$0xf]
    %v8787 = vunpack.c.l.b16 %v8779
    %v8788 = vunpack.c.l.b16 %v8780
    %v8789 = vunpack.c.l.b16 %v8781
    %v8790 = vunpack.c.l.b16 %v8782
    %v8791 = vpack.c.b16 %v8788, %v8787
    %v8792 = vpack.c.b16 %v8790, %v8789
    %v8796 = vsel %vm8575, %v8776, 0
    %v8799 = vsel %vm8575, %v8777, 0
    %8801 = vmatprep.subr.bf16.mxu0 0
    %8802 = vmatpush1.bf16.msra.mxu0 %v8791
    %8803 = vmatprep.subr.bf16.mxu0 0
    %8804 = vmatpush1.bf16.msra.mxu0 %v8792
    %8805 = vmatprep.subr.bf16.mxu0 0
    %8806 = vmatpush1.bf16.msra.mxu0 0
    %8807 = vmatprep.subr.bf16.mxu0 0
    %8808 = vmatpush1.bf16.msra.mxu0 0
    %8809 = vmatprep.subr.bf16.mxu0 0
    %8810 = vmatpush1.bf16.msra.mxu0 0
    %8811 = vmatprep.subr.bf16.mxu0 0
    %8812 = vmatpush1.bf16.msra.mxu0 0
    %8813 = vmatprep.subr.bf16.mxu0 0
    %8814 = vmatpush1.bf16.msra.mxu0 0
    %8815 = vmatprep.subr.bf16.mxu0 0
    %8816 = vmatpush1.bf16.msra.mxu0 0
    %8817 = vmatprep.subr.bf16.mxu0 0
    %8818 = vmatpush1.bf16.msra.mxu0 0
    %8819 = vmatprep.subr.bf16.mxu0 0
    %8820 = vmatpush1.bf16.msra.mxu0 0
    %8821 = vmatprep.subr.bf16.mxu0 0
    %8822 = vmatpush1.bf16.msra.mxu0 0
    %8823 = vmatprep.subr.bf16.mxu0 0
    %8824 = vmatpush1.bf16.msra.mxu0 0
    %8825 = vmatprep.subr.bf16.mxu0 0
    %8826 = vmatpush1.bf16.msra.mxu0 0
    %8827 = vmatprep.subr.bf16.mxu0 0
    %8828 = vmatpush1.bf16.msra.mxu0 0
    %8829 = vmatprep.subr.bf16.mxu0 0
    %8830 = vmatpush1.bf16.msra.mxu0 0
    %8831 = vmatprep.subr.bf16.mxu0 0
    %8832 = vmatpush1.bf16.msra.mxu0 0
    %8833 = vmatprep.mubr.bf16.mxu0 0
    %8834 = vmatmul.mubr.bf16.gmra.mrb[0].mxu0 %v8796
    %v8835 = vpop.f32.mrb[0].mxu0
    %v8836 = vadd.f32 0.0, %v8835
    %v8837 = vpop.f32.mrb[0].mxu0
    %v8838 = vpop.f32.mrb[0].mxu0
    %v8839 = vadd.f32 0.0, %v8838
    %v8840 = vpop.f32.mrb[0].mxu0
    %8841 = vmatprep.mubr.bf16.mxu0 0
    %8842 = vmatmul.mubr.bf16.gmra.mrb[0].mxu0 %v8799
    %v8843 = vpop.f32.mrb[0].mxu0
    %v8844 = vadd.f32 0.0, %v8843
    %v8845 = vpop.f32.mrb[0].mxu0
    %v8846 = vpop.f32.mrb[0].mxu0
    %v8847 = vadd.f32 0.0, %v8846
    %v8848 = vpop.f32.mrb[0].mxu0
    %8849 = vdwg.mxu0
    %v8850 = vadd.f32 %v8772, %v8836
    %v8851 = vadd.f32 %v8773, %v8839
    %v8852 = vadd.f32 %v8774, %v8844
    %v8853 = vadd.f32 %v8775, %v8847
    %v8854 = vpack.c.bf16 %v8363, %v8360
    %v8855 = vpack.c.bf16 %v8371, %v8368
    %s8856 = scalar_lea.vmem %s6, 64
    %v8857 = vld [vmem:[%s8856] sm:$0xf]
    %v8858 = vld [vmem:[%s8856 + $0x4] sm:$0xf]
    %v8859 = vld [vmem:[%s8856 + $0x8] sm:$0xf]
    %v8860 = vld [vmem:[%s8856 + $0xc] sm:$0xf]
    %v8865 = vunpack.c.l.b16 %v8857
    %v8866 = vunpack.c.l.b16 %v8858
    %v8867 = vunpack.c.l.b16 %v8859
    %v8868 = vunpack.c.l.b16 %v8860
    %v8869 = vpack.c.b16 %v8866, %v8865
    %v8870 = vpack.c.b16 %v8868, %v8867
    %v8874 = vsel %vm8575, %v8854, 0
    %v8877 = vsel %vm8575, %v8855, 0
    %8879 = vmatprep.subr.bf16.mxu0 0
    %8880 = vmatpush1.bf16.msra.mxu0 %v8869
    %8881 = vmatprep.subr.bf16.mxu0 0
    %8882 = vmatpush1.bf16.msra.mxu0 %v8870
    %8883 = vmatprep.subr.bf16.mxu0 0
    %8884 = vmatpush1.bf16.msra.mxu0 0
    %8885 = vmatprep.subr.bf16.mxu0 0
    %8886 = vmatpush1.bf16.msra.mxu0 0
    %8887 = vmatprep.subr.bf16.mxu0 0
    %8888 = vmatpush1.bf16.msra.mxu0 0
    %8889 = vmatprep.subr.bf16.mxu0 0
    %8890 = vmatpush1.bf16.msra.mxu0 0
    %8891 = vmatprep.subr.bf16.mxu0 0
    %8892 = vmatpush1.bf16.msra.mxu0 0
    %8893 = vmatprep.subr.bf16.mxu0 0
    %8894 = vmatpush1.bf16.msra.mxu0 0
    %8895 = vmatprep.subr.bf16.mxu0 0
    %8896 = vmatpush1.bf16.msra.mxu0 0
    %8897 = vmatprep.subr.bf16.mxu0 0
    %8898 = vmatpush1.bf16.msra.mxu0 0
    %8899 = vmatprep.subr.bf16.mxu0 0
    %8900 = vmatpush1.bf16.msra.mxu0 0
    %8901 = vmatprep.subr.bf16.mxu0 0
    %8902 = vmatpush1.bf16.msra.mxu0 0
    %8903 = vmatprep.subr.bf16.mxu0 0
    %8904 = vmatpush1.bf16.msra.mxu0 0
    %8905 = vmatprep.subr.bf16.mxu0 0
    %8906 = vmatpush1.bf16.msra.mxu0 0
    %8907 = vmatprep.subr.bf16.mxu0 0
    %8908 = vmatpush1.bf16.msra.mxu0 0
    %8909 = vmatprep.subr.bf16.mxu0 0
    %8910 = vmatpush1.bf16.msra.mxu0 0
    %8911 = vmatprep.mubr.bf16.mxu0 0
    %8912 = vmatmul.mubr.bf16.gmra.mrb[0].mxu0 %v8874
    %v8913 = vpop.f32.mrb[0].mxu0
    %v8914 = vadd.f32 0.0, %v8913
    %v8915 = vpop.f32.mrb[0].mxu0
    %v8916 = vpop.f32.mrb[0].mxu0
    %v8917 = vadd.f32 0.0, %v8916
    %v8918 = vpop.f32.mrb[0].mxu0
    %8919 = vmatprep.mubr.bf16.mxu0 0
    %8920 = vmatmul.mubr.bf16.gmra.mrb[0].mxu0 %v8877
    %v8921 = vpop.f32.mrb[0].mxu0
    %v8922 = vadd.f32 0.0, %v8921
    %v8923 = vpop.f32.mrb[0].mxu0
    %v8924 = vpop.f32.mrb[0].mxu0
    %v8925 = vadd.f32 0.0, %v8924
    %v8926 = vpop.f32.mrb[0].mxu0
    %8927 = vdwg.mxu0
    %v8928 = vadd.f32 %v8850, %v8914
    %v8929 = vadd.f32 %v8851, %v8917
    %v8930 = vadd.f32 %v8852, %v8922
    %v8931 = vadd.f32 %v8853, %v8925
    %v8932 = vpack.c.bf16 %v8379, %v8376
    %v8933 = vpack.c.bf16 %v8387, %v8384
    %s8934 = scalar_lea.vmem %s6, 80
    %v8935 = vld [vmem:[%s8934] sm:$0xf]
    %v8936 = vld [vmem:[%s8934 + $0x4] sm:$0xf]
    %v8937 = vld [vmem:[%s8934 + $0x8] sm:$0xf]
    %v8938 = vld [vmem:[%s8934 + $0xc] sm:$0xf]
    %v8943 = vunpack.c.l.b16 %v8935
    %v8944 = vunpack.c.l.b16 %v8936
    %v8945 = vunpack.c.l.b16 %v8937
    %v8946 = vunpack.c.l.b16 %v8938
    %v8947 = vpack.c.b16 %v8944, %v8943
    %v8948 = vpack.c.b16 %v8946, %v8945
    %v8952 = vsel %vm8575, %v8932, 0
    %v8955 = vsel %vm8575, %v8933, 0
    %8957 = vmatprep.subr.bf16.mxu0 0
    %8958 = vmatpush1.bf16.msra.mxu0 %v8947
    %8959 = vmatprep.subr.bf16.mxu0 0
    %8960 = vmatpush1.bf16.msra.mxu0 %v8948
    %8961 = vmatprep.subr.bf16.mxu0 0
    %8962 = vmatpush1.bf16.msra.mxu0 0
    %8963 = vmatprep.subr.bf16.mxu0 0
    %8964 = vmatpush1.bf16.msra.mxu0 0
    %8965 = vmatprep.subr.bf16.mxu0 0
    %8966 = vmatpush1.bf16.msra.mxu0 0
    %8967 = vmatprep.subr.bf16.mxu0 0
    %8968 = vmatpush1.bf16.msra.mxu0 0
    %8969 = vmatprep.subr.bf16.mxu0 0
    %8970 = vmatpush1.bf16.msra.mxu0 0
    %8971 = vmatprep.subr.bf16.mxu0 0
    %8972 = vmatpush1.bf16.msra.mxu0 0
    %8973 = vmatprep.subr.bf16.mxu0 0
    %8974 = vmatpush1.bf16.msra.mxu0 0
    %8975 = vmatprep.subr.bf16.mxu0 0
    %8976 = vmatpush1.bf16.msra.mxu0 0
    %8977 = vmatprep.subr.bf16.mxu0 0
    %8978 = vmatpush1.bf16.msra.mxu0 0
    %8979 = vmatprep.subr.bf16.mxu0 0
    %8980 = vmatpush1.bf16.msra.mxu0 0
    %8981 = vmatprep.subr.bf16.mxu0 0
    %8982 = vmatpush1.bf16.msra.mxu0 0
    %8983 = vmatprep.subr.bf16.mxu0 0
    %8984 = vmatpush1.bf16.msra.mxu0 0
    %8985 = vmatprep.subr.bf16.mxu0 0
    %8986 = vmatpush1.bf16.msra.mxu0 0
    %8987 = vmatprep.subr.bf16.mxu0 0
    %8988 = vmatpush1.bf16.msra.mxu0 0
    %8989 = vmatprep.mubr.bf16.mxu0 0
    %8990 = vmatmul.mubr.bf16.gmra.mrb[0].mxu0 %v8952
    %v8991 = vpop.f32.mrb[0].mxu0
    %v8992 = vadd.f32 0.0, %v8991
    %v8993 = vpop.f32.mrb[0].mxu0
    %v8994 = vpop.f32.mrb[0].mxu0
    %v8995 = vadd.f32 0.0, %v8994
    %v8996 = vpop.f32.mrb[0].mxu0
    %8997 = vmatprep.mubr.bf16.mxu0 0
    %8998 = vmatmul.mubr.bf16.gmra.mrb[0].mxu0 %v8955
    %v8999 = vpop.f32.mrb[0].mxu0
    %v9000 = vadd.f32 0.0, %v8999
    %v9001 = vpop.f32.mrb[0].mxu0
    %v9002 = vpop.f32.mrb[0].mxu0
    %v9003 = vadd.f32 0.0, %v9002
    %v9004 = vpop.f32.mrb[0].mxu0
    %9005 = vdwg.mxu0
    %v9006 = vadd.f32 %v8928, %v8992
    %v9007 = vadd.f32 %v8929, %v8995
    %v9008 = vadd.f32 %v8930, %v9000
    %v9009 = vadd.f32 %v8931, %v9003
    %v9010 = vpack.c.bf16 %v8395, %v8392
    %v9011 = vpack.c.bf16 %v8403, %v8400
    %s9012 = scalar_lea.vmem %s6, 96
    %v9013 = vld [vmem:[%s9012] sm:$0xf]
    %v9014 = vld [vmem:[%s9012 + $0x4] sm:$0xf]
    %v9015 = vld [vmem:[%s9012 + $0x8] sm:$0xf]
    %v9016 = vld [vmem:[%s9012 + $0xc] sm:$0xf]
    %v9021 = vunpack.c.l.b16 %v9013
    %v9022 = vunpack.c.l.b16 %v9014
    %v9023 = vunpack.c.l.b16 %v9015
    %v9024 = vunpack.c.l.b16 %v9016
    %v9025 = vpack.c.b16 %v9022, %v9021
    %v9026 = vpack.c.b16 %v9024, %v9023
    %v9030 = vsel %vm8575, %v9010, 0
    %v9033 = vsel %vm8575, %v9011, 0
    %9035 = vmatprep.subr.bf16.mxu0 0
    %9036 = vmatpush1.bf16.msra.mxu0 %v9025
    %9037 = vmatprep.subr.bf16.mxu0 0
    %9038 = vmatpush1.bf16.msra.mxu0 %v9026
    %9039 = vmatprep.subr.bf16.mxu0 0
    %9040 = vmatpush1.bf16.msra.mxu0 0
    %9041 = vmatprep.subr.bf16.mxu0 0
    %9042 = vmatpush1.bf16.msra.mxu0 0
    %9043 = vmatprep.subr.bf16.mxu0 0
    %9044 = vmatpush1.bf16.msra.mxu0 0
    %9045 = vmatprep.subr.bf16.mxu0 0
    %9046 = vmatpush1.bf16.msra.mxu0 0
    %9047 = vmatprep.subr.bf16.mxu0 0
    %9048 = vmatpush1.bf16.msra.mxu0 0
    %9049 = vmatprep.subr.bf16.mxu0 0
    %9050 = vmatpush1.bf16.msra.mxu0 0
    %9051 = vmatprep.subr.bf16.mxu0 0
    %9052 = vmatpush1.bf16.msra.mxu0 0
    %9053 = vmatprep.subr.bf16.mxu0 0
    %9054 = vmatpush1.bf16.msra.mxu0 0
    %9055 = vmatprep.subr.bf16.mxu0 0
    %9056 = vmatpush1.bf16.msra.mxu0 0
    %9057 = vmatprep.subr.bf16.mxu0 0
    %9058 = vmatpush1.bf16.msra.mxu0 0
    %9059 = vmatprep.subr.bf16.mxu0 0
    %9060 = vmatpush1.bf16.msra.mxu0 0
    %9061 = vmatprep.subr.bf16.mxu0 0
    %9062 = vmatpush1.bf16.msra.mxu0 0
    %9063 = vmatprep.subr.bf16.mxu0 0
    %9064 = vmatpush1.bf16.msra.mxu0 0
    %9065 = vmatprep.subr.bf16.mxu0 0
    %9066 = vmatpush1.bf16.msra.mxu0 0
    %9067 = vmatprep.mubr.bf16.mxu0 0
    %9068 = vmatmul.mubr.bf16.gmra.mrb[0].mxu0 %v9030
    %v9069 = vpop.f32.mrb[0].mxu0
    %v9070 = vadd.f32 0.0, %v9069
    %v9071 = vpop.f32.mrb[0].mxu0
    %v9072 = vpop.f32.mrb[0].mxu0
    %v9073 = vadd.f32 0.0, %v9072
    %v9074 = vpop.f32.mrb[0].mxu0
    %9075 = vmatprep.mubr.bf16.mxu0 0
    %9076 = vmatmul.mubr.bf16.gmra.mrb[0].mxu0 %v9033
    %v9077 = vpop.f32.mrb[0].mxu0
    %v9078 = vadd.f32 0.0, %v9077
    %v9079 = vpop.f32.mrb[0].mxu0
    %v9080 = vpop.f32.mrb[0].mxu0
    %v9081 = vadd.f32 0.0, %v9080
    %v9082 = vpop.f32.mrb[0].mxu0
    %9083 = vdwg.mxu0
    %v9084 = vadd.f32 %v9006, %v9070
    %v9085 = vadd.f32 %v9007, %v9073
    %v9086 = vadd.f32 %v9008, %v9078
    %v9087 = vadd.f32 %v9009, %v9081
    %v9088 = vpack.c.bf16 %v8411, %v8408
    %v9089 = vpack.c.bf16 %v8419, %v8416
    %s9090 = scalar_lea.vmem %s6, 112
    %v9091 = vld [vmem:[%s9090] sm:$0xf]
    %v9092 = vld [vmem:[%s9090 + $0x4] sm:$0xf]
    %v9093 = vld [vmem:[%s9090 + $0x8] sm:$0xf]
    %v9094 = vld [vmem:[%s9090 + $0xc] sm:$0xf]
    %v9099 = vunpack.c.l.b16 %v9091
    %v9100 = vunpack.c.l.b16 %v9092
    %v9101 = vunpack.c.l.b16 %v9093
    %v9102 = vunpack.c.l.b16 %v9094
    %v9103 = vpack.c.b16 %v9100, %v9099
    %v9104 = vpack.c.b16 %v9102, %v9101
    %v9108 = vsel %vm8575, %v9088, 0
    %v9111 = vsel %vm8575, %v9089, 0
    %9113 = vmatprep.subr.bf16.mxu0 0
    %9114 = vmatpush1.bf16.msra.mxu0 %v9103
    %9115 = vmatprep.subr.bf16.mxu0 0
    %9116 = vmatpush1.bf16.msra.mxu0 %v9104
    %9117 = vmatprep.subr.bf16.mxu0 0
    %9118 = vmatpush1.bf16.msra.mxu0 0
    %9119 = vmatprep.subr.bf16.mxu0 0
    %9120 = vmatpush1.bf16.msra.mxu0 0
    %9121 = vmatprep.subr.bf16.mxu0 0
    %9122 = vmatpush1.bf16.msra.mxu0 0
    %9123 = vmatprep.subr.bf16.mxu0 0
    %9124 = vmatpush1.bf16.msra.mxu0 0
    %9125 = vmatprep.subr.bf16.mxu0 0
    %9126 = vmatpush1.bf16.msra.mxu0 0
    %9127 = vmatprep.subr.bf16.mxu0 0
    %9128 = vmatpush1.bf16.msra.mxu0 0
    %9129 = vmatprep.subr.bf16.mxu0 0
    %9130 = vmatpush1.bf16.msra.mxu0 0
    %9131 = vmatprep.subr.bf16.mxu0 0
    %9132 = vmatpush1.bf16.msra.mxu0 0
    %9133 = vmatprep.subr.bf16.mxu0 0
    %9134 = vmatpush1.bf16.msra.mxu0 0
    %9135 = vmatprep.subr.bf16.mxu0 0
    %9136 = vmatpush1.bf16.msra.mxu0 0
    %9137 = vmatprep.subr.bf16.mxu0 0
    %9138 = vmatpush1.bf16.msra.mxu0 0
    %9139 = vmatprep.subr.bf16.mxu0 0
    %9140 = vmatpush1.bf16.msra.mxu0 0
    %9141 = vmatprep.subr.bf16.mxu0 0
    %9142 = vmatpush1.bf16.msra.mxu0 0
    %9143 = vmatprep.subr.bf16.mxu0 0
    %9144 = vmatpush1.bf16.msra.mxu0 0
    %9145 = vmatprep.mubr.bf16.mxu0 0
    %9146 = vmatmul.mubr.bf16.gmra.mrb[0].mxu0 %v9108
    %v9147 = vpop.f32.mrb[0].mxu0
    %v9148 = vadd.f32 0.0, %v9147
    %v9149 = vpop.f32.mrb[0].mxu0
    %v9150 = vpop.f32.mrb[0].mxu0
    %v9151 = vadd.f32 0.0, %v9150
    %v9152 = vpop.f32.mrb[0].mxu0
    %9153 = vmatprep.mubr.bf16.mxu0 0
    %9154 = vmatmul.mubr.bf16.gmra.mrb[0].mxu0 %v9111
    %v9155 = vpop.f32.mrb[0].mxu0
    %v9156 = vadd.f32 0.0, %v9155
    %v9157 = vpop.f32.mrb[0].mxu0
    %v9158 = vpop.f32.mrb[0].mxu0
    %v9159 = vadd.f32 0.0, %v9158
    %v9160 = vpop.f32.mrb[0].mxu0
    %9161 = vdwg.mxu0
    %v9162 = vadd.f32 %v9084, %v9148
    %v9163 = vadd.f32 %v9085, %v9151
    %v9164 = vadd.f32 %v9086, %v9156
    %v9165 = vadd.f32 %v9087, %v9159
    %v9166 = vpack.c.bf16 %v8427, %v8424
    %v9167 = vpack.c.bf16 %v8435, %v8432
    %s9168 = scalar_lea.vmem %s6, 128
    %v9169 = vld [vmem:[%s9168] sm:$0xf]
    %v9170 = vld [vmem:[%s9168 + $0x4] sm:$0xf]
    %v9171 = vld [vmem:[%s9168 + $0x8] sm:$0xf]
    %v9172 = vld [vmem:[%s9168 + $0xc] sm:$0xf]
    %v9177 = vunpack.c.l.b16 %v9169
    %v9178 = vunpack.c.l.b16 %v9170
    %v9179 = vunpack.c.l.b16 %v9171
    %v9180 = vunpack.c.l.b16 %v9172
    %v9181 = vpack.c.b16 %v9178, %v9177
    %v9182 = vpack.c.b16 %v9180, %v9179
    %v9186 = vsel %vm8575, %v9166, 0
    %v9189 = vsel %vm8575, %v9167, 0
    %9191 = vmatprep.subr.bf16.mxu0 0
    %9192 = vmatpush1.bf16.msra.mxu0 %v9181
    %9193 = vmatprep.subr.bf16.mxu0 0
    %9194 = vmatpush1.bf16.msra.mxu0 %v9182
    %9195 = vmatprep.subr.bf16.mxu0 0
    %9196 = vmatpush1.bf16.msra.mxu0 0
    %9197 = vmatprep.subr.bf16.mxu0 0
    %9198 = vmatpush1.bf16.msra.mxu0 0
    %9199 = vmatprep.subr.bf16.mxu0 0
    %9200 = vmatpush1.bf16.msra.mxu0 0
    %9201 = vmatprep.subr.bf16.mxu0 0
    %9202 = vmatpush1.bf16.msra.mxu0 0
    %9203 = vmatprep.subr.bf16.mxu0 0
    %9204 = vmatpush1.bf16.msra.mxu0 0
    %9205 = vmatprep.subr.bf16.mxu0 0
    %9206 = vmatpush1.bf16.msra.mxu0 0
    %9207 = vmatprep.subr.bf16.mxu0 0
    %9208 = vmatpush1.bf16.msra.mxu0 0
    %9209 = vmatprep.subr.bf16.mxu0 0
    %9210 = vmatpush1.bf16.msra.mxu0 0
    %9211 = vmatprep.subr.bf16.mxu0 0
    %9212 = vmatpush1.bf16.msra.mxu0 0
    %9213 = vmatprep.subr.bf16.mxu0 0
    %9214 = vmatpush1.bf16.msra.mxu0 0
    %9215 = vmatprep.subr.bf16.mxu0 0
    %9216 = vmatpush1.bf16.msra.mxu0 0
    %9217 = vmatprep.subr.bf16.mxu0 0
    %9218 = vmatpush1.bf16.msra.mxu0 0
    %9219 = vmatprep.subr.bf16.mxu0 0
    %9220 = vmatpush1.bf16.msra.mxu0 0
    %9221 = vmatprep.subr.bf16.mxu0 0
    %9222 = vmatpush1.bf16.msra.mxu0 0
    %9223 = vmatprep.mubr.bf16.mxu0 0
    %9224 = vmatmul.mubr.bf16.gmra.mrb[0].mxu0 %v9186
    %v9225 = vpop.f32.mrb[0].mxu0
    %v9226 = vadd.f32 0.0, %v9225
    %v9227 = vpop.f32.mrb[0].mxu0
    %v9228 = vpop.f32.mrb[0].mxu0
    %v9229 = vadd.f32 0.0, %v9228
    %v9230 = vpop.f32.mrb[0].mxu0
    %9231 = vmatprep.mubr.bf16.mxu0 0
    %9232 = vmatmul.mubr.bf16.gmra.mrb[0].mxu0 %v9189
    %v9233 = vpop.f32.mrb[0].mxu0
    %v9234 = vadd.f32 0.0, %v9233
    %v9235 = vpop.f32.mrb[0].mxu0
    %v9236 = vpop.f32.mrb[0].mxu0
    %v9237 = vadd.f32 0.0, %v9236
    %v9238 = vpop.f32.mrb[0].mxu0
    %9239 = vdwg.mxu0
    %v9240 = vadd.f32 %v9162, %v9226
    %v9241 = vadd.f32 %v9163, %v9229
    %v9242 = vadd.f32 %v9164, %v9234
    %v9243 = vadd.f32 %v9165, %v9237
    %v9244 = vpack.c.bf16 %v8443, %v8440
    %v9245 = vpack.c.bf16 %v8451, %v8448
    %s9246 = scalar_lea.vmem %s6, 144
    %v9247 = vld [vmem:[%s9246] sm:$0xf]
    %v9248 = vld [vmem:[%s9246 + $0x4] sm:$0xf]
    %v9249 = vld [vmem:[%s9246 + $0x8] sm:$0xf]
    %v9250 = vld [vmem:[%s9246 + $0xc] sm:$0xf]
    %v9255 = vunpack.c.l.b16 %v9247
    %v9256 = vunpack.c.l.b16 %v9248
    %v9257 = vunpack.c.l.b16 %v9249
    %v9258 = vunpack.c.l.b16 %v9250
    %v9259 = vpack.c.b16 %v9256, %v9255
    %v9260 = vpack.c.b16 %v9258, %v9257
    %v9264 = vsel %vm8575, %v9244, 0
    %v9267 = vsel %vm8575, %v9245, 0
    %9269 = vmatprep.subr.bf16.mxu0 0
    %9270 = vmatpush1.bf16.msra.mxu0 %v9259
    %9271 = vmatprep.subr.bf16.mxu0 0
    %9272 = vmatpush1.bf16.msra.mxu0 %v9260
    %9273 = vmatprep.subr.bf16.mxu0 0
    %9274 = vmatpush1.bf16.msra.mxu0 0
    %9275 = vmatprep.subr.bf16.mxu0 0
    %9276 = vmatpush1.bf16.msra.mxu0 0
    %9277 = vmatprep.subr.bf16.mxu0 0
    %9278 = vmatpush1.bf16.msra.mxu0 0
    %9279 = vmatprep.subr.bf16.mxu0 0
    %9280 = vmatpush1.bf16.msra.mxu0 0
    %9281 = vmatprep.subr.bf16.mxu0 0
    %9282 = vmatpush1.bf16.msra.mxu0 0
    %9283 = vmatprep.subr.bf16.mxu0 0
    %9284 = vmatpush1.bf16.msra.mxu0 0
    %9285 = vmatprep.subr.bf16.mxu0 0
    %9286 = vmatpush1.bf16.msra.mxu0 0
    %9287 = vmatprep.subr.bf16.mxu0 0
    %9288 = vmatpush1.bf16.msra.mxu0 0
    %9289 = vmatprep.subr.bf16.mxu0 0
    %9290 = vmatpush1.bf16.msra.mxu0 0
    %9291 = vmatprep.subr.bf16.mxu0 0
    %9292 = vmatpush1.bf16.msra.mxu0 0
    %9293 = vmatprep.subr.bf16.mxu0 0
    %9294 = vmatpush1.bf16.msra.mxu0 0
    %9295 = vmatprep.subr.bf16.mxu0 0
    %9296 = vmatpush1.bf16.msra.mxu0 0
    %9297 = vmatprep.subr.bf16.mxu0 0
    %9298 = vmatpush1.bf16.msra.mxu0 0
    %9299 = vmatprep.subr.bf16.mxu0 0
    %9300 = vmatpush1.bf16.msra.mxu0 0
    %9301 = vmatprep.mubr.bf16.mxu0 0
    %9302 = vmatmul.mubr.bf16.gmra.mrb[0].mxu0 %v9264
    %v9303 = vpop.f32.mrb[0].mxu0
    %v9304 = vadd.f32 0.0, %v9303
    %v9305 = vpop.f32.mrb[0].mxu0
    %v9306 = vpop.f32.mrb[0].mxu0
    %v9307 = vadd.f32 0.0, %v9306
    %v9308 = vpop.f32.mrb[0].mxu0
    %9309 = vmatprep.mubr.bf16.mxu0 0
    %9310 = vmatmul.mubr.bf16.gmra.mrb[0].mxu0 %v9267
    %v9311 = vpop.f32.mrb[0].mxu0
    %v9312 = vadd.f32 0.0, %v9311
    %v9313 = vpop.f32.mrb[0].mxu0
    %v9314 = vpop.f32.mrb[0].mxu0
    %v9315 = vadd.f32 0.0, %v9314
    %v9316 = vpop.f32.mrb[0].mxu0
    %9317 = vdwg.mxu0
    %v9318 = vadd.f32 %v9240, %v9304
    %v9319 = vadd.f32 %v9241, %v9307
    %v9320 = vadd.f32 %v9242, %v9312
    %v9321 = vadd.f32 %v9243, %v9315
    %v9322 = vpack.c.bf16 %v8459, %v8456
    %v9323 = vpack.c.bf16 %v8467, %v8464
    %s9324 = scalar_lea.vmem %s6, 160
    %v9325 = vld [vmem:[%s9324] sm:$0xf]
    %v9326 = vld [vmem:[%s9324 + $0x4] sm:$0xf]
    %v9327 = vld [vmem:[%s9324 + $0x8] sm:$0xf]
    %v9328 = vld [vmem:[%s9324 + $0xc] sm:$0xf]
    %v9333 = vunpack.c.l.b16 %v9325
    %v9334 = vunpack.c.l.b16 %v9326
    %v9335 = vunpack.c.l.b16 %v9327
    %v9336 = vunpack.c.l.b16 %v9328
    %v9337 = vpack.c.b16 %v9334, %v9333
    %v9338 = vpack.c.b16 %v9336, %v9335
    %v9342 = vsel %vm8575, %v9322, 0
    %v9345 = vsel %vm8575, %v9323, 0
    %9347 = vmatprep.subr.bf16.mxu0 0
    %9348 = vmatpush1.bf16.msra.mxu0 %v9337
    %9349 = vmatprep.subr.bf16.mxu0 0
    %9350 = vmatpush1.bf16.msra.mxu0 %v9338
    %9351 = vmatprep.subr.bf16.mxu0 0
    %9352 = vmatpush1.bf16.msra.mxu0 0
    %9353 = vmatprep.subr.bf16.mxu0 0
    %9354 = vmatpush1.bf16.msra.mxu0 0
    %9355 = vmatprep.subr.bf16.mxu0 0
    %9356 = vmatpush1.bf16.msra.mxu0 0
    %9357 = vmatprep.subr.bf16.mxu0 0
    %9358 = vmatpush1.bf16.msra.mxu0 0
    %9359 = vmatprep.subr.bf16.mxu0 0
    %9360 = vmatpush1.bf16.msra.mxu0 0
    %9361 = vmatprep.subr.bf16.mxu0 0
    %9362 = vmatpush1.bf16.msra.mxu0 0
    %9363 = vmatprep.subr.bf16.mxu0 0
    %9364 = vmatpush1.bf16.msra.mxu0 0
    %9365 = vmatprep.subr.bf16.mxu0 0
    %9366 = vmatpush1.bf16.msra.mxu0 0
    %9367 = vmatprep.subr.bf16.mxu0 0
    %9368 = vmatpush1.bf16.msra.mxu0 0
    %9369 = vmatprep.subr.bf16.mxu0 0
    %9370 = vmatpush1.bf16.msra.mxu0 0
    %9371 = vmatprep.subr.bf16.mxu0 0
    %9372 = vmatpush1.bf16.msra.mxu0 0
    %9373 = vmatprep.subr.bf16.mxu0 0
    %9374 = vmatpush1.bf16.msra.mxu0 0
    %9375 = vmatprep.subr.bf16.mxu0 0
    %9376 = vmatpush1.bf16.msra.mxu0 0
    %9377 = vmatprep.subr.bf16.mxu0 0
    %9378 = vmatpush1.bf16.msra.mxu0 0
    %9379 = vmatprep.mubr.bf16.mxu0 0
    %9380 = vmatmul.mubr.bf16.gmra.mrb[0].mxu0 %v9342
    %v9381 = vpop.f32.mrb[0].mxu0
    %v9382 = vadd.f32 0.0, %v9381
    %v9383 = vpop.f32.mrb[0].mxu0
    %v9384 = vpop.f32.mrb[0].mxu0
    %v9385 = vadd.f32 0.0, %v9384
    %v9386 = vpop.f32.mrb[0].mxu0
    %9387 = vmatprep.mubr.bf16.mxu0 0
    %9388 = vmatmul.mubr.bf16.gmra.mrb[0].mxu0 %v9345
    %v9389 = vpop.f32.mrb[0].mxu0
    %v9390 = vadd.f32 0.0, %v9389
    %v9391 = vpop.f32.mrb[0].mxu0
    %v9392 = vpop.f32.mrb[0].mxu0
    %v9393 = vadd.f32 0.0, %v9392
    %v9394 = vpop.f32.mrb[0].mxu0
    %9395 = vdwg.mxu0
    %v9396 = vadd.f32 %v9318, %v9382
    %v9397 = vadd.f32 %v9319, %v9385
    %v9398 = vadd.f32 %v9320, %v9390
    %v9399 = vadd.f32 %v9321, %v9393
    %v9400 = vpack.c.bf16 %v8475, %v8472
    %v9401 = vpack.c.bf16 %v8483, %v8480
    %s9402 = scalar_lea.vmem %s6, 176
    %v9403 = vld [vmem:[%s9402] sm:$0xf]
    %v9404 = vld [vmem:[%s9402 + $0x4] sm:$0xf]
    %v9405 = vld [vmem:[%s9402 + $0x8] sm:$0xf]
    %v9406 = vld [vmem:[%s9402 + $0xc] sm:$0xf]
    %v9411 = vunpack.c.l.b16 %v9403
    %v9412 = vunpack.c.l.b16 %v9404
    %v9413 = vunpack.c.l.b16 %v9405
    %v9414 = vunpack.c.l.b16 %v9406
    %v9415 = vpack.c.b16 %v9412, %v9411
    %v9416 = vpack.c.b16 %v9414, %v9413
    %v9420 = vsel %vm8575, %v9400, 0
    %v9423 = vsel %vm8575, %v9401, 0
    %9425 = vmatprep.subr.bf16.mxu0 0
    %9426 = vmatpush1.bf16.msra.mxu0 %v9415
    %9427 = vmatprep.subr.bf16.mxu0 0
    %9428 = vmatpush1.bf16.msra.mxu0 %v9416
    %9429 = vmatprep.subr.bf16.mxu0 0
    %9430 = vmatpush1.bf16.msra.mxu0 0
    %9431 = vmatprep.subr.bf16.mxu0 0
    %9432 = vmatpush1.bf16.msra.mxu0 0
    %9433 = vmatprep.subr.bf16.mxu0 0
    %9434 = vmatpush1.bf16.msra.mxu0 0
    %9435 = vmatprep.subr.bf16.mxu0 0
    %9436 = vmatpush1.bf16.msra.mxu0 0
    %9437 = vmatprep.subr.bf16.mxu0 0
    %9438 = vmatpush1.bf16.msra.mxu0 0
    %9439 = vmatprep.subr.bf16.mxu0 0
    %9440 = vmatpush1.bf16.msra.mxu0 0
    %9441 = vmatprep.subr.bf16.mxu0 0
    %9442 = vmatpush1.bf16.msra.mxu0 0
    %9443 = vmatprep.subr.bf16.mxu0 0
    %9444 = vmatpush1.bf16.msra.mxu0 0
    %9445 = vmatprep.subr.bf16.mxu0 0
    %9446 = vmatpush1.bf16.msra.mxu0 0
    %9447 = vmatprep.subr.bf16.mxu0 0
    %9448 = vmatpush1.bf16.msra.mxu0 0
    %9449 = vmatprep.subr.bf16.mxu0 0
    %9450 = vmatpush1.bf16.msra.mxu0 0
    %9451 = vmatprep.subr.bf16.mxu0 0
    %9452 = vmatpush1.bf16.msra.mxu0 0
    %9453 = vmatprep.subr.bf16.mxu0 0
    %9454 = vmatpush1.bf16.msra.mxu0 0
    %9455 = vmatprep.subr.bf16.mxu0 0
    %9456 = vmatpush1.bf16.msra.mxu0 0
    %9457 = vmatprep.mubr.bf16.mxu0 0
    %9458 = vmatmul.mubr.bf16.gmra.mrb[0].mxu0 %v9420
    %v9459 = vpop.f32.mrb[0].mxu0
    %v9460 = vadd.f32 0.0, %v9459
    %v9461 = vpop.f32.mrb[0].mxu0
    %v9462 = vpop.f32.mrb[0].mxu0
    %v9463 = vadd.f32 0.0, %v9462
    %v9464 = vpop.f32.mrb[0].mxu0
    %9465 = vmatprep.mubr.bf16.mxu0 0
    %9466 = vmatmul.mubr.bf16.gmra.mrb[0].mxu0 %v9423
    %v9467 = vpop.f32.mrb[0].mxu0
    %v9468 = vadd.f32 0.0, %v9467
    %v9469 = vpop.f32.mrb[0].mxu0
    %v9470 = vpop.f32.mrb[0].mxu0
    %v9471 = vadd.f32 0.0, %v9470
    %v9472 = vpop.f32.mrb[0].mxu0
    %9473 = vdwg.mxu0
    %v9474 = vadd.f32 %v9396, %v9460
    %v9475 = vadd.f32 %v9397, %v9463
    %v9476 = vadd.f32 %v9398, %v9468
    %v9477 = vadd.f32 %v9399, %v9471
    %v9478 = vpack.c.bf16 %v8491, %v8488
    %v9479 = vpack.c.bf16 %v8499, %v8496
    %s9480 = scalar_lea.vmem %s6, 192
    %v9481 = vld [vmem:[%s9480] sm:$0xf]
    %v9482 = vld [vmem:[%s9480 + $0x4] sm:$0xf]
    %v9483 = vld [vmem:[%s9480 + $0x8] sm:$0xf]
    %v9484 = vld [vmem:[%s9480 + $0xc] sm:$0xf]
    %v9489 = vunpack.c.l.b16 %v9481
    %v9490 = vunpack.c.l.b16 %v9482
    %v9491 = vunpack.c.l.b16 %v9483
    %v9492 = vunpack.c.l.b16 %v9484
    %v9493 = vpack.c.b16 %v9490, %v9489
    %v9494 = vpack.c.b16 %v9492, %v9491
    %v9498 = vsel %vm8575, %v9478, 0
    %v9501 = vsel %vm8575, %v9479, 0
    %9503 = vmatprep.subr.bf16.mxu0 0
    %9504 = vmatpush1.bf16.msra.mxu0 %v9493
    %9505 = vmatprep.subr.bf16.mxu0 0
    %9506 = vmatpush1.bf16.msra.mxu0 %v9494
    %9507 = vmatprep.subr.bf16.mxu0 0
    %9508 = vmatpush1.bf16.msra.mxu0 0
    %9509 = vmatprep.subr.bf16.mxu0 0
    %9510 = vmatpush1.bf16.msra.mxu0 0
    %9511 = vmatprep.subr.bf16.mxu0 0
    %9512 = vmatpush1.bf16.msra.mxu0 0
    %9513 = vmatprep.subr.bf16.mxu0 0
    %9514 = vmatpush1.bf16.msra.mxu0 0
    %9515 = vmatprep.subr.bf16.mxu0 0
    %9516 = vmatpush1.bf16.msra.mxu0 0
    %9517 = vmatprep.subr.bf16.mxu0 0
    %9518 = vmatpush1.bf16.msra.mxu0 0
    %9519 = vmatprep.subr.bf16.mxu0 0
    %9520 = vmatpush1.bf16.msra.mxu0 0
    %9521 = vmatprep.subr.bf16.mxu0 0
    %9522 = vmatpush1.bf16.msra.mxu0 0
    %9523 = vmatprep.subr.bf16.mxu0 0
    %9524 = vmatpush1.bf16.msra.mxu0 0
    %9525 = vmatprep.subr.bf16.mxu0 0
    %9526 = vmatpush1.bf16.msra.mxu0 0
    %9527 = vmatprep.subr.bf16.mxu0 0
    %9528 = vmatpush1.bf16.msra.mxu0 0
    %9529 = vmatprep.subr.bf16.mxu0 0
    %9530 = vmatpush1.bf16.msra.mxu0 0
    %9531 = vmatprep.subr.bf16.mxu0 0
    %9532 = vmatpush1.bf16.msra.mxu0 0
    %9533 = vmatprep.subr.bf16.mxu0 0
    %9534 = vmatpush1.bf16.msra.mxu0 0
    %9535 = vmatprep.mubr.bf16.mxu0 0
    %9536 = vmatmul.mubr.bf16.gmra.mrb[0].mxu0 %v9498
    %v9537 = vpop.f32.mrb[0].mxu0
    %v9538 = vadd.f32 0.0, %v9537
    %v9539 = vpop.f32.mrb[0].mxu0
    %v9540 = vpop.f32.mrb[0].mxu0
    %v9541 = vadd.f32 0.0, %v9540
    %v9542 = vpop.f32.mrb[0].mxu0
    %9543 = vmatprep.mubr.bf16.mxu0 0
    %9544 = vmatmul.mubr.bf16.gmra.mrb[0].mxu0 %v9501
    %v9545 = vpop.f32.mrb[0].mxu0
    %v9546 = vadd.f32 0.0, %v9545
    %v9547 = vpop.f32.mrb[0].mxu0
    %v9548 = vpop.f32.mrb[0].mxu0
    %v9549 = vadd.f32 0.0, %v9548
    %v9550 = vpop.f32.mrb[0].mxu0
    %9551 = vdwg.mxu0
    %v9552 = vadd.f32 %v9474, %v9538
    %v9553 = vadd.f32 %v9475, %v9541
    %v9554 = vadd.f32 %v9476, %v9546
    %v9555 = vadd.f32 %v9477, %v9549
    %v9556 = vpack.c.bf16 %v8507, %v8504
    %v9557 = vpack.c.bf16 %v8515, %v8512
    %s9558 = scalar_lea.vmem %s6, 208
    %v9559 = vld [vmem:[%s9558] sm:$0xf]
    %v9560 = vld [vmem:[%s9558 + $0x4] sm:$0xf]
    %v9561 = vld [vmem:[%s9558 + $0x8] sm:$0xf]
    %v9562 = vld [vmem:[%s9558 + $0xc] sm:$0xf]
    %v9567 = vunpack.c.l.b16 %v9559
    %v9568 = vunpack.c.l.b16 %v9560
    %v9569 = vunpack.c.l.b16 %v9561
    %v9570 = vunpack.c.l.b16 %v9562
    %v9571 = vpack.c.b16 %v9568, %v9567
    %v9572 = vpack.c.b16 %v9570, %v9569
    %v9576 = vsel %vm8575, %v9556, 0
    %v9579 = vsel %vm8575, %v9557, 0
    %9581 = vmatprep.subr.bf16.mxu0 0
    %9582 = vmatpush1.bf16.msra.mxu0 %v9571
    %9583 = vmatprep.subr.bf16.mxu0 0
    %9584 = vmatpush1.bf16.msra.mxu0 %v9572
    %9585 = vmatprep.subr.bf16.mxu0 0
    %9586 = vmatpush1.bf16.msra.mxu0 0
    %9587 = vmatprep.subr.bf16.mxu0 0
    %9588 = vmatpush1.bf16.msra.mxu0 0
    %9589 = vmatprep.subr.bf16.mxu0 0
    %9590 = vmatpush1.bf16.msra.mxu0 0
    %9591 = vmatprep.subr.bf16.mxu0 0
    %9592 = vmatpush1.bf16.msra.mxu0 0
    %9593 = vmatprep.subr.bf16.mxu0 0
    %9594 = vmatpush1.bf16.msra.mxu0 0
    %9595 = vmatprep.subr.bf16.mxu0 0
    %9596 = vmatpush1.bf16.msra.mxu0 0
    %9597 = vmatprep.subr.bf16.mxu0 0
    %9598 = vmatpush1.bf16.msra.mxu0 0
    %9599 = vmatprep.subr.bf16.mxu0 0
    %9600 = vmatpush1.bf16.msra.mxu0 0
    %9601 = vmatprep.subr.bf16.mxu0 0
    %9602 = vmatpush1.bf16.msra.mxu0 0
    %9603 = vmatprep.subr.bf16.mxu0 0
    %9604 = vmatpush1.bf16.msra.mxu0 0
    %9605 = vmatprep.subr.bf16.mxu0 0
    %9606 = vmatpush1.bf16.msra.mxu0 0
    %9607 = vmatprep.subr.bf16.mxu0 0
    %9608 = vmatpush1.bf16.msra.mxu0 0
    %9609 = vmatprep.subr.bf16.mxu0 0
    %9610 = vmatpush1.bf16.msra.mxu0 0
    %9611 = vmatprep.subr.bf16.mxu0 0
    %9612 = vmatpush1.bf16.msra.mxu0 0
    %9613 = vmatprep.mubr.bf16.mxu0 0
    %9614 = vmatmul.mubr.bf16.gmra.mrb[0].mxu0 %v9576
    %v9615 = vpop.f32.mrb[0].mxu0
    %v9616 = vadd.f32 0.0, %v9615
    %v9617 = vpop.f32.mrb[0].mxu0
    %v9618 = vpop.f32.mrb[0].mxu0
    %v9619 = vadd.f32 0.0, %v9618
    %v9620 = vpop.f32.mrb[0].mxu0
    %9621 = vmatprep.mubr.bf16.mxu0 0
    %9622 = vmatmul.mubr.bf16.gmra.mrb[0].mxu0 %v9579
    %v9623 = vpop.f32.mrb[0].mxu0
    %v9624 = vadd.f32 0.0, %v9623
    %v9625 = vpop.f32.mrb[0].mxu0
    %v9626 = vpop.f32.mrb[0].mxu0
    %v9627 = vadd.f32 0.0, %v9626
    %v9628 = vpop.f32.mrb[0].mxu0
    %9629 = vdwg.mxu0
    %v9630 = vadd.f32 %v9552, %v9616
    %v9631 = vadd.f32 %v9553, %v9619
    %v9632 = vadd.f32 %v9554, %v9624
    %v9633 = vadd.f32 %v9555, %v9627
    %v9634 = vpack.c.bf16 %v8523, %v8520
    %v9635 = vpack.c.bf16 %v8531, %v8528
    %s9636 = scalar_lea.vmem %s6, 224
    %v9637 = vld [vmem:[%s9636] sm:$0xf]
    %v9638 = vld [vmem:[%s9636 + $0x4] sm:$0xf]
    %v9639 = vld [vmem:[%s9636 + $0x8] sm:$0xf]
    %v9640 = vld [vmem:[%s9636 + $0xc] sm:$0xf]
    %v9645 = vunpack.c.l.b16 %v9637
    %v9646 = vunpack.c.l.b16 %v9638
    %v9647 = vunpack.c.l.b16 %v9639
    %v9648 = vunpack.c.l.b16 %v9640
    %v9649 = vpack.c.b16 %v9646, %v9645
    %v9650 = vpack.c.b16 %v9648, %v9647
    %v9654 = vsel %vm8575, %v9634, 0
    %v9657 = vsel %vm8575, %v9635, 0
    %9659 = vmatprep.subr.bf16.mxu0 0
    %9660 = vmatpush1.bf16.msra.mxu0 %v9649
    %9661 = vmatprep.subr.bf16.mxu0 0
    %9662 = vmatpush1.bf16.msra.mxu0 %v9650
    %9663 = vmatprep.subr.bf16.mxu0 0
    %9664 = vmatpush1.bf16.msra.mxu0 0
    %9665 = vmatprep.subr.bf16.mxu0 0
    %9666 = vmatpush1.bf16.msra.mxu0 0
    %9667 = vmatprep.subr.bf16.mxu0 0
    %9668 = vmatpush1.bf16.msra.mxu0 0
    %9669 = vmatprep.subr.bf16.mxu0 0
    %9670 = vmatpush1.bf16.msra.mxu0 0
    %9671 = vmatprep.subr.bf16.mxu0 0
    %9672 = vmatpush1.bf16.msra.mxu0 0
    %9673 = vmatprep.subr.bf16.mxu0 0
    %9674 = vmatpush1.bf16.msra.mxu0 0
    %9675 = vmatprep.subr.bf16.mxu0 0
    %9676 = vmatpush1.bf16.msra.mxu0 0
    %9677 = vmatprep.subr.bf16.mxu0 0
    %9678 = vmatpush1.bf16.msra.mxu0 0
    %9679 = vmatprep.subr.bf16.mxu0 0
    %9680 = vmatpush1.bf16.msra.mxu0 0
    %9681 = vmatprep.subr.bf16.mxu0 0
    %9682 = vmatpush1.bf16.msra.mxu0 0
    %9683 = vmatprep.subr.bf16.mxu0 0
    %9684 = vmatpush1.bf16.msra.mxu0 0
    %9685 = vmatprep.subr.bf16.mxu0 0
    %9686 = vmatpush1.bf16.msra.mxu0 0
    %9687 = vmatprep.subr.bf16.mxu0 0
    %9688 = vmatpush1.bf16.msra.mxu0 0
    %9689 = vmatprep.subr.bf16.mxu0 0
    %9690 = vmatpush1.bf16.msra.mxu0 0
    %9691 = vmatprep.mubr.bf16.mxu0 0
    %9692 = vmatmul.mubr.bf16.gmra.mrb[0].mxu0 %v9654
    %v9693 = vpop.f32.mrb[0].mxu0
    %v9694 = vadd.f32 0.0, %v9693
    %v9695 = vpop.f32.mrb[0].mxu0
    %v9696 = vpop.f32.mrb[0].mxu0
    %v9697 = vadd.f32 0.0, %v9696
    %v9698 = vpop.f32.mrb[0].mxu0
    %9699 = vmatprep.mubr.bf16.mxu0 0
    %9700 = vmatmul.mubr.bf16.gmra.mrb[0].mxu0 %v9657
    %v9701 = vpop.f32.mrb[0].mxu0
    %v9702 = vadd.f32 0.0, %v9701
    %v9703 = vpop.f32.mrb[0].mxu0
    %v9704 = vpop.f32.mrb[0].mxu0
    %v9705 = vadd.f32 0.0, %v9704
    %v9706 = vpop.f32.mrb[0].mxu0
    %9707 = vdwg.mxu0
    %v9708 = vadd.f32 %v9630, %v9694
    %v9709 = vadd.f32 %v9631, %v9697
    %v9710 = vadd.f32 %v9632, %v9702
    %v9711 = vadd.f32 %v9633, %v9705
    %v9712 = vpack.c.bf16 %v8539, %v8536
    %v9713 = vpack.c.bf16 %v8547, %v8544
    %s9714 = scalar_lea.vmem %s6, 240
    %v9715 = vld [vmem:[%s9714] sm:$0xf]
    %v9716 = vld [vmem:[%s9714 + $0x4] sm:$0xf]
    %v9717 = vld [vmem:[%s9714 + $0x8] sm:$0xf]
    %v9718 = vld [vmem:[%s9714 + $0xc] sm:$0xf]
    %v9723 = vunpack.c.l.b16 %v9715
    %v9724 = vunpack.c.l.b16 %v9716
    %v9725 = vunpack.c.l.b16 %v9717
    %v9726 = vunpack.c.l.b16 %v9718
    %v9727 = vpack.c.b16 %v9724, %v9723
    %v9728 = vpack.c.b16 %v9726, %v9725
    %v9732 = vsel %vm8575, %v9712, 0
    %v9735 = vsel %vm8575, %v9713, 0
    %9737 = vmatprep.subr.bf16.mxu0 0
    %9738 = vmatpush1.bf16.msra.mxu0 %v9727
    %9739 = vmatprep.subr.bf16.mxu0 0
    %9740 = vmatpush1.bf16.msra.mxu0 %v9728
    %9741 = vmatprep.subr.bf16.mxu0 0
    %9742 = vmatpush1.bf16.msra.mxu0 0
    %9743 = vmatprep.subr.bf16.mxu0 0
    %9744 = vmatpush1.bf16.msra.mxu0 0
    %9745 = vmatprep.subr.bf16.mxu0 0
    %9746 = vmatpush1.bf16.msra.mxu0 0
    %9747 = vmatprep.subr.bf16.mxu0 0
    %9748 = vmatpush1.bf16.msra.mxu0 0
    %9749 = vmatprep.subr.bf16.mxu0 0
    %9750 = vmatpush1.bf16.msra.mxu0 0
    %9751 = vmatprep.subr.bf16.mxu0 0
    %9752 = vmatpush1.bf16.msra.mxu0 0
    %9753 = vmatprep.subr.bf16.mxu0 0
    %9754 = vmatpush1.bf16.msra.mxu0 0
    %9755 = vmatprep.subr.bf16.mxu0 0
    %9756 = vmatpush1.bf16.msra.mxu0 0
    %9757 = vmatprep.subr.bf16.mxu0 0
    %9758 = vmatpush1.bf16.msra.mxu0 0
    %9759 = vmatprep.subr.bf16.mxu0 0
    %9760 = vmatpush1.bf16.msra.mxu0 0
    %9761 = vmatprep.subr.bf16.mxu0 0
    %9762 = vmatpush1.bf16.msra.mxu0 0
    %9763 = vmatprep.subr.bf16.mxu0 0
    %9764 = vmatpush1.bf16.msra.mxu0 0
    %9765 = vmatprep.subr.bf16.mxu0 0
    %9766 = vmatpush1.bf16.msra.mxu0 0
    %9767 = vmatprep.subr.bf16.mxu0 0
    %9768 = vmatpush1.bf16.msra.mxu0 0
    %9769 = vmatprep.mubr.bf16.mxu0 0
    %9770 = vmatmul.mubr.bf16.gmra.mrb[0].mxu0 %v9732
    %v9771 = vpop.f32.mrb[0].mxu0
    %v9772 = vadd.f32 0.0, %v9771
    %v9773 = vpop.f32.mrb[0].mxu0
    %v9774 = vpop.f32.mrb[0].mxu0
    %v9775 = vadd.f32 0.0, %v9774
    %v9776 = vpop.f32.mrb[0].mxu0
    %9777 = vmatprep.mubr.bf16.mxu0 0
    %9778 = vmatmul.mubr.bf16.gmra.mrb[0].mxu0 %v9735
    %v9779 = vpop.f32.mrb[0].mxu0
    %v9780 = vadd.f32 0.0, %v9779
    %v9781 = vpop.f32.mrb[0].mxu0
    %v9782 = vpop.f32.mrb[0].mxu0
    %v9783 = vadd.f32 0.0, %v9782
    %v9784 = vpop.f32.mrb[0].mxu0
    %9785 = vdwg.mxu0
    %v9786 = vadd.f32 %v9708, %v9772
    %v9787 = vadd.f32 %v9709, %v9775
    %v9788 = vadd.f32 %v9710, %v9780
    %v9789 = vadd.f32 %v9711, %v9783
    %v9790 = vtanh.pop %v9786
    %v9791 = vtanh.pop %v9787
    %v9792 = vtanh.pop %v9788
    %v9793 = vtanh.pop %v9789
    %vm9794 = vcmask 15360
    %9795 = vst.msk [vmem:[%s7] sm:$0xff] %vm9794, %v9790
    %9796 = vst.msk [vmem:[%s7 + $0x8] sm:$0xff] %vm9794, %v9791
    %9797 = vst.msk [vmem:[%s7 + $0x10] sm:$0xff] %vm9794, %v9792
    %9798 = vst.msk [vmem:[%s7 + $0x18] sm:$0xff] %vm9794, %v9793
    // Predicated region
    $region38: #{tpu_custom_call.1} parent=1 // pred_check
      _
    $region39: #{tpu_custom_call.1} parent=1 // pred_check_branch
      %9800 = sbr.rel (0) target = $region41
    $region40: #{tpu_custom_call.1} parent=1 // pred_region
      _
    $region41: #{tpu_custom_call.1} parent=1 // pred_fallthru
      _
    // Predicated region
    $region42: #{tpu_custom_call.1} parent=1 // pred_check
      _
    $region43: #{tpu_custom_call.1} parent=1 // pred_check_branch
      %9802 = sbr.rel (0) target = $region45
    $region44: #{tpu_custom_call.1} parent=1 // pred_region
      _
    $region45: #{tpu_custom_call.1} parent=1 // pred_fallthru
      _
    %9803 = vsyncpa [#allocation3], 1
    %9804 = vsyncpa [#allocation5], 1

</llo_original>
